<compile_context>
chip_gen: v7x
topology: tpu7x:2x2x1
jax: 0.10.0
libtpu: 0.0.40
codegen_flags: <defaults>
</compile_context>

<pallas_src>
import math

import jax
import jax.numpy as jnp
from jax import lax
from jax.experimental import pallas as pl
from jax.experimental.pallas import tpu as pltpu


# ----------------------------- config (small) -----------------------------
B = 8            # batch  (len(texts))
S = 32           # sequence length (lm_max_length)
H = 128          # hidden size     (768 in bert-base, scaled down)
NH = 4           # attention heads
DH = H // NH     # head dim (32)
FFN = 4 * H      # intermediate size
L = 2            # encoder layers  (12 in bert-base, scaled down)
VOCAB = 64
MAX_POS = 64
TYPE_VOCAB = 2
LN_EPS = 1e-12
DTYPE = jnp.float32
WDTYPE = jnp.bfloat16   # matmul weight / MXU operand dtype

# Row blocking: each block holds whole sequences and fills the MXU rows.
B_BLOCKS = 2                     # leading "parallel" grid axis (2nd TC on v7x)
B_PER_BLOCK = B // B_BLOCKS      # sequences per block
BLOCK_ROWS = B_PER_BLOCK * S     # 128 rows -> full MXU row fill

assert B % B_BLOCKS == 0 and H == NH * DH and BLOCK_ROWS % 8 == 0


# --------------------------- in-kernel helpers -----------------------------
def _ln_f32(x, g, b):
    """LayerNorm over last dim, f32 math; g/b are (1, H) broadcast."""
    mean = jnp.mean(x, axis=-1, keepdims=True)
    xc = x - mean
    var = jnp.mean(xc * xc, axis=-1, keepdims=True)
    return xc * lax.rsqrt(var + LN_EPS) * g.astype(jnp.float32) + b.astype(jnp.float32)


def _split_heads(t):
    """(BLOCK_ROWS, H) -> head-major slab (B_PER_BLOCK*NH, S, DH).

    Built from lane slices + layout-preserving leading-dim reshapes and a
    leading-dim concat: one relayout per tensor per layer (no 4D transposes).
    """
    return jnp.concatenate(
        [t[:, h * DH:(h + 1) * DH].reshape(B_PER_BLOCK, S, DH)
         for h in range(NH)],
        axis=0)


def _merge_heads(t):
    """(B_PER_BLOCK*NH, S, DH) -> lane-dense (BLOCK_ROWS, H)."""
    return jnp.concatenate(
        [t[h * B_PER_BLOCK:(h + 1) * B_PER_BLOCK].reshape(BLOCK_ROWS, DH)
         for h in range(NH)],
        axis=-1)


# --------------------- fused whole-forward Pallas kernel -------------------
def _bert_kernel(emb_ref, embg_ref, embb_ref,
                 wqkv_ref, bqkv_ref, wo_ref, bo_ref, ln1g_ref, ln1b_ref,
                 wf1_ref, bf1_ref, wf2_ref, bf2_ref, ln2g_ref, ln2b_ref,
                 wp_ref, bp_ref,
                 pooled_ref, x_scr):
    layer = pl.program_id(1)

    # ---- layer 0: embeddings LayerNorm, result kept resident in VMEM ------
    @pl.when(layer == 0)
    def _():
        x_scr[...] = _ln_f32(emb_ref[...].astype(jnp.float32),
                             embg_ref[...], embb_ref[...])

    x = x_scr[...]                                            # (BLOCK_ROWS, H) f32

    # ---- fused QKV projection: one [H, 3H] matmul, lane-dense 3H output ---
    qkv = (jnp.dot(x.astype(WDTYPE), wqkv_ref[0],
                   preferred_element_type=jnp.float32)
           + bqkv_ref[0].astype(jnp.float32)).astype(WDTYPE)  # (BLOCK_ROWS, 3H)
    q = _split_heads(qkv[:, 0 * H:1 * H])                     # (BPB*NH, S, DH)
    k = _split_heads(qkv[:, 1 * H:2 * H])
    v = _split_heads(qkv[:, 2 * H:3 * H])

    # ---- batched attention over all sequences x heads of this block -------
    # TODO(synk): padding attention mask omitted (synthetic inputs have no pad).
    s = jnp.einsum('bqd,bkd->bqk', q, k,
                   preferred_element_type=jnp.float32) * (1.0 / math.sqrt(DH))
    s = s - jnp.max(s, axis=-1, keepdims=True)
    p = jnp.exp(s)
    p = p * pl.reciprocal(jnp.sum(p, axis=-1, keepdims=True), approx=True)
    ctx = jnp.einsum('bqk,bkd->bqd', p.astype(WDTYPE), v,
                     preferred_element_type=jnp.float32)      # (BPB*NH, S, DH)

    # ---- head merge fused into a single K=128 output projection -----------
    ctx = _merge_heads(ctx.astype(WDTYPE))                    # (BLOCK_ROWS, H)
    attn = (jnp.dot(ctx, wo_ref[0], preferred_element_type=jnp.float32)
            + bo_ref[0].astype(jnp.float32))

    # ---- LN1 (residual in-register) ----------------------------------------
    x = _ln_f32(attn + x, ln1g_ref[0], ln1b_ref[0])

    # ---- FFN (tanh-gelu on EUP) + LN2 --------------------------------------
    h1 = jax.nn.gelu(
        jnp.dot(x.astype(WDTYPE), wf1_ref[0],
                preferred_element_type=jnp.float32)
        + bf1_ref[0].astype(jnp.float32),
        approximate=True)                                     # (BLOCK_ROWS, FFN)
    h2 = (jnp.dot(h1.astype(WDTYPE), wf2_ref[0],
                  preferred_element_type=jnp.float32)
          + bf2_ref[0].astype(jnp.float32))                   # (BLOCK_ROWS, H)
    x = _ln_f32(h2 + x, ln2g_ref[0], ln2b_ref[0])
    x_scr[...] = x

    # ---- last layer: ContextPooler folded in (dense + gelu, full-row MXU) --
    @pl.when(layer == pl.num_programs(1) - 1)
    def _():
        pooled_all = jax.nn.gelu(
            jnp.dot(x.astype(WDTYPE), wp_ref[...],
                    preferred_element_type=jnp.float32)
            + bp_ref[...].astype(jnp.float32),
            approximate=True)                                 # (BLOCK_ROWS, H)
        pooled_ref[...] = pooled_all.astype(pooled_ref.dtype)


# ------------------------------ pallas_call --------------------------------
def fused_bert(params, emb):
    n_layers = params["wqkv"].shape[0]

    def _full(shape):
        rank = len(shape)
        return pl.BlockSpec(shape, lambda rb, l: (0,) * rank)

    def _rows(shape):
        return pl.BlockSpec(shape, lambda rb, l: (rb, 0))

    def _layer(shape):
        rank = len(shape)
        return pl.BlockSpec((1,) + shape, lambda rb, l: (l,) + (0,) * rank)

    in_specs = [
        _rows((BLOCK_ROWS, H)),            # summed embeddings (per row block)
        _full((1, H)),                     # emb LN gamma
        _full((1, H)),                     # emb LN beta
        _layer((H, 3 * H)),                # wqkv
        _layer((1, 3 * H)),                # bqkv
        _layer((H, H)),                    # wo
        _layer((1, H)),                    # bo
        _layer((1, H)),                    # ln1 gamma
        _layer((1, H)),                    # ln1 beta
        _layer((H, FFN)),                  # wf1
        _layer((1, FFN)),                  # bf1
        _layer((FFN, H)),                  # wf2
        _layer((1, H)),                    # bf2
        _layer((1, H)),                    # ln2 gamma
        _layer((1, H)),                    # ln2 beta
        _full((H, H)),                     # pooler w
        _full((1, H)),                     # pooler b
    ]

    grid_spec = pltpu.PrefetchScalarGridSpec(
        num_scalar_prefetch=0,
        grid=(B_BLOCKS, n_layers),
        in_specs=in_specs,
        out_specs=pl.BlockSpec((BLOCK_ROWS, H), lambda rb, l: (rb, 0)),
        scratch_shapes=[pltpu.VMEM((BLOCK_ROWS, H), jnp.float32)],
    )

    pooled_all = pl.pallas_call(
        _bert_kernel,
        out_shape=jax.ShapeDtypeStruct((B * S, H), DTYPE),
        grid_spec=grid_spec,
        # Row blocks are independent (parallel -> both TCs on v7x);
        # layers carry the VMEM-resident activation (arbitrary).
        compiler_params=pltpu.CompilerParams(
            dimension_semantics=("parallel", "arbitrary")),
    )(emb,
      params["emb_ln_g"], params["emb_ln_b"],
      params["wqkv"], params["bqkv"], params["wo"], params["bo"],
      params["ln1_g"], params["ln1_b"],
      params["wf1"], params["bf1"], params["wf2"], params["bf2"],
      params["ln2_g"], params["ln2_b"],
      params["pooler_w"], params["pooler_b"])

    # ContextPooler consumes the [CLS] token of each sequence (rows b*S).
    return pooled_all.reshape(B, S, H)[:, 0, :]               # (B, H)


# ---------------------------- parameter setup ------------------------------
def init_params(key):
    def dense(k, fan_in, fan_out):
        kw, kb = jax.random.split(k)
        w = 0.02 * jax.random.normal(kw, (fan_in, fan_out), jnp.float32)
        b = 0.02 * jax.random.normal(kb, (fan_out,), jnp.float32)
        return w, b

    keys = jax.random.split(key, 4 + L)
    wqkv, bqkv, wo, bo = [], [], [], []
    wf1, bf1, wf2, bf2 = [], [], [], []
    ln1g, ln1b, ln2g, ln2b = [], [], [], []
    for li in range(L):
        lk = jax.random.split(keys[4 + li], 6)
        qw, qb = dense(lk[0], H, H)
        kw_, kb_ = dense(lk[1], H, H)
        vw, vb = dense(lk[2], H, H)
        wqkv.append(jnp.concatenate([qw, kw_, vw], axis=1))   # (H, 3H)
        bqkv.append(jnp.concatenate([qb, kb_, vb], axis=0))   # (3H,)
        ow, ob = dense(lk[3], H, H)
        wo.append(ow); bo.append(ob)
        f1w, f1b_ = dense(lk[4], H, FFN)
        f2w, f2b_ = dense(lk[5], FFN, H)
        wf1.append(f1w); bf1.append(f1b_)
        wf2.append(f2w); bf2.append(f2b_)
        ln1g.append(jnp.ones((H,), jnp.float32)); ln1b.append(jnp.zeros((H,), jnp.float32))
        ln2g.append(jnp.ones((H,), jnp.float32)); ln2b.append(jnp.zeros((H,), jnp.float32))

    pw, pb = dense(keys[3], H, H)

    # NOTE: at bert-base scale, quantize matmul weights (int8 on v6e / fp8 on
    # v7x) and FFN-tile wf1/wf2 with vmem_limit_bytes set; unnecessary here.
    params = {
        "word_emb": 0.02 * jax.random.normal(keys[0], (VOCAB, H), jnp.float32),
        "pos_emb": 0.02 * jax.random.normal(keys[1], (MAX_POS, H), jnp.float32),
        "type_emb": 0.02 * jax.random.normal(keys[2], (TYPE_VOCAB, H), jnp.float32),
        "emb_ln_g": jnp.ones((1, H), jnp.float32),
        "emb_ln_b": jnp.zeros((1, H), jnp.float32),
        # stacked per-layer params; matmul weights stored bf16 (MXU operands)
        "wqkv": jnp.stack(wqkv).astype(WDTYPE),               # (L, H, 3H)
        "bqkv": jnp.stack(bqkv)[:, None, :],                  # (L, 1, 3H) f32
        "wo":   jnp.stack(wo).astype(WDTYPE),                 # (L, H, H)
        "bo":   jnp.stack(bo)[:, None, :],                    # (L, 1, H)
        "ln1_g": jnp.stack(ln1g)[:, None, :],
        "ln1_b": jnp.stack(ln1b)[:, None, :],
        "wf1":  jnp.stack(wf1).astype(WDTYPE),                # (L, H, FFN)
        "bf1":  jnp.stack(bf1)[:, None, :],                   # (L, 1, FFN)
        "wf2":  jnp.stack(wf2).astype(WDTYPE),                # (L, FFN, H)
        "bf2":  jnp.stack(bf2)[:, None, :],                   # (L, 1, H)
        "ln2_g": jnp.stack(ln2g)[:, None, :],
        "ln2_b": jnp.stack(ln2b)[:, None, :],
        "pooler_w": pw.astype(WDTYPE),                        # (H, H)
        "pooler_b": pb[None, :],                              # (1, H)
    }
    return params


# ------------------------------ forward pass -------------------------------
def bert_forward(params, input_ids, token_type_ids):
    assert S <= MAX_POS, "sequence length exceeds position-embedding table"
    # Embedding gathers + sum are cheap XLA glue (fused into the gathers);
    # the kernel gets a single (B*S, H) embedding input.
    we = params["word_emb"][input_ids]                        # (B, S, H)
    pe = params["pos_emb"][:S][None, :, :]                    # (1, S, H)
    te = params["type_emb"][token_type_ids]                   # (B, S, H)
    emb = (we + pe + te).reshape(B * S, H)
    return fused_bert(params, emb)                            # (B, H)


# ---------------------------------- main -----------------------------------
if __name__ == "__main__":
    key = jax.random.PRNGKey(0)
    k_ids, k_params = jax.random.split(key)

    # Synthetic "tokenized texts": deterministic token ids.
    # TODO(synk): HF tokenizer has no Pallas/JAX equivalent; synthetic ids used.
    input_ids = jax.random.randint(k_ids, (B, S), 0, VOCAB, dtype=jnp.int32)
    token_type_ids = jnp.zeros((B, S), dtype=jnp.int32)

    params = init_params(k_params)

    pooled = jax.jit(bert_forward)(params, input_ids, token_type_ids)
    pooled = jax.block_until_ready(pooled)

    assert pooled.shape == (B, H)
    assert bool(jnp.all(jnp.isfinite(pooled)))
    print("KERNEL_OK")
</pallas_src>

<mosaic_0001>
module attributes {stable_mosaic.version = 11 : i64} {
  func.func @_bert_kernel(%arg0: i32, %arg1: i32, %arg2: memref<128x128xf32, #tpu.memory_space<vmem>>, %arg3: memref<1x128xf32, #tpu.memory_space<vmem>>, %arg4: memref<1x128xf32, #tpu.memory_space<vmem>>, %arg5: memref<1x128x384xbf16, #tpu.memory_space<vmem>>, %arg6: memref<1x1x384xf32, #tpu.memory_space<vmem>>, %arg7: memref<1x128x128xbf16, #tpu.memory_space<vmem>>, %arg8: memref<1x1x128xf32, #tpu.memory_space<vmem>>, %arg9: memref<1x1x128xf32, #tpu.memory_space<vmem>>, %arg10: memref<1x1x128xf32, #tpu.memory_space<vmem>>, %arg11: memref<1x128x512xbf16, #tpu.memory_space<vmem>>, %arg12: memref<1x1x512xf32, #tpu.memory_space<vmem>>, %arg13: memref<1x512x128xbf16, #tpu.memory_space<vmem>>, %arg14: memref<1x1x128xf32, #tpu.memory_space<vmem>>, %arg15: memref<1x1x128xf32, #tpu.memory_space<vmem>>, %arg16: memref<1x1x128xf32, #tpu.memory_space<vmem>>, %arg17: memref<128x128xbf16, #tpu.memory_space<vmem>>, %arg18: memref<1x128xf32, #tpu.memory_space<vmem>>, %arg19: memref<128x128xf32, #tpu.memory_space<vmem>>, %arg20: memref<128x128xf32, #tpu.memory_space<vmem>>) attributes {dimension_semantics = [#tpu.dimension_semantics<parallel>, #tpu.dimension_semantics<arbitrary>], iteration_bounds = array<i64: 2, 2>, scalar_prefetch = 0 : i64, scratch_operands = 1 : i64, tpu.core_type = #tpu.core_type<tc>, window_params = [{transform_indices = @transform_0, window_bounds = array<i64: 128, 128>}, {pipeline_mode = #tpu.pipeline_mode<synchronous>, transform_indices = @transform_1, window_bounds = array<i64: 1, 128>}, {pipeline_mode = #tpu.pipeline_mode<synchronous>, transform_indices = @transform_2, window_bounds = array<i64: 1, 128>}, {transform_indices = @transform_3, window_bounds = array<i64: 1, 128, 384>}, {transform_indices = @transform_4, window_bounds = array<i64: 1, 1, 384>}, {transform_indices = @transform_5, window_bounds = array<i64: 1, 128, 128>}, {transform_indices = @transform_6, window_bounds = array<i64: 1, 1, 128>}, {transform_indices = @transform_7, window_bounds = array<i64: 1, 1, 128>}, {transform_indices = @transform_8, window_bounds = array<i64: 1, 1, 128>}, {transform_indices = @transform_9, window_bounds = array<i64: 1, 128, 512>}, {transform_indices = @transform_10, window_bounds = array<i64: 1, 1, 512>}, {transform_indices = @transform_11, window_bounds = array<i64: 1, 512, 128>}, {transform_indices = @transform_12, window_bounds = array<i64: 1, 1, 128>}, {transform_indices = @transform_13, window_bounds = array<i64: 1, 1, 128>}, {transform_indices = @transform_14, window_bounds = array<i64: 1, 1, 128>}, {pipeline_mode = #tpu.pipeline_mode<synchronous>, transform_indices = @transform_15, window_bounds = array<i64: 128, 128>}, {pipeline_mode = #tpu.pipeline_mode<synchronous>, transform_indices = @transform_16, window_bounds = array<i64: 1, 128>}, {transform_indices = @transform_17, window_bounds = array<i64: 128, 128>}]} {
    %c0_i32 = arith.constant 0 : i32
    %0 = arith.cmpi eq, %arg1, %c0_i32 : i32
    %1 = arith.extui %0 : i1 to i32
    %c0_i32_0 = arith.constant 0 : i32
    %2 = arith.cmpi ne, %1, %c0_i32_0 : i32
    scf.if %2 {
      %c0_63 = arith.constant 0 : index
      %c0_64 = arith.constant 0 : index
      %158 = vector.load %arg2[%c0_63, %c0_64] : memref<128x128xf32, #tpu.memory_space<vmem>>, vector<128x128xf32>
      %c0_65 = arith.constant 0 : index
      %c0_66 = arith.constant 0 : index
      %159 = vector.load %arg3[%c0_65, %c0_66] : memref<1x128xf32, #tpu.memory_space<vmem>>, vector<1x128xf32>
      %c0_67 = arith.constant 0 : index
      %c0_68 = arith.constant 0 : index
      %160 = vector.load %arg4[%c0_67, %c0_68] : memref<1x128xf32, #tpu.memory_space<vmem>>, vector<1x128xf32>
      %cst_69 = arith.constant dense<0.000000e+00> : vector<128xf32>
      %161 = vector.multi_reduction <add>, %158, %cst_69 [1] : vector<128x128xf32> to vector<128xf32>
      %162 = vector.shape_cast %161 : vector<128xf32> to vector<128x1xf32>
      %cst_70 = arith.constant 1.280000e+02 : f32
      %163 = vector.broadcast %cst_70 : f32 to vector<128x1xf32>
      %164 = arith.divf %162, %163 : vector<128x1xf32>
      %165 = vector.broadcast %164 : vector<128x1xf32> to vector<128x128xf32>
      %166 = arith.subf %158, %165 : vector<128x128xf32>
      %167 = arith.mulf %166, %166 : vector<128x128xf32>
      %cst_71 = arith.constant dense<0.000000e+00> : vector<128xf32>
      %168 = vector.multi_reduction <add>, %167, %cst_71 [1] : vector<128x128xf32> to vector<128xf32>
      %169 = vector.shape_cast %168 : vector<128xf32> to vector<128x1xf32>
      %cst_72 = arith.constant 1.280000e+02 : f32
      %170 = vector.broadcast %cst_72 : f32 to vector<128x1xf32>
      %171 = arith.divf %169, %170 : vector<128x1xf32>
      %cst_73 = arith.constant 9.99999996E-13 : f32
      %172 = vector.broadcast %cst_73 : f32 to vector<128x1xf32>
      %173 = arith.addf %171, %172 : vector<128x1xf32>
      %174 = math.rsqrt %173 : vector<128x1xf32>
      %175 = vector.broadcast %174 : vector<128x1xf32> to vector<128x128xf32>
      %176 = arith.mulf %166, %175 : vector<128x128xf32>
      %177 = vector.broadcast %159 : vector<1x128xf32> to vector<128x128xf32>
      %178 = arith.mulf %176, %177 : vector<128x128xf32>
      %179 = vector.broadcast %160 : vector<1x128xf32> to vector<128x128xf32>
      %180 = arith.addf %178, %179 : vector<128x128xf32>
      %c0_74 = arith.constant 0 : index
      %c0_75 = arith.constant 0 : index
      %181 = vector.load %arg20[%c0_74, %c0_75] : memref<128x128xf32, #tpu.memory_space<vmem>>, vector<128x128xf32>
      tpu.vector_store %arg20[%c0_74, %c0_75], %180 {strides = array<i32>} : memref<128x128xf32, #tpu.memory_space<vmem>>, vector<128x128xf32>,
    } else {
    }
    %c0 = arith.constant 0 : index
    %c0_1 = arith.constant 0 : index
    %3 = vector.load %arg20[%c0, %c0_1] : memref<128x128xf32, #tpu.memory_space<vmem>>, vector<128x128xf32>
    %4 = arith.truncf %3 : vector<128x128xf32> to vector<128x128xbf16>
    %c0_2 = arith.constant 0 : index
    %c0_3 = arith.constant 0 : index
    %c0_4 = arith.constant 0 : index
    %5 = vector.load %arg5[%c0_2, %c0_3, %c0_4] : memref<1x128x384xbf16, #tpu.memory_space<vmem>>, vector<1x128x384xbf16>
    %6 = vector.shape_cast %5 : vector<1x128x384xbf16> to vector<128x384xbf16>
    %cst = arith.constant dense<0.000000e+00> : vector<128x384xf32>
    %7 = tpu.matmul %4, %6, %cst {dimension_numbers = #tpu.dot_dimension_numbers<[1], [0], [0], [1], [0, 0, 1, 1], [], []>} : vector<128x128xbf16>, vector<128x384xbf16>, vector<128x384xf32> -> vector<128x384xf32>
    %c0_5 = arith.constant 0 : index
    %c0_6 = arith.constant 0 : index
    %c0_7 = arith.constant 0 : index
    %8 = vector.load %arg6[%c0_5, %c0_6, %c0_7] : memref<1x1x384xf32, #tpu.memory_space<vmem>>, vector<1x1x384xf32>
    %9 = vector.shape_cast %8 : vector<1x1x384xf32> to vector<1x384xf32>
    %10 = vector.broadcast %9 : vector<1x384xf32> to vector<128x384xf32>
    %11 = arith.addf %7, %10 : vector<128x384xf32>
    %12 = arith.truncf %11 : vector<128x384xf32> to vector<128x384xbf16>
    %13 = vector.extract_strided_slice %12 {offsets = [0, 0], sizes = [128, 128], strides = [1, 1]} : vector<128x384xbf16> to vector<128x128xbf16>
    %14 = vector.extract_strided_slice %13 {offsets = [0, 0], sizes = [128, 32], strides = [1, 1]} : vector<128x128xbf16> to vector<128x32xbf16>
    %15 = vector.shape_cast %14 : vector<128x32xbf16> to vector<4x32x32xbf16>
    %16 = vector.extract_strided_slice %13 {offsets = [0, 32], sizes = [128, 32], strides = [1, 1]} : vector<128x128xbf16> to vector<128x32xbf16>
    %17 = vector.shape_cast %16 : vector<128x32xbf16> to vector<4x32x32xbf16>
    %18 = vector.extract_strided_slice %13 {offsets = [0, 64], sizes = [128, 32], strides = [1, 1]} : vector<128x128xbf16> to vector<128x32xbf16>
    %19 = vector.shape_cast %18 : vector<128x32xbf16> to vector<4x32x32xbf16>
    %20 = vector.extract_strided_slice %13 {offsets = [0, 96], sizes = [128, 32], strides = [1, 1]} : vector<128x128xbf16> to vector<128x32xbf16>
    %21 = vector.shape_cast %20 : vector<128x32xbf16> to vector<4x32x32xbf16>
    %22 = tpu.concatenate %15, %17, %19, %21 in 0 : vector<4x32x32xbf16>, vector<4x32x32xbf16>, vector<4x32x32xbf16>, vector<4x32x32xbf16> -> vector<16x32x32xbf16>
    %23 = vector.extract_strided_slice %12 {offsets = [0, 128], sizes = [128, 128], strides = [1, 1]} : vector<128x384xbf16> to vector<128x128xbf16>
    %24 = vector.extract_strided_slice %23 {offsets = [0, 0], sizes = [128, 32], strides = [1, 1]} : vector<128x128xbf16> to vector<128x32xbf16>
    %25 = vector.shape_cast %24 : vector<128x32xbf16> to vector<4x32x32xbf16>
    %26 = vector.extract_strided_slice %23 {offsets = [0, 32], sizes = [128, 32], strides = [1, 1]} : vector<128x128xbf16> to vector<128x32xbf16>
    %27 = vector.shape_cast %26 : vector<128x32xbf16> to vector<4x32x32xbf16>
    %28 = vector.extract_strided_slice %23 {offsets = [0, 64], sizes = [128, 32], strides = [1, 1]} : vector<128x128xbf16> to vector<128x32xbf16>
    %29 = vector.shape_cast %28 : vector<128x32xbf16> to vector<4x32x32xbf16>
    %30 = vector.extract_strided_slice %23 {offsets = [0, 96], sizes = [128, 32], strides = [1, 1]} : vector<128x128xbf16> to vector<128x32xbf16>
    %31 = vector.shape_cast %30 : vector<128x32xbf16> to vector<4x32x32xbf16>
    %32 = tpu.concatenate %25, %27, %29, %31 in 0 : vector<4x32x32xbf16>, vector<4x32x32xbf16>, vector<4x32x32xbf16>, vector<4x32x32xbf16> -> vector<16x32x32xbf16>
    %33 = vector.extract_strided_slice %12 {offsets = [0, 256], sizes = [128, 128], strides = [1, 1]} : vector<128x384xbf16> to vector<128x128xbf16>
    %34 = vector.extract_strided_slice %33 {offsets = [0, 0], sizes = [128, 32], strides = [1, 1]} : vector<128x128xbf16> to vector<128x32xbf16>
    %35 = vector.shape_cast %34 : vector<128x32xbf16> to vector<4x32x32xbf16>
    %36 = vector.extract_strided_slice %33 {offsets = [0, 32], sizes = [128, 32], strides = [1, 1]} : vector<128x128xbf16> to vector<128x32xbf16>
    %37 = vector.shape_cast %36 : vector<128x32xbf16> to vector<4x32x32xbf16>
    %38 = vector.extract_strided_slice %33 {offsets = [0, 64], sizes = [128, 32], strides = [1, 1]} : vector<128x128xbf16> to vector<128x32xbf16>
    %39 = vector.shape_cast %38 : vector<128x32xbf16> to vector<4x32x32xbf16>
    %40 = vector.extract_strided_slice %33 {offsets = [0, 96], sizes = [128, 32], strides = [1, 1]} : vector<128x128xbf16> to vector<128x32xbf16>
    %41 = vector.shape_cast %40 : vector<128x32xbf16> to vector<4x32x32xbf16>
    %42 = tpu.concatenate %35, %37, %39, %41 in 0 : vector<4x32x32xbf16>, vector<4x32x32xbf16>, vector<4x32x32xbf16>, vector<4x32x32xbf16> -> vector<16x32x32xbf16>
    "tpu.trace_start"() <{level = 10 : i32, message = "bqd,bkd->bqk"}> : () -> ()
    %cst_8 = arith.constant dense<0.000000e+00> : vector<16x32x32xf32>
    %43 = tpu.matmul %22, %32, %cst_8 {dimension_numbers = #tpu.dot_dimension_numbers<[2], [2], [1], [1], [0, 0, 0, 1, 1, 1], [0], [0]>} : vector<16x32x32xbf16>, vector<16x32x32xbf16>, vector<16x32x32xf32> -> vector<16x32x32xf32>
    "tpu.trace_stop"() : () -> ()
    %cst_9 = arith.constant 0.176776692 : f32
    %44 = vector.broadcast %cst_9 : f32 to vector<16x32x32xf32>
    %45 = arith.mulf %43, %44 : vector<16x32x32xf32>
    %cst_10 = arith.constant dense<0xFF800000> : vector<16x32xf32>
    %46 = vector.multi_reduction <maximumf>, %45, %cst_10 [2] : vector<16x32x32xf32> to vector<16x32xf32>
    %47 = vector.shape_cast %46 : vector<16x32xf32> to vector<16x32x1xf32>
    %48 = vector.broadcast %47 : vector<16x32x1xf32> to vector<16x32x32xf32>
    %49 = arith.subf %45, %48 : vector<16x32x32xf32>
    %50 = math.exp %49 : vector<16x32x32xf32>
    %cst_11 = arith.constant dense<0.000000e+00> : vector<16x32xf32>
    %51 = vector.multi_reduction <add>, %50, %cst_11 [2] : vector<16x32x32xf32> to vector<16x32xf32>
    %52 = vector.shape_cast %51 : vector<16x32xf32> to vector<16x32x1xf32>
    %53 = tpu.reciprocal %52 {approx = true} : vector<16x32x1xf32> -> vector<16x32x1xf32>
    %54 = vector.broadcast %53 : vector<16x32x1xf32> to vector<16x32x32xf32>
    %55 = arith.mulf %50, %54 : vector<16x32x32xf32>
    %56 = arith.truncf %55 : vector<16x32x32xf32> to vector<16x32x32xbf16>
    "tpu.trace_start"() <{level = 10 : i32, message = "bqk,bkd->bqd"}> : () -> ()
    %cst_12 = arith.constant dense<0.000000e+00> : vector<16x32x32xf32>
    %57 = tpu.matmul %56, %42, %cst_12 {dimension_numbers = #tpu.dot_dimension_numbers<[2], [1], [1], [2], [0, 0, 0, 1, 1, 2], [0], [0]>} : vector<16x32x32xbf16>, vector<16x32x32xbf16>, vector<16x32x32xf32> -> vector<16x32x32xf32>
    "tpu.trace_stop"() : () -> ()
    %58 = arith.truncf %57 : vector<16x32x32xf32> to vector<16x32x32xbf16>
    %59 = vector.extract_strided_slice %58 {offsets = [0, 0, 0], sizes = [4, 32, 32], strides = [1, 1, 1]} : vector<16x32x32xbf16> to vector<4x32x32xbf16>
    %60 = vector.shape_cast %59 : vector<4x32x32xbf16> to vector<128x32xbf16>
    %61 = vector.extract_strided_slice %58 {offsets = [4, 0, 0], sizes = [4, 32, 32], strides = [1, 1, 1]} : vector<16x32x32xbf16> to vector<4x32x32xbf16>
    %62 = vector.shape_cast %61 : vector<4x32x32xbf16> to vector<128x32xbf16>
    %63 = vector.extract_strided_slice %58 {offsets = [8, 0, 0], sizes = [4, 32, 32], strides = [1, 1, 1]} : vector<16x32x32xbf16> to vector<4x32x32xbf16>
    %64 = vector.shape_cast %63 : vector<4x32x32xbf16> to vector<128x32xbf16>
    %65 = vector.extract_strided_slice %58 {offsets = [12, 0, 0], sizes = [4, 32, 32], strides = [1, 1, 1]} : vector<16x32x32xbf16> to vector<4x32x32xbf16>
    %66 = vector.shape_cast %65 : vector<4x32x32xbf16> to vector<128x32xbf16>
    %67 = tpu.concatenate %60, %62, %64, %66 in 1 : vector<128x32xbf16>, vector<128x32xbf16>, vector<128x32xbf16>, vector<128x32xbf16> -> vector<128x128xbf16>
    %c0_13 = arith.constant 0 : index
    %c0_14 = arith.constant 0 : index
    %c0_15 = arith.constant 0 : index
    %68 = vector.load %arg7[%c0_13, %c0_14, %c0_15] : memref<1x128x128xbf16, #tpu.memory_space<vmem>>, vector<1x128x128xbf16>
    %69 = vector.shape_cast %68 : vector<1x128x128xbf16> to vector<128x128xbf16>
    %cst_16 = arith.constant dense<0.000000e+00> : vector<128x128xf32>
    %70 = tpu.matmul %67, %69, %cst_16 {dimension_numbers = #tpu.dot_dimension_numbers<[1], [0], [0], [1], [0, 0, 1, 1], [], []>} : vector<128x128xbf16>, vector<128x128xbf16>, vector<128x128xf32> -> vector<128x128xf32>
    %c0_17 = arith.constant 0 : index
    %c0_18 = arith.constant 0 : index
    %c0_19 = arith.constant 0 : index
    %71 = vector.load %arg8[%c0_17, %c0_18, %c0_19] : memref<1x1x128xf32, #tpu.memory_space<vmem>>, vector<1x1x128xf32>
    %72 = vector.shape_cast %71 : vector<1x1x128xf32> to vector<1x128xf32>
    %73 = vector.broadcast %72 : vector<1x128xf32> to vector<128x128xf32>
    %74 = arith.addf %70, %73 : vector<128x128xf32>
    %75 = arith.addf %74, %3 : vector<128x128xf32>
    %c0_20 = arith.constant 0 : index
    %c0_21 = arith.constant 0 : index
    %c0_22 = arith.constant 0 : index
    %76 = vector.load %arg9[%c0_20, %c0_21, %c0_22] : memref<1x1x128xf32, #tpu.memory_space<vmem>>, vector<1x1x128xf32>
    %77 = vector.shape_cast %76 : vector<1x1x128xf32> to vector<1x128xf32>
    %c0_23 = arith.constant 0 : index
    %c0_24 = arith.constant 0 : index
    %c0_25 = arith.constant 0 : index
    %78 = vector.load %arg10[%c0_23, %c0_24, %c0_25] : memref<1x1x128xf32, #tpu.memory_space<vmem>>, vector<1x1x128xf32>
    %79 = vector.shape_cast %78 : vector<1x1x128xf32> to vector<1x128xf32>
    %cst_26 = arith.constant dense<0.000000e+00> : vector<128xf32>
    %80 = vector.multi_reduction <add>, %75, %cst_26 [1] : vector<128x128xf32> to vector<128xf32>
    %81 = vector.shape_cast %80 : vector<128xf32> to vector<128x1xf32>
    %cst_27 = arith.constant 1.280000e+02 : f32
    %82 = vector.broadcast %cst_27 : f32 to vector<128x1xf32>
    %83 = arith.divf %81, %82 : vector<128x1xf32>
    %84 = vector.broadcast %83 : vector<128x1xf32> to vector<128x128xf32>
    %85 = arith.subf %75, %84 : vector<128x128xf32>
    %86 = arith.mulf %85, %85 : vector<128x128xf32>
    %cst_28 = arith.constant dense<0.000000e+00> : vector<128xf32>
    %87 = vector.multi_reduction <add>, %86, %cst_28 [1] : vector<128x128xf32> to vector<128xf32>
    %88 = vector.shape_cast %87 : vector<128xf32> to vector<128x1xf32>
    %cst_29 = arith.constant 1.280000e+02 : f32
    %89 = vector.broadcast %cst_29 : f32 to vector<128x1xf32>
    %90 = arith.divf %88, %89 : vector<128x1xf32>
    %cst_30 = arith.constant 9.99999996E-13 : f32
    %91 = vector.broadcast %cst_30 : f32 to vector<128x1xf32>
    %92 = arith.addf %90, %91 : vector<128x1xf32>
    %93 = math.rsqrt %92 : vector<128x1xf32>
    %94 = vector.broadcast %93 : vector<128x1xf32> to vector<128x128xf32>
    %95 = arith.mulf %85, %94 : vector<128x128xf32>
    %96 = vector.broadcast %77 : vector<1x128xf32> to vector<128x128xf32>
    %97 = arith.mulf %95, %96 : vector<128x128xf32>
    %98 = vector.broadcast %79 : vector<1x128xf32> to vector<128x128xf32>
    %99 = arith.addf %97, %98 : vector<128x128xf32>
    %100 = arith.truncf %99 : vector<128x128xf32> to vector<128x128xbf16>
    %c0_31 = arith.constant 0 : index
    %c0_32 = arith.constant 0 : index
    %c0_33 = arith.constant 0 : index
    %101 = vector.load %arg11[%c0_31, %c0_32, %c0_33] : memref<1x128x512xbf16, #tpu.memory_space<vmem>>, vector<1x128x512xbf16>
    %102 = vector.shape_cast %101 : vector<1x128x512xbf16> to vector<128x512xbf16>
    %cst_34 = arith.constant dense<0.000000e+00> : vector<128x512xf32>
    %103 = tpu.matmul %100, %102, %cst_34 {dimension_numbers = #tpu.dot_dimension_numbers<[1], [0], [0], [1], [0, 0, 1, 1], [], []>} : vector<128x128xbf16>, vector<128x512xbf16>, vector<128x512xf32> -> vector<128x512xf32>
    %c0_35 = arith.constant 0 : index
    %c0_36 = arith.constant 0 : index
    %c0_37 = arith.constant 0 : index
    %104 = vector.load %arg12[%c0_35, %c0_36, %c0_37] : memref<1x1x512xf32, #tpu.memory_space<vmem>>, vector<1x1x512xf32>
    %105 = vector.shape_cast %104 : vector<1x1x512xf32> to vector<1x512xf32>
    %106 = vector.broadcast %105 : vector<1x512xf32> to vector<128x512xf32>
    %107 = arith.addf %103, %106 : vector<128x512xf32>
    %108 = arith.mulf %107, %107 : vector<128x512xf32>
    %109 = arith.mulf %107, %108 : vector<128x512xf32>
    %cst_38 = arith.constant 4.471500e-02 : f32
    %110 = vector.broadcast %cst_38 : f32 to vector<128x512xf32>
    %111 = arith.mulf %110, %109 : vector<128x512xf32>
    %112 = arith.addf %107, %111 : vector<128x512xf32>
    %cst_39 = arith.constant 0.797884583 : f32
    %113 = vector.broadcast %cst_39 : f32 to vector<128x512xf32>
    %114 = arith.mulf %113, %112 : vector<128x512xf32>
    %115 = math.tanh %114 : vector<128x512xf32>
    %cst_40 = arith.constant 1.000000e+00 : f32
    %116 = vector.broadcast %cst_40 : f32 to vector<128x512xf32>
    %117 = arith.addf %116, %115 : vector<128x512xf32>
    %cst_41 = arith.constant 5.000000e-01 : f32
    %118 = vector.broadcast %cst_41 : f32 to vector<128x512xf32>
    %119 = arith.mulf %118, %117 : vector<128x512xf32>
    %120 = arith.mulf %107, %119 : vector<128x512xf32>
    %121 = arith.truncf %120 : vector<128x512xf32> to vector<128x512xbf16>
    %c0_42 = arith.constant 0 : index
    %c0_43 = arith.constant 0 : index
    %c0_44 = arith.constant 0 : index
    %122 = vector.load %arg13[%c0_42, %c0_43, %c0_44] : memref<1x512x128xbf16, #tpu.memory_space<vmem>>, vector<1x512x128xbf16>
    %123 = vector.shape_cast %122 : vector<1x512x128xbf16> to vector<512x128xbf16>
    %cst_45 = arith.constant dense<0.000000e+00> : vector<128x128xf32>
    %124 = tpu.matmul %121, %123, %cst_45 {dimension_numbers = #tpu.dot_dimension_numbers<[1], [0], [0], [1], [0, 0, 1, 1], [], []>} : vector<128x512xbf16>, vector<512x128xbf16>, vector<128x128xf32> -> vector<128x128xf32>
    %c0_46 = arith.constant 0 : index
    %c0_47 = arith.constant 0 : index
    %c0_48 = arith.constant 0 : index
    %125 = vector.load %arg14[%c0_46, %c0_47, %c0_48] : memref<1x1x128xf32, #tpu.memory_space<vmem>>, vector<1x1x128xf32>
    %126 = vector.shape_cast %125 : vector<1x1x128xf32> to vector<1x128xf32>
    %127 = vector.broadcast %126 : vector<1x128xf32> to vector<128x128xf32>
    %128 = arith.addf %124, %127 : vector<128x128xf32>
    %129 = arith.addf %128, %99 : vector<128x128xf32>
    %c0_49 = arith.constant 0 : index
    %c0_50 = arith.constant 0 : index
    %c0_51 = arith.constant 0 : index
    %130 = vector.load %arg15[%c0_49, %c0_50, %c0_51] : memref<1x1x128xf32, #tpu.memory_space<vmem>>, vector<1x1x128xf32>
    %131 = vector.shape_cast %130 : vector<1x1x128xf32> to vector<1x128xf32>
    %c0_52 = arith.constant 0 : index
    %c0_53 = arith.constant 0 : index
    %c0_54 = arith.constant 0 : index
    %132 = vector.load %arg16[%c0_52, %c0_53, %c0_54] : memref<1x1x128xf32, #tpu.memory_space<vmem>>, vector<1x1x128xf32>
    %133 = vector.shape_cast %132 : vector<1x1x128xf32> to vector<1x128xf32>
    %cst_55 = arith.constant dense<0.000000e+00> : vector<128xf32>
    %134 = vector.multi_reduction <add>, %129, %cst_55 [1] : vector<128x128xf32> to vector<128xf32>
    %135 = vector.shape_cast %134 : vector<128xf32> to vector<128x1xf32>
    %cst_56 = arith.constant 1.280000e+02 : f32
    %136 = vector.broadcast %cst_56 : f32 to vector<128x1xf32>
    %137 = arith.divf %135, %136 : vector<128x1xf32>
    %138 = vector.broadcast %137 : vector<128x1xf32> to vector<128x128xf32>
    %139 = arith.subf %129, %138 : vector<128x128xf32>
    %140 = arith.mulf %139, %139 : vector<128x128xf32>
    %cst_57 = arith.constant dense<0.000000e+00> : vector<128xf32>
    %141 = vector.multi_reduction <add>, %140, %cst_57 [1] : vector<128x128xf32> to vector<128xf32>
    %142 = vector.shape_cast %141 : vector<128xf32> to vector<128x1xf32>
    %cst_58 = arith.constant 1.280000e+02 : f32
    %143 = vector.broadcast %cst_58 : f32 to vector<128x1xf32>
    %144 = arith.divf %142, %143 : vector<128x1xf32>
    %cst_59 = arith.constant 9.99999996E-13 : f32
    %145 = vector.broadcast %cst_59 : f32 to vector<128x1xf32>
    %146 = arith.addf %144, %145 : vector<128x1xf32>
    %147 = math.rsqrt %146 : vector<128x1xf32>
    %148 = vector.broadcast %147 : vector<128x1xf32> to vector<128x128xf32>
    %149 = arith.mulf %139, %148 : vector<128x128xf32>
    %150 = vector.broadcast %131 : vector<1x128xf32> to vector<128x128xf32>
    %151 = arith.mulf %149, %150 : vector<128x128xf32>
    %152 = vector.broadcast %133 : vector<1x128xf32> to vector<128x128xf32>
    %153 = arith.addf %151, %152 : vector<128x128xf32>
    %c0_60 = arith.constant 0 : index
    %c0_61 = arith.constant 0 : index
    %154 = vector.load %arg20[%c0_60, %c0_61] : memref<128x128xf32, #tpu.memory_space<vmem>>, vector<128x128xf32>
    tpu.vector_store %arg20[%c0_60, %c0_61], %153 {strides = array<i32>} : memref<128x128xf32, #tpu.memory_space<vmem>>, vector<128x128xf32>,
    %c1_i32 = arith.constant 1 : i32
    %155 = arith.cmpi eq, %arg1, %c1_i32 : i32
    %156 = arith.extui %155 : i1 to i32
    %c0_i32_62 = arith.constant 0 : i32
    %157 = arith.cmpi ne, %156, %c0_i32_62 : i32
    scf.if %157 {
      %158 = arith.truncf %153 : vector<128x128xf32> to vector<128x128xbf16>
      %c0_63 = arith.constant 0 : index
      %c0_64 = arith.constant 0 : index
      %159 = vector.load %arg17[%c0_63, %c0_64] : memref<128x128xbf16, #tpu.memory_space<vmem>>, vector<128x128xbf16>
      %cst_65 = arith.constant dense<0.000000e+00> : vector<128x128xf32>
      %160 = tpu.matmul %158, %159, %cst_65 {dimension_numbers = #tpu.dot_dimension_numbers<[1], [0], [0], [1], [0, 0, 1, 1], [], []>} : vector<128x128xbf16>, vector<128x128xbf16>, vector<128x128xf32> -> vector<128x128xf32>
      %c0_66 = arith.constant 0 : index
      %c0_67 = arith.constant 0 : index
      %161 = vector.load %arg18[%c0_66, %c0_67] : memref<1x128xf32, #tpu.memory_space<vmem>>, vector<1x128xf32>
      %162 = vector.broadcast %161 : vector<1x128xf32> to vector<128x128xf32>
      %163 = arith.addf %160, %162 : vector<128x128xf32>
      %164 = arith.mulf %163, %163 : vector<128x128xf32>
      %165 = arith.mulf %163, %164 : vector<128x128xf32>
      %cst_68 = arith.constant 4.471500e-02 : f32
      %166 = vector.broadcast %cst_68 : f32 to vector<128x128xf32>
      %167 = arith.mulf %166, %165 : vector<128x128xf32>
      %168 = arith.addf %163, %167 : vector<128x128xf32>
      %cst_69 = arith.constant 0.797884583 : f32
      %169 = vector.broadcast %cst_69 : f32 to vector<128x128xf32>
      %170 = arith.mulf %169, %168 : vector<128x128xf32>
      %171 = math.tanh %170 : vector<128x128xf32>
      %cst_70 = arith.constant 1.000000e+00 : f32
      %172 = vector.broadcast %cst_70 : f32 to vector<128x128xf32>
      %173 = arith.addf %172, %171 : vector<128x128xf32>
      %cst_71 = arith.constant 5.000000e-01 : f32
      %174 = vector.broadcast %cst_71 : f32 to vector<128x128xf32>
      %175 = arith.mulf %174, %173 : vector<128x128xf32>
      %176 = arith.mulf %163, %175 : vector<128x128xf32>
      %c0_72 = arith.constant 0 : index
      %c0_73 = arith.constant 0 : index
      %177 = vector.load %arg19[%c0_72, %c0_73] : memref<128x128xf32, #tpu.memory_space<vmem>>, vector<128x128xf32>
      tpu.vector_store %arg19[%c0_72, %c0_73], %176 {strides = array<i32>} : memref<128x128xf32, #tpu.memory_space<vmem>>, vector<128x128xf32>,
    } else {
    }
    return
  }
  func.func @transform_0(%arg0: i32, %arg1: i32) -> (i32, i32) {
    %c0_i32 = arith.constant 0 : i32
    %c0_i32_0 = arith.constant 0 : i32
    return %arg0, %c0_i32 : i32, i32
  }
  func.func @transform_1(%arg0: i32, %arg1: i32) -> (i32, i32) {
    %c0_i32 = arith.constant 0 : i32
    %c0_i32_0 = arith.constant 0 : i32
    %c0_i32_1 = arith.constant 0 : i32
    return %c0_i32, %c0_i32_0 : i32, i32
  }
  func.func @transform_2(%arg0: i32, %arg1: i32) -> (i32, i32) {
    %c0_i32 = arith.constant 0 : i32
    %c0_i32_0 = arith.constant 0 : i32
    %c0_i32_1 = arith.constant 0 : i32
    return %c0_i32, %c0_i32_0 : i32, i32
  }
  func.func @transform_3(%arg0: i32, %arg1: i32) -> (i32, i32, i32) {
    %c0_i32 = arith.constant 0 : i32
    %c0_i32_0 = arith.constant 0 : i32
    %c0_i32_1 = arith.constant 0 : i32
    return %arg1, %c0_i32, %c0_i32_0 : i32, i32, i32
  }
  func.func @transform_4(%arg0: i32, %arg1: i32) -> (i32, i32, i32) {
    %c0_i32 = arith.constant 0 : i32
    %c0_i32_0 = arith.constant 0 : i32
    %c0_i32_1 = arith.constant 0 : i32
    return %arg1, %c0_i32, %c0_i32_0 : i32, i32, i32
  }
  func.func @transform_5(%arg0: i32, %arg1: i32) -> (i32, i32, i32) {
    %c0_i32 = arith.constant 0 : i32
    %c0_i32_0 = arith.constant 0 : i32
    %c0_i32_1 = arith.constant 0 : i32
    return %arg1, %c0_i32, %c0_i32_0 : i32, i32, i32
  }
  func.func @transform_6(%arg0: i32, %arg1: i32) -> (i32, i32, i32) {
    %c0_i32 = arith.constant 0 : i32
    %c0_i32_0 = arith.constant 0 : i32
    %c0_i32_1 = arith.constant 0 : i32
    return %arg1, %c0_i32, %c0_i32_0 : i32, i32, i32
  }
  func.func @transform_7(%arg0: i32, %arg1: i32) -> (i32, i32, i32) {
    %c0_i32 = arith.constant 0 : i32
    %c0_i32_0 = arith.constant 0 : i32
    %c0_i32_1 = arith.constant 0 : i32
    return %arg1, %c0_i32, %c0_i32_0 : i32, i32, i32
  }
  func.func @transform_8(%arg0: i32, %arg1: i32) -> (i32, i32, i32) {
    %c0_i32 = arith.constant 0 : i32
    %c0_i32_0 = arith.constant 0 : i32
    %c0_i32_1 = arith.constant 0 : i32
    return %arg1, %c0_i32, %c0_i32_0 : i32, i32, i32
  }
  func.func @transform_9(%arg0: i32, %arg1: i32) -> (i32, i32, i32) {
    %c0_i32 = arith.constant 0 : i32
    %c0_i32_0 = arith.constant 0 : i32
    %c0_i32_1 = arith.constant 0 : i32
    return %arg1, %c0_i32, %c0_i32_0 : i32, i32, i32
  }
  func.func @transform_10(%arg0: i32, %arg1: i32) -> (i32, i32, i32) {
    %c0_i32 = arith.constant 0 : i32
    %c0_i32_0 = arith.constant 0 : i32
    %c0_i32_1 = arith.constant 0 : i32
    return %arg1, %c0_i32, %c0_i32_0 : i32, i32, i32
  }
  func.func @transform_11(%arg0: i32, %arg1: i32) -> (i32, i32, i32) {
    %c0_i32 = arith.constant 0 : i32
    %c0_i32_0 = arith.constant 0 : i32
    %c0_i32_1 = arith.constant 0 : i32
    return %arg1, %c0_i32, %c0_i32_0 : i32, i32, i32
  }
  func.func @transform_12(%arg0: i32, %arg1: i32) -> (i32, i32, i32) {
    %c0_i32 = arith.constant 0 : i32
    %c0_i32_0 = arith.constant 0 : i32
    %c0_i32_1 = arith.constant 0 : i32
    return %arg1, %c0_i32, %c0_i32_0 : i32, i32, i32
  }
  func.func @transform_13(%arg0: i32, %arg1: i32) -> (i32, i32, i32) {
    %c0_i32 = arith.constant 0 : i32
    %c0_i32_0 = arith.constant 0 : i32
    %c0_i32_1 = arith.constant 0 : i32
    return %arg1, %c0_i32, %c0_i32_0 : i32, i32, i32
  }
  func.func @transform_14(%arg0: i32, %arg1: i32) -> (i32, i32, i32) {
    %c0_i32 = arith.constant 0 : i32
    %c0_i32_0 = arith.constant 0 : i32
    %c0_i32_1 = arith.constant 0 : i32
    return %arg1, %c0_i32, %c0_i32_0 : i32, i32, i32
  }
  func.func @transform_15(%arg0: i32, %arg1: i32) -> (i32, i32) {
    %c0_i32 = arith.constant 0 : i32
    %c0_i32_0 = arith.constant 0 : i32
    %c0_i32_1 = arith.constant 0 : i32
    return %c0_i32, %c0_i32_0 : i32, i32
  }
  func.func @transform_16(%arg0: i32, %arg1: i32) -> (i32, i32) {
    %c0_i32 = arith.constant 0 : i32
    %c0_i32_0 = arith.constant 0 : i32
    %c0_i32_1 = arith.constant 0 : i32
    return %c0_i32, %c0_i32_0 : i32, i32
  }
  func.func @transform_17(%arg0: i32, %arg1: i32) -> (i32, i32) {
    %c0_i32 = arith.constant 0 : i32
    %c0_i32_0 = arith.constant 0 : i32
    return %arg0, %c0_i32 : i32, i32
  }
}

</mosaic_0001>

<llo_original>
// kernel: bert_forward.1
$region0: #{bert_forward.1}
  #allocation0 [shape = 'u32[]', space=smem, size = 0x4, offset = 0x4, fixed_abs, tag = 'smem constant byte address 0x4 - core index']
  #allocation1 [shape = 'u32[144,128]{1,0:T(1,128)}', space=vmem, size = 0x12000, scoped, tag = 'internal scratch']
  #allocation2 [shape = 'f32[128,128]{1,0:T(8,128)}', space=vmem, size = 0x10000, scoped, tag = 'scratch operand']
  %s0 = inlined_call_operand.vmem [shape: f32[256,128], index: 0, kind: input, shape index: {}]
  %s1 = inlined_call_operand.vmem [shape: f32[1,128], index: 1, kind: input, shape index: {}]
  %s2 = inlined_call_operand.vmem [shape: f32[1,128], index: 2, kind: input, shape index: {}]
  %s3 = inlined_call_operand.vmem [shape: bf16[2,128,384], index: 3, kind: input, shape index: {}]
  %s4 = inlined_call_operand.vmem [shape: f32[2,1,384], index: 4, kind: input, shape index: {}]
  %s5 = inlined_call_operand.vmem [shape: bf16[2,128,128], index: 5, kind: input, shape index: {}]
  %s6 = inlined_call_operand.vmem [shape: f32[2,1,128], index: 6, kind: input, shape index: {}]
  %s7 = inlined_call_operand.vmem [shape: f32[2,1,128], index: 7, kind: input, shape index: {}]
  %s8 = inlined_call_operand.vmem [shape: f32[2,1,128], index: 8, kind: input, shape index: {}]
  %s9 = inlined_call_operand.vmem [shape: bf16[2,128,512], index: 9, kind: input, shape index: {}]
  %s10 = inlined_call_operand.vmem [shape: f32[2,1,512], index: 10, kind: input, shape index: {}]
  %s11 = inlined_call_operand.vmem [shape: bf16[2,512,128], index: 11, kind: input, shape index: {}]
  %s12 = inlined_call_operand.vmem [shape: f32[2,1,128], index: 12, kind: input, shape index: {}]
  %s13 = inlined_call_operand.vmem [shape: f32[2,1,128], index: 13, kind: input, shape index: {}]
  %s14 = inlined_call_operand.vmem [shape: f32[2,1,128], index: 14, kind: input, shape index: {}]
  %s15 = inlined_call_operand.vmem [shape: bf16[128,128], index: 15, kind: input, shape index: {}]
  %s16 = inlined_call_operand.vmem [shape: f32[1,128], index: 16, kind: input, shape index: {}]
  %s17 = inlined_call_operand.vmem [shape: f32[256,128], index: 17, kind: output, shape index: {}]
  %s18 = sld [smem:[#allocation0]]
  $region109: #{bert_forward.1} parent=0
    _
  %s20 = ssub.s32 1, %s18
  %s21 = scalar_select 0, %s20, %s18
  loop: start=0, step=1, limit=6
  $region2: #{bert_forward.1} parent=0 // loop_pre_header
    _
  $region3: #{bert_forward.1} parent=0 // loop_header
    %s23 = sphi 0, %s27
    %p24 = scmp.ge.s32.totalorder %s23, 6
    %s30 = sphi 0, %s42
    %s31 = sphi 0, %s38
    %s32 = sphi 0, %s30
    %s33 = sphi 0, %s31
    %s34 = sphi 0, %s32
    %s35 = sphi 0, %s33
    %s45 = sphi 0, %s47
    %s48 = sphi 0, %s45
    %s49 = sphi 0, %s48
    %s65 = sphi 0, %s49
    %s69 = sphi 0, %s69
    %s71 = sphi 0, %s69
    %s72 = sphi 0, %s71
    %s86 = sphi 0, %s72
    %s90 = sphi 0, %s90
    %s92 = sphi 0, %s90
    %s93 = sphi 0, %s92
    %s107 = sphi 0, %s93
    %s113 = sphi 0, %s115
    %s116 = sphi 0, %s113
    %s117 = sphi 0, %s116
    %s133 = sphi 0, %s117
    %s139 = sphi 0, %s141
    %s142 = sphi 0, %s139
    %s143 = sphi 0, %s142
    %s159 = sphi 0, %s143
    %s165 = sphi 0, %s167
    %s168 = sphi 0, %s165
    %s169 = sphi 0, %s168
    %s185 = sphi 0, %s169
    %s191 = sphi 0, %s193
    %s194 = sphi 0, %s191
    %s195 = sphi 0, %s194
    %s211 = sphi 0, %s195
    %s217 = sphi 0, %s219
    %s220 = sphi 0, %s217
    %s221 = sphi 0, %s220
    %s237 = sphi 0, %s221
    %s243 = sphi 0, %s245
    %s246 = sphi 0, %s243
    %s247 = sphi 0, %s246
    %s263 = sphi 0, %s247
    %s269 = sphi 0, %s271
    %s272 = sphi 0, %s269
    %s273 = sphi 0, %s272
    %s289 = sphi 0, %s273
    %s295 = sphi 0, %s297
    %s298 = sphi 0, %s295
    %s299 = sphi 0, %s298
    %s315 = sphi 0, %s299
    %s321 = sphi 0, %s323
    %s324 = sphi 0, %s321
    %s325 = sphi 0, %s324
    %s341 = sphi 0, %s325
    %s347 = sphi 0, %s349
    %s350 = sphi 0, %s347
    %s351 = sphi 0, %s350
    %s367 = sphi 0, %s351
    %s373 = sphi 0, %s375
    %s376 = sphi 0, %s373
    %s377 = sphi 0, %s376
    %s393 = sphi 0, %s377
    %s399 = sphi 0, %s401
    %s402 = sphi 0, %s399
    %s403 = sphi 0, %s402
    %s419 = sphi 0, %s403
    %s423 = sphi 0, %s423
    %s425 = sphi 0, %s423
    %s426 = sphi 0, %s425
    %s440 = sphi 0, %s426
    %s444 = sphi 0, %s444
    %s446 = sphi 0, %s444
    %s447 = sphi 0, %s446
    %s461 = sphi 0, %s447
    %s467 = sphi 0, %s469
    %s470 = sphi 0, %s467
    %s471 = sphi 0, %s470
    %s487 = sphi 0, %s471
  $region4: #{bert_forward.1} parent=0 // loop_header_branch
    %26 = sbr.rel (%p24) target = $region8
  $region5: #{bert_forward.1} parent=0 // loop_body
    %s28 = ssub.s32 %s23, 1
    %s29 = ssub.s32 %s23, 2
    %s36 = sadd.s32 1, %s31
    %p37 = scmp.ge.s32.totalorder %s36, 2
    %s38 = scalar_select %p37, 0, %s36
    %s39 = sadd.s32 1, %s30
    %s40 = scalar_select %p37, %s39, %s30
    %p41 = scmp.ge.s32.totalorder %s40, 2
    %s42 = scalar_select %p41, 0, %s40
    %s43 = ssub.s32 %s30, %s42
    %p44 = scmp.eq.s32.totalorder %s43, 0
    %s46 = sadd.s32 %s45, 1
    %s47 = scalar_select %p44, %s45, %s46
    %p50 = pneg %p44
    %p51 = scmp.eq.s32.totalorder %s23, 3
    %p52 = por %p50, %p51
    %p53 = scmp.ne.s32.totalorder %s45, %s48
    %p54 = scmp.eq.s32.totalorder %s23, 0
    %p55 = por %p53, %p54
    %p56 = scmp.ne.s32.totalorder %s45, %s48
    %p57 = scmp.eq.s32.totalorder %s28, 3
    %p58 = por %p56, %p57
    %p59 = scmp.ne.s32.totalorder %s48, %s49
    %p60 = scmp.eq.s32.totalorder %s28, 0
    %p61 = por %p59, %p60
    %p62 = scmp.ne.s32.totalorder %s48, %s49
    %p63 = scmp.eq.s32.totalorder %s29, 3
    %p64 = por %p62, %p63
    %p66 = scmp.ne.s32.totalorder %s49, %s65
    %p67 = scmp.eq.s32.totalorder %s29, 0
    %p68 = por %p66, %p67
    %s70 = sadd.s32 %s69, 1
    %p73 = scmp.eq.s32.totalorder %s23, 3
    %p74 = scmp.ne.s32.totalorder %s69, %s71
    %p75 = scmp.eq.s32.totalorder %s23, 0
    %p76 = por %p74, %p75
    %p77 = scmp.ne.s32.totalorder %s69, %s71
    %p78 = scmp.eq.s32.totalorder %s28, 3
    %p79 = por %p77, %p78
    %p80 = scmp.ne.s32.totalorder %s71, %s72
    %p81 = scmp.eq.s32.totalorder %s28, 0
    %p82 = por %p80, %p81
    %p83 = scmp.ne.s32.totalorder %s71, %s72
    %p84 = scmp.eq.s32.totalorder %s29, 3
    %p85 = por %p83, %p84
    %p87 = scmp.ne.s32.totalorder %s72, %s86
    %p88 = scmp.eq.s32.totalorder %s29, 0
    %p89 = por %p87, %p88
    %s91 = sadd.s32 %s90, 1
    %p94 = scmp.eq.s32.totalorder %s23, 3
    %p95 = scmp.ne.s32.totalorder %s90, %s92
    %p96 = scmp.eq.s32.totalorder %s23, 0
    %p97 = por %p95, %p96
    %p98 = scmp.ne.s32.totalorder %s90, %s92
    %p99 = scmp.eq.s32.totalorder %s28, 3
    %p100 = por %p98, %p99
    %p101 = scmp.ne.s32.totalorder %s92, %s93
    %p102 = scmp.eq.s32.totalorder %s28, 0
    %p103 = por %p101, %p102
    %p104 = scmp.ne.s32.totalorder %s92, %s93
    %p105 = scmp.eq.s32.totalorder %s29, 3
    %p106 = por %p104, %p105
    %p108 = scmp.ne.s32.totalorder %s93, %s107
    %p109 = scmp.eq.s32.totalorder %s29, 0
    %p110 = por %p108, %p109
    %s111 = ssub.s32 %s31, %s38
    %p112 = scmp.eq.s32.totalorder %s111, 0
    %s114 = sadd.s32 %s113, 1
    %s115 = scalar_select %p112, %s113, %s114
    %p118 = pneg %p112
    %p119 = scmp.eq.s32.totalorder %s23, 3
    %p120 = por %p118, %p119
    %p121 = scmp.ne.s32.totalorder %s113, %s116
    %p122 = scmp.eq.s32.totalorder %s23, 0
    %p123 = por %p121, %p122
    %p124 = scmp.ne.s32.totalorder %s113, %s116
    %p125 = scmp.eq.s32.totalorder %s28, 3
    %p126 = por %p124, %p125
    %p127 = scmp.ne.s32.totalorder %s116, %s117
    %p128 = scmp.eq.s32.totalorder %s28, 0
    %p129 = por %p127, %p128
    %p130 = scmp.ne.s32.totalorder %s116, %s117
    %p131 = scmp.eq.s32.totalorder %s29, 3
    %p132 = por %p130, %p131
    %p134 = scmp.ne.s32.totalorder %s117, %s133
    %p135 = scmp.eq.s32.totalorder %s29, 0
    %p136 = por %p134, %p135
    %s137 = ssub.s32 %s31, %s38
    %p138 = scmp.eq.s32.totalorder %s137, 0
    %s140 = sadd.s32 %s139, 1
    %s141 = scalar_select %p138, %s139, %s140
    %p144 = pneg %p138
    %p145 = scmp.eq.s32.totalorder %s23, 3
    %p146 = por %p144, %p145
    %p147 = scmp.ne.s32.totalorder %s139, %s142
    %p148 = scmp.eq.s32.totalorder %s23, 0
    %p149 = por %p147, %p148
    %p150 = scmp.ne.s32.totalorder %s139, %s142
    %p151 = scmp.eq.s32.totalorder %s28, 3
    %p152 = por %p150, %p151
    %p153 = scmp.ne.s32.totalorder %s142, %s143
    %p154 = scmp.eq.s32.totalorder %s28, 0
    %p155 = por %p153, %p154
    %p156 = scmp.ne.s32.totalorder %s142, %s143
    %p157 = scmp.eq.s32.totalorder %s29, 3
    %p158 = por %p156, %p157
    %p160 = scmp.ne.s32.totalorder %s143, %s159
    %p161 = scmp.eq.s32.totalorder %s29, 0
    %p162 = por %p160, %p161
    %s163 = ssub.s32 %s31, %s38
    %p164 = scmp.eq.s32.totalorder %s163, 0
    %s166 = sadd.s32 %s165, 1
    %s167 = scalar_select %p164, %s165, %s166
    %p170 = pneg %p164
    %p171 = scmp.eq.s32.totalorder %s23, 3
    %p172 = por %p170, %p171
    %p173 = scmp.ne.s32.totalorder %s165, %s168
    %p174 = scmp.eq.s32.totalorder %s23, 0
    %p175 = por %p173, %p174
    %p176 = scmp.ne.s32.totalorder %s165, %s168
    %p177 = scmp.eq.s32.totalorder %s28, 3
    %p178 = por %p176, %p177
    %p179 = scmp.ne.s32.totalorder %s168, %s169
    %p180 = scmp.eq.s32.totalorder %s28, 0
    %p181 = por %p179, %p180
    %p182 = scmp.ne.s32.totalorder %s168, %s169
    %p183 = scmp.eq.s32.totalorder %s29, 3
    %p184 = por %p182, %p183
    %p186 = scmp.ne.s32.totalorder %s169, %s185
    %p187 = scmp.eq.s32.totalorder %s29, 0
    %p188 = por %p186, %p187
    %s189 = ssub.s32 %s31, %s38
    %p190 = scmp.eq.s32.totalorder %s189, 0
    %s192 = sadd.s32 %s191, 1
    %s193 = scalar_select %p190, %s191, %s192
    %p196 = pneg %p190
    %p197 = scmp.eq.s32.totalorder %s23, 3
    %p198 = por %p196, %p197
    %p199 = scmp.ne.s32.totalorder %s191, %s194
    %p200 = scmp.eq.s32.totalorder %s23, 0
    %p201 = por %p199, %p200
    %p202 = scmp.ne.s32.totalorder %s191, %s194
    %p203 = scmp.eq.s32.totalorder %s28, 3
    %p204 = por %p202, %p203
    %p205 = scmp.ne.s32.totalorder %s194, %s195
    %p206 = scmp.eq.s32.totalorder %s28, 0
    %p207 = por %p205, %p206
    %p208 = scmp.ne.s32.totalorder %s194, %s195
    %p209 = scmp.eq.s32.totalorder %s29, 3
    %p210 = por %p208, %p209
    %p212 = scmp.ne.s32.totalorder %s195, %s211
    %p213 = scmp.eq.s32.totalorder %s29, 0
    %p214 = por %p212, %p213
    %s215 = ssub.s32 %s31, %s38
    %p216 = scmp.eq.s32.totalorder %s215, 0
    %s218 = sadd.s32 %s217, 1
    %s219 = scalar_select %p216, %s217, %s218
    %p222 = pneg %p216
    %p223 = scmp.eq.s32.totalorder %s23, 3
    %p224 = por %p222, %p223
    %p225 = scmp.ne.s32.totalorder %s217, %s220
    %p226 = scmp.eq.s32.totalorder %s23, 0
    %p227 = por %p225, %p226
    %p228 = scmp.ne.s32.totalorder %s217, %s220
    %p229 = scmp.eq.s32.totalorder %s28, 3
    %p230 = por %p228, %p229
    %p231 = scmp.ne.s32.totalorder %s220, %s221
    %p232 = scmp.eq.s32.totalorder %s28, 0
    %p233 = por %p231, %p232
    %p234 = scmp.ne.s32.totalorder %s220, %s221
    %p235 = scmp.eq.s32.totalorder %s29, 3
    %p236 = por %p234, %p235
    %p238 = scmp.ne.s32.totalorder %s221, %s237
    %p239 = scmp.eq.s32.totalorder %s29, 0
    %p240 = por %p238, %p239
    %s241 = ssub.s32 %s31, %s38
    %p242 = scmp.eq.s32.totalorder %s241, 0
    %s244 = sadd.s32 %s243, 1
    %s245 = scalar_select %p242, %s243, %s244
    %p248 = pneg %p242
    %p249 = scmp.eq.s32.totalorder %s23, 3
    %p250 = por %p248, %p249
    %p251 = scmp.ne.s32.totalorder %s243, %s246
    %p252 = scmp.eq.s32.totalorder %s23, 0
    %p253 = por %p251, %p252
    %p254 = scmp.ne.s32.totalorder %s243, %s246
    %p255 = scmp.eq.s32.totalorder %s28, 3
    %p256 = por %p254, %p255
    %p257 = scmp.ne.s32.totalorder %s246, %s247
    %p258 = scmp.eq.s32.totalorder %s28, 0
    %p259 = por %p257, %p258
    %p260 = scmp.ne.s32.totalorder %s246, %s247
    %p261 = scmp.eq.s32.totalorder %s29, 3
    %p262 = por %p260, %p261
    %p264 = scmp.ne.s32.totalorder %s247, %s263
    %p265 = scmp.eq.s32.totalorder %s29, 0
    %p266 = por %p264, %p265
    %s267 = ssub.s32 %s31, %s38
    %p268 = scmp.eq.s32.totalorder %s267, 0
    %s270 = sadd.s32 %s269, 1
    %s271 = scalar_select %p268, %s269, %s270
    %p274 = pneg %p268
    %p275 = scmp.eq.s32.totalorder %s23, 3
    %p276 = por %p274, %p275
    %p277 = scmp.ne.s32.totalorder %s269, %s272
    %p278 = scmp.eq.s32.totalorder %s23, 0
    %p279 = por %p277, %p278
    %p280 = scmp.ne.s32.totalorder %s269, %s272
    %p281 = scmp.eq.s32.totalorder %s28, 3
    %p282 = por %p280, %p281
    %p283 = scmp.ne.s32.totalorder %s272, %s273
    %p284 = scmp.eq.s32.totalorder %s28, 0
    %p285 = por %p283, %p284
    %p286 = scmp.ne.s32.totalorder %s272, %s273
    %p287 = scmp.eq.s32.totalorder %s29, 3
    %p288 = por %p286, %p287
    %p290 = scmp.ne.s32.totalorder %s273, %s289
    %p291 = scmp.eq.s32.totalorder %s29, 0
    %p292 = por %p290, %p291
    %s293 = ssub.s32 %s31, %s38
    %p294 = scmp.eq.s32.totalorder %s293, 0
    %s296 = sadd.s32 %s295, 1
    %s297 = scalar_select %p294, %s295, %s296
    %p300 = pneg %p294
    %p301 = scmp.eq.s32.totalorder %s23, 3
    %p302 = por %p300, %p301
    %p303 = scmp.ne.s32.totalorder %s295, %s298
    %p304 = scmp.eq.s32.totalorder %s23, 0
    %p305 = por %p303, %p304
    %p306 = scmp.ne.s32.totalorder %s295, %s298
    %p307 = scmp.eq.s32.totalorder %s28, 3
    %p308 = por %p306, %p307
    %p309 = scmp.ne.s32.totalorder %s298, %s299
    %p310 = scmp.eq.s32.totalorder %s28, 0
    %p311 = por %p309, %p310
    %p312 = scmp.ne.s32.totalorder %s298, %s299
    %p313 = scmp.eq.s32.totalorder %s29, 3
    %p314 = por %p312, %p313
    %p316 = scmp.ne.s32.totalorder %s299, %s315
    %p317 = scmp.eq.s32.totalorder %s29, 0
    %p318 = por %p316, %p317
    %s319 = ssub.s32 %s31, %s38
    %p320 = scmp.eq.s32.totalorder %s319, 0
    %s322 = sadd.s32 %s321, 1
    %s323 = scalar_select %p320, %s321, %s322
    %p326 = pneg %p320
    %p327 = scmp.eq.s32.totalorder %s23, 3
    %p328 = por %p326, %p327
    %p329 = scmp.ne.s32.totalorder %s321, %s324
    %p330 = scmp.eq.s32.totalorder %s23, 0
    %p331 = por %p329, %p330
    %p332 = scmp.ne.s32.totalorder %s321, %s324
    %p333 = scmp.eq.s32.totalorder %s28, 3
    %p334 = por %p332, %p333
    %p335 = scmp.ne.s32.totalorder %s324, %s325
    %p336 = scmp.eq.s32.totalorder %s28, 0
    %p337 = por %p335, %p336
    %p338 = scmp.ne.s32.totalorder %s324, %s325
    %p339 = scmp.eq.s32.totalorder %s29, 3
    %p340 = por %p338, %p339
    %p342 = scmp.ne.s32.totalorder %s325, %s341
    %p343 = scmp.eq.s32.totalorder %s29, 0
    %p344 = por %p342, %p343
    %s345 = ssub.s32 %s31, %s38
    %p346 = scmp.eq.s32.totalorder %s345, 0
    %s348 = sadd.s32 %s347, 1
    %s349 = scalar_select %p346, %s347, %s348
    %p352 = pneg %p346
    %p353 = scmp.eq.s32.totalorder %s23, 3
    %p354 = por %p352, %p353
    %p355 = scmp.ne.s32.totalorder %s347, %s350
    %p356 = scmp.eq.s32.totalorder %s23, 0
    %p357 = por %p355, %p356
    %p358 = scmp.ne.s32.totalorder %s347, %s350
    %p359 = scmp.eq.s32.totalorder %s28, 3
    %p360 = por %p358, %p359
    %p361 = scmp.ne.s32.totalorder %s350, %s351
    %p362 = scmp.eq.s32.totalorder %s28, 0
    %p363 = por %p361, %p362
    %p364 = scmp.ne.s32.totalorder %s350, %s351
    %p365 = scmp.eq.s32.totalorder %s29, 3
    %p366 = por %p364, %p365
    %p368 = scmp.ne.s32.totalorder %s351, %s367
    %p369 = scmp.eq.s32.totalorder %s29, 0
    %p370 = por %p368, %p369
    %s371 = ssub.s32 %s31, %s38
    %p372 = scmp.eq.s32.totalorder %s371, 0
    %s374 = sadd.s32 %s373, 1
    %s375 = scalar_select %p372, %s373, %s374
    %p378 = pneg %p372
    %p379 = scmp.eq.s32.totalorder %s23, 3
    %p380 = por %p378, %p379
    %p381 = scmp.ne.s32.totalorder %s373, %s376
    %p382 = scmp.eq.s32.totalorder %s23, 0
    %p383 = por %p381, %p382
    %p384 = scmp.ne.s32.totalorder %s373, %s376
    %p385 = scmp.eq.s32.totalorder %s28, 3
    %p386 = por %p384, %p385
    %p387 = scmp.ne.s32.totalorder %s376, %s377
    %p388 = scmp.eq.s32.totalorder %s28, 0
    %p389 = por %p387, %p388
    %p390 = scmp.ne.s32.totalorder %s376, %s377
    %p391 = scmp.eq.s32.totalorder %s29, 3
    %p392 = por %p390, %p391
    %p394 = scmp.ne.s32.totalorder %s377, %s393
    %p395 = scmp.eq.s32.totalorder %s29, 0
    %p396 = por %p394, %p395
    %s397 = ssub.s32 %s31, %s38
    %p398 = scmp.eq.s32.totalorder %s397, 0
    %s400 = sadd.s32 %s399, 1
    %s401 = scalar_select %p398, %s399, %s400
    %p404 = pneg %p398
    %p405 = scmp.eq.s32.totalorder %s23, 3
    %p406 = por %p404, %p405
    %p407 = scmp.ne.s32.totalorder %s399, %s402
    %p408 = scmp.eq.s32.totalorder %s23, 0
    %p409 = por %p407, %p408
    %p410 = scmp.ne.s32.totalorder %s399, %s402
    %p411 = scmp.eq.s32.totalorder %s28, 3
    %p412 = por %p410, %p411
    %p413 = scmp.ne.s32.totalorder %s402, %s403
    %p414 = scmp.eq.s32.totalorder %s28, 0
    %p415 = por %p413, %p414
    %p416 = scmp.ne.s32.totalorder %s402, %s403
    %p417 = scmp.eq.s32.totalorder %s29, 3
    %p418 = por %p416, %p417
    %p420 = scmp.ne.s32.totalorder %s403, %s419
    %p421 = scmp.eq.s32.totalorder %s29, 0
    %p422 = por %p420, %p421
    %s424 = sadd.s32 %s423, 1
    %p427 = scmp.eq.s32.totalorder %s23, 3
    %p428 = scmp.ne.s32.totalorder %s423, %s425
    %p429 = scmp.eq.s32.totalorder %s23, 0
    %p430 = por %p428, %p429
    %p431 = scmp.ne.s32.totalorder %s423, %s425
    %p432 = scmp.eq.s32.totalorder %s28, 3
    %p433 = por %p431, %p432
    %p434 = scmp.ne.s32.totalorder %s425, %s426
    %p435 = scmp.eq.s32.totalorder %s28, 0
    %p436 = por %p434, %p435
    %p437 = scmp.ne.s32.totalorder %s425, %s426
    %p438 = scmp.eq.s32.totalorder %s29, 3
    %p439 = por %p437, %p438
    %p441 = scmp.ne.s32.totalorder %s426, %s440
    %p442 = scmp.eq.s32.totalorder %s29, 0
    %p443 = por %p441, %p442
    %s445 = sadd.s32 %s444, 1
    %p448 = scmp.eq.s32.totalorder %s23, 3
    %p449 = scmp.ne.s32.totalorder %s444, %s446
    %p450 = scmp.eq.s32.totalorder %s23, 0
    %p451 = por %p449, %p450
    %p452 = scmp.ne.s32.totalorder %s444, %s446
    %p453 = scmp.eq.s32.totalorder %s28, 3
    %p454 = por %p452, %p453
    %p455 = scmp.ne.s32.totalorder %s446, %s447
    %p456 = scmp.eq.s32.totalorder %s28, 0
    %p457 = por %p455, %p456
    %p458 = scmp.ne.s32.totalorder %s446, %s447
    %p459 = scmp.eq.s32.totalorder %s29, 3
    %p460 = por %p458, %p459
    %p462 = scmp.ne.s32.totalorder %s447, %s461
    %p463 = scmp.eq.s32.totalorder %s29, 0
    %p464 = por %p462, %p463
    %s465 = ssub.s32 %s30, %s42
    %p466 = scmp.eq.s32.totalorder %s465, 0
    %s468 = sadd.s32 %s467, 1
    %s469 = scalar_select %p466, %s467, %s468
    %p472 = pneg %p466
    %p473 = scmp.eq.s32.totalorder %s23, 3
    %p474 = por %p472, %p473
    %p475 = scmp.ne.s32.totalorder %s467, %s470
    %p476 = scmp.eq.s32.totalorder %s23, 0
    %p477 = por %p475, %p476
    %p478 = scmp.ne.s32.totalorder %s467, %s470
    %p479 = scmp.eq.s32.totalorder %s28, 3
    %p480 = por %p478, %p479
    %p481 = scmp.ne.s32.totalorder %s470, %s471
    %p482 = scmp.eq.s32.totalorder %s28, 0
    %p483 = por %p481, %p482
    %p484 = scmp.ne.s32.totalorder %s470, %s471
    %p485 = scmp.eq.s32.totalorder %s29, 3
    %p486 = por %p484, %p485
    %p488 = scmp.ne.s32.totalorder %s471, %s487
    %p489 = scmp.eq.s32.totalorder %s29, 0
    %p490 = por %p488, %p489
    %p491 = scmp.le.s32.totalorder 1, %s23
    %p492 = scmp.lt.s32.totalorder %s23, 5
    %p493 = pnand %p491, %p492
    %p494 = pneg %p493
    // Predicated region
    $region9: #{bert_forward.1} parent=5 // pred_check
      _
    $region10: #{bert_forward.1} parent=5 // pred_check_branch
      %496 = sbr.rel (%p493) target = $region12
    $region11: #{bert_forward.1} parent=5 // pred_region
      %s497 = ssub.s32 %s23, 1
      // Predicated region
      $region13: #{bert_forward.1} parent=11 // pred_check
        %p498 = pneg %p82
      $region14: #{bert_forward.1} parent=11 // pred_check_branch
        %500 = sbr.rel (%p498) target = $region16
      $region15: #{bert_forward.1} parent=11 // pred_region
        _
      $region16: #{bert_forward.1} parent=11 // pred_fallthru
        _
      // Predicated region
      $region17: #{bert_forward.1} parent=11 // pred_check
        %p501 = pneg %p103
      $region18: #{bert_forward.1} parent=11 // pred_check_branch
        %503 = sbr.rel (%p501) target = $region20
      $region19: #{bert_forward.1} parent=11 // pred_region
        _
      $region20: #{bert_forward.1} parent=11 // pred_fallthru
        _
      // Predicated region
      $region21: #{bert_forward.1} parent=11 // pred_check
        %p504 = pneg %p436
      $region22: #{bert_forward.1} parent=11 // pred_check_branch
        %506 = sbr.rel (%p504) target = $region24
      $region23: #{bert_forward.1} parent=11 // pred_region
        _
      $region24: #{bert_forward.1} parent=11 // pred_fallthru
        _
      // Predicated region
      $region25: #{bert_forward.1} parent=11 // pred_check
        %p507 = pneg %p457
      $region26: #{bert_forward.1} parent=11 // pred_check_branch
        %509 = sbr.rel (%p507) target = $region28
      $region27: #{bert_forward.1} parent=11 // pred_region
        _
      $region28: #{bert_forward.1} parent=11 // pred_fallthru
        _
    $region12: #{bert_forward.1} parent=5 // pred_fallthru
      _
    %p510 = scmp.lt.s32.totalorder %s23, 4
    // Predicated region
    $region29: #{bert_forward.1} parent=5 // pred_check
      %p511 = pneg %p510
    $region30: #{bert_forward.1} parent=5 // pred_check_branch
      %513 = sbr.rel (%p511) target = $region32
    $region31: #{bert_forward.1} parent=5 // pred_region
      // Predicated region
      $region33: #{bert_forward.1} parent=31 // pred_check
        %p514 = pneg %p55
      $region34: #{bert_forward.1} parent=31 // pred_check_branch
        %516 = sbr.rel (%p514) target = $region36
      $region35: #{bert_forward.1} parent=31 // pred_region
        %s517 = smul.u32 16, %s30
        %p518 = scmp.lt.s32.totalorder %s517, 31
        %s519 = scalar_select %p518, %s517, 31
        %s520 = smul.addr %s519, 8
        %s521 = scalar_lea.vmem %s0, %s520
        %s522 = smul.u32 16, %s30
      $region36: #{bert_forward.1} parent=31 // pred_fallthru
        _
      // Predicated region
      $region37: #{bert_forward.1} parent=31 // pred_check
        %p523 = pneg %p123
      $region38: #{bert_forward.1} parent=31 // pred_check_branch
        %525 = sbr.rel (%p523) target = $region40
      $region39: #{bert_forward.1} parent=31 // pred_region
        %p526 = scmp.lt.s32.totalorder %s31, 1
        %s527 = scalar_select %p526, %s31, 1
        %s528 = smul.addr %s527, 48
        %s529 = smul.addr %s528, 4
        %s530 = scalar_lea.vmem %s3, %s529
      $region40: #{bert_forward.1} parent=31 // pred_fallthru
        _
      // Predicated region
      $region41: #{bert_forward.1} parent=31 // pred_check
        %p531 = pneg %p149
      $region42: #{bert_forward.1} parent=31 // pred_check_branch
        %533 = sbr.rel (%p531) target = $region44
      $region43: #{bert_forward.1} parent=31 // pred_region
        %p534 = scmp.lt.s32.totalorder %s31, 1
        %s535 = scalar_select %p534, %s31, 1
        %s536 = smul.addr %s535, 3
        %s537 = scalar_lea.vmem %s4, %s536
      $region44: #{bert_forward.1} parent=31 // pred_fallthru
        _
      // Predicated region
      $region45: #{bert_forward.1} parent=31 // pred_check
        %p538 = pneg %p175
      $region46: #{bert_forward.1} parent=31 // pred_check_branch
        %540 = sbr.rel (%p538) target = $region48
      $region47: #{bert_forward.1} parent=31 // pred_region
        %p541 = scmp.lt.s32.totalorder %s31, 1
        %s542 = scalar_select %p541, %s31, 1
        %s543 = smul.addr %s542, 16
        %s544 = smul.addr %s543, 4
        %s545 = scalar_lea.vmem %s5, %s544
      $region48: #{bert_forward.1} parent=31 // pred_fallthru
        _
      // Predicated region
      $region49: #{bert_forward.1} parent=31 // pred_check
        %p546 = pneg %p201
      $region50: #{bert_forward.1} parent=31 // pred_check_branch
        %548 = sbr.rel (%p546) target = $region52
      $region51: #{bert_forward.1} parent=31 // pred_region
        %p549 = scmp.lt.s32.totalorder %s31, 1
        %s550 = scalar_select %p549, %s31, 1
        %s551 = scalar_lea.vmem %s6, %s550
      $region52: #{bert_forward.1} parent=31 // pred_fallthru
        _
      // Predicated region
      $region53: #{bert_forward.1} parent=31 // pred_check
        %p552 = pneg %p227
      $region54: #{bert_forward.1} parent=31 // pred_check_branch
        %554 = sbr.rel (%p552) target = $region56
      $region55: #{bert_forward.1} parent=31 // pred_region
        %p555 = scmp.lt.s32.totalorder %s31, 1
        %s556 = scalar_select %p555, %s31, 1
        %s557 = scalar_lea.vmem %s7, %s556
      $region56: #{bert_forward.1} parent=31 // pred_fallthru
        _
      // Predicated region
      $region57: #{bert_forward.1} parent=31 // pred_check
        %p558 = pneg %p253
      $region58: #{bert_forward.1} parent=31 // pred_check_branch
        %560 = sbr.rel (%p558) target = $region60
      $region59: #{bert_forward.1} parent=31 // pred_region
        %p561 = scmp.lt.s32.totalorder %s31, 1
        %s562 = scalar_select %p561, %s31, 1
        %s563 = scalar_lea.vmem %s8, %s562
      $region60: #{bert_forward.1} parent=31 // pred_fallthru
        _
      // Predicated region
      $region61: #{bert_forward.1} parent=31 // pred_check
        %p564 = pneg %p279
      $region62: #{bert_forward.1} parent=31 // pred_check_branch
        %566 = sbr.rel (%p564) target = $region64
      $region63: #{bert_forward.1} parent=31 // pred_region
        %p567 = scmp.lt.s32.totalorder %s31, 1
        %s568 = scalar_select %p567, %s31, 1
        %s569 = smul.addr %s568, 64
        %s570 = smul.addr %s569, 4
        %s571 = scalar_lea.vmem %s9, %s570
      $region64: #{bert_forward.1} parent=31 // pred_fallthru
        _
      // Predicated region
      $region65: #{bert_forward.1} parent=31 // pred_check
        %p572 = pneg %p305
      $region66: #{bert_forward.1} parent=31 // pred_check_branch
        %574 = sbr.rel (%p572) target = $region68
      $region67: #{bert_forward.1} parent=31 // pred_region
        %p575 = scmp.lt.s32.totalorder %s31, 1
        %s576 = scalar_select %p575, %s31, 1
        %s577 = smul.addr %s576, 4
        %s578 = scalar_lea.vmem %s10, %s577
      $region68: #{bert_forward.1} parent=31 // pred_fallthru
        _
      // Predicated region
      $region69: #{bert_forward.1} parent=31 // pred_check
        %p579 = pneg %p331
      $region70: #{bert_forward.1} parent=31 // pred_check_branch
        %581 = sbr.rel (%p579) target = $region72
      $region71: #{bert_forward.1} parent=31 // pred_region
        %p582 = scmp.lt.s32.totalorder %s31, 1
        %s583 = scalar_select %p582, %s31, 1
        %s584 = smul.addr %s583, 64
        %s585 = smul.addr %s584, 4
        %s586 = scalar_lea.vmem %s11, %s585
      $region72: #{bert_forward.1} parent=31 // pred_fallthru
        _
      // Predicated region
      $region73: #{bert_forward.1} parent=31 // pred_check
        %p587 = pneg %p357
      $region74: #{bert_forward.1} parent=31 // pred_check_branch
        %589 = sbr.rel (%p587) target = $region76
      $region75: #{bert_forward.1} parent=31 // pred_region
        %p590 = scmp.lt.s32.totalorder %s31, 1
        %s591 = scalar_select %p590, %s31, 1
        %s592 = scalar_lea.vmem %s12, %s591
      $region76: #{bert_forward.1} parent=31 // pred_fallthru
        _
      // Predicated region
      $region77: #{bert_forward.1} parent=31 // pred_check
        %p593 = pneg %p383
      $region78: #{bert_forward.1} parent=31 // pred_check_branch
        %595 = sbr.rel (%p593) target = $region80
      $region79: #{bert_forward.1} parent=31 // pred_region
        %p596 = scmp.lt.s32.totalorder %s31, 1
        %s597 = scalar_select %p596, %s31, 1
        %s598 = scalar_lea.vmem %s13, %s597
      $region80: #{bert_forward.1} parent=31 // pred_fallthru
        _
      // Predicated region
      $region81: #{bert_forward.1} parent=31 // pred_check
        %p599 = pneg %p409
      $region82: #{bert_forward.1} parent=31 // pred_check_branch
        %601 = sbr.rel (%p599) target = $region84
      $region83: #{bert_forward.1} parent=31 // pred_region
        %p602 = scmp.lt.s32.totalorder %s31, 1
        %s603 = scalar_select %p602, %s31, 1
        %s604 = scalar_lea.vmem %s14, %s603
      $region84: #{bert_forward.1} parent=31 // pred_fallthru
        _
    $region32: #{bert_forward.1} parent=5 // pred_fallthru
      _
    %p605 = scmp.le.s32.totalorder 1, %s23
    %p606 = scmp.lt.s32.totalorder %s23, 5
    %p607 = pnand %p605, %p606
    %p608 = pneg %p607
    // Predicated region
    $region85: #{bert_forward.1} parent=5 // pred_check
      _
    $region86: #{bert_forward.1} parent=5 // pred_check_branch
      %610 = sbr.rel (%p607) target = $region88
    $region87: #{bert_forward.1} parent=5 // pred_region
      %s611 = ssub.s32 %s23, 1
      %s612 = smul.u32 16, %s32
      %p613 = scmp.lt.s32.totalorder %s612, 31
      %s614 = scalar_select %p613, %s612, 31
      %s615 = smul.addr %s614, 8
      %s616 = scalar_lea.vmem %s0, %s615
      %p617 = pneg %p61
      %p618 = pneg %p58
      %p619 = pneg %p82
      %p620 = pneg %p79
      %p621 = pneg %p103
      %p622 = pneg %p100
      %p623 = scmp.lt.s32.totalorder %s33, 1
      %s624 = scalar_select %p623, %s33, 1
      %s625 = smul.addr %s624, 48
      %s626 = smul.addr %s625, 4
      %s627 = scalar_lea.vmem %s3, %s626
      %p628 = pneg %p129
      %p629 = pneg %p126
      %p630 = scmp.lt.s32.totalorder %s33, 1
      %s631 = scalar_select %p630, %s33, 1
      %s632 = smul.addr %s631, 3
      %s633 = scalar_lea.vmem %s4, %s632
      %p634 = pneg %p155
      %p635 = pneg %p152
      %p636 = scmp.lt.s32.totalorder %s33, 1
      %s637 = scalar_select %p636, %s33, 1
      %s638 = smul.addr %s637, 16
      %s639 = smul.addr %s638, 4
      %s640 = scalar_lea.vmem %s5, %s639
      %p641 = pneg %p181
      %p642 = pneg %p178
      %p643 = scmp.lt.s32.totalorder %s33, 1
      %s644 = scalar_select %p643, %s33, 1
      %s645 = scalar_lea.vmem %s6, %s644
      %p646 = pneg %p207
      %p647 = pneg %p204
      %p648 = scmp.lt.s32.totalorder %s33, 1
      %s649 = scalar_select %p648, %s33, 1
      %s650 = scalar_lea.vmem %s7, %s649
      %p651 = pneg %p233
      %p652 = pneg %p230
      %p653 = scmp.lt.s32.totalorder %s33, 1
      %s654 = scalar_select %p653, %s33, 1
      %s655 = scalar_lea.vmem %s8, %s654
      %p656 = pneg %p259
      %p657 = pneg %p256
      %p658 = scmp.lt.s32.totalorder %s33, 1
      %s659 = scalar_select %p658, %s33, 1
      %s660 = smul.addr %s659, 64
      %s661 = smul.addr %s660, 4
      %s662 = scalar_lea.vmem %s9, %s661
      %p663 = pneg %p285
      %p664 = pneg %p282
      %p665 = scmp.lt.s32.totalorder %s33, 1
      %s666 = scalar_select %p665, %s33, 1
      %s667 = smul.addr %s666, 4
      %s668 = scalar_lea.vmem %s10, %s667
      %p669 = pneg %p311
      %p670 = pneg %p308
      %p671 = scmp.lt.s32.totalorder %s33, 1
      %s672 = scalar_select %p671, %s33, 1
      %s673 = smul.addr %s672, 64
      %s674 = smul.addr %s673, 4
      %s675 = scalar_lea.vmem %s11, %s674
      %p676 = pneg %p337
      %p677 = pneg %p334
      %p678 = scmp.lt.s32.totalorder %s33, 1
      %s679 = scalar_select %p678, %s33, 1
      %s680 = scalar_lea.vmem %s12, %s679
      %p681 = pneg %p363
      %p682 = pneg %p360
      %p683 = scmp.lt.s32.totalorder %s33, 1
      %s684 = scalar_select %p683, %s33, 1
      %s685 = scalar_lea.vmem %s13, %s684
      %p686 = pneg %p389
      %p687 = pneg %p386
      %p688 = scmp.lt.s32.totalorder %s33, 1
      %s689 = scalar_select %p688, %s33, 1
      %s690 = scalar_lea.vmem %s14, %s689
      %p691 = pneg %p415
      %p692 = pneg %p412
      %p693 = pneg %p436
      %p694 = pneg %p433
      %p695 = pneg %p457
      %p696 = pneg %p454
      %p697 = pneg %p483
      %p698 = pneg %p480
      %s699 = smul.u32 16, %s32
      %p700 = scmp.lt.s32.totalorder %s699, 31
      %s701 = scalar_select %p700, %s699, 31
      %s702 = smul.addr %s701, 8
      %s703 = scalar_lea.vmem %s17, %s702
      %s704 = smul.u32 16, %s32
      %p705 = scmp.lt.s32.totalorder %s704, 31
      %s706 = scalar_select %p705, %s704, 31
      %s707 = smul.addr %s706, 8
      %s708 = scalar_lea.vmem %s0, %s707
      %s709 = smul.u32 16, %s32
      %p710 = scmp.lt.s32.totalorder %s33, 1
      %s711 = scalar_select %p710, %s33, 1
      %s712 = smul.addr %s711, 48
      %s713 = smul.addr %s712, 4
      %s714 = scalar_lea.vmem %s3, %s713
      %p715 = scmp.lt.s32.totalorder %s33, 1
      %s716 = scalar_select %p715, %s33, 1
      %s717 = smul.addr %s716, 3
      %s718 = scalar_lea.vmem %s4, %s717
      %p719 = scmp.lt.s32.totalorder %s33, 1
      %s720 = scalar_select %p719, %s33, 1
      %s721 = smul.addr %s720, 16
      %s722 = smul.addr %s721, 4
      %s723 = scalar_lea.vmem %s5, %s722
      %p724 = scmp.lt.s32.totalorder %s33, 1
      %s725 = scalar_select %p724, %s33, 1
      %s726 = scalar_lea.vmem %s6, %s725
      %p727 = scmp.lt.s32.totalorder %s33, 1
      %s728 = scalar_select %p727, %s33, 1
      %s729 = scalar_lea.vmem %s7, %s728
      %p730 = scmp.lt.s32.totalorder %s33, 1
      %s731 = scalar_select %p730, %s33, 1
      %s732 = scalar_lea.vmem %s8, %s731
      %p733 = scmp.lt.s32.totalorder %s33, 1
      %s734 = scalar_select %p733, %s33, 1
      %s735 = smul.addr %s734, 64
      %s736 = smul.addr %s735, 4
      %s737 = scalar_lea.vmem %s9, %s736
      %p738 = scmp.lt.s32.totalorder %s33, 1
      %s739 = scalar_select %p738, %s33, 1
      %s740 = smul.addr %s739, 4
      %s741 = scalar_lea.vmem %s10, %s740
      %p742 = scmp.lt.s32.totalorder %s33, 1
      %s743 = scalar_select %p742, %s33, 1
      %s744 = smul.addr %s743, 64
      %s745 = smul.addr %s744, 4
      %s746 = scalar_lea.vmem %s11, %s745
      %p747 = scmp.lt.s32.totalorder %s33, 1
      %s748 = scalar_select %p747, %s33, 1
      %s749 = scalar_lea.vmem %s12, %s748
      %p750 = scmp.lt.s32.totalorder %s33, 1
      %s751 = scalar_select %p750, %s33, 1
      %s752 = scalar_lea.vmem %s13, %s751
      %p753 = scmp.lt.s32.totalorder %s33, 1
      %s754 = scalar_select %p753, %s33, 1
      %s755 = scalar_lea.vmem %s14, %s754
      %s756 = smul.u32 16, %s32
      %p757 = scmp.lt.s32.totalorder %s756, 31
      %s758 = scalar_select %p757, %s756, 31
      %s759 = smul.addr %s758, 8
      %s760 = scalar_lea.vmem %s17, %s759
      %s761 = smul.u32 16, %s32
      %p763 = scmp.eq.s32.totalorder %s33, 0
      // Predicated region
      $region89: #{bert_forward.1} parent=87 // pred_check
        %p764 = pneg %p763
      $region90: #{bert_forward.1} parent=87 // pred_check_branch
        %766 = sbr.rel (%p764) target = $region92
      $region91: #{bert_forward.1} parent=87 // pred_region
        %v767 = vld [vmem:[%s708] sm:$0xff]
        %v768 = vld [vmem:[%s708 + $0x8] sm:$0xff]
        %v769 = vld [vmem:[%s708 + $0x10] sm:$0xff]
        %v770 = vld [vmem:[%s708 + $0x18] sm:$0xff]
        %v771 = vld [vmem:[%s708 + $0x20] sm:$0xff]
        %v772 = vld [vmem:[%s708 + $0x28] sm:$0xff]
        %v773 = vld [vmem:[%s708 + $0x30] sm:$0xff]
        %v774 = vld [vmem:[%s708 + $0x38] sm:$0xff]
        %v775 = vld [vmem:[%s708 + $0x40] sm:$0xff]
        %v776 = vld [vmem:[%s708 + $0x48] sm:$0xff]
        %v777 = vld [vmem:[%s708 + $0x50] sm:$0xff]
        %v778 = vld [vmem:[%s708 + $0x58] sm:$0xff]
        %v779 = vld [vmem:[%s708 + $0x60] sm:$0xff]
        %v780 = vld [vmem:[%s708 + $0x68] sm:$0xff]
        %v781 = vld [vmem:[%s708 + $0x70] sm:$0xff]
        %v782 = vld [vmem:[%s708 + $0x78] sm:$0xff]
        %v783 = vld [vmem:[%s1] sm:$0x1]
        %v784 = vld [vmem:[%s2] sm:$0x1]
        %785 = vadd.xlane.f32.xlu0 %v767
        %v786 = vpop.xlane.xlu0 %785
        %787 = vadd.xlane.f32.xlu0 %v768
        %v788 = vpop.xlane.xlu0 %787
        %789 = vadd.xlane.f32.xlu0 %v769
        %v790 = vpop.xlane.xlu0 %789
        %791 = vadd.xlane.f32.xlu0 %v770
        %v792 = vpop.xlane.xlu0 %791
        %793 = vadd.xlane.f32.xlu0 %v771
        %v794 = vpop.xlane.xlu0 %793
        %795 = vadd.xlane.f32.xlu0 %v772
        %v796 = vpop.xlane.xlu0 %795
        %797 = vadd.xlane.f32.xlu0 %v773
        %v798 = vpop.xlane.xlu0 %797
        %799 = vadd.xlane.f32.xlu0 %v774
        %v800 = vpop.xlane.xlu0 %799
        %801 = vadd.xlane.f32.xlu0 %v775
        %v802 = vpop.xlane.xlu0 %801
        %803 = vadd.xlane.f32.xlu0 %v776
        %v804 = vpop.xlane.xlu0 %803
        %805 = vadd.xlane.f32.xlu0 %v777
        %v806 = vpop.xlane.xlu0 %805
        %807 = vadd.xlane.f32.xlu0 %v778
        %v808 = vpop.xlane.xlu0 %807
        %809 = vadd.xlane.f32.xlu0 %v779
        %v810 = vpop.xlane.xlu0 %809
        %811 = vadd.xlane.f32.xlu0 %v780
        %v812 = vpop.xlane.xlu0 %811
        %813 = vadd.xlane.f32.xlu0 %v781
        %v814 = vpop.xlane.xlu0 %813
        %815 = vadd.xlane.f32.xlu0 %v782
        %v816 = vpop.xlane.xlu0 %815
        %v817 = vrcp.pop 128.0
        %v818 = vmul.f32 %v786, %v817
        %v819 = vmul.f32 %v788, %v817
        %v820 = vmul.f32 %v790, %v817
        %v821 = vmul.f32 %v792, %v817
        %v822 = vmul.f32 %v794, %v817
        %v823 = vmul.f32 %v796, %v817
        %v824 = vmul.f32 %v798, %v817
        %v825 = vmul.f32 %v800, %v817
        %v826 = vmul.f32 %v802, %v817
        %v827 = vmul.f32 %v804, %v817
        %v828 = vmul.f32 %v806, %v817
        %v829 = vmul.f32 %v808, %v817
        %v830 = vmul.f32 %v810, %v817
        %v831 = vmul.f32 %v812, %v817
        %v832 = vmul.f32 %v814, %v817
        %v833 = vmul.f32 %v816, %v817
        %v834 = vsub.f32 %v767, %v818
        %v835 = vsub.f32 %v768, %v819
        %v836 = vsub.f32 %v769, %v820
        %v837 = vsub.f32 %v770, %v821
        %v838 = vsub.f32 %v771, %v822
        %v839 = vsub.f32 %v772, %v823
        %v840 = vsub.f32 %v773, %v824
        %v841 = vsub.f32 %v774, %v825
        %v842 = vsub.f32 %v775, %v826
        %v843 = vsub.f32 %v776, %v827
        %v844 = vsub.f32 %v777, %v828
        %v845 = vsub.f32 %v778, %v829
        %v846 = vsub.f32 %v779, %v830
        %v847 = vsub.f32 %v780, %v831
        %v848 = vsub.f32 %v781, %v832
        %v849 = vsub.f32 %v782, %v833
        %v850 = vmul.f32 %v834, %v834
        %v851 = vmul.f32 %v835, %v835
        %v852 = vmul.f32 %v836, %v836
        %v853 = vmul.f32 %v837, %v837
        %v854 = vmul.f32 %v838, %v838
        %v855 = vmul.f32 %v839, %v839
        %v856 = vmul.f32 %v840, %v840
        %v857 = vmul.f32 %v841, %v841
        %v858 = vmul.f32 %v842, %v842
        %v859 = vmul.f32 %v843, %v843
        %v860 = vmul.f32 %v844, %v844
        %v861 = vmul.f32 %v845, %v845
        %v862 = vmul.f32 %v846, %v846
        %v863 = vmul.f32 %v847, %v847
        %v864 = vmul.f32 %v848, %v848
        %v865 = vmul.f32 %v849, %v849
        %866 = vadd.xlane.f32.xlu0 %v850
        %v867 = vpop.xlane.xlu0 %866
        %868 = vadd.xlane.f32.xlu0 %v851
        %v869 = vpop.xlane.xlu0 %868
        %870 = vadd.xlane.f32.xlu0 %v852
        %v871 = vpop.xlane.xlu0 %870
        %872 = vadd.xlane.f32.xlu0 %v853
        %v873 = vpop.xlane.xlu0 %872
        %874 = vadd.xlane.f32.xlu0 %v854
        %v875 = vpop.xlane.xlu0 %874
        %876 = vadd.xlane.f32.xlu0 %v855
        %v877 = vpop.xlane.xlu0 %876
        %878 = vadd.xlane.f32.xlu0 %v856
        %v879 = vpop.xlane.xlu0 %878
        %880 = vadd.xlane.f32.xlu0 %v857
        %v881 = vpop.xlane.xlu0 %880
        %882 = vadd.xlane.f32.xlu0 %v858
        %v883 = vpop.xlane.xlu0 %882
        %884 = vadd.xlane.f32.xlu0 %v859
        %v885 = vpop.xlane.xlu0 %884
        %886 = vadd.xlane.f32.xlu0 %v860
        %v887 = vpop.xlane.xlu0 %886
        %888 = vadd.xlane.f32.xlu0 %v861
        %v889 = vpop.xlane.xlu0 %888
        %890 = vadd.xlane.f32.xlu0 %v862
        %v891 = vpop.xlane.xlu0 %890
        %892 = vadd.xlane.f32.xlu0 %v863
        %v893 = vpop.xlane.xlu0 %892
        %894 = vadd.xlane.f32.xlu0 %v864
        %v895 = vpop.xlane.xlu0 %894
        %896 = vadd.xlane.f32.xlu0 %v865
        %v897 = vpop.xlane.xlu0 %896
        %v898 = vmul.f32 %v867, %v817
        %v899 = vmul.f32 %v869, %v817
        %v900 = vmul.f32 %v871, %v817
        %v901 = vmul.f32 %v873, %v817
        %v902 = vmul.f32 %v875, %v817
        %v903 = vmul.f32 %v877, %v817
        %v904 = vmul.f32 %v879, %v817
        %v905 = vmul.f32 %v881, %v817
        %v906 = vmul.f32 %v883, %v817
        %v907 = vmul.f32 %v885, %v817
        %v908 = vmul.f32 %v887, %v817
        %v909 = vmul.f32 %v889, %v817
        %v910 = vmul.f32 %v891, %v817
        %v911 = vmul.f32 %v893, %v817
        %v912 = vmul.f32 %v895, %v817
        %v913 = vmul.f32 %v897, %v817
        %v914 = vadd.f32 %v898, 1e-12
        %v915 = vadd.f32 %v899, 1e-12
        %v916 = vadd.f32 %v900, 1e-12
        %v917 = vadd.f32 %v901, 1e-12
        %v918 = vadd.f32 %v902, 1e-12
        %v919 = vadd.f32 %v903, 1e-12
        %v920 = vadd.f32 %v904, 1e-12
        %v921 = vadd.f32 %v905, 1e-12
        %v922 = vadd.f32 %v906, 1e-12
        %v923 = vadd.f32 %v907, 1e-12
        %v924 = vadd.f32 %v908, 1e-12
        %v925 = vadd.f32 %v909, 1e-12
        %v926 = vadd.f32 %v910, 1e-12
        %v927 = vadd.f32 %v911, 1e-12
        %v928 = vadd.f32 %v912, 1e-12
        %v929 = vadd.f32 %v913, 1e-12
        %v930 = vrsqrt.pop %v914
        %v931 = vrsqrt.pop %v915
        %v932 = vrsqrt.pop %v916
        %v933 = vrsqrt.pop %v917
        %v934 = vrsqrt.pop %v918
        %v935 = vrsqrt.pop %v919
        %v936 = vrsqrt.pop %v920
        %v937 = vrsqrt.pop %v921
        %v938 = vrsqrt.pop %v922
        %v939 = vrsqrt.pop %v923
        %v940 = vrsqrt.pop %v924
        %v941 = vrsqrt.pop %v925
        %v942 = vrsqrt.pop %v926
        %v943 = vrsqrt.pop %v927
        %v944 = vrsqrt.pop %v928
        %v945 = vrsqrt.pop %v929
        %v946 = vmul.f32 %v834, %v930
        %v947 = vmul.f32 %v835, %v931
        %v948 = vmul.f32 %v836, %v932
        %v949 = vmul.f32 %v837, %v933
        %v950 = vmul.f32 %v838, %v934
        %v951 = vmul.f32 %v839, %v935
        %v952 = vmul.f32 %v840, %v936
        %v953 = vmul.f32 %v841, %v937
        %v954 = vmul.f32 %v842, %v938
        %v955 = vmul.f32 %v843, %v939
        %v956 = vmul.f32 %v844, %v940
        %v957 = vmul.f32 %v845, %v941
        %v958 = vmul.f32 %v846, %v942
        %v959 = vmul.f32 %v847, %v943
        %v960 = vmul.f32 %v848, %v944
        %v961 = vmul.f32 %v849, %v945
        %v963 = vlaneseq
        %v964 = vshrl.u32 %v963, 7
        %v965 = vsub.s32 0, %v964
        %v966 = vrot.slane %v783, %v965
        %v968 = vmul.f32 %v946, %v966
        %v969 = vmul.f32 %v947, %v966
        %v970 = vmul.f32 %v948, %v966
        %v971 = vmul.f32 %v949, %v966
        %v972 = vmul.f32 %v950, %v966
        %v973 = vmul.f32 %v951, %v966
        %v974 = vmul.f32 %v952, %v966
        %v975 = vmul.f32 %v953, %v966
        %v976 = vmul.f32 %v954, %v966
        %v977 = vmul.f32 %v955, %v966
        %v978 = vmul.f32 %v956, %v966
        %v979 = vmul.f32 %v957, %v966
        %v980 = vmul.f32 %v958, %v966
        %v981 = vmul.f32 %v959, %v966
        %v982 = vmul.f32 %v960, %v966
        %v983 = vmul.f32 %v961, %v966
        %v985 = vlaneseq
        %v986 = vshrl.u32 %v985, 7
        %v987 = vsub.s32 0, %v986
        %v988 = vrot.slane %v784, %v987
        %v990 = vadd.f32 %v968, %v988
        %v991 = vadd.f32 %v969, %v988
        %v992 = vadd.f32 %v970, %v988
        %v993 = vadd.f32 %v971, %v988
        %v994 = vadd.f32 %v972, %v988
        %v995 = vadd.f32 %v973, %v988
        %v996 = vadd.f32 %v974, %v988
        %v997 = vadd.f32 %v975, %v988
        %v998 = vadd.f32 %v976, %v988
        %v999 = vadd.f32 %v977, %v988
        %v1000 = vadd.f32 %v978, %v988
        %v1001 = vadd.f32 %v979, %v988
        %v1002 = vadd.f32 %v980, %v988
        %v1003 = vadd.f32 %v981, %v988
        %v1004 = vadd.f32 %v982, %v988
        %v1005 = vadd.f32 %v983, %v988
        %1006 = vst [vmem:[#allocation2] sm:$0xff] %v990
        %1007 = vst [vmem:[#allocation2 + $0x8] sm:$0xff] %v991
        %1008 = vst [vmem:[#allocation2 + $0x10] sm:$0xff] %v992
        %1009 = vst [vmem:[#allocation2 + $0x18] sm:$0xff] %v993
        %1010 = vst [vmem:[#allocation2 + $0x20] sm:$0xff] %v994
        %1011 = vst [vmem:[#allocation2 + $0x28] sm:$0xff] %v995
        %1012 = vst [vmem:[#allocation2 + $0x30] sm:$0xff] %v996
        %1013 = vst [vmem:[#allocation2 + $0x38] sm:$0xff] %v997
        %1014 = vst [vmem:[#allocation2 + $0x40] sm:$0xff] %v998
        %1015 = vst [vmem:[#allocation2 + $0x48] sm:$0xff] %v999
        %1016 = vst [vmem:[#allocation2 + $0x50] sm:$0xff] %v1000
        %1017 = vst [vmem:[#allocation2 + $0x58] sm:$0xff] %v1001
        %1018 = vst [vmem:[#allocation2 + $0x60] sm:$0xff] %v1002
        %1019 = vst [vmem:[#allocation2 + $0x68] sm:$0xff] %v1003
        %1020 = vst [vmem:[#allocation2 + $0x70] sm:$0xff] %v1004
        %1021 = vst [vmem:[#allocation2 + $0x78] sm:$0xff] %v1005
      $region92: #{bert_forward.1} parent=87 // pred_fallthru
        _
      %v1022 = vld [vmem:[#allocation2] sm:$0xff]
      %v1023 = vld [vmem:[#allocation2 + $0x8] sm:$0xff]
      %v1024 = vld [vmem:[#allocation2 + $0x10] sm:$0xff]
      %v1025 = vld [vmem:[#allocation2 + $0x18] sm:$0xff]
      %v1026 = vld [vmem:[#allocation2 + $0x20] sm:$0xff]
      %v1027 = vld [vmem:[#allocation2 + $0x28] sm:$0xff]
      %v1028 = vld [vmem:[#allocation2 + $0x30] sm:$0xff]
      %v1029 = vld [vmem:[#allocation2 + $0x38] sm:$0xff]
      %v1030 = vld [vmem:[#allocation2 + $0x40] sm:$0xff]
      %v1031 = vld [vmem:[#allocation2 + $0x48] sm:$0xff]
      %v1032 = vld [vmem:[#allocation2 + $0x50] sm:$0xff]
      %v1033 = vld [vmem:[#allocation2 + $0x58] sm:$0xff]
      %v1034 = vld [vmem:[#allocation2 + $0x60] sm:$0xff]
      %v1035 = vld [vmem:[#allocation2 + $0x68] sm:$0xff]
      %v1036 = vld [vmem:[#allocation2 + $0x70] sm:$0xff]
      %v1037 = vld [vmem:[#allocation2 + $0x78] sm:$0xff]
      %v1038 = vpack.c.bf16 %v1023, %v1022
      %v1039 = vpack.c.bf16 %v1025, %v1024
      %v1040 = vpack.c.bf16 %v1027, %v1026
      %v1041 = vpack.c.bf16 %v1029, %v1028
      %v1042 = vpack.c.bf16 %v1031, %v1030
      %v1043 = vpack.c.bf16 %v1033, %v1032
      %v1044 = vpack.c.bf16 %v1035, %v1034
      %v1045 = vpack.c.bf16 %v1037, %v1036
      %v1046 = vld [vmem:[%s714] sm:$0xff]
      %v1047 = vld [vmem:[%s714 + $0x8] sm:$0xf]
      %v1048 = vld [vmem:[%s714 + $0xc] sm:$0xff]
      %v1049 = vld [vmem:[%s714 + $0x14] sm:$0xf]
      %v1050 = vld [vmem:[%s714 + $0x18] sm:$0xff]
      %v1051 = vld [vmem:[%s714 + $0x20] sm:$0xf]
      %v1052 = vld [vmem:[%s714 + $0x24] sm:$0xff]
      %v1053 = vld [vmem:[%s714 + $0x2c] sm:$0xf]
      %v1054 = vld [vmem:[%s714 + $0x30] sm:$0xff]
      %v1055 = vld [vmem:[%s714 + $0x38] sm:$0xf]
      %v1056 = vld [vmem:[%s714 + $0x3c] sm:$0xff]
      %v1057 = vld [vmem:[%s714 + $0x44] sm:$0xf]
      %v1058 = vld [vmem:[%s714 + $0x48] sm:$0xff]
      %v1059 = vld [vmem:[%s714 + $0x50] sm:$0xf]
      %v1060 = vld [vmem:[%s714 + $0x54] sm:$0xff]
      %v1061 = vld [vmem:[%s714 + $0x5c] sm:$0xf]
      %v1062 = vld [vmem:[%s714 + $0x60] sm:$0xff]
      %v1063 = vld [vmem:[%s714 + $0x68] sm:$0xf]
      %v1064 = vld [vmem:[%s714 + $0x6c] sm:$0xff]
      %v1065 = vld [vmem:[%s714 + $0x74] sm:$0xf]
      %v1066 = vld [vmem:[%s714 + $0x78] sm:$0xff]
      %v1067 = vld [vmem:[%s714 + $0x80] sm:$0xf]
      %v1068 = vld [vmem:[%s714 + $0x84] sm:$0xff]
      %v1069 = vld [vmem:[%s714 + $0x8c] sm:$0xf]
      %v1070 = vld [vmem:[%s714 + $0x90] sm:$0xff]
      %v1071 = vld [vmem:[%s714 + $0x98] sm:$0xf]
      %v1072 = vld [vmem:[%s714 + $0x9c] sm:$0xff]
      %v1073 = vld [vmem:[%s714 + $0xa4] sm:$0xf]
      %v1074 = vld [vmem:[%s714 + $0xa8] sm:$0xff]
      %v1075 = vld [vmem:[%s714 + $0xb0] sm:$0xf]
      %v1076 = vld [vmem:[%s714 + $0xb4] sm:$0xff]
      %v1077 = vld [vmem:[%s714 + $0xbc] sm:$0xf]
      %v1078 = vld [vmem:[%s718] sm:$0x7]
      %v1080 = vlaneseq
      %v1081 = vshrl.u32 %v1080, 7
      %v1082 = vsub.s32 0, %v1081
      %v1083 = vrot.slane %v1078, %v1082
      %v1084 = vlaneseq
      %v1085 = vshrl.u32 %v1084, 7
      %v1086 = vsub.s32 1, %v1085
      %v1087 = vrot.slane %v1078, %v1086
      %v1088 = vlaneseq
      %v1089 = vshrl.u32 %v1088, 7
      %v1090 = vsub.s32 2, %v1089
      %v1091 = vrot.slane %v1078, %v1090
      %v1127 = vunpack.c.l.b16 %v1046
      %v1128 = vunpack.c.h.b16 %v1046
      %v1129 = vunpack.c.l.b16 %v1047
      %v1130 = vunpack.c.l.b16 %v1048
      %v1131 = vunpack.c.h.b16 %v1048
      %v1132 = vunpack.c.l.b16 %v1049
      %v1133 = vunpack.c.l.b16 %v1050
      %v1134 = vunpack.c.h.b16 %v1050
      %v1135 = vunpack.c.l.b16 %v1051
      %v1136 = vunpack.c.l.b16 %v1052
      %v1137 = vunpack.c.h.b16 %v1052
      %v1138 = vunpack.c.l.b16 %v1053
      %v1139 = vunpack.c.l.b16 %v1054
      %v1140 = vunpack.c.h.b16 %v1054
      %v1141 = vunpack.c.l.b16 %v1055
      %v1142 = vunpack.c.l.b16 %v1056
      %v1143 = vunpack.c.h.b16 %v1056
      %v1144 = vunpack.c.l.b16 %v1057
      %v1145 = vunpack.c.l.b16 %v1058
      %v1146 = vunpack.c.h.b16 %v1058
      %v1147 = vunpack.c.l.b16 %v1059
      %v1148 = vunpack.c.l.b16 %v1060
      %v1149 = vunpack.c.h.b16 %v1060
      %v1150 = vunpack.c.l.b16 %v1061
      %v1151 = vunpack.c.l.b16 %v1062
      %v1152 = vunpack.c.h.b16 %v1062
      %v1153 = vunpack.c.l.b16 %v1063
      %v1154 = vunpack.c.l.b16 %v1064
      %v1155 = vunpack.c.h.b16 %v1064
      %v1156 = vunpack.c.l.b16 %v1065
      %v1157 = vunpack.c.l.b16 %v1066
      %v1158 = vunpack.c.h.b16 %v1066
      %v1159 = vunpack.c.l.b16 %v1067
      %v1160 = vunpack.c.l.b16 %v1068
      %v1161 = vunpack.c.h.b16 %v1068
      %v1162 = vunpack.c.l.b16 %v1069
      %v1163 = vunpack.c.l.b16 %v1070
      %v1164 = vunpack.c.h.b16 %v1070
      %v1165 = vunpack.c.l.b16 %v1071
      %v1166 = vunpack.c.l.b16 %v1072
      %v1167 = vunpack.c.h.b16 %v1072
      %v1168 = vunpack.c.l.b16 %v1073
      %v1169 = vunpack.c.l.b16 %v1074
      %v1170 = vunpack.c.h.b16 %v1074
      %v1171 = vunpack.c.l.b16 %v1075
      %v1172 = vunpack.c.l.b16 %v1076
      %v1173 = vunpack.c.h.b16 %v1076
      %v1174 = vunpack.c.l.b16 %v1077
      %v1175 = vpack.c.b16 %v1130, %v1127
      %v1176 = vpack.c.b16 %v1131, %v1128
      %v1177 = vpack.c.b16 %v1132, %v1129
      %v1178 = vpack.c.b16 %v1136, %v1133
      %v1179 = vpack.c.b16 %v1137, %v1134
      %v1180 = vpack.c.b16 %v1138, %v1135
      %v1181 = vpack.c.b16 %v1142, %v1139
      %v1182 = vpack.c.b16 %v1143, %v1140
      %v1183 = vpack.c.b16 %v1144, %v1141
      %v1184 = vpack.c.b16 %v1148, %v1145
      %v1185 = vpack.c.b16 %v1149, %v1146
      %v1186 = vpack.c.b16 %v1150, %v1147
      %v1187 = vpack.c.b16 %v1154, %v1151
      %v1188 = vpack.c.b16 %v1155, %v1152
      %v1189 = vpack.c.b16 %v1156, %v1153
      %v1190 = vpack.c.b16 %v1160, %v1157
      %v1191 = vpack.c.b16 %v1161, %v1158
      %v1192 = vpack.c.b16 %v1162, %v1159
      %v1193 = vpack.c.b16 %v1166, %v1163
      %v1194 = vpack.c.b16 %v1167, %v1164
      %v1195 = vpack.c.b16 %v1168, %v1165
      %v1196 = vpack.c.b16 %v1172, %v1169
      %v1197 = vpack.c.b16 %v1173, %v1170
      %v1198 = vpack.c.b16 %v1174, %v1171
      %1223 = vmatprep.subr.bf16.mxu0 %v1176
      %1224 = vmatpush1.bf16.msra.mxu0 %v1175
      %1225 = vmatprep.subr.bf16.mxu0 %v1179
      %1226 = vmatpush1.bf16.msra.mxu0 %v1178
      %1227 = vmatprep.subr.bf16.mxu0 %v1182
      %1228 = vmatpush1.bf16.msra.mxu0 %v1181
      %1229 = vmatprep.subr.bf16.mxu0 %v1185
      %1230 = vmatpush1.bf16.msra.mxu0 %v1184
      %1231 = vmatprep.subr.bf16.mxu0 %v1188
      %1232 = vmatpush1.bf16.msra.mxu0 %v1187
      %1233 = vmatprep.subr.bf16.mxu0 %v1191
      %1234 = vmatpush1.bf16.msra.mxu0 %v1190
      %1235 = vmatprep.subr.bf16.mxu0 %v1194
      %1236 = vmatpush1.bf16.msra.mxu0 %v1193
      %1237 = vmatprep.subr.bf16.mxu0 %v1197
      %1238 = vmatpush1.bf16.msra.mxu0 %v1196
      %1239 = vmatprep.subr.bf16.mxu0 0
      %1240 = vmatpush1.bf16.msra.mxu0 0
      %1241 = vmatprep.subr.bf16.mxu0 0
      %1242 = vmatpush1.bf16.msra.mxu0 0
      %1243 = vmatprep.subr.bf16.mxu0 0
      %1244 = vmatpush1.bf16.msra.mxu0 0
      %1245 = vmatprep.subr.bf16.mxu0 0
      %1246 = vmatpush1.bf16.msra.mxu0 0
      %1247 = vmatprep.subr.bf16.mxu0 0
      %1248 = vmatpush1.bf16.msra.mxu0 0
      %1249 = vmatprep.subr.bf16.mxu0 0
      %1250 = vmatpush1.bf16.msra.mxu0 0
      %1251 = vmatprep.subr.bf16.mxu0 0
      %1252 = vmatpush1.bf16.msra.mxu0 0
      %1253 = vmatprep.subr.bf16.mxu0 0
      %1254 = vmatpush1.bf16.msra.mxu0 0
      %1255 = vmatprep.mubr.bf16.mxu0 0
      %1256 = vmatmul.mubr.bf16.gmra.mrb[0].mxu0 %v1038
      %v1257 = vpop.f32.mrb[0].mxu0
      %v1258 = vadd.f32 %v1083, %v1257
      %v1259 = vpop.f32.mrb[0].mxu0
      %v1260 = vadd.f32 %v1087, %v1259
      %v1261 = vpop.f32.mrb[0].mxu0
      %v1262 = vadd.f32 %v1083, %v1261
      %v1263 = vpop.f32.mrb[0].mxu0
      %v1264 = vadd.f32 %v1087, %v1263
      %1265 = vmatprep.mubr.bf16.mxu0 0
      %1266 = vmatmul.mubr.bf16.gmra.mrb[0].mxu0 %v1039
      %v1267 = vpop.f32.mrb[0].mxu0
      %v1268 = vadd.f32 %v1083, %v1267
      %v1269 = vpop.f32.mrb[0].mxu0
      %v1270 = vadd.f32 %v1087, %v1269
      %v1271 = vpop.f32.mrb[0].mxu0
      %v1272 = vadd.f32 %v1083, %v1271
      %v1273 = vpop.f32.mrb[0].mxu0
      %v1274 = vadd.f32 %v1087, %v1273
      %1275 = vmatprep.mubr.bf16.mxu0 0
      %1276 = vmatmul.mubr.bf16.gmra.mrb[0].mxu0 %v1040
      %v1277 = vpop.f32.mrb[0].mxu0
      %v1278 = vadd.f32 %v1083, %v1277
      %v1279 = vpop.f32.mrb[0].mxu0
      %v1280 = vadd.f32 %v1087, %v1279
      %v1281 = vpop.f32.mrb[0].mxu0
      %v1282 = vadd.f32 %v1083, %v1281
      %v1283 = vpop.f32.mrb[0].mxu0
      %v1284 = vadd.f32 %v1087, %v1283
      %1285 = vmatprep.mubr.bf16.mxu0 0
      %1286 = vmatmul.mubr.bf16.gmra.mrb[0].mxu0 %v1041
      %v1287 = vpop.f32.mrb[0].mxu0
      %v1288 = vadd.f32 %v1083, %v1287
      %v1289 = vpop.f32.mrb[0].mxu0
      %v1290 = vadd.f32 %v1087, %v1289
      %v1291 = vpop.f32.mrb[0].mxu0
      %v1292 = vadd.f32 %v1083, %v1291
      %v1293 = vpop.f32.mrb[0].mxu0
      %v1294 = vadd.f32 %v1087, %v1293
      %1295 = vmatprep.mubr.bf16.mxu0 0
      %1296 = vmatmul.mubr.bf16.gmra.mrb[0].mxu0 %v1042
      %v1297 = vpop.f32.mrb[0].mxu0
      %v1298 = vadd.f32 %v1083, %v1297
      %v1299 = vpop.f32.mrb[0].mxu0
      %v1300 = vadd.f32 %v1087, %v1299
      %v1301 = vpop.f32.mrb[0].mxu0
      %v1302 = vadd.f32 %v1083, %v1301
      %v1303 = vpop.f32.mrb[0].mxu0
      %v1304 = vadd.f32 %v1087, %v1303
      %1305 = vmatprep.mubr.bf16.mxu0 0
      %1306 = vmatmul.mubr.bf16.gmra.mrb[0].mxu0 %v1043
      %v1307 = vpop.f32.mrb[0].mxu0
      %v1308 = vadd.f32 %v1083, %v1307
      %v1309 = vpop.f32.mrb[0].mxu0
      %v1310 = vadd.f32 %v1087, %v1309
      %v1311 = vpop.f32.mrb[0].mxu0
      %v1312 = vadd.f32 %v1083, %v1311
      %v1313 = vpop.f32.mrb[0].mxu0
      %v1314 = vadd.f32 %v1087, %v1313
      %1315 = vmatprep.mubr.bf16.mxu0 0
      %1316 = vmatmul.mubr.bf16.gmra.mrb[0].mxu0 %v1044
      %v1317 = vpop.f32.mrb[0].mxu0
      %v1318 = vadd.f32 %v1083, %v1317
      %v1319 = vpop.f32.mrb[0].mxu0
      %v1320 = vadd.f32 %v1087, %v1319
      %v1321 = vpop.f32.mrb[0].mxu0
      %v1322 = vadd.f32 %v1083, %v1321
      %v1323 = vpop.f32.mrb[0].mxu0
      %v1324 = vadd.f32 %v1087, %v1323
      %1325 = vmatprep.mubr.bf16.mxu0 0
      %1326 = vmatmul.mubr.bf16.gmra.mrb[0].mxu0 %v1045
      %v1327 = vpop.f32.mrb[0].mxu0
      %v1328 = vadd.f32 %v1083, %v1327
      %v1329 = vpop.f32.mrb[0].mxu0
      %v1330 = vadd.f32 %v1087, %v1329
      %v1331 = vpop.f32.mrb[0].mxu0
      %v1332 = vadd.f32 %v1083, %v1331
      %v1333 = vpop.f32.mrb[0].mxu0
      %v1334 = vadd.f32 %v1087, %v1333
      %1335 = vdwg.mxu0
      %1336 = vmatprep.subr.bf16.mxu0 0
      %1337 = vmatpush1.bf16.msra.mxu0 %v1177
      %1338 = vmatprep.subr.bf16.mxu0 0
      %1339 = vmatpush1.bf16.msra.mxu0 %v1180
      %1340 = vmatprep.subr.bf16.mxu0 0
      %1341 = vmatpush1.bf16.msra.mxu0 %v1183
      %1342 = vmatprep.subr.bf16.mxu0 0
      %1343 = vmatpush1.bf16.msra.mxu0 %v1186
      %1344 = vmatprep.subr.bf16.mxu0 0
      %1345 = vmatpush1.bf16.msra.mxu0 %v1189
      %1346 = vmatprep.subr.bf16.mxu0 0
      %1347 = vmatpush1.bf16.msra.mxu0 %v1192
      %1348 = vmatprep.subr.bf16.mxu0 0
      %1349 = vmatpush1.bf16.msra.mxu0 %v1195
      %1350 = vmatprep.subr.bf16.mxu0 0
      %1351 = vmatpush1.bf16.msra.mxu0 %v1198
      %1352 = vmatprep.subr.bf16.mxu0 0
      %1353 = vmatpush1.bf16.msra.mxu0 0
      %1354 = vmatprep.subr.bf16.mxu0 0
      %1355 = vmatpush1.bf16.msra.mxu0 0
      %1356 = vmatprep.subr.bf16.mxu0 0
      %1357 = vmatpush1.bf16.msra.mxu0 0
      %1358 = vmatprep.subr.bf16.mxu0 0
      %1359 = vmatpush1.bf16.msra.mxu0 0
      %1360 = vmatprep.subr.bf16.mxu0 0
      %1361 = vmatpush1.bf16.msra.mxu0 0
      %1362 = vmatprep.subr.bf16.mxu0 0
      %1363 = vmatpush1.bf16.msra.mxu0 0
      %1364 = vmatprep.subr.bf16.mxu0 0
      %1365 = vmatpush1.bf16.msra.mxu0 0
      %1366 = vmatprep.subr.bf16.mxu0 0
      %1367 = vmatpush1.bf16.msra.mxu0 0
      %1368 = vmatprep.mubr.bf16.mxu0 0
      %1369 = vmatmul.mubr.bf16.gmra.mrb[0].mxu0 %v1038
      %v1370 = vpop.f32.mrb[0].mxu0
      %v1371 = vadd.f32 %v1091, %v1370
      %v1372 = vpop.f32.mrb[0].mxu0
      %v1373 = vpop.f32.mrb[0].mxu0
      %v1374 = vadd.f32 %v1091, %v1373
      %v1375 = vpop.f32.mrb[0].mxu0
      %1376 = vmatprep.mubr.bf16.mxu0 0
      %1377 = vmatmul.mubr.bf16.gmra.mrb[0].mxu0 %v1039
      %v1378 = vpop.f32.mrb[0].mxu0
      %v1379 = vadd.f32 %v1091, %v1378
      %v1380 = vpop.f32.mrb[0].mxu0
      %v1381 = vpop.f32.mrb[0].mxu0
      %v1382 = vadd.f32 %v1091, %v1381
      %v1383 = vpop.f32.mrb[0].mxu0
      %1384 = vmatprep.mubr.bf16.mxu0 0
      %1385 = vmatmul.mubr.bf16.gmra.mrb[0].mxu0 %v1040
      %v1386 = vpop.f32.mrb[0].mxu0
      %v1387 = vadd.f32 %v1091, %v1386
      %v1388 = vpop.f32.mrb[0].mxu0
      %v1389 = vpop.f32.mrb[0].mxu0
      %v1390 = vadd.f32 %v1091, %v1389
      %v1391 = vpop.f32.mrb[0].mxu0
      %1392 = vmatprep.mubr.bf16.mxu0 0
      %1393 = vmatmul.mubr.bf16.gmra.mrb[0].mxu0 %v1041
      %v1394 = vpop.f32.mrb[0].mxu0
      %v1395 = vadd.f32 %v1091, %v1394
      %v1396 = vpop.f32.mrb[0].mxu0
      %v1397 = vpop.f32.mrb[0].mxu0
      %v1398 = vadd.f32 %v1091, %v1397
      %v1399 = vpop.f32.mrb[0].mxu0
      %1400 = vmatprep.mubr.bf16.mxu0 0
      %1401 = vmatmul.mubr.bf16.gmra.mrb[0].mxu0 %v1042
      %v1402 = vpop.f32.mrb[0].mxu0
      %v1403 = vadd.f32 %v1091, %v1402
      %v1404 = vpop.f32.mrb[0].mxu0
      %v1405 = vpop.f32.mrb[0].mxu0
      %v1406 = vadd.f32 %v1091, %v1405
      %v1407 = vpop.f32.mrb[0].mxu0
      %1408 = vmatprep.mubr.bf16.mxu0 0
      %1409 = vmatmul.mubr.bf16.gmra.mrb[0].mxu0 %v1043
      %v1410 = vpop.f32.mrb[0].mxu0
      %v1411 = vadd.f32 %v1091, %v1410
      %v1412 = vpop.f32.mrb[0].mxu0
      %v1413 = vpop.f32.mrb[0].mxu0
      %v1414 = vadd.f32 %v1091, %v1413
      %v1415 = vpop.f32.mrb[0].mxu0
      %1416 = vmatprep.mubr.bf16.mxu0 0
      %1417 = vmatmul.mubr.bf16.gmra.mrb[0].mxu0 %v1044
      %v1418 = vpop.f32.mrb[0].mxu0
      %v1419 = vadd.f32 %v1091, %v1418
      %v1420 = vpop.f32.mrb[0].mxu0
      %v1421 = vpop.f32.mrb[0].mxu0
      %v1422 = vadd.f32 %v1091, %v1421
      %v1423 = vpop.f32.mrb[0].mxu0
      %1424 = vmatprep.mubr.bf16.mxu0 0
      %1425 = vmatmul.mubr.bf16.gmra.mrb[0].mxu0 %v1045
      %v1426 = vpop.f32.mrb[0].mxu0
      %v1427 = vadd.f32 %v1091, %v1426
      %v1428 = vpop.f32.mrb[0].mxu0
      %v1429 = vpop.f32.mrb[0].mxu0
      %v1430 = vadd.f32 %v1091, %v1429
      %v1431 = vpop.f32.mrb[0].mxu0
      %1432 = vdwg.mxu0
      %v1433 = vpack.c.bf16 %v1262, %v1258
      %v1434 = vpack.c.bf16 %v1264, %v1260
      %v1435 = vpack.c.bf16 %v1374, %v1371
      %v1436 = vpack.c.bf16 %v1272, %v1268
      %v1437 = vpack.c.bf16 %v1274, %v1270
      %v1438 = vpack.c.bf16 %v1382, %v1379
      %v1439 = vpack.c.bf16 %v1282, %v1278
      %v1440 = vpack.c.bf16 %v1284, %v1280
      %v1441 = vpack.c.bf16 %v1390, %v1387
      %v1442 = vpack.c.bf16 %v1292, %v1288
      %v1443 = vpack.c.bf16 %v1294, %v1290
      %v1444 = vpack.c.bf16 %v1398, %v1395
      %v1445 = vpack.c.bf16 %v1302, %v1298
      %v1446 = vpack.c.bf16 %v1304, %v1300
      %v1447 = vpack.c.bf16 %v1406, %v1403
      %v1448 = vpack.c.bf16 %v1312, %v1308
      %v1449 = vpack.c.bf16 %v1314, %v1310
      %v1450 = vpack.c.bf16 %v1414, %v1411
      %v1451 = vpack.c.bf16 %v1322, %v1318
      %v1452 = vpack.c.bf16 %v1324, %v1320
      %v1453 = vpack.c.bf16 %v1422, %v1419
      %v1454 = vpack.c.bf16 %v1332, %v1328
      %v1455 = vpack.c.bf16 %v1334, %v1330
      %v1456 = vpack.c.bf16 %v1430, %v1427
      %1465 = vrot.lane.b32.xlu0 %v1433, 96
      %v1466 = vpop.permute.xlu0 %1465
      %1467 = vrot.lane.b32.xlu0 %v1436, 96
      %v1468 = vpop.permute.xlu0 %1467
      %1469 = vrot.lane.b32.xlu0 %v1439, 96
      %v1470 = vpop.permute.xlu0 %1469
      %1471 = vrot.lane.b32.xlu0 %v1442, 96
      %v1472 = vpop.permute.xlu0 %1471
      %1473 = vrot.lane.b32.xlu0 %v1445, 96
      %v1474 = vpop.permute.xlu0 %1473
      %1475 = vrot.lane.b32.xlu0 %v1448, 96
      %v1476 = vpop.permute.xlu0 %1475
      %1477 = vrot.lane.b32.xlu0 %v1451, 96
      %v1478 = vpop.permute.xlu0 %1477
      %1479 = vrot.lane.b32.xlu0 %v1454, 96
      %v1480 = vpop.permute.xlu0 %1479
      %1481 = vrot.lane.b32.xlu0 %v1433, 64
      %v1482 = vpop.permute.xlu0 %1481
      %1483 = vrot.lane.b32.xlu0 %v1436, 64
      %v1484 = vpop.permute.xlu0 %1483
      %1485 = vrot.lane.b32.xlu0 %v1439, 64
      %v1486 = vpop.permute.xlu0 %1485
      %1487 = vrot.lane.b32.xlu0 %v1442, 64
      %v1488 = vpop.permute.xlu0 %1487
      %1489 = vrot.lane.b32.xlu0 %v1445, 64
      %v1490 = vpop.permute.xlu0 %1489
      %1491 = vrot.lane.b32.xlu0 %v1448, 64
      %v1492 = vpop.permute.xlu0 %1491
      %1493 = vrot.lane.b32.xlu0 %v1451, 64
      %v1494 = vpop.permute.xlu0 %1493
      %1495 = vrot.lane.b32.xlu0 %v1454, 64
      %v1496 = vpop.permute.xlu0 %1495
      %1497 = vrot.lane.b32.xlu0 %v1433, 32
      %v1498 = vpop.permute.xlu0 %1497
      %1499 = vrot.lane.b32.xlu0 %v1436, 32
      %v1500 = vpop.permute.xlu0 %1499
      %1501 = vrot.lane.b32.xlu0 %v1439, 32
      %v1502 = vpop.permute.xlu0 %1501
      %1503 = vrot.lane.b32.xlu0 %v1442, 32
      %v1504 = vpop.permute.xlu0 %1503
      %1505 = vrot.lane.b32.xlu0 %v1445, 32
      %v1506 = vpop.permute.xlu0 %1505
      %1507 = vrot.lane.b32.xlu0 %v1448, 32
      %v1508 = vpop.permute.xlu0 %1507
      %1509 = vrot.lane.b32.xlu0 %v1451, 32
      %v1510 = vpop.permute.xlu0 %1509
      %1511 = vrot.lane.b32.xlu0 %v1454, 32
      %v1512 = vpop.permute.xlu0 %1511
      %1521 = vrot.lane.b32.xlu0 %v1434, 96
      %v1522 = vpop.permute.xlu0 %1521
      %1523 = vrot.lane.b32.xlu0 %v1437, 96
      %v1524 = vpop.permute.xlu0 %1523
      %1525 = vrot.lane.b32.xlu0 %v1440, 96
      %v1526 = vpop.permute.xlu0 %1525
      %1527 = vrot.lane.b32.xlu0 %v1443, 96
      %v1528 = vpop.permute.xlu0 %1527
      %1529 = vrot.lane.b32.xlu0 %v1446, 96
      %v1530 = vpop.permute.xlu0 %1529
      %1531 = vrot.lane.b32.xlu0 %v1449, 96
      %v1532 = vpop.permute.xlu0 %1531
      %1533 = vrot.lane.b32.xlu0 %v1452, 96
      %v1534 = vpop.permute.xlu0 %1533
      %1535 = vrot.lane.b32.xlu0 %v1455, 96
      %v1536 = vpop.permute.xlu0 %1535
      %1537 = vrot.lane.b32.xlu0 %v1434, 64
      %v1538 = vpop.permute.xlu0 %1537
      %1539 = vrot.lane.b32.xlu0 %v1437, 64
      %v1540 = vpop.permute.xlu0 %1539
      %1541 = vrot.lane.b32.xlu0 %v1440, 64
      %v1542 = vpop.permute.xlu0 %1541
      %1543 = vrot.lane.b32.xlu0 %v1443, 64
      %v1544 = vpop.permute.xlu0 %1543
      %1545 = vrot.lane.b32.xlu0 %v1446, 64
      %v1546 = vpop.permute.xlu0 %1545
      %1547 = vrot.lane.b32.xlu0 %v1449, 64
      %v1548 = vpop.permute.xlu0 %1547
      %1549 = vrot.lane.b32.xlu0 %v1452, 64
      %v1550 = vpop.permute.xlu0 %1549
      %1551 = vrot.lane.b32.xlu0 %v1455, 64
      %v1552 = vpop.permute.xlu0 %1551
      %1553 = vrot.lane.b32.xlu0 %v1434, 32
      %v1554 = vpop.permute.xlu0 %1553
      %1555 = vrot.lane.b32.xlu0 %v1437, 32
      %v1556 = vpop.permute.xlu0 %1555
      %1557 = vrot.lane.b32.xlu0 %v1440, 32
      %v1558 = vpop.permute.xlu0 %1557
      %1559 = vrot.lane.b32.xlu0 %v1443, 32
      %v1560 = vpop.permute.xlu0 %1559
      %1561 = vrot.lane.b32.xlu0 %v1446, 32
      %v1562 = vpop.permute.xlu0 %1561
      %1563 = vrot.lane.b32.xlu0 %v1449, 32
      %v1564 = vpop.permute.xlu0 %1563
      %1565 = vrot.lane.b32.xlu0 %v1452, 32
      %v1566 = vpop.permute.xlu0 %1565
      %1567 = vrot.lane.b32.xlu0 %v1455, 32
      %v1568 = vpop.permute.xlu0 %1567
      %1577 = vrot.lane.b32.xlu0 %v1435, 96
      %v1578 = vpop.permute.xlu0 %1577
      %1579 = vrot.lane.b32.xlu0 %v1438, 96
      %v1580 = vpop.permute.xlu0 %1579
      %1581 = vrot.lane.b32.xlu0 %v1441, 96
      %v1582 = vpop.permute.xlu0 %1581
      %1583 = vrot.lane.b32.xlu0 %v1444, 96
      %v1584 = vpop.permute.xlu0 %1583
      %1585 = vrot.lane.b32.xlu0 %v1447, 96
      %v1586 = vpop.permute.xlu0 %1585
      %1587 = vrot.lane.b32.xlu0 %v1450, 96
      %v1588 = vpop.permute.xlu0 %1587
      %1589 = vrot.lane.b32.xlu0 %v1453, 96
      %v1590 = vpop.permute.xlu0 %1589
      %1591 = vrot.lane.b32.xlu0 %v1456, 96
      %v1592 = vpop.permute.xlu0 %1591
      %1601 = vrot.lane.b32.xlu0 %v1435, 64
      %v1602 = vpop.permute.xlu0 %1601
      %1603 = vrot.lane.b32.xlu0 %v1438, 64
      %v1604 = vpop.permute.xlu0 %1603
      %1605 = vrot.lane.b32.xlu0 %v1441, 64
      %v1606 = vpop.permute.xlu0 %1605
      %1607 = vrot.lane.b32.xlu0 %v1444, 64
      %v1608 = vpop.permute.xlu0 %1607
      %1609 = vrot.lane.b32.xlu0 %v1447, 64
      %v1610 = vpop.permute.xlu0 %1609
      %1611 = vrot.lane.b32.xlu0 %v1450, 64
      %v1612 = vpop.permute.xlu0 %1611
      %1613 = vrot.lane.b32.xlu0 %v1453, 64
      %v1614 = vpop.permute.xlu0 %1613
      %1615 = vrot.lane.b32.xlu0 %v1456, 64
      %v1616 = vpop.permute.xlu0 %1615
      %1625 = vrot.lane.b32.xlu0 %v1435, 32
      %v1626 = vpop.permute.xlu0 %1625
      %1627 = vrot.lane.b32.xlu0 %v1438, 32
      %v1628 = vpop.permute.xlu0 %1627
      %1629 = vrot.lane.b32.xlu0 %v1441, 32
      %v1630 = vpop.permute.xlu0 %1629
      %1631 = vrot.lane.b32.xlu0 %v1444, 32
      %v1632 = vpop.permute.xlu0 %1631
      %1633 = vrot.lane.b32.xlu0 %v1447, 32
      %v1634 = vpop.permute.xlu0 %1633
      %1635 = vrot.lane.b32.xlu0 %v1450, 32
      %v1636 = vpop.permute.xlu0 %1635
      %1637 = vrot.lane.b32.xlu0 %v1453, 32
      %v1638 = vpop.permute.xlu0 %1637
      %1639 = vrot.lane.b32.xlu0 %v1456, 32
      %v1640 = vpop.permute.xlu0 %1639
      %vm1649 = vcmask 261120
      %v1651 = vsel %vm1649, %v1433, 0
      %v1654 = vsel %vm1649, %v1436, 0
      %v1657 = vsel %vm1649, %v1434, 0
      %v1660 = vsel %vm1649, %v1437, 0
      %1662 = vmatprep.subr.bf16.mxu0 0
      %1663 = vmatpush1.bf16.xpose.msra.mxu0 %v1657
      %1664 = vmatprep.subr.bf16.mxu0 0
      %1665 = vmatpush1.bf16.xpose.msra.mxu0 %v1660
      %1666 = vmatprep.subr.bf16.mxu0 0
      %1667 = vmatpush1.bf16.xpose.msra.mxu0 0
      %1668 = vmatprep.subr.bf16.mxu0 0
      %1669 = vmatpush1.bf16.xpose.msra.mxu0 0
      %1670 = vmatprep.subr.bf16.mxu0 0
      %1671 = vmatpush1.bf16.xpose.msra.mxu0 0
      %1672 = vmatprep.subr.bf16.mxu0 0
      %1673 = vmatpush1.bf16.xpose.msra.mxu0 0
      %1674 = vmatprep.subr.bf16.mxu0 0
      %1675 = vmatpush1.bf16.xpose.msra.mxu0 0
      %1676 = vmatprep.subr.bf16.mxu0 0
      %1677 = vmatpush1.bf16.xpose.msra.mxu0 0
      %1678 = vmatprep.subr.bf16.mxu0 0
      %1679 = vmatpush1.bf16.xpose.msra.mxu0 0
      %1680 = vmatprep.subr.bf16.mxu0 0
      %1681 = vmatpush1.bf16.xpose.msra.mxu0 0
      %1682 = vmatprep.subr.bf16.mxu0 0
      %1683 = vmatpush1.bf16.xpose.msra.mxu0 0
      %1684 = vmatprep.subr.bf16.mxu0 0
      %1685 = vmatpush1.bf16.xpose.msra.mxu0 0
      %1686 = vmatprep.subr.bf16.mxu0 0
      %1687 = vmatpush1.bf16.xpose.msra.mxu0 0
      %1688 = vmatprep.subr.bf16.mxu0 0
      %1689 = vmatpush1.bf16.xpose.msra.mxu0 0
      %1690 = vmatprep.subr.bf16.mxu0 0
      %1691 = vmatpush1.bf16.xpose.msra.mxu0 0
      %1692 = vmatprep.subr.bf16.mxu0 0
      %1693 = vmatpush1.bf16.xpose.msra.mxu0 0
      %1694 = vmatprep.mubr.bf16.mxu0 0
      %1695 = vmatmul.mubr.bf16.gmra.mrb[0].mxu0 %v1651
      %v1696 = vpop.f32.mrb[0].mxu0
      %v1697 = vadd.f32 0.0, %v1696
      %v1698 = vpop.f32.mrb[0].mxu0
      %v1699 = vpop.f32.mrb[0].mxu0
      %v1700 = vadd.f32 0.0, %v1699
      %v1701 = vpop.f32.mrb[0].mxu0
      %1702 = vmatprep.mubr.bf16.mxu0 0
      %1703 = vmatmul.mubr.bf16.gmra.mrb[0].mxu0 %v1654
      %v1704 = vpop.f32.mrb[0].mxu0
      %v1705 = vadd.f32 0.0, %v1704
      %v1706 = vpop.f32.mrb[0].mxu0
      %v1707 = vpop.f32.mrb[0].mxu0
      %v1708 = vadd.f32 0.0, %v1707
      %v1709 = vpop.f32.mrb[0].mxu0
      %1710 = vdwg.mxu0
      %v1712 = vsel %vm1649, %v1439, 0
      %v1715 = vsel %vm1649, %v1442, 0
      %v1718 = vsel %vm1649, %v1440, 0
      %v1721 = vsel %vm1649, %v1443, 0
      %1723 = vmatprep.subr.bf16.mxu0 0
      %1724 = vmatpush1.bf16.xpose.msra.mxu0 %v1718
      %1725 = vmatprep.subr.bf16.mxu0 0
      %1726 = vmatpush1.bf16.xpose.msra.mxu0 %v1721
      %1727 = vmatprep.subr.bf16.mxu0 0
      %1728 = vmatpush1.bf16.xpose.msra.mxu0 0
      %1729 = vmatprep.subr.bf16.mxu0 0
      %1730 = vmatpush1.bf16.xpose.msra.mxu0 0
      %1731 = vmatprep.subr.bf16.mxu0 0
      %1732 = vmatpush1.bf16.xpose.msra.mxu0 0
      %1733 = vmatprep.subr.bf16.mxu0 0
      %1734 = vmatpush1.bf16.xpose.msra.mxu0 0
      %1735 = vmatprep.subr.bf16.mxu0 0
      %1736 = vmatpush1.bf16.xpose.msra.mxu0 0
      %1737 = vmatprep.subr.bf16.mxu0 0
      %1738 = vmatpush1.bf16.xpose.msra.mxu0 0
      %1739 = vmatprep.subr.bf16.mxu0 0
      %1740 = vmatpush1.bf16.xpose.msra.mxu0 0
      %1741 = vmatprep.subr.bf16.mxu0 0
      %1742 = vmatpush1.bf16.xpose.msra.mxu0 0
      %1743 = vmatprep.subr.bf16.mxu0 0
      %1744 = vmatpush1.bf16.xpose.msra.mxu0 0
      %1745 = vmatprep.subr.bf16.mxu0 0
      %1746 = vmatpush1.bf16.xpose.msra.mxu0 0
      %1747 = vmatprep.subr.bf16.mxu0 0
      %1748 = vmatpush1.bf16.xpose.msra.mxu0 0
      %1749 = vmatprep.subr.bf16.mxu0 0
      %1750 = vmatpush1.bf16.xpose.msra.mxu0 0
      %1751 = vmatprep.subr.bf16.mxu0 0
      %1752 = vmatpush1.bf16.xpose.msra.mxu0 0
      %1753 = vmatprep.subr.bf16.mxu0 0
      %1754 = vmatpush1.bf16.xpose.msra.mxu0 0
      %1755 = vmatprep.mubr.bf16.mxu0 0
      %1756 = vmatmul.mubr.bf16.gmra.mrb[0].mxu0 %v1712
      %v1757 = vpop.f32.mrb[0].mxu0
      %v1758 = vadd.f32 0.0, %v1757
      %v1759 = vpop.f32.mrb[0].mxu0
      %v1760 = vpop.f32.mrb[0].mxu0
      %v1761 = vadd.f32 0.0, %v1760
      %v1762 = vpop.f32.mrb[0].mxu0
      %1763 = vmatprep.mubr.bf16.mxu0 0
      %1764 = vmatmul.mubr.bf16.gmra.mrb[0].mxu0 %v1715
      %v1765 = vpop.f32.mrb[0].mxu0
      %v1766 = vadd.f32 0.0, %v1765
      %v1767 = vpop.f32.mrb[0].mxu0
      %v1768 = vpop.f32.mrb[0].mxu0
      %v1769 = vadd.f32 0.0, %v1768
      %v1770 = vpop.f32.mrb[0].mxu0
      %1771 = vdwg.mxu0
      %v1773 = vsel %vm1649, %v1445, 0
      %v1776 = vsel %vm1649, %v1448, 0
      %v1779 = vsel %vm1649, %v1446, 0
      %v1782 = vsel %vm1649, %v1449, 0
      %1784 = vmatprep.subr.bf16.mxu0 0
      %1785 = vmatpush1.bf16.xpose.msra.mxu0 %v1779
      %1786 = vmatprep.subr.bf16.mxu0 0
      %1787 = vmatpush1.bf16.xpose.msra.mxu0 %v1782
      %1788 = vmatprep.subr.bf16.mxu0 0
      %1789 = vmatpush1.bf16.xpose.msra.mxu0 0
      %1790 = vmatprep.subr.bf16.mxu0 0
      %1791 = vmatpush1.bf16.xpose.msra.mxu0 0
      %1792 = vmatprep.subr.bf16.mxu0 0
      %1793 = vmatpush1.bf16.xpose.msra.mxu0 0
      %1794 = vmatprep.subr.bf16.mxu0 0
      %1795 = vmatpush1.bf16.xpose.msra.mxu0 0
      %1796 = vmatprep.subr.bf16.mxu0 0
      %1797 = vmatpush1.bf16.xpose.msra.mxu0 0
      %1798 = vmatprep.subr.bf16.mxu0 0
      %1799 = vmatpush1.bf16.xpose.msra.mxu0 0
      %1800 = vmatprep.subr.bf16.mxu0 0
      %1801 = vmatpush1.bf16.xpose.msra.mxu0 0
      %1802 = vmatprep.subr.bf16.mxu0 0
      %1803 = vmatpush1.bf16.xpose.msra.mxu0 0
      %1804 = vmatprep.subr.bf16.mxu0 0
      %1805 = vmatpush1.bf16.xpose.msra.mxu0 0
      %1806 = vmatprep.subr.bf16.mxu0 0
      %1807 = vmatpush1.bf16.xpose.msra.mxu0 0
      %1808 = vmatprep.subr.bf16.mxu0 0
      %1809 = vmatpush1.bf16.xpose.msra.mxu0 0
      %1810 = vmatprep.subr.bf16.mxu0 0
      %1811 = vmatpush1.bf16.xpose.msra.mxu0 0
      %1812 = vmatprep.subr.bf16.mxu0 0
      %1813 = vmatpush1.bf16.xpose.msra.mxu0 0
      %1814 = vmatprep.subr.bf16.mxu0 0
      %1815 = vmatpush1.bf16.xpose.msra.mxu0 0
      %1816 = vmatprep.mubr.bf16.mxu0 0
      %1817 = vmatmul.mubr.bf16.gmra.mrb[0].mxu0 %v1773
      %v1818 = vpop.f32.mrb[0].mxu0
      %v1819 = vadd.f32 0.0, %v1818
      %v1820 = vpop.f32.mrb[0].mxu0
      %v1821 = vpop.f32.mrb[0].mxu0
      %v1822 = vadd.f32 0.0, %v1821
      %v1823 = vpop.f32.mrb[0].mxu0
      %1824 = vmatprep.mubr.bf16.mxu0 0
      %1825 = vmatmul.mubr.bf16.gmra.mrb[0].mxu0 %v1776
      %v1826 = vpop.f32.mrb[0].mxu0
      %v1827 = vadd.f32 0.0, %v1826
      %v1828 = vpop.f32.mrb[0].mxu0
      %v1829 = vpop.f32.mrb[0].mxu0
      %v1830 = vadd.f32 0.0, %v1829
      %v1831 = vpop.f32.mrb[0].mxu0
      %1832 = vdwg.mxu0
      %v1834 = vsel %vm1649, %v1451, 0
      %v1837 = vsel %vm1649, %v1454, 0
      %v1840 = vsel %vm1649, %v1452, 0
      %v1843 = vsel %vm1649, %v1455, 0
      %1845 = vmatprep.subr.bf16.mxu0 0
      %1846 = vmatpush1.bf16.xpose.msra.mxu0 %v1840
      %1847 = vmatprep.subr.bf16.mxu0 0
      %1848 = vmatpush1.bf16.xpose.msra.mxu0 %v1843
      %1849 = vmatprep.subr.bf16.mxu0 0
      %1850 = vmatpush1.bf16.xpose.msra.mxu0 0
      %1851 = vmatprep.subr.bf16.mxu0 0
      %1852 = vmatpush1.bf16.xpose.msra.mxu0 0
      %1853 = vmatprep.subr.bf16.mxu0 0
      %1854 = vmatpush1.bf16.xpose.msra.mxu0 0
      %1855 = vmatprep.subr.bf16.mxu0 0
      %1856 = vmatpush1.bf16.xpose.msra.mxu0 0
      %1857 = vmatprep.subr.bf16.mxu0 0
      %1858 = vmatpush1.bf16.xpose.msra.mxu0 0
      %1859 = vmatprep.subr.bf16.mxu0 0
      %1860 = vmatpush1.bf16.xpose.msra.mxu0 0
      %1861 = vmatprep.subr.bf16.mxu0 0
      %1862 = vmatpush1.bf16.xpose.msra.mxu0 0
      %1863 = vmatprep.subr.bf16.mxu0 0
      %1864 = vmatpush1.bf16.xpose.msra.mxu0 0
      %1865 = vmatprep.subr.bf16.mxu0 0
      %1866 = vmatpush1.bf16.xpose.msra.mxu0 0
      %1867 = vmatprep.subr.bf16.mxu0 0
      %1868 = vmatpush1.bf16.xpose.msra.mxu0 0
      %1869 = vmatprep.subr.bf16.mxu0 0
      %1870 = vmatpush1.bf16.xpose.msra.mxu0 0
      %1871 = vmatprep.subr.bf16.mxu0 0
      %1872 = vmatpush1.bf16.xpose.msra.mxu0 0
      %1873 = vmatprep.subr.bf16.mxu0 0
      %1874 = vmatpush1.bf16.xpose.msra.mxu0 0
      %1875 = vmatprep.subr.bf16.mxu0 0
      %1876 = vmatpush1.bf16.xpose.msra.mxu0 0
      %1877 = vmatprep.mubr.bf16.mxu0 0
      %1878 = vmatmul.mubr.bf16.gmra.mrb[0].mxu0 %v1834
      %v1879 = vpop.f32.mrb[0].mxu0
      %v1880 = vadd.f32 0.0, %v1879
      %v1881 = vpop.f32.mrb[0].mxu0
      %v1882 = vpop.f32.mrb[0].mxu0
      %v1883 = vadd.f32 0.0, %v1882
      %v1884 = vpop.f32.mrb[0].mxu0
      %1885 = vmatprep.mubr.bf16.mxu0 0
      %1886 = vmatmul.mubr.bf16.gmra.mrb[0].mxu0 %v1837
      %v1887 = vpop.f32.mrb[0].mxu0
      %v1888 = vadd.f32 0.0, %v1887
      %v1889 = vpop.f32.mrb[0].mxu0
      %v1890 = vpop.f32.mrb[0].mxu0
      %v1891 = vadd.f32 0.0, %v1890
      %v1892 = vpop.f32.mrb[0].mxu0
      %1893 = vdwg.mxu0
      %v1895 = vsel %vm1649, %v1466, 0
      %v1898 = vsel %vm1649, %v1468, 0
      %v1901 = vsel %vm1649, %v1522, 0
      %v1904 = vsel %vm1649, %v1524, 0
      %1906 = vmatprep.subr.bf16.mxu0 0
      %1907 = vmatpush1.bf16.xpose.msra.mxu0 %v1901
      %1908 = vmatprep.subr.bf16.mxu0 0
      %1909 = vmatpush1.bf16.xpose.msra.mxu0 %v1904
      %1910 = vmatprep.subr.bf16.mxu0 0
      %1911 = vmatpush1.bf16.xpose.msra.mxu0 0
      %1912 = vmatprep.subr.bf16.mxu0 0
      %1913 = vmatpush1.bf16.xpose.msra.mxu0 0
      %1914 = vmatprep.subr.bf16.mxu0 0
      %1915 = vmatpush1.bf16.xpose.msra.mxu0 0
      %1916 = vmatprep.subr.bf16.mxu0 0
      %1917 = vmatpush1.bf16.xpose.msra.mxu0 0
      %1918 = vmatprep.subr.bf16.mxu0 0
      %1919 = vmatpush1.bf16.xpose.msra.mxu0 0
      %1920 = vmatprep.subr.bf16.mxu0 0
      %1921 = vmatpush1.bf16.xpose.msra.mxu0 0
      %1922 = vmatprep.subr.bf16.mxu0 0
      %1923 = vmatpush1.bf16.xpose.msra.mxu0 0
      %1924 = vmatprep.subr.bf16.mxu0 0
      %1925 = vmatpush1.bf16.xpose.msra.mxu0 0
      %1926 = vmatprep.subr.bf16.mxu0 0
      %1927 = vmatpush1.bf16.xpose.msra.mxu0 0
      %1928 = vmatprep.subr.bf16.mxu0 0
      %1929 = vmatpush1.bf16.xpose.msra.mxu0 0
      %1930 = vmatprep.subr.bf16.mxu0 0
      %1931 = vmatpush1.bf16.xpose.msra.mxu0 0
      %1932 = vmatprep.subr.bf16.mxu0 0
      %1933 = vmatpush1.bf16.xpose.msra.mxu0 0
      %1934 = vmatprep.subr.bf16.mxu0 0
      %1935 = vmatpush1.bf16.xpose.msra.mxu0 0
      %1936 = vmatprep.subr.bf16.mxu0 0
      %1937 = vmatpush1.bf16.xpose.msra.mxu0 0
      %1938 = vmatprep.mubr.bf16.mxu0 0
      %1939 = vmatmul.mubr.bf16.gmra.mrb[0].mxu0 %v1895
      %v1940 = vpop.f32.mrb[0].mxu0
      %v1941 = vadd.f32 0.0, %v1940
      %v1942 = vpop.f32.mrb[0].mxu0
      %v1943 = vpop.f32.mrb[0].mxu0
      %v1944 = vadd.f32 0.0, %v1943
      %v1945 = vpop.f32.mrb[0].mxu0
      %1946 = vmatprep.mubr.bf16.mxu0 0
      %1947 = vmatmul.mubr.bf16.gmra.mrb[0].mxu0 %v1898
      %v1948 = vpop.f32.mrb[0].mxu0
      %v1949 = vadd.f32 0.0, %v1948
      %v1950 = vpop.f32.mrb[0].mxu0
      %v1951 = vpop.f32.mrb[0].mxu0
      %v1952 = vadd.f32 0.0, %v1951
      %v1953 = vpop.f32.mrb[0].mxu0
      %1954 = vdwg.mxu0
      %v1956 = vsel %vm1649, %v1470, 0
      %v1959 = vsel %vm1649, %v1472, 0
      %v1962 = vsel %vm1649, %v1526, 0
      %v1965 = vsel %vm1649, %v1528, 0
      %1967 = vmatprep.subr.bf16.mxu0 0
      %1968 = vmatpush1.bf16.xpose.msra.mxu0 %v1962
      %1969 = vmatprep.subr.bf16.mxu0 0
      %1970 = vmatpush1.bf16.xpose.msra.mxu0 %v1965
      %1971 = vmatprep.subr.bf16.mxu0 0
      %1972 = vmatpush1.bf16.xpose.msra.mxu0 0
      %1973 = vmatprep.subr.bf16.mxu0 0
      %1974 = vmatpush1.bf16.xpose.msra.mxu0 0
      %1975 = vmatprep.subr.bf16.mxu0 0
      %1976 = vmatpush1.bf16.xpose.msra.mxu0 0
      %1977 = vmatprep.subr.bf16.mxu0 0
      %1978 = vmatpush1.bf16.xpose.msra.mxu0 0
      %1979 = vmatprep.subr.bf16.mxu0 0
      %1980 = vmatpush1.bf16.xpose.msra.mxu0 0
      %1981 = vmatprep.subr.bf16.mxu0 0
      %1982 = vmatpush1.bf16.xpose.msra.mxu0 0
      %1983 = vmatprep.subr.bf16.mxu0 0
      %1984 = vmatpush1.bf16.xpose.msra.mxu0 0
      %1985 = vmatprep.subr.bf16.mxu0 0
      %1986 = vmatpush1.bf16.xpose.msra.mxu0 0
      %1987 = vmatprep.subr.bf16.mxu0 0
      %1988 = vmatpush1.bf16.xpose.msra.mxu0 0
      %1989 = vmatprep.subr.bf16.mxu0 0
      %1990 = vmatpush1.bf16.xpose.msra.mxu0 0
      %1991 = vmatprep.subr.bf16.mxu0 0
      %1992 = vmatpush1.bf16.xpose.msra.mxu0 0
      %1993 = vmatprep.subr.bf16.mxu0 0
      %1994 = vmatpush1.bf16.xpose.msra.mxu0 0
      %1995 = vmatprep.subr.bf16.mxu0 0
      %1996 = vmatpush1.bf16.xpose.msra.mxu0 0
      %1997 = vmatprep.subr.bf16.mxu0 0
      %1998 = vmatpush1.bf16.xpose.msra.mxu0 0
      %1999 = vmatprep.mubr.bf16.mxu0 0
      %2000 = vmatmul.mubr.bf16.gmra.mrb[0].mxu0 %v1956
      %v2001 = vpop.f32.mrb[0].mxu0
      %v2002 = vadd.f32 0.0, %v2001
      %v2003 = vpop.f32.mrb[0].mxu0
      %v2004 = vpop.f32.mrb[0].mxu0
      %v2005 = vadd.f32 0.0, %v2004
      %v2006 = vpop.f32.mrb[0].mxu0
      %2007 = vmatprep.mubr.bf16.mxu0 0
      %2008 = vmatmul.mubr.bf16.gmra.mrb[0].mxu0 %v1959
      %v2009 = vpop.f32.mrb[0].mxu0
      %v2010 = vadd.f32 0.0, %v2009
      %v2011 = vpop.f32.mrb[0].mxu0
      %v2012 = vpop.f32.mrb[0].mxu0
      %v2013 = vadd.f32 0.0, %v2012
      %v2014 = vpop.f32.mrb[0].mxu0
      %2015 = vdwg.mxu0
      %v2017 = vsel %vm1649, %v1474, 0
      %v2020 = vsel %vm1649, %v1476, 0
      %v2023 = vsel %vm1649, %v1530, 0
      %v2026 = vsel %vm1649, %v1532, 0
      %2028 = vmatprep.subr.bf16.mxu0 0
      %2029 = vmatpush1.bf16.xpose.msra.mxu0 %v2023
      %2030 = vmatprep.subr.bf16.mxu0 0
      %2031 = vmatpush1.bf16.xpose.msra.mxu0 %v2026
      %2032 = vmatprep.subr.bf16.mxu0 0
      %2033 = vmatpush1.bf16.xpose.msra.mxu0 0
      %2034 = vmatprep.subr.bf16.mxu0 0
      %2035 = vmatpush1.bf16.xpose.msra.mxu0 0
      %2036 = vmatprep.subr.bf16.mxu0 0
      %2037 = vmatpush1.bf16.xpose.msra.mxu0 0
      %2038 = vmatprep.subr.bf16.mxu0 0
      %2039 = vmatpush1.bf16.xpose.msra.mxu0 0
      %2040 = vmatprep.subr.bf16.mxu0 0
      %2041 = vmatpush1.bf16.xpose.msra.mxu0 0
      %2042 = vmatprep.subr.bf16.mxu0 0
      %2043 = vmatpush1.bf16.xpose.msra.mxu0 0
      %2044 = vmatprep.subr.bf16.mxu0 0
      %2045 = vmatpush1.bf16.xpose.msra.mxu0 0
      %2046 = vmatprep.subr.bf16.mxu0 0
      %2047 = vmatpush1.bf16.xpose.msra.mxu0 0
      %2048 = vmatprep.subr.bf16.mxu0 0
      %2049 = vmatpush1.bf16.xpose.msra.mxu0 0
      %2050 = vmatprep.subr.bf16.mxu0 0
      %2051 = vmatpush1.bf16.xpose.msra.mxu0 0
      %2052 = vmatprep.subr.bf16.mxu0 0
      %2053 = vmatpush1.bf16.xpose.msra.mxu0 0
      %2054 = vmatprep.subr.bf16.mxu0 0
      %2055 = vmatpush1.bf16.xpose.msra.mxu0 0
      %2056 = vmatprep.subr.bf16.mxu0 0
      %2057 = vmatpush1.bf16.xpose.msra.mxu0 0
      %2058 = vmatprep.subr.bf16.mxu0 0
      %2059 = vmatpush1.bf16.xpose.msra.mxu0 0
      %2060 = vmatprep.mubr.bf16.mxu0 0
      %2061 = vmatmul.mubr.bf16.gmra.mrb[0].mxu0 %v2017
      %v2062 = vpop.f32.mrb[0].mxu0
      %v2063 = vadd.f32 0.0, %v2062
      %v2064 = vpop.f32.mrb[0].mxu0
      %v2065 = vpop.f32.mrb[0].mxu0
      %v2066 = vadd.f32 0.0, %v2065
      %v2067 = vpop.f32.mrb[0].mxu0
      %2068 = vmatprep.mubr.bf16.mxu0 0
      %2069 = vmatmul.mubr.bf16.gmra.mrb[0].mxu0 %v2020
      %v2070 = vpop.f32.mrb[0].mxu0
      %v2071 = vadd.f32 0.0, %v2070
      %v2072 = vpop.f32.mrb[0].mxu0
      %v2073 = vpop.f32.mrb[0].mxu0
      %v2074 = vadd.f32 0.0, %v2073
      %v2075 = vpop.f32.mrb[0].mxu0
      %2076 = vdwg.mxu0
      %v2078 = vsel %vm1649, %v1478, 0
      %v2081 = vsel %vm1649, %v1480, 0
      %v2084 = vsel %vm1649, %v1534, 0
      %v2087 = vsel %vm1649, %v1536, 0
      %2089 = vmatprep.subr.bf16.mxu0 0
      %2090 = vmatpush1.bf16.xpose.msra.mxu0 %v2084
      %2091 = vmatprep.subr.bf16.mxu0 0
      %2092 = vmatpush1.bf16.xpose.msra.mxu0 %v2087
      %2093 = vmatprep.subr.bf16.mxu0 0
      %2094 = vmatpush1.bf16.xpose.msra.mxu0 0
      %2095 = vmatprep.subr.bf16.mxu0 0
      %2096 = vmatpush1.bf16.xpose.msra.mxu0 0
      %2097 = vmatprep.subr.bf16.mxu0 0
      %2098 = vmatpush1.bf16.xpose.msra.mxu0 0
      %2099 = vmatprep.subr.bf16.mxu0 0
      %2100 = vmatpush1.bf16.xpose.msra.mxu0 0
      %2101 = vmatprep.subr.bf16.mxu0 0
      %2102 = vmatpush1.bf16.xpose.msra.mxu0 0
      %2103 = vmatprep.subr.bf16.mxu0 0
      %2104 = vmatpush1.bf16.xpose.msra.mxu0 0
      %2105 = vmatprep.subr.bf16.mxu0 0
      %2106 = vmatpush1.bf16.xpose.msra.mxu0 0
      %2107 = vmatprep.subr.bf16.mxu0 0
      %2108 = vmatpush1.bf16.xpose.msra.mxu0 0
      %2109 = vmatprep.subr.bf16.mxu0 0
      %2110 = vmatpush1.bf16.xpose.msra.mxu0 0
      %2111 = vmatprep.subr.bf16.mxu0 0
      %2112 = vmatpush1.bf16.xpose.msra.mxu0 0
      %2113 = vmatprep.subr.bf16.mxu0 0
      %2114 = vmatpush1.bf16.xpose.msra.mxu0 0
      %2115 = vmatprep.subr.bf16.mxu0 0
      %2116 = vmatpush1.bf16.xpose.msra.mxu0 0
      %2117 = vmatprep.subr.bf16.mxu0 0
      %2118 = vmatpush1.bf16.xpose.msra.mxu0 0
      %2119 = vmatprep.subr.bf16.mxu0 0
      %2120 = vmatpush1.bf16.xpose.msra.mxu0 0
      %2121 = vmatprep.mubr.bf16.mxu0 0
      %2122 = vmatmul.mubr.bf16.gmra.mrb[0].mxu0 %v2078
      %v2123 = vpop.f32.mrb[0].mxu0
      %v2124 = vadd.f32 0.0, %v2123
      %v2125 = vpop.f32.mrb[0].mxu0
      %v2126 = vpop.f32.mrb[0].mxu0
      %v2127 = vadd.f32 0.0, %v2126
      %v2128 = vpop.f32.mrb[0].mxu0
      %2129 = vmatprep.mubr.bf16.mxu0 0
      %2130 = vmatmul.mubr.bf16.gmra.mrb[0].mxu0 %v2081
      %v2131 = vpop.f32.mrb[0].mxu0
      %v2132 = vadd.f32 0.0, %v2131
      %v2133 = vpop.f32.mrb[0].mxu0
      %v2134 = vpop.f32.mrb[0].mxu0
      %v2135 = vadd.f32 0.0, %v2134
      %v2136 = vpop.f32.mrb[0].mxu0
      %2137 = vdwg.mxu0
      %v2139 = vsel %vm1649, %v1482, 0
      %v2142 = vsel %vm1649, %v1484, 0
      %v2145 = vsel %vm1649, %v1538, 0
      %v2148 = vsel %vm1649, %v1540, 0
      %2150 = vmatprep.subr.bf16.mxu0 0
      %2151 = vmatpush1.bf16.xpose.msra.mxu0 %v2145
      %2152 = vmatprep.subr.bf16.mxu0 0
      %2153 = vmatpush1.bf16.xpose.msra.mxu0 %v2148
      %2154 = vmatprep.subr.bf16.mxu0 0
      %2155 = vmatpush1.bf16.xpose.msra.mxu0 0
      %2156 = vmatprep.subr.bf16.mxu0 0
      %2157 = vmatpush1.bf16.xpose.msra.mxu0 0
      %2158 = vmatprep.subr.bf16.mxu0 0
      %2159 = vmatpush1.bf16.xpose.msra.mxu0 0
      %2160 = vmatprep.subr.bf16.mxu0 0
      %2161 = vmatpush1.bf16.xpose.msra.mxu0 0
      %2162 = vmatprep.subr.bf16.mxu0 0
      %2163 = vmatpush1.bf16.xpose.msra.mxu0 0
      %2164 = vmatprep.subr.bf16.mxu0 0
      %2165 = vmatpush1.bf16.xpose.msra.mxu0 0
      %2166 = vmatprep.subr.bf16.mxu0 0
      %2167 = vmatpush1.bf16.xpose.msra.mxu0 0
      %2168 = vmatprep.subr.bf16.mxu0 0
      %2169 = vmatpush1.bf16.xpose.msra.mxu0 0
      %2170 = vmatprep.subr.bf16.mxu0 0
      %2171 = vmatpush1.bf16.xpose.msra.mxu0 0
      %2172 = vmatprep.subr.bf16.mxu0 0
      %2173 = vmatpush1.bf16.xpose.msra.mxu0 0
      %2174 = vmatprep.subr.bf16.mxu0 0
      %2175 = vmatpush1.bf16.xpose.msra.mxu0 0
      %2176 = vmatprep.subr.bf16.mxu0 0
      %2177 = vmatpush1.bf16.xpose.msra.mxu0 0
      %2178 = vmatprep.subr.bf16.mxu0 0
      %2179 = vmatpush1.bf16.xpose.msra.mxu0 0
      %2180 = vmatprep.subr.bf16.mxu0 0
      %2181 = vmatpush1.bf16.xpose.msra.mxu0 0
      %2182 = vmatprep.mubr.bf16.mxu0 0
      %2183 = vmatmul.mubr.bf16.gmra.mrb[0].mxu0 %v2139
      %v2184 = vpop.f32.mrb[0].mxu0
      %v2185 = vadd.f32 0.0, %v2184
      %v2186 = vpop.f32.mrb[0].mxu0
      %v2187 = vpop.f32.mrb[0].mxu0
      %v2188 = vadd.f32 0.0, %v2187
      %v2189 = vpop.f32.mrb[0].mxu0
      %2190 = vmatprep.mubr.bf16.mxu0 0
      %2191 = vmatmul.mubr.bf16.gmra.mrb[0].mxu0 %v2142
      %v2192 = vpop.f32.mrb[0].mxu0
      %v2193 = vadd.f32 0.0, %v2192
      %v2194 = vpop.f32.mrb[0].mxu0
      %v2195 = vpop.f32.mrb[0].mxu0
      %v2196 = vadd.f32 0.0, %v2195
      %v2197 = vpop.f32.mrb[0].mxu0
      %2198 = vdwg.mxu0
      %v2200 = vsel %vm1649, %v1486, 0
      %v2203 = vsel %vm1649, %v1488, 0
      %v2206 = vsel %vm1649, %v1542, 0
      %v2209 = vsel %vm1649, %v1544, 0
      %2211 = vmatprep.subr.bf16.mxu0 0
      %2212 = vmatpush1.bf16.xpose.msra.mxu0 %v2206
      %2213 = vmatprep.subr.bf16.mxu0 0
      %2214 = vmatpush1.bf16.xpose.msra.mxu0 %v2209
      %2215 = vmatprep.subr.bf16.mxu0 0
      %2216 = vmatpush1.bf16.xpose.msra.mxu0 0
      %2217 = vmatprep.subr.bf16.mxu0 0
      %2218 = vmatpush1.bf16.xpose.msra.mxu0 0
      %2219 = vmatprep.subr.bf16.mxu0 0
      %2220 = vmatpush1.bf16.xpose.msra.mxu0 0
      %2221 = vmatprep.subr.bf16.mxu0 0
      %2222 = vmatpush1.bf16.xpose.msra.mxu0 0
      %2223 = vmatprep.subr.bf16.mxu0 0
      %2224 = vmatpush1.bf16.xpose.msra.mxu0 0
      %2225 = vmatprep.subr.bf16.mxu0 0
      %2226 = vmatpush1.bf16.xpose.msra.mxu0 0
      %2227 = vmatprep.subr.bf16.mxu0 0
      %2228 = vmatpush1.bf16.xpose.msra.mxu0 0
      %2229 = vmatprep.subr.bf16.mxu0 0
      %2230 = vmatpush1.bf16.xpose.msra.mxu0 0
      %2231 = vmatprep.subr.bf16.mxu0 0
      %2232 = vmatpush1.bf16.xpose.msra.mxu0 0
      %2233 = vmatprep.subr.bf16.mxu0 0
      %2234 = vmatpush1.bf16.xpose.msra.mxu0 0
      %2235 = vmatprep.subr.bf16.mxu0 0
      %2236 = vmatpush1.bf16.xpose.msra.mxu0 0
      %2237 = vmatprep.subr.bf16.mxu0 0
      %2238 = vmatpush1.bf16.xpose.msra.mxu0 0
      %2239 = vmatprep.subr.bf16.mxu0 0
      %2240 = vmatpush1.bf16.xpose.msra.mxu0 0
      %2241 = vmatprep.subr.bf16.mxu0 0
      %2242 = vmatpush1.bf16.xpose.msra.mxu0 0
      %2243 = vmatprep.mubr.bf16.mxu0 0
      %2244 = vmatmul.mubr.bf16.gmra.mrb[0].mxu0 %v2200
      %v2245 = vpop.f32.mrb[0].mxu0
      %v2246 = vadd.f32 0.0, %v2245
      %v2247 = vpop.f32.mrb[0].mxu0
      %v2248 = vpop.f32.mrb[0].mxu0
      %v2249 = vadd.f32 0.0, %v2248
      %v2250 = vpop.f32.mrb[0].mxu0
      %2251 = vmatprep.mubr.bf16.mxu0 0
      %2252 = vmatmul.mubr.bf16.gmra.mrb[0].mxu0 %v2203
      %v2253 = vpop.f32.mrb[0].mxu0
      %v2254 = vadd.f32 0.0, %v2253
      %v2255 = vpop.f32.mrb[0].mxu0
      %v2256 = vpop.f32.mrb[0].mxu0
      %v2257 = vadd.f32 0.0, %v2256
      %v2258 = vpop.f32.mrb[0].mxu0
      %2259 = vdwg.mxu0
      %v2261 = vsel %vm1649, %v1490, 0
      %v2264 = vsel %vm1649, %v1492, 0
      %v2267 = vsel %vm1649, %v1546, 0
      %v2270 = vsel %vm1649, %v1548, 0
      %2272 = vmatprep.subr.bf16.mxu0 0
      %2273 = vmatpush1.bf16.xpose.msra.mxu0 %v2267
      %2274 = vmatprep.subr.bf16.mxu0 0
      %2275 = vmatpush1.bf16.xpose.msra.mxu0 %v2270
      %2276 = vmatprep.subr.bf16.mxu0 0
      %2277 = vmatpush1.bf16.xpose.msra.mxu0 0
      %2278 = vmatprep.subr.bf16.mxu0 0
      %2279 = vmatpush1.bf16.xpose.msra.mxu0 0
      %2280 = vmatprep.subr.bf16.mxu0 0
      %2281 = vmatpush1.bf16.xpose.msra.mxu0 0
      %2282 = vmatprep.subr.bf16.mxu0 0
      %2283 = vmatpush1.bf16.xpose.msra.mxu0 0
      %2284 = vmatprep.subr.bf16.mxu0 0
      %2285 = vmatpush1.bf16.xpose.msra.mxu0 0
      %2286 = vmatprep.subr.bf16.mxu0 0
      %2287 = vmatpush1.bf16.xpose.msra.mxu0 0
      %2288 = vmatprep.subr.bf16.mxu0 0
      %2289 = vmatpush1.bf16.xpose.msra.mxu0 0
      %2290 = vmatprep.subr.bf16.mxu0 0
      %2291 = vmatpush1.bf16.xpose.msra.mxu0 0
      %2292 = vmatprep.subr.bf16.mxu0 0
      %2293 = vmatpush1.bf16.xpose.msra.mxu0 0
      %2294 = vmatprep.subr.bf16.mxu0 0
      %2295 = vmatpush1.bf16.xpose.msra.mxu0 0
      %2296 = vmatprep.subr.bf16.mxu0 0
      %2297 = vmatpush1.bf16.xpose.msra.mxu0 0
      %2298 = vmatprep.subr.bf16.mxu0 0
      %2299 = vmatpush1.bf16.xpose.msra.mxu0 0
      %2300 = vmatprep.subr.bf16.mxu0 0
      %2301 = vmatpush1.bf16.xpose.msra.mxu0 0
      %2302 = vmatprep.subr.bf16.mxu0 0
      %2303 = vmatpush1.bf16.xpose.msra.mxu0 0
      %2304 = vmatprep.mubr.bf16.mxu0 0
      %2305 = vmatmul.mubr.bf16.gmra.mrb[0].mxu0 %v2261
      %v2306 = vpop.f32.mrb[0].mxu0
      %v2307 = vadd.f32 0.0, %v2306
      %v2308 = vpop.f32.mrb[0].mxu0
      %v2309 = vpop.f32.mrb[0].mxu0
      %v2310 = vadd.f32 0.0, %v2309
      %v2311 = vpop.f32.mrb[0].mxu0
      %2312 = vmatprep.mubr.bf16.mxu0 0
      %2313 = vmatmul.mubr.bf16.gmra.mrb[0].mxu0 %v2264
      %v2314 = vpop.f32.mrb[0].mxu0
      %v2315 = vadd.f32 0.0, %v2314
      %v2316 = vpop.f32.mrb[0].mxu0
      %v2317 = vpop.f32.mrb[0].mxu0
      %v2318 = vadd.f32 0.0, %v2317
      %v2319 = vpop.f32.mrb[0].mxu0
      %2320 = vdwg.mxu0
      %v2322 = vsel %vm1649, %v1494, 0
      %v2325 = vsel %vm1649, %v1496, 0
      %v2328 = vsel %vm1649, %v1550, 0
      %v2331 = vsel %vm1649, %v1552, 0
      %2333 = vmatprep.subr.bf16.mxu0 0
      %2334 = vmatpush1.bf16.xpose.msra.mxu0 %v2328
      %2335 = vmatprep.subr.bf16.mxu0 0
      %2336 = vmatpush1.bf16.xpose.msra.mxu0 %v2331
      %2337 = vmatprep.subr.bf16.mxu0 0
      %2338 = vmatpush1.bf16.xpose.msra.mxu0 0
      %2339 = vmatprep.subr.bf16.mxu0 0
      %2340 = vmatpush1.bf16.xpose.msra.mxu0 0
      %2341 = vmatprep.subr.bf16.mxu0 0
      %2342 = vmatpush1.bf16.xpose.msra.mxu0 0
      %2343 = vmatprep.subr.bf16.mxu0 0
      %2344 = vmatpush1.bf16.xpose.msra.mxu0 0
      %2345 = vmatprep.subr.bf16.mxu0 0
      %2346 = vmatpush1.bf16.xpose.msra.mxu0 0
      %2347 = vmatprep.subr.bf16.mxu0 0
      %2348 = vmatpush1.bf16.xpose.msra.mxu0 0
      %2349 = vmatprep.subr.bf16.mxu0 0
      %2350 = vmatpush1.bf16.xpose.msra.mxu0 0
      %2351 = vmatprep.subr.bf16.mxu0 0
      %2352 = vmatpush1.bf16.xpose.msra.mxu0 0
      %2353 = vmatprep.subr.bf16.mxu0 0
      %2354 = vmatpush1.bf16.xpose.msra.mxu0 0
      %2355 = vmatprep.subr.bf16.mxu0 0
      %2356 = vmatpush1.bf16.xpose.msra.mxu0 0
      %2357 = vmatprep.subr.bf16.mxu0 0
      %2358 = vmatpush1.bf16.xpose.msra.mxu0 0
      %2359 = vmatprep.subr.bf16.mxu0 0
      %2360 = vmatpush1.bf16.xpose.msra.mxu0 0
      %2361 = vmatprep.subr.bf16.mxu0 0
      %2362 = vmatpush1.bf16.xpose.msra.mxu0 0
      %2363 = vmatprep.subr.bf16.mxu0 0
      %2364 = vmatpush1.bf16.xpose.msra.mxu0 0
      %2365 = vmatprep.mubr.bf16.mxu0 0
      %2366 = vmatmul.mubr.bf16.gmra.mrb[0].mxu0 %v2322
      %v2367 = vpop.f32.mrb[0].mxu0
      %v2368 = vadd.f32 0.0, %v2367
      %v2369 = vpop.f32.mrb[0].mxu0
      %v2370 = vpop.f32.mrb[0].mxu0
      %v2371 = vadd.f32 0.0, %v2370
      %v2372 = vpop.f32.mrb[0].mxu0
      %2373 = vmatprep.mubr.bf16.mxu0 0
      %2374 = vmatmul.mubr.bf16.gmra.mrb[0].mxu0 %v2325
      %v2375 = vpop.f32.mrb[0].mxu0
      %v2376 = vadd.f32 0.0, %v2375
      %v2377 = vpop.f32.mrb[0].mxu0
      %v2378 = vpop.f32.mrb[0].mxu0
      %v2379 = vadd.f32 0.0, %v2378
      %v2380 = vpop.f32.mrb[0].mxu0
      %2381 = vdwg.mxu0
      %v2383 = vsel %vm1649, %v1498, 0
      %v2386 = vsel %vm1649, %v1500, 0
      %v2389 = vsel %vm1649, %v1554, 0
      %v2392 = vsel %vm1649, %v1556, 0
      %2394 = vmatprep.subr.bf16.mxu0 0
      %2395 = vmatpush1.bf16.xpose.msra.mxu0 %v2389
      %2396 = vmatprep.subr.bf16.mxu0 0
      %2397 = vmatpush1.bf16.xpose.msra.mxu0 %v2392
      %2398 = vmatprep.subr.bf16.mxu0 0
      %2399 = vmatpush1.bf16.xpose.msra.mxu0 0
      %2400 = vmatprep.subr.bf16.mxu0 0
      %2401 = vmatpush1.bf16.xpose.msra.mxu0 0
      %2402 = vmatprep.subr.bf16.mxu0 0
      %2403 = vmatpush1.bf16.xpose.msra.mxu0 0
      %2404 = vmatprep.subr.bf16.mxu0 0
      %2405 = vmatpush1.bf16.xpose.msra.mxu0 0
      %2406 = vmatprep.subr.bf16.mxu0 0
      %2407 = vmatpush1.bf16.xpose.msra.mxu0 0
      %2408 = vmatprep.subr.bf16.mxu0 0
      %2409 = vmatpush1.bf16.xpose.msra.mxu0 0
      %2410 = vmatprep.subr.bf16.mxu0 0
      %2411 = vmatpush1.bf16.xpose.msra.mxu0 0
      %2412 = vmatprep.subr.bf16.mxu0 0
      %2413 = vmatpush1.bf16.xpose.msra.mxu0 0
      %2414 = vmatprep.subr.bf16.mxu0 0
      %2415 = vmatpush1.bf16.xpose.msra.mxu0 0
      %2416 = vmatprep.subr.bf16.mxu0 0
      %2417 = vmatpush1.bf16.xpose.msra.mxu0 0
      %2418 = vmatprep.subr.bf16.mxu0 0
      %2419 = vmatpush1.bf16.xpose.msra.mxu0 0
      %2420 = vmatprep.subr.bf16.mxu0 0
      %2421 = vmatpush1.bf16.xpose.msra.mxu0 0
      %2422 = vmatprep.subr.bf16.mxu0 0
      %2423 = vmatpush1.bf16.xpose.msra.mxu0 0
      %2424 = vmatprep.subr.bf16.mxu0 0
      %2425 = vmatpush1.bf16.xpose.msra.mxu0 0
      %2426 = vmatprep.mubr.bf16.mxu0 0
      %2427 = vmatmul.mubr.bf16.gmra.mrb[0].mxu0 %v2383
      %v2428 = vpop.f32.mrb[0].mxu0
      %v2429 = vadd.f32 0.0, %v2428
      %v2430 = vpop.f32.mrb[0].mxu0
      %v2431 = vpop.f32.mrb[0].mxu0
      %v2432 = vadd.f32 0.0, %v2431
      %v2433 = vpop.f32.mrb[0].mxu0
      %2434 = vmatprep.mubr.bf16.mxu0 0
      %2435 = vmatmul.mubr.bf16.gmra.mrb[0].mxu0 %v2386
      %v2436 = vpop.f32.mrb[0].mxu0
      %v2437 = vadd.f32 0.0, %v2436
      %v2438 = vpop.f32.mrb[0].mxu0
      %v2439 = vpop.f32.mrb[0].mxu0
      %v2440 = vadd.f32 0.0, %v2439
      %v2441 = vpop.f32.mrb[0].mxu0
      %2442 = vdwg.mxu0
      %v2444 = vsel %vm1649, %v1502, 0
      %v2447 = vsel %vm1649, %v1504, 0
      %v2450 = vsel %vm1649, %v1558, 0
      %v2453 = vsel %vm1649, %v1560, 0
      %2455 = vmatprep.subr.bf16.mxu0 0
      %2456 = vmatpush1.bf16.xpose.msra.mxu0 %v2450
      %2457 = vmatprep.subr.bf16.mxu0 0
      %2458 = vmatpush1.bf16.xpose.msra.mxu0 %v2453
      %2459 = vmatprep.subr.bf16.mxu0 0
      %2460 = vmatpush1.bf16.xpose.msra.mxu0 0
      %2461 = vmatprep.subr.bf16.mxu0 0
      %2462 = vmatpush1.bf16.xpose.msra.mxu0 0
      %2463 = vmatprep.subr.bf16.mxu0 0
      %2464 = vmatpush1.bf16.xpose.msra.mxu0 0
      %2465 = vmatprep.subr.bf16.mxu0 0
      %2466 = vmatpush1.bf16.xpose.msra.mxu0 0
      %2467 = vmatprep.subr.bf16.mxu0 0
      %2468 = vmatpush1.bf16.xpose.msra.mxu0 0
      %2469 = vmatprep.subr.bf16.mxu0 0
      %2470 = vmatpush1.bf16.xpose.msra.mxu0 0
      %2471 = vmatprep.subr.bf16.mxu0 0
      %2472 = vmatpush1.bf16.xpose.msra.mxu0 0
      %2473 = vmatprep.subr.bf16.mxu0 0
      %2474 = vmatpush1.bf16.xpose.msra.mxu0 0
      %2475 = vmatprep.subr.bf16.mxu0 0
      %2476 = vmatpush1.bf16.xpose.msra.mxu0 0
      %2477 = vmatprep.subr.bf16.mxu0 0
      %2478 = vmatpush1.bf16.xpose.msra.mxu0 0
      %2479 = vmatprep.subr.bf16.mxu0 0
      %2480 = vmatpush1.bf16.xpose.msra.mxu0 0
      %2481 = vmatprep.subr.bf16.mxu0 0
      %2482 = vmatpush1.bf16.xpose.msra.mxu0 0
      %2483 = vmatprep.subr.bf16.mxu0 0
      %2484 = vmatpush1.bf16.xpose.msra.mxu0 0
      %2485 = vmatprep.subr.bf16.mxu0 0
      %2486 = vmatpush1.bf16.xpose.msra.mxu0 0
      %2487 = vmatprep.mubr.bf16.mxu0 0
      %2488 = vmatmul.mubr.bf16.gmra.mrb[0].mxu0 %v2444
      %v2489 = vpop.f32.mrb[0].mxu0
      %v2490 = vadd.f32 0.0, %v2489
      %v2491 = vpop.f32.mrb[0].mxu0
      %v2492 = vpop.f32.mrb[0].mxu0
      %v2493 = vadd.f32 0.0, %v2492
      %v2494 = vpop.f32.mrb[0].mxu0
      %2495 = vmatprep.mubr.bf16.mxu0 0
      %2496 = vmatmul.mubr.bf16.gmra.mrb[0].mxu0 %v2447
      %v2497 = vpop.f32.mrb[0].mxu0
      %v2498 = vadd.f32 0.0, %v2497
      %v2499 = vpop.f32.mrb[0].mxu0
      %v2500 = vpop.f32.mrb[0].mxu0
      %v2501 = vadd.f32 0.0, %v2500
      %v2502 = vpop.f32.mrb[0].mxu0
      %2503 = vdwg.mxu0
      %v2505 = vsel %vm1649, %v1506, 0
      %v2508 = vsel %vm1649, %v1508, 0
      %v2511 = vsel %vm1649, %v1562, 0
      %v2514 = vsel %vm1649, %v1564, 0
      %2516 = vmatprep.subr.bf16.mxu0 0
      %2517 = vmatpush1.bf16.xpose.msra.mxu0 %v2511
      %2518 = vmatprep.subr.bf16.mxu0 0
      %2519 = vmatpush1.bf16.xpose.msra.mxu0 %v2514
      %2520 = vmatprep.subr.bf16.mxu0 0
      %2521 = vmatpush1.bf16.xpose.msra.mxu0 0
      %2522 = vmatprep.subr.bf16.mxu0 0
      %2523 = vmatpush1.bf16.xpose.msra.mxu0 0
      %2524 = vmatprep.subr.bf16.mxu0 0
      %2525 = vmatpush1.bf16.xpose.msra.mxu0 0
      %2526 = vmatprep.subr.bf16.mxu0 0
      %2527 = vmatpush1.bf16.xpose.msra.mxu0 0
      %2528 = vmatprep.subr.bf16.mxu0 0
      %2529 = vmatpush1.bf16.xpose.msra.mxu0 0
      %2530 = vmatprep.subr.bf16.mxu0 0
      %2531 = vmatpush1.bf16.xpose.msra.mxu0 0
      %2532 = vmatprep.subr.bf16.mxu0 0
      %2533 = vmatpush1.bf16.xpose.msra.mxu0 0
      %2534 = vmatprep.subr.bf16.mxu0 0
      %2535 = vmatpush1.bf16.xpose.msra.mxu0 0
      %2536 = vmatprep.subr.bf16.mxu0 0
      %2537 = vmatpush1.bf16.xpose.msra.mxu0 0
      %2538 = vmatprep.subr.bf16.mxu0 0
      %2539 = vmatpush1.bf16.xpose.msra.mxu0 0
      %2540 = vmatprep.subr.bf16.mxu0 0
      %2541 = vmatpush1.bf16.xpose.msra.mxu0 0
      %2542 = vmatprep.subr.bf16.mxu0 0
      %2543 = vmatpush1.bf16.xpose.msra.mxu0 0
      %2544 = vmatprep.subr.bf16.mxu0 0
      %2545 = vmatpush1.bf16.xpose.msra.mxu0 0
      %2546 = vmatprep.subr.bf16.mxu0 0
      %2547 = vmatpush1.bf16.xpose.msra.mxu0 0
      %2548 = vmatprep.mubr.bf16.mxu0 0
      %2549 = vmatmul.mubr.bf16.gmra.mrb[0].mxu0 %v2505
      %v2550 = vpop.f32.mrb[0].mxu0
      %v2551 = vadd.f32 0.0, %v2550
      %v2552 = vpop.f32.mrb[0].mxu0
      %v2553 = vpop.f32.mrb[0].mxu0
      %v2554 = vadd.f32 0.0, %v2553
      %v2555 = vpop.f32.mrb[0].mxu0
      %2556 = vmatprep.mubr.bf16.mxu0 0
      %2557 = vmatmul.mubr.bf16.gmra.mrb[0].mxu0 %v2508
      %v2558 = vpop.f32.mrb[0].mxu0
      %v2559 = vadd.f32 0.0, %v2558
      %v2560 = vpop.f32.mrb[0].mxu0
      %v2561 = vpop.f32.mrb[0].mxu0
      %v2562 = vadd.f32 0.0, %v2561
      %v2563 = vpop.f32.mrb[0].mxu0
      %2564 = vdwg.mxu0
      %v2566 = vsel %vm1649, %v1510, 0
      %v2569 = vsel %vm1649, %v1512, 0
      %v2572 = vsel %vm1649, %v1566, 0
      %v2575 = vsel %vm1649, %v1568, 0
      %2577 = vmatprep.subr.bf16.mxu0 0
      %2578 = vmatpush1.bf16.xpose.msra.mxu0 %v2572
      %2579 = vmatprep.subr.bf16.mxu0 0
      %2580 = vmatpush1.bf16.xpose.msra.mxu0 %v2575
      %2581 = vmatprep.subr.bf16.mxu0 0
      %2582 = vmatpush1.bf16.xpose.msra.mxu0 0
      %2583 = vmatprep.subr.bf16.mxu0 0
      %2584 = vmatpush1.bf16.xpose.msra.mxu0 0
      %2585 = vmatprep.subr.bf16.mxu0 0
      %2586 = vmatpush1.bf16.xpose.msra.mxu0 0
      %2587 = vmatprep.subr.bf16.mxu0 0
      %2588 = vmatpush1.bf16.xpose.msra.mxu0 0
      %2589 = vmatprep.subr.bf16.mxu0 0
      %2590 = vmatpush1.bf16.xpose.msra.mxu0 0
      %2591 = vmatprep.subr.bf16.mxu0 0
      %2592 = vmatpush1.bf16.xpose.msra.mxu0 0
      %2593 = vmatprep.subr.bf16.mxu0 0
      %2594 = vmatpush1.bf16.xpose.msra.mxu0 0
      %2595 = vmatprep.subr.bf16.mxu0 0
      %2596 = vmatpush1.bf16.xpose.msra.mxu0 0
      %2597 = vmatprep.subr.bf16.mxu0 0
      %2598 = vmatpush1.bf16.xpose.msra.mxu0 0
      %2599 = vmatprep.subr.bf16.mxu0 0
      %2600 = vmatpush1.bf16.xpose.msra.mxu0 0
      %2601 = vmatprep.subr.bf16.mxu0 0
      %2602 = vmatpush1.bf16.xpose.msra.mxu0 0
      %2603 = vmatprep.subr.bf16.mxu0 0
      %2604 = vmatpush1.bf16.xpose.msra.mxu0 0
      %2605 = vmatprep.subr.bf16.mxu0 0
      %2606 = vmatpush1.bf16.xpose.msra.mxu0 0
      %2607 = vmatprep.subr.bf16.mxu0 0
      %2608 = vmatpush1.bf16.xpose.msra.mxu0 0
      %2609 = vmatprep.mubr.bf16.mxu0 0
      %2610 = vmatmul.mubr.bf16.gmra.mrb[0].mxu0 %v2566
      %v2611 = vpop.f32.mrb[0].mxu0
      %v2612 = vadd.f32 0.0, %v2611
      %v2613 = vpop.f32.mrb[0].mxu0
      %v2614 = vpop.f32.mrb[0].mxu0
      %v2615 = vadd.f32 0.0, %v2614
      %v2616 = vpop.f32.mrb[0].mxu0
      %2617 = vmatprep.mubr.bf16.mxu0 0
      %2618 = vmatmul.mubr.bf16.gmra.mrb[0].mxu0 %v2569
      %v2619 = vpop.f32.mrb[0].mxu0
      %v2620 = vadd.f32 0.0, %v2619
      %v2621 = vpop.f32.mrb[0].mxu0
      %v2622 = vpop.f32.mrb[0].mxu0
      %v2623 = vadd.f32 0.0, %v2622
      %v2624 = vpop.f32.mrb[0].mxu0
      %2625 = vdwg.mxu0
      %v2626 = vmul.f32 %v1697, 0.17677669
      %v2627 = vmul.f32 %v1700, 0.17677669
      %v2628 = vmul.f32 %v1705, 0.17677669
      %v2629 = vmul.f32 %v1708, 0.17677669
      %v2630 = vmul.f32 %v1758, 0.17677669
      %v2631 = vmul.f32 %v1761, 0.17677669
      %v2632 = vmul.f32 %v1766, 0.17677669
      %v2633 = vmul.f32 %v1769, 0.17677669
      %v2634 = vmul.f32 %v1819, 0.17677669
      %v2635 = vmul.f32 %v1822, 0.17677669
      %v2636 = vmul.f32 %v1827, 0.17677669
      %v2637 = vmul.f32 %v1830, 0.17677669
      %v2638 = vmul.f32 %v1880, 0.17677669
      %v2639 = vmul.f32 %v1883, 0.17677669
      %v2640 = vmul.f32 %v1888, 0.17677669
      %v2641 = vmul.f32 %v1891, 0.17677669
      %v2642 = vmul.f32 %v1941, 0.17677669
      %v2643 = vmul.f32 %v1944, 0.17677669
      %v2644 = vmul.f32 %v1949, 0.17677669
      %v2645 = vmul.f32 %v1952, 0.17677669
      %v2646 = vmul.f32 %v2002, 0.17677669
      %v2647 = vmul.f32 %v2005, 0.17677669
      %v2648 = vmul.f32 %v2010, 0.17677669
      %v2649 = vmul.f32 %v2013, 0.17677669
      %v2650 = vmul.f32 %v2063, 0.17677669
      %v2651 = vmul.f32 %v2066, 0.17677669
      %v2652 = vmul.f32 %v2071, 0.17677669
      %v2653 = vmul.f32 %v2074, 0.17677669
      %v2654 = vmul.f32 %v2124, 0.17677669
      %v2655 = vmul.f32 %v2127, 0.17677669
      %v2656 = vmul.f32 %v2132, 0.17677669
      %v2657 = vmul.f32 %v2135, 0.17677669
      %v2658 = vmul.f32 %v2185, 0.17677669
      %v2659 = vmul.f32 %v2188, 0.17677669
      %v2660 = vmul.f32 %v2193, 0.17677669
      %v2661 = vmul.f32 %v2196, 0.17677669
      %v2662 = vmul.f32 %v2246, 0.17677669
      %v2663 = vmul.f32 %v2249, 0.17677669
      %v2664 = vmul.f32 %v2254, 0.17677669
      %v2665 = vmul.f32 %v2257, 0.17677669
      %v2666 = vmul.f32 %v2307, 0.17677669
      %v2667 = vmul.f32 %v2310, 0.17677669
      %v2668 = vmul.f32 %v2315, 0.17677669
      %v2669 = vmul.f32 %v2318, 0.17677669
      %v2670 = vmul.f32 %v2368, 0.17677669
      %v2671 = vmul.f32 %v2371, 0.17677669
      %v2672 = vmul.f32 %v2376, 0.17677669
      %v2673 = vmul.f32 %v2379, 0.17677669
      %v2674 = vmul.f32 %v2429, 0.17677669
      %v2675 = vmul.f32 %v2432, 0.17677669
      %v2676 = vmul.f32 %v2437, 0.17677669
      %v2677 = vmul.f32 %v2440, 0.17677669
      %v2678 = vmul.f32 %v2490, 0.17677669
      %v2679 = vmul.f32 %v2493, 0.17677669
      %v2680 = vmul.f32 %v2498, 0.17677669
      %v2681 = vmul.f32 %v2501, 0.17677669
      %v2682 = vmul.f32 %v2551, 0.17677669
      %v2683 = vmul.f32 %v2554, 0.17677669
      %v2684 = vmul.f32 %v2559, 0.17677669
      %v2685 = vmul.f32 %v2562, 0.17677669
      %v2686 = vmul.f32 %v2612, 0.17677669
      %v2687 = vmul.f32 %v2615, 0.17677669
      %v2688 = vmul.f32 %v2620, 0.17677669
      %v2689 = vmul.f32 %v2623, 0.17677669
      %v2690 = vsel %vm1649, %v2626, -inf
      %2691 = vmax.xlane.f32.xlu0 %v2690
      %v2692 = vpop.xlane.xlu0 %2691
      %v2693 = vsel %vm1649, %v2627, -inf
      %2694 = vmax.xlane.f32.xlu0 %v2693
      %v2695 = vpop.xlane.xlu0 %2694
      %v2696 = vsel %vm1649, %v2628, -inf
      %2697 = vmax.xlane.f32.xlu0 %v2696
      %v2698 = vpop.xlane.xlu0 %2697
      %v2699 = vsel %vm1649, %v2629, -inf
      %2700 = vmax.xlane.f32.xlu0 %v2699
      %v2701 = vpop.xlane.xlu0 %2700
      %v2702 = vsel %vm1649, %v2630, -inf
      %2703 = vmax.xlane.f32.xlu0 %v2702
      %v2704 = vpop.xlane.xlu0 %2703
      %v2705 = vsel %vm1649, %v2631, -inf
      %2706 = vmax.xlane.f32.xlu0 %v2705
      %v2707 = vpop.xlane.xlu0 %2706
      %v2708 = vsel %vm1649, %v2632, -inf
      %2709 = vmax.xlane.f32.xlu0 %v2708
      %v2710 = vpop.xlane.xlu0 %2709
      %v2711 = vsel %vm1649, %v2633, -inf
      %2712 = vmax.xlane.f32.xlu0 %v2711
      %v2713 = vpop.xlane.xlu0 %2712
      %v2714 = vsel %vm1649, %v2634, -inf
      %2715 = vmax.xlane.f32.xlu0 %v2714
      %v2716 = vpop.xlane.xlu0 %2715
      %v2717 = vsel %vm1649, %v2635, -inf
      %2718 = vmax.xlane.f32.xlu0 %v2717
      %v2719 = vpop.xlane.xlu0 %2718
      %v2720 = vsel %vm1649, %v2636, -inf
      %2721 = vmax.xlane.f32.xlu0 %v2720
      %v2722 = vpop.xlane.xlu0 %2721
      %v2723 = vsel %vm1649, %v2637, -inf
      %2724 = vmax.xlane.f32.xlu0 %v2723
      %v2725 = vpop.xlane.xlu0 %2724
      %v2726 = vsel %vm1649, %v2638, -inf
      %2727 = vmax.xlane.f32.xlu0 %v2726
      %v2728 = vpop.xlane.xlu0 %2727
      %v2729 = vsel %vm1649, %v2639, -inf
      %2730 = vmax.xlane.f32.xlu0 %v2729
      %v2731 = vpop.xlane.xlu0 %2730
      %v2732 = vsel %vm1649, %v2640, -inf
      %2733 = vmax.xlane.f32.xlu0 %v2732
      %v2734 = vpop.xlane.xlu0 %2733
      %v2735 = vsel %vm1649, %v2641, -inf
      %2736 = vmax.xlane.f32.xlu0 %v2735
      %v2737 = vpop.xlane.xlu0 %2736
      %v2738 = vsel %vm1649, %v2642, -inf
      %2739 = vmax.xlane.f32.xlu0 %v2738
      %v2740 = vpop.xlane.xlu0 %2739
      %v2741 = vsel %vm1649, %v2643, -inf
      %2742 = vmax.xlane.f32.xlu0 %v2741
      %v2743 = vpop.xlane.xlu0 %2742
      %v2744 = vsel %vm1649, %v2644, -inf
      %2745 = vmax.xlane.f32.xlu0 %v2744
      %v2746 = vpop.xlane.xlu0 %2745
      %v2747 = vsel %vm1649, %v2645, -inf
      %2748 = vmax.xlane.f32.xlu0 %v2747
      %v2749 = vpop.xlane.xlu0 %2748
      %v2750 = vsel %vm1649, %v2646, -inf
      %2751 = vmax.xlane.f32.xlu0 %v2750
      %v2752 = vpop.xlane.xlu0 %2751
      %v2753 = vsel %vm1649, %v2647, -inf
      %2754 = vmax.xlane.f32.xlu0 %v2753
      %v2755 = vpop.xlane.xlu0 %2754
      %v2756 = vsel %vm1649, %v2648, -inf
      %2757 = vmax.xlane.f32.xlu0 %v2756
      %v2758 = vpop.xlane.xlu0 %2757
      %v2759 = vsel %vm1649, %v2649, -inf
      %2760 = vmax.xlane.f32.xlu0 %v2759
      %v2761 = vpop.xlane.xlu0 %2760
      %v2762 = vsel %vm1649, %v2650, -inf
      %2763 = vmax.xlane.f32.xlu0 %v2762
      %v2764 = vpop.xlane.xlu0 %2763
      %v2765 = vsel %vm1649, %v2651, -inf
      %2766 = vmax.xlane.f32.xlu0 %v2765
      %v2767 = vpop.xlane.xlu0 %2766
      %v2768 = vsel %vm1649, %v2652, -inf
      %2769 = vmax.xlane.f32.xlu0 %v2768
      %v2770 = vpop.xlane.xlu0 %2769
      %v2771 = vsel %vm1649, %v2653, -inf
      %2772 = vmax.xlane.f32.xlu0 %v2771
      %v2773 = vpop.xlane.xlu0 %2772
      %v2774 = vsel %vm1649, %v2654, -inf
      %2775 = vmax.xlane.f32.xlu0 %v2774
      %v2776 = vpop.xlane.xlu0 %2775
      %v2777 = vsel %vm1649, %v2655, -inf
      %2778 = vmax.xlane.f32.xlu0 %v2777
      %v2779 = vpop.xlane.xlu0 %2778
      %v2780 = vsel %vm1649, %v2656, -inf
      %2781 = vmax.xlane.f32.xlu0 %v2780
      %v2782 = vpop.xlane.xlu0 %2781
      %v2783 = vsel %vm1649, %v2657, -inf
      %2784 = vmax.xlane.f32.xlu0 %v2783
      %v2785 = vpop.xlane.xlu0 %2784
      %v2786 = vsel %vm1649, %v2658, -inf
      %2787 = vmax.xlane.f32.xlu0 %v2786
      %v2788 = vpop.xlane.xlu0 %2787
      %v2789 = vsel %vm1649, %v2659, -inf
      %2790 = vmax.xlane.f32.xlu0 %v2789
      %v2791 = vpop.xlane.xlu0 %2790
      %v2792 = vsel %vm1649, %v2660, -inf
      %2793 = vmax.xlane.f32.xlu0 %v2792
      %v2794 = vpop.xlane.xlu0 %2793
      %v2795 = vsel %vm1649, %v2661, -inf
      %2796 = vmax.xlane.f32.xlu0 %v2795
      %v2797 = vpop.xlane.xlu0 %2796
      %v2798 = vsel %vm1649, %v2662, -inf
      %2799 = vmax.xlane.f32.xlu0 %v2798
      %v2800 = vpop.xlane.xlu0 %2799
      %v2801 = vsel %vm1649, %v2663, -inf
      %2802 = vmax.xlane.f32.xlu0 %v2801
      %v2803 = vpop.xlane.xlu0 %2802
      %v2804 = vsel %vm1649, %v2664, -inf
      %2805 = vmax.xlane.f32.xlu0 %v2804
      %v2806 = vpop.xlane.xlu0 %2805
      %v2807 = vsel %vm1649, %v2665, -inf
      %2808 = vmax.xlane.f32.xlu0 %v2807
      %v2809 = vpop.xlane.xlu0 %2808
      %v2810 = vsel %vm1649, %v2666, -inf
      %2811 = vmax.xlane.f32.xlu0 %v2810
      %v2812 = vpop.xlane.xlu0 %2811
      %v2813 = vsel %vm1649, %v2667, -inf
      %2814 = vmax.xlane.f32.xlu0 %v2813
      %v2815 = vpop.xlane.xlu0 %2814
      %v2816 = vsel %vm1649, %v2668, -inf
      %2817 = vmax.xlane.f32.xlu0 %v2816
      %v2818 = vpop.xlane.xlu0 %2817
      %v2819 = vsel %vm1649, %v2669, -inf
      %2820 = vmax.xlane.f32.xlu0 %v2819
      %v2821 = vpop.xlane.xlu0 %2820
      %v2822 = vsel %vm1649, %v2670, -inf
      %2823 = vmax.xlane.f32.xlu0 %v2822
      %v2824 = vpop.xlane.xlu0 %2823
      %v2825 = vsel %vm1649, %v2671, -inf
      %2826 = vmax.xlane.f32.xlu0 %v2825
      %v2827 = vpop.xlane.xlu0 %2826
      %v2828 = vsel %vm1649, %v2672, -inf
      %2829 = vmax.xlane.f32.xlu0 %v2828
      %v2830 = vpop.xlane.xlu0 %2829
      %v2831 = vsel %vm1649, %v2673, -inf
      %2832 = vmax.xlane.f32.xlu0 %v2831
      %v2833 = vpop.xlane.xlu0 %2832
      %v2834 = vsel %vm1649, %v2674, -inf
      %2835 = vmax.xlane.f32.xlu0 %v2834
      %v2836 = vpop.xlane.xlu0 %2835
      %v2837 = vsel %vm1649, %v2675, -inf
      %2838 = vmax.xlane.f32.xlu0 %v2837
      %v2839 = vpop.xlane.xlu0 %2838
      %v2840 = vsel %vm1649, %v2676, -inf
      %2841 = vmax.xlane.f32.xlu0 %v2840
      %v2842 = vpop.xlane.xlu0 %2841
      %v2843 = vsel %vm1649, %v2677, -inf
      %2844 = vmax.xlane.f32.xlu0 %v2843
      %v2845 = vpop.xlane.xlu0 %2844
      %v2846 = vsel %vm1649, %v2678, -inf
      %2847 = vmax.xlane.f32.xlu0 %v2846
      %v2848 = vpop.xlane.xlu0 %2847
      %v2849 = vsel %vm1649, %v2679, -inf
      %2850 = vmax.xlane.f32.xlu0 %v2849
      %v2851 = vpop.xlane.xlu0 %2850
      %v2852 = vsel %vm1649, %v2680, -inf
      %2853 = vmax.xlane.f32.xlu0 %v2852
      %v2854 = vpop.xlane.xlu0 %2853
      %v2855 = vsel %vm1649, %v2681, -inf
      %2856 = vmax.xlane.f32.xlu0 %v2855
      %v2857 = vpop.xlane.xlu0 %2856
      %v2858 = vsel %vm1649, %v2682, -inf
      %2859 = vmax.xlane.f32.xlu0 %v2858
      %v2860 = vpop.xlane.xlu0 %2859
      %v2861 = vsel %vm1649, %v2683, -inf
      %2862 = vmax.xlane.f32.xlu0 %v2861
      %v2863 = vpop.xlane.xlu0 %2862
      %v2864 = vsel %vm1649, %v2684, -inf
      %2865 = vmax.xlane.f32.xlu0 %v2864
      %v2866 = vpop.xlane.xlu0 %2865
      %v2867 = vsel %vm1649, %v2685, -inf
      %2868 = vmax.xlane.f32.xlu0 %v2867
      %v2869 = vpop.xlane.xlu0 %2868
      %v2870 = vsel %vm1649, %v2686, -inf
      %2871 = vmax.xlane.f32.xlu0 %v2870
      %v2872 = vpop.xlane.xlu0 %2871
      %v2873 = vsel %vm1649, %v2687, -inf
      %2874 = vmax.xlane.f32.xlu0 %v2873
      %v2875 = vpop.xlane.xlu0 %2874
      %v2876 = vsel %vm1649, %v2688, -inf
      %2877 = vmax.xlane.f32.xlu0 %v2876
      %v2878 = vpop.xlane.xlu0 %2877
      %v2879 = vsel %vm1649, %v2689, -inf
      %2880 = vmax.xlane.f32.xlu0 %v2879
      %v2881 = vpop.xlane.xlu0 %2880
      %v2882 = vsub.f32 %v2626, %v2692
      %v2883 = vsub.f32 %v2627, %v2695
      %v2884 = vsub.f32 %v2628, %v2698
      %v2885 = vsub.f32 %v2629, %v2701
      %v2886 = vsub.f32 %v2630, %v2704
      %v2887 = vsub.f32 %v2631, %v2707
      %v2888 = vsub.f32 %v2632, %v2710
      %v2889 = vsub.f32 %v2633, %v2713
      %v2890 = vsub.f32 %v2634, %v2716
      %v2891 = vsub.f32 %v2635, %v2719
      %v2892 = vsub.f32 %v2636, %v2722
      %v2893 = vsub.f32 %v2637, %v2725
      %v2894 = vsub.f32 %v2638, %v2728
      %v2895 = vsub.f32 %v2639, %v2731
      %v2896 = vsub.f32 %v2640, %v2734
      %v2897 = vsub.f32 %v2641, %v2737
      %v2898 = vsub.f32 %v2642, %v2740
      %v2899 = vsub.f32 %v2643, %v2743
      %v2900 = vsub.f32 %v2644, %v2746
      %v2901 = vsub.f32 %v2645, %v2749
      %v2902 = vsub.f32 %v2646, %v2752
      %v2903 = vsub.f32 %v2647, %v2755
      %v2904 = vsub.f32 %v2648, %v2758
      %v2905 = vsub.f32 %v2649, %v2761
      %v2906 = vsub.f32 %v2650, %v2764
      %v2907 = vsub.f32 %v2651, %v2767
      %v2908 = vsub.f32 %v2652, %v2770
      %v2909 = vsub.f32 %v2653, %v2773
      %v2910 = vsub.f32 %v2654, %v2776
      %v2911 = vsub.f32 %v2655, %v2779
      %v2912 = vsub.f32 %v2656, %v2782
      %v2913 = vsub.f32 %v2657, %v2785
      %v2914 = vsub.f32 %v2658, %v2788
      %v2915 = vsub.f32 %v2659, %v2791
      %v2916 = vsub.f32 %v2660, %v2794
      %v2917 = vsub.f32 %v2661, %v2797
      %v2918 = vsub.f32 %v2662, %v2800
      %v2919 = vsub.f32 %v2663, %v2803
      %v2920 = vsub.f32 %v2664, %v2806
      %v2921 = vsub.f32 %v2665, %v2809
      %v2922 = vsub.f32 %v2666, %v2812
      %v2923 = vsub.f32 %v2667, %v2815
      %v2924 = vsub.f32 %v2668, %v2818
      %v2925 = vsub.f32 %v2669, %v2821
      %v2926 = vsub.f32 %v2670, %v2824
      %v2927 = vsub.f32 %v2671, %v2827
      %v2928 = vsub.f32 %v2672, %v2830
      %v2929 = vsub.f32 %v2673, %v2833
      %v2930 = vsub.f32 %v2674, %v2836
      %v2931 = vsub.f32 %v2675, %v2839
      %v2932 = vsub.f32 %v2676, %v2842
      %v2933 = vsub.f32 %v2677, %v2845
      %v2934 = vsub.f32 %v2678, %v2848
      %v2935 = vsub.f32 %v2679, %v2851
      %v2936 = vsub.f32 %v2680, %v2854
      %v2937 = vsub.f32 %v2681, %v2857
      %v2938 = vsub.f32 %v2682, %v2860
      %v2939 = vsub.f32 %v2683, %v2863
      %v2940 = vsub.f32 %v2684, %v2866
      %v2941 = vsub.f32 %v2685, %v2869
      %v2942 = vsub.f32 %v2686, %v2872
      %v2943 = vsub.f32 %v2687, %v2875
      %v2944 = vsub.f32 %v2688, %v2878
      %v2945 = vsub.f32 %v2689, %v2881
      %v2946 = vmul.f32 %v2882, 1.442695
      %v2947 = vpow.pop %v2946
      %v2948 = vmul.f32 %v2883, 1.442695
      %v2949 = vpow.pop %v2948
      %v2950 = vmul.f32 %v2884, 1.442695
      %v2951 = vpow.pop %v2950
      %v2952 = vmul.f32 %v2885, 1.442695
      %v2953 = vpow.pop %v2952
      %v2954 = vmul.f32 %v2886, 1.442695
      %v2955 = vpow.pop %v2954
      %v2956 = vmul.f32 %v2887, 1.442695
      %v2957 = vpow.pop %v2956
      %v2958 = vmul.f32 %v2888, 1.442695
      %v2959 = vpow.pop %v2958
      %v2960 = vmul.f32 %v2889, 1.442695
      %v2961 = vpow.pop %v2960
      %v2962 = vmul.f32 %v2890, 1.442695
      %v2963 = vpow.pop %v2962
      %v2964 = vmul.f32 %v2891, 1.442695
      %v2965 = vpow.pop %v2964
      %v2966 = vmul.f32 %v2892, 1.442695
      %v2967 = vpow.pop %v2966
      %v2968 = vmul.f32 %v2893, 1.442695
      %v2969 = vpow.pop %v2968
      %v2970 = vmul.f32 %v2894, 1.442695
      %v2971 = vpow.pop %v2970
      %v2972 = vmul.f32 %v2895, 1.442695
      %v2973 = vpow.pop %v2972
      %v2974 = vmul.f32 %v2896, 1.442695
      %v2975 = vpow.pop %v2974
      %v2976 = vmul.f32 %v2897, 1.442695
      %v2977 = vpow.pop %v2976
      %v2978 = vmul.f32 %v2898, 1.442695
      %v2979 = vpow.pop %v2978
      %v2980 = vmul.f32 %v2899, 1.442695
      %v2981 = vpow.pop %v2980
      %v2982 = vmul.f32 %v2900, 1.442695
      %v2983 = vpow.pop %v2982
      %v2984 = vmul.f32 %v2901, 1.442695
      %v2985 = vpow.pop %v2984
      %v2986 = vmul.f32 %v2902, 1.442695
      %v2987 = vpow.pop %v2986
      %v2988 = vmul.f32 %v2903, 1.442695
      %v2989 = vpow.pop %v2988
      %v2990 = vmul.f32 %v2904, 1.442695
      %v2991 = vpow.pop %v2990
      %v2992 = vmul.f32 %v2905, 1.442695
      %v2993 = vpow.pop %v2992
      %v2994 = vmul.f32 %v2906, 1.442695
      %v2995 = vpow.pop %v2994
      %v2996 = vmul.f32 %v2907, 1.442695
      %v2997 = vpow.pop %v2996
      %v2998 = vmul.f32 %v2908, 1.442695
      %v2999 = vpow.pop %v2998
      %v3000 = vmul.f32 %v2909, 1.442695
      %v3001 = vpow.pop %v3000
      %v3002 = vmul.f32 %v2910, 1.442695
      %v3003 = vpow.pop %v3002
      %v3004 = vmul.f32 %v2911, 1.442695
      %v3005 = vpow.pop %v3004
      %v3006 = vmul.f32 %v2912, 1.442695
      %v3007 = vpow.pop %v3006
      %v3008 = vmul.f32 %v2913, 1.442695
      %v3009 = vpow.pop %v3008
      %v3010 = vmul.f32 %v2914, 1.442695
      %v3011 = vpow.pop %v3010
      %v3012 = vmul.f32 %v2915, 1.442695
      %v3013 = vpow.pop %v3012
      %v3014 = vmul.f32 %v2916, 1.442695
      %v3015 = vpow.pop %v3014
      %v3016 = vmul.f32 %v2917, 1.442695
      %v3017 = vpow.pop %v3016
      %v3018 = vmul.f32 %v2918, 1.442695
      %v3019 = vpow.pop %v3018
      %v3020 = vmul.f32 %v2919, 1.442695
      %v3021 = vpow.pop %v3020
      %v3022 = vmul.f32 %v2920, 1.442695
      %v3023 = vpow.pop %v3022
      %v3024 = vmul.f32 %v2921, 1.442695
      %v3025 = vpow.pop %v3024
      %v3026 = vmul.f32 %v2922, 1.442695
      %v3027 = vpow.pop %v3026
      %v3028 = vmul.f32 %v2923, 1.442695
      %v3029 = vpow.pop %v3028
      %v3030 = vmul.f32 %v2924, 1.442695
      %v3031 = vpow.pop %v3030
      %v3032 = vmul.f32 %v2925, 1.442695
      %v3033 = vpow.pop %v3032
      %v3034 = vmul.f32 %v2926, 1.442695
      %v3035 = vpow.pop %v3034
      %v3036 = vmul.f32 %v2927, 1.442695
      %v3037 = vpow.pop %v3036
      %v3038 = vmul.f32 %v2928, 1.442695
      %v3039 = vpow.pop %v3038
      %v3040 = vmul.f32 %v2929, 1.442695
      %v3041 = vpow.pop %v3040
      %v3042 = vmul.f32 %v2930, 1.442695
      %v3043 = vpow.pop %v3042
      %v3044 = vmul.f32 %v2931, 1.442695
      %v3045 = vpow.pop %v3044
      %v3046 = vmul.f32 %v2932, 1.442695
      %v3047 = vpow.pop %v3046
      %v3048 = vmul.f32 %v2933, 1.442695
      %v3049 = vpow.pop %v3048
      %v3050 = vmul.f32 %v2934, 1.442695
      %v3051 = vpow.pop %v3050
      %v3052 = vmul.f32 %v2935, 1.442695
      %v3053 = vpow.pop %v3052
      %v3054 = vmul.f32 %v2936, 1.442695
      %v3055 = vpow.pop %v3054
      %v3056 = vmul.f32 %v2937, 1.442695
      %v3057 = vpow.pop %v3056
      %v3058 = vmul.f32 %v2938, 1.442695
      %v3059 = vpow.pop %v3058
      %v3060 = vmul.f32 %v2939, 1.442695
      %v3061 = vpow.pop %v3060
      %v3062 = vmul.f32 %v2940, 1.442695
      %v3063 = vpow.pop %v3062
      %v3064 = vmul.f32 %v2941, 1.442695
      %v3065 = vpow.pop %v3064
      %v3066 = vmul.f32 %v2942, 1.442695
      %v3067 = vpow.pop %v3066
      %v3068 = vmul.f32 %v2943, 1.442695
      %v3069 = vpow.pop %v3068
      %v3070 = vmul.f32 %v2944, 1.442695
      %v3071 = vpow.pop %v3070
      %v3072 = vmul.f32 %v2945, 1.442695
      %v3073 = vpow.pop %v3072
      %v3074 = vsel %vm1649, %v2947, 0.0
      %3075 = vadd.xlane.f32.xlu0 %v3074
      %v3076 = vpop.xlane.xlu0 %3075
      %v3077 = vsel %vm1649, %v2949, 0.0
      %3078 = vadd.xlane.f32.xlu0 %v3077
      %v3079 = vpop.xlane.xlu0 %3078
      %v3080 = vsel %vm1649, %v2951, 0.0
      %3081 = vadd.xlane.f32.xlu0 %v3080
      %v3082 = vpop.xlane.xlu0 %3081
      %v3083 = vsel %vm1649, %v2953, 0.0
      %3084 = vadd.xlane.f32.xlu0 %v3083
      %v3085 = vpop.xlane.xlu0 %3084
      %v3086 = vsel %vm1649, %v2955, 0.0
      %3087 = vadd.xlane.f32.xlu0 %v3086
      %v3088 = vpop.xlane.xlu0 %3087
      %v3089 = vsel %vm1649, %v2957, 0.0
      %3090 = vadd.xlane.f32.xlu0 %v3089
      %v3091 = vpop.xlane.xlu0 %3090
      %v3092 = vsel %vm1649, %v2959, 0.0
      %3093 = vadd.xlane.f32.xlu0 %v3092
      %v3094 = vpop.xlane.xlu0 %3093
      %v3095 = vsel %vm1649, %v2961, 0.0
      %3096 = vadd.xlane.f32.xlu0 %v3095
      %v3097 = vpop.xlane.xlu0 %3096
      %v3098 = vsel %vm1649, %v2963, 0.0
      %3099 = vadd.xlane.f32.xlu0 %v3098
      %v3100 = vpop.xlane.xlu0 %3099
      %v3101 = vsel %vm1649, %v2965, 0.0
      %3102 = vadd.xlane.f32.xlu0 %v3101
      %v3103 = vpop.xlane.xlu0 %3102
      %v3104 = vsel %vm1649, %v2967, 0.0
      %3105 = vadd.xlane.f32.xlu0 %v3104
      %v3106 = vpop.xlane.xlu0 %3105
      %v3107 = vsel %vm1649, %v2969, 0.0
      %3108 = vadd.xlane.f32.xlu0 %v3107
      %v3109 = vpop.xlane.xlu0 %3108
      %v3110 = vsel %vm1649, %v2971, 0.0
      %3111 = vadd.xlane.f32.xlu0 %v3110
      %v3112 = vpop.xlane.xlu0 %3111
      %v3113 = vsel %vm1649, %v2973, 0.0
      %3114 = vadd.xlane.f32.xlu0 %v3113
      %v3115 = vpop.xlane.xlu0 %3114
      %v3116 = vsel %vm1649, %v2975, 0.0
      %3117 = vadd.xlane.f32.xlu0 %v3116
      %v3118 = vpop.xlane.xlu0 %3117
      %v3119 = vsel %vm1649, %v2977, 0.0
      %3120 = vadd.xlane.f32.xlu0 %v3119
      %v3121 = vpop.xlane.xlu0 %3120
      %v3122 = vsel %vm1649, %v2979, 0.0
      %3123 = vadd.xlane.f32.xlu0 %v3122
      %v3124 = vpop.xlane.xlu0 %3123
      %v3125 = vsel %vm1649, %v2981, 0.0
      %3126 = vadd.xlane.f32.xlu0 %v3125
      %v3127 = vpop.xlane.xlu0 %3126
      %v3128 = vsel %vm1649, %v2983, 0.0
      %3129 = vadd.xlane.f32.xlu0 %v3128
      %v3130 = vpop.xlane.xlu0 %3129
      %v3131 = vsel %vm1649, %v2985, 0.0
      %3132 = vadd.xlane.f32.xlu0 %v3131
      %v3133 = vpop.xlane.xlu0 %3132
      %v3134 = vsel %vm1649, %v2987, 0.0
      %3135 = vadd.xlane.f32.xlu0 %v3134
      %v3136 = vpop.xlane.xlu0 %3135
      %v3137 = vsel %vm1649, %v2989, 0.0
      %3138 = vadd.xlane.f32.xlu0 %v3137
      %v3139 = vpop.xlane.xlu0 %3138
      %v3140 = vsel %vm1649, %v2991, 0.0
      %3141 = vadd.xlane.f32.xlu0 %v3140
      %v3142 = vpop.xlane.xlu0 %3141
      %v3143 = vsel %vm1649, %v2993, 0.0
      %3144 = vadd.xlane.f32.xlu0 %v3143
      %v3145 = vpop.xlane.xlu0 %3144
      %v3146 = vsel %vm1649, %v2995, 0.0
      %3147 = vadd.xlane.f32.xlu0 %v3146
      %v3148 = vpop.xlane.xlu0 %3147
      %v3149 = vsel %vm1649, %v2997, 0.0
      %3150 = vadd.xlane.f32.xlu0 %v3149
      %v3151 = vpop.xlane.xlu0 %3150
      %v3152 = vsel %vm1649, %v2999, 0.0
      %3153 = vadd.xlane.f32.xlu0 %v3152
      %v3154 = vpop.xlane.xlu0 %3153
      %v3155 = vsel %vm1649, %v3001, 0.0
      %3156 = vadd.xlane.f32.xlu0 %v3155
      %v3157 = vpop.xlane.xlu0 %3156
      %v3158 = vsel %vm1649, %v3003, 0.0
      %3159 = vadd.xlane.f32.xlu0 %v3158
      %v3160 = vpop.xlane.xlu0 %3159
      %v3161 = vsel %vm1649, %v3005, 0.0
      %3162 = vadd.xlane.f32.xlu0 %v3161
      %v3163 = vpop.xlane.xlu0 %3162
      %v3164 = vsel %vm1649, %v3007, 0.0
      %3165 = vadd.xlane.f32.xlu0 %v3164
      %v3166 = vpop.xlane.xlu0 %3165
      %v3167 = vsel %vm1649, %v3009, 0.0
      %3168 = vadd.xlane.f32.xlu0 %v3167
      %v3169 = vpop.xlane.xlu0 %3168
      %v3170 = vsel %vm1649, %v3011, 0.0
      %3171 = vadd.xlane.f32.xlu0 %v3170
      %v3172 = vpop.xlane.xlu0 %3171
      %v3173 = vsel %vm1649, %v3013, 0.0
      %3174 = vadd.xlane.f32.xlu0 %v3173
      %v3175 = vpop.xlane.xlu0 %3174
      %v3176 = vsel %vm1649, %v3015, 0.0
      %3177 = vadd.xlane.f32.xlu0 %v3176
      %v3178 = vpop.xlane.xlu0 %3177
      %v3179 = vsel %vm1649, %v3017, 0.0
      %3180 = vadd.xlane.f32.xlu0 %v3179
      %v3181 = vpop.xlane.xlu0 %3180
      %v3182 = vsel %vm1649, %v3019, 0.0
      %3183 = vadd.xlane.f32.xlu0 %v3182
      %v3184 = vpop.xlane.xlu0 %3183
      %v3185 = vsel %vm1649, %v3021, 0.0
      %3186 = vadd.xlane.f32.xlu0 %v3185
      %v3187 = vpop.xlane.xlu0 %3186
      %v3188 = vsel %vm1649, %v3023, 0.0
      %3189 = vadd.xlane.f32.xlu0 %v3188
      %v3190 = vpop.xlane.xlu0 %3189
      %v3191 = vsel %vm1649, %v3025, 0.0
      %3192 = vadd.xlane.f32.xlu0 %v3191
      %v3193 = vpop.xlane.xlu0 %3192
      %v3194 = vsel %vm1649, %v3027, 0.0
      %3195 = vadd.xlane.f32.xlu0 %v3194
      %v3196 = vpop.xlane.xlu0 %3195
      %v3197 = vsel %vm1649, %v3029, 0.0
      %3198 = vadd.xlane.f32.xlu0 %v3197
      %v3199 = vpop.xlane.xlu0 %3198
      %v3200 = vsel %vm1649, %v3031, 0.0
      %3201 = vadd.xlane.f32.xlu0 %v3200
      %v3202 = vpop.xlane.xlu0 %3201
      %v3203 = vsel %vm1649, %v3033, 0.0
      %3204 = vadd.xlane.f32.xlu0 %v3203
      %v3205 = vpop.xlane.xlu0 %3204
      %v3206 = vsel %vm1649, %v3035, 0.0
      %3207 = vadd.xlane.f32.xlu0 %v3206
      %v3208 = vpop.xlane.xlu0 %3207
      %v3209 = vsel %vm1649, %v3037, 0.0
      %3210 = vadd.xlane.f32.xlu0 %v3209
      %v3211 = vpop.xlane.xlu0 %3210
      %v3212 = vsel %vm1649, %v3039, 0.0
      %3213 = vadd.xlane.f32.xlu0 %v3212
      %v3214 = vpop.xlane.xlu0 %3213
      %v3215 = vsel %vm1649, %v3041, 0.0
      %3216 = vadd.xlane.f32.xlu0 %v3215
      %v3217 = vpop.xlane.xlu0 %3216
      %v3218 = vsel %vm1649, %v3043, 0.0
      %3219 = vadd.xlane.f32.xlu0 %v3218
      %v3220 = vpop.xlane.xlu0 %3219
      %v3221 = vsel %vm1649, %v3045, 0.0
      %3222 = vadd.xlane.f32.xlu0 %v3221
      %v3223 = vpop.xlane.xlu0 %3222
      %v3224 = vsel %vm1649, %v3047, 0.0
      %3225 = vadd.xlane.f32.xlu0 %v3224
      %v3226 = vpop.xlane.xlu0 %3225
      %v3227 = vsel %vm1649, %v3049, 0.0
      %3228 = vadd.xlane.f32.xlu0 %v3227
      %v3229 = vpop.xlane.xlu0 %3228
      %v3230 = vsel %vm1649, %v3051, 0.0
      %3231 = vadd.xlane.f32.xlu0 %v3230
      %v3232 = vpop.xlane.xlu0 %3231
      %v3233 = vsel %vm1649, %v3053, 0.0
      %3234 = vadd.xlane.f32.xlu0 %v3233
      %v3235 = vpop.xlane.xlu0 %3234
      %v3236 = vsel %vm1649, %v3055, 0.0
      %3237 = vadd.xlane.f32.xlu0 %v3236
      %v3238 = vpop.xlane.xlu0 %3237
      %v3239 = vsel %vm1649, %v3057, 0.0
      %3240 = vadd.xlane.f32.xlu0 %v3239
      %v3241 = vpop.xlane.xlu0 %3240
      %v3242 = vsel %vm1649, %v3059, 0.0
      %3243 = vadd.xlane.f32.xlu0 %v3242
      %v3244 = vpop.xlane.xlu0 %3243
      %v3245 = vsel %vm1649, %v3061, 0.0
      %3246 = vadd.xlane.f32.xlu0 %v3245
      %v3247 = vpop.xlane.xlu0 %3246
      %v3248 = vsel %vm1649, %v3063, 0.0
      %3249 = vadd.xlane.f32.xlu0 %v3248
      %v3250 = vpop.xlane.xlu0 %3249
      %v3251 = vsel %vm1649, %v3065, 0.0
      %3252 = vadd.xlane.f32.xlu0 %v3251
      %v3253 = vpop.xlane.xlu0 %3252
      %v3254 = vsel %vm1649, %v3067, 0.0
      %3255 = vadd.xlane.f32.xlu0 %v3254
      %v3256 = vpop.xlane.xlu0 %3255
      %v3257 = vsel %vm1649, %v3069, 0.0
      %3258 = vadd.xlane.f32.xlu0 %v3257
      %v3259 = vpop.xlane.xlu0 %3258
      %v3260 = vsel %vm1649, %v3071, 0.0
      %3261 = vadd.xlane.f32.xlu0 %v3260
      %v3262 = vpop.xlane.xlu0 %3261
      %v3263 = vsel %vm1649, %v3073, 0.0
      %3264 = vadd.xlane.f32.xlu0 %v3263
      %v3265 = vpop.xlane.xlu0 %3264
      %v3266 = vrcp.pop %v3076
      %v3267 = vrcp.pop %v3079
      %v3268 = vrcp.pop %v3082
      %v3269 = vrcp.pop %v3085
      %v3270 = vrcp.pop %v3088
      %v3271 = vrcp.pop %v3091
      %v3272 = vrcp.pop %v3094
      %v3273 = vrcp.pop %v3097
      %v3274 = vrcp.pop %v3100
      %v3275 = vrcp.pop %v3103
      %v3276 = vrcp.pop %v3106
      %v3277 = vrcp.pop %v3109
      %v3278 = vrcp.pop %v3112
      %v3279 = vrcp.pop %v3115
      %v3280 = vrcp.pop %v3118
      %v3281 = vrcp.pop %v3121
      %v3282 = vrcp.pop %v3124
      %v3283 = vrcp.pop %v3127
      %v3284 = vrcp.pop %v3130
      %v3285 = vrcp.pop %v3133
      %v3286 = vrcp.pop %v3136
      %v3287 = vrcp.pop %v3139
      %v3288 = vrcp.pop %v3142
      %v3289 = vrcp.pop %v3145
      %v3290 = vrcp.pop %v3148
      %v3291 = vrcp.pop %v3151
      %v3292 = vrcp.pop %v3154
      %v3293 = vrcp.pop %v3157
      %v3294 = vrcp.pop %v3160
      %v3295 = vrcp.pop %v3163
      %v3296 = vrcp.pop %v3166
      %v3297 = vrcp.pop %v3169
      %v3298 = vrcp.pop %v3172
      %v3299 = vrcp.pop %v3175
      %v3300 = vrcp.pop %v3178
      %v3301 = vrcp.pop %v3181
      %v3302 = vrcp.pop %v3184
      %v3303 = vrcp.pop %v3187
      %v3304 = vrcp.pop %v3190
      %v3305 = vrcp.pop %v3193
      %v3306 = vrcp.pop %v3196
      %v3307 = vrcp.pop %v3199
      %v3308 = vrcp.pop %v3202
      %v3309 = vrcp.pop %v3205
      %v3310 = vrcp.pop %v3208
      %v3311 = vrcp.pop %v3211
      %v3312 = vrcp.pop %v3214
      %v3313 = vrcp.pop %v3217
      %v3314 = vrcp.pop %v3220
      %v3315 = vrcp.pop %v3223
      %v3316 = vrcp.pop %v3226
      %v3317 = vrcp.pop %v3229
      %v3318 = vrcp.pop %v3232
      %v3319 = vrcp.pop %v3235
      %v3320 = vrcp.pop %v3238
      %v3321 = vrcp.pop %v3241
      %v3322 = vrcp.pop %v3244
      %v3323 = vrcp.pop %v3247
      %v3324 = vrcp.pop %v3250
      %v3325 = vrcp.pop %v3253
      %v3326 = vrcp.pop %v3256
      %v3327 = vrcp.pop %v3259
      %v3328 = vrcp.pop %v3262
      %v3329 = vrcp.pop %v3265
      %v3330 = vmul.f32 %v2947, %v3266
      %v3331 = vmul.f32 %v2949, %v3267
      %v3332 = vmul.f32 %v2951, %v3268
      %v3333 = vmul.f32 %v2953, %v3269
      %v3334 = vmul.f32 %v2955, %v3270
      %v3335 = vmul.f32 %v2957, %v3271
      %v3336 = vmul.f32 %v2959, %v3272
      %v3337 = vmul.f32 %v2961, %v3273
      %v3338 = vmul.f32 %v2963, %v3274
      %v3339 = vmul.f32 %v2965, %v3275
      %v3340 = vmul.f32 %v2967, %v3276
      %v3341 = vmul.f32 %v2969, %v3277
      %v3342 = vmul.f32 %v2971, %v3278
      %v3343 = vmul.f32 %v2973, %v3279
      %v3344 = vmul.f32 %v2975, %v3280
      %v3345 = vmul.f32 %v2977, %v3281
      %v3346 = vmul.f32 %v2979, %v3282
      %v3347 = vmul.f32 %v2981, %v3283
      %v3348 = vmul.f32 %v2983, %v3284
      %v3349 = vmul.f32 %v2985, %v3285
      %v3350 = vmul.f32 %v2987, %v3286
      %v3351 = vmul.f32 %v2989, %v3287
      %v3352 = vmul.f32 %v2991, %v3288
      %v3353 = vmul.f32 %v2993, %v3289
      %v3354 = vmul.f32 %v2995, %v3290
      %v3355 = vmul.f32 %v2997, %v3291
      %v3356 = vmul.f32 %v2999, %v3292
      %v3357 = vmul.f32 %v3001, %v3293
      %v3358 = vmul.f32 %v3003, %v3294
      %v3359 = vmul.f32 %v3005, %v3295
      %v3360 = vmul.f32 %v3007, %v3296
      %v3361 = vmul.f32 %v3009, %v3297
      %v3362 = vmul.f32 %v3011, %v3298
      %v3363 = vmul.f32 %v3013, %v3299
      %v3364 = vmul.f32 %v3015, %v3300
      %v3365 = vmul.f32 %v3017, %v3301
      %v3366 = vmul.f32 %v3019, %v3302
      %v3367 = vmul.f32 %v3021, %v3303
      %v3368 = vmul.f32 %v3023, %v3304
      %v3369 = vmul.f32 %v3025, %v3305
      %v3370 = vmul.f32 %v3027, %v3306
      %v3371 = vmul.f32 %v3029, %v3307
      %v3372 = vmul.f32 %v3031, %v3308
      %v3373 = vmul.f32 %v3033, %v3309
      %v3374 = vmul.f32 %v3035, %v3310
      %v3375 = vmul.f32 %v3037, %v3311
      %v3376 = vmul.f32 %v3039, %v3312
      %v3377 = vmul.f32 %v3041, %v3313
      %v3378 = vmul.f32 %v3043, %v3314
      %v3379 = vmul.f32 %v3045, %v3315
      %v3380 = vmul.f32 %v3047, %v3316
      %v3381 = vmul.f32 %v3049, %v3317
      %v3382 = vmul.f32 %v3051, %v3318
      %v3383 = vmul.f32 %v3053, %v3319
      %v3384 = vmul.f32 %v3055, %v3320
      %v3385 = vmul.f32 %v3057, %v3321
      %v3386 = vmul.f32 %v3059, %v3322
      %v3387 = vmul.f32 %v3061, %v3323
      %v3388 = vmul.f32 %v3063, %v3324
      %v3389 = vmul.f32 %v3065, %v3325
      %v3390 = vmul.f32 %v3067, %v3326
      %v3391 = vmul.f32 %v3069, %v3327
      %v3392 = vmul.f32 %v3071, %v3328
      %v3393 = vmul.f32 %v3073, %v3329
      %v3394 = vpack.c.bf16 %v3331, %v3330
      %v3395 = vpack.c.bf16 %v3333, %v3332
      %v3396 = vpack.c.bf16 %v3335, %v3334
      %v3397 = vpack.c.bf16 %v3337, %v3336
      %v3398 = vpack.c.bf16 %v3339, %v3338
      %v3399 = vpack.c.bf16 %v3341, %v3340
      %v3400 = vpack.c.bf16 %v3343, %v3342
      %v3401 = vpack.c.bf16 %v3345, %v3344
      %v3402 = vpack.c.bf16 %v3347, %v3346
      %v3403 = vpack.c.bf16 %v3349, %v3348
      %v3404 = vpack.c.bf16 %v3351, %v3350
      %v3405 = vpack.c.bf16 %v3353, %v3352
      %v3406 = vpack.c.bf16 %v3355, %v3354
      %v3407 = vpack.c.bf16 %v3357, %v3356
      %v3408 = vpack.c.bf16 %v3359, %v3358
      %v3409 = vpack.c.bf16 %v3361, %v3360
      %v3410 = vpack.c.bf16 %v3363, %v3362
      %v3411 = vpack.c.bf16 %v3365, %v3364
      %v3412 = vpack.c.bf16 %v3367, %v3366
      %v3413 = vpack.c.bf16 %v3369, %v3368
      %v3414 = vpack.c.bf16 %v3371, %v3370
      %v3415 = vpack.c.bf16 %v3373, %v3372
      %v3416 = vpack.c.bf16 %v3375, %v3374
      %v3417 = vpack.c.bf16 %v3377, %v3376
      %v3418 = vpack.c.bf16 %v3379, %v3378
      %v3419 = vpack.c.bf16 %v3381, %v3380
      %v3420 = vpack.c.bf16 %v3383, %v3382
      %v3421 = vpack.c.bf16 %v3385, %v3384
      %v3422 = vpack.c.bf16 %v3387, %v3386
      %v3423 = vpack.c.bf16 %v3389, %v3388
      %v3424 = vpack.c.bf16 %v3391, %v3390
      %v3425 = vpack.c.bf16 %v3393, %v3392
      %v3427 = vsel %vm1649, %v3394, 0
      %v3430 = vsel %vm1649, %v3395, 0
      %3432 = vmatprep.subr.bf16.mxu0 0
      %3433 = vmatpush1.bf16.msra.mxu0 %v1435
      %3434 = vmatprep.subr.bf16.mxu0 0
      %3435 = vmatpush1.bf16.msra.mxu0 %v1438
      %3436 = vmatprep.subr.bf16.mxu0 0
      %3437 = vmatpush1.bf16.msra.mxu0 0
      %3438 = vmatprep.subr.bf16.mxu0 0
      %3439 = vmatpush1.bf16.msra.mxu0 0
      %3440 = vmatprep.subr.bf16.mxu0 0
      %3441 = vmatpush1.bf16.msra.mxu0 0
      %3442 = vmatprep.subr.bf16.mxu0 0
      %3443 = vmatpush1.bf16.msra.mxu0 0
      %3444 = vmatprep.subr.bf16.mxu0 0
      %3445 = vmatpush1.bf16.msra.mxu0 0
      %3446 = vmatprep.subr.bf16.mxu0 0
      %3447 = vmatpush1.bf16.msra.mxu0 0
      %3448 = vmatprep.subr.bf16.mxu0 0
      %3449 = vmatpush1.bf16.msra.mxu0 0
      %3450 = vmatprep.subr.bf16.mxu0 0
      %3451 = vmatpush1.bf16.msra.mxu0 0
      %3452 = vmatprep.subr.bf16.mxu0 0
      %3453 = vmatpush1.bf16.msra.mxu0 0
      %3454 = vmatprep.subr.bf16.mxu0 0
      %3455 = vmatpush1.bf16.msra.mxu0 0
      %3456 = vmatprep.subr.bf16.mxu0 0
      %3457 = vmatpush1.bf16.msra.mxu0 0
      %3458 = vmatprep.subr.bf16.mxu0 0
      %3459 = vmatpush1.bf16.msra.mxu0 0
      %3460 = vmatprep.subr.bf16.mxu0 0
      %3461 = vmatpush1.bf16.msra.mxu0 0
      %3462 = vmatprep.subr.bf16.mxu0 0
      %3463 = vmatpush1.bf16.msra.mxu0 0
      %3464 = vmatprep.mubr.bf16.mxu0 0
      %3465 = vmatmul.mubr.bf16.gmra.mrb[0].mxu0 %v3427
      %v3466 = vpop.f32.mrb[0].mxu0
      %v3467 = vadd.f32 0.0, %v3466
      %v3468 = vpop.f32.mrb[0].mxu0
      %v3469 = vpop.f32.mrb[0].mxu0
      %v3470 = vadd.f32 0.0, %v3469
      %v3471 = vpop.f32.mrb[0].mxu0
      %3472 = vmatprep.mubr.bf16.mxu0 0
      %3473 = vmatmul.mubr.bf16.gmra.mrb[0].mxu0 %v3430
      %v3474 = vpop.f32.mrb[0].mxu0
      %v3475 = vadd.f32 0.0, %v3474
      %v3476 = vpop.f32.mrb[0].mxu0
      %v3477 = vpop.f32.mrb[0].mxu0
      %v3478 = vadd.f32 0.0, %v3477
      %v3479 = vpop.f32.mrb[0].mxu0
      %3480 = vdwg.mxu0
      %v3482 = vsel %vm1649, %v3396, 0
      %v3485 = vsel %vm1649, %v3397, 0
      %3487 = vmatprep.subr.bf16.mxu0 0
      %3488 = vmatpush1.bf16.msra.mxu0 %v1441
      %3489 = vmatprep.subr.bf16.mxu0 0
      %3490 = vmatpush1.bf16.msra.mxu0 %v1444
      %3491 = vmatprep.subr.bf16.mxu0 0
      %3492 = vmatpush1.bf16.msra.mxu0 0
      %3493 = vmatprep.subr.bf16.mxu0 0
      %3494 = vmatpush1.bf16.msra.mxu0 0
      %3495 = vmatprep.subr.bf16.mxu0 0
      %3496 = vmatpush1.bf16.msra.mxu0 0
      %3497 = vmatprep.subr.bf16.mxu0 0
      %3498 = vmatpush1.bf16.msra.mxu0 0
      %3499 = vmatprep.subr.bf16.mxu0 0
      %3500 = vmatpush1.bf16.msra.mxu0 0
      %3501 = vmatprep.subr.bf16.mxu0 0
      %3502 = vmatpush1.bf16.msra.mxu0 0
      %3503 = vmatprep.subr.bf16.mxu0 0
      %3504 = vmatpush1.bf16.msra.mxu0 0
      %3505 = vmatprep.subr.bf16.mxu0 0
      %3506 = vmatpush1.bf16.msra.mxu0 0
      %3507 = vmatprep.subr.bf16.mxu0 0
      %3508 = vmatpush1.bf16.msra.mxu0 0
      %3509 = vmatprep.subr.bf16.mxu0 0
      %3510 = vmatpush1.bf16.msra.mxu0 0
      %3511 = vmatprep.subr.bf16.mxu0 0
      %3512 = vmatpush1.bf16.msra.mxu0 0
      %3513 = vmatprep.subr.bf16.mxu0 0
      %3514 = vmatpush1.bf16.msra.mxu0 0
      %3515 = vmatprep.subr.bf16.mxu0 0
      %3516 = vmatpush1.bf16.msra.mxu0 0
      %3517 = vmatprep.subr.bf16.mxu0 0
      %3518 = vmatpush1.bf16.msra.mxu0 0
      %3519 = vmatprep.mubr.bf16.mxu0 0
      %3520 = vmatmul.mubr.bf16.gmra.mrb[0].mxu0 %v3482
      %v3521 = vpop.f32.mrb[0].mxu0
      %v3522 = vadd.f32 0.0, %v3521
      %v3523 = vpop.f32.mrb[0].mxu0
      %v3524 = vpop.f32.mrb[0].mxu0
      %v3525 = vadd.f32 0.0, %v3524
      %v3526 = vpop.f32.mrb[0].mxu0
      %3527 = vmatprep.mubr.bf16.mxu0 0
      %3528 = vmatmul.mubr.bf16.gmra.mrb[0].mxu0 %v3485
      %v3529 = vpop.f32.mrb[0].mxu0
      %v3530 = vadd.f32 0.0, %v3529
      %v3531 = vpop.f32.mrb[0].mxu0
      %v3532 = vpop.f32.mrb[0].mxu0
      %v3533 = vadd.f32 0.0, %v3532
      %v3534 = vpop.f32.mrb[0].mxu0
      %3535 = vdwg.mxu0
      %v3537 = vsel %vm1649, %v3398, 0
      %v3540 = vsel %vm1649, %v3399, 0
      %3542 = vmatprep.subr.bf16.mxu0 0
      %3543 = vmatpush1.bf16.msra.mxu0 %v1447
      %3544 = vmatprep.subr.bf16.mxu0 0
      %3545 = vmatpush1.bf16.msra.mxu0 %v1450
      %3546 = vmatprep.subr.bf16.mxu0 0
      %3547 = vmatpush1.bf16.msra.mxu0 0
      %3548 = vmatprep.subr.bf16.mxu0 0
      %3549 = vmatpush1.bf16.msra.mxu0 0
      %3550 = vmatprep.subr.bf16.mxu0 0
      %3551 = vmatpush1.bf16.msra.mxu0 0
      %3552 = vmatprep.subr.bf16.mxu0 0
      %3553 = vmatpush1.bf16.msra.mxu0 0
      %3554 = vmatprep.subr.bf16.mxu0 0
      %3555 = vmatpush1.bf16.msra.mxu0 0
      %3556 = vmatprep.subr.bf16.mxu0 0
      %3557 = vmatpush1.bf16.msra.mxu0 0
      %3558 = vmatprep.subr.bf16.mxu0 0
      %3559 = vmatpush1.bf16.msra.mxu0 0
      %3560 = vmatprep.subr.bf16.mxu0 0
      %3561 = vmatpush1.bf16.msra.mxu0 0
      %3562 = vmatprep.subr.bf16.mxu0 0
      %3563 = vmatpush1.bf16.msra.mxu0 0
      %3564 = vmatprep.subr.bf16.mxu0 0
      %3565 = vmatpush1.bf16.msra.mxu0 0
      %3566 = vmatprep.subr.bf16.mxu0 0
      %3567 = vmatpush1.bf16.msra.mxu0 0
      %3568 = vmatprep.subr.bf16.mxu0 0
      %3569 = vmatpush1.bf16.msra.mxu0 0
      %3570 = vmatprep.subr.bf16.mxu0 0
      %3571 = vmatpush1.bf16.msra.mxu0 0
      %3572 = vmatprep.subr.bf16.mxu0 0
      %3573 = vmatpush1.bf16.msra.mxu0 0
      %3574 = vmatprep.mubr.bf16.mxu0 0
      %3575 = vmatmul.mubr.bf16.gmra.mrb[0].mxu0 %v3537
      %v3576 = vpop.f32.mrb[0].mxu0
      %v3577 = vadd.f32 0.0, %v3576
      %v3578 = vpop.f32.mrb[0].mxu0
      %v3579 = vpop.f32.mrb[0].mxu0
      %v3580 = vadd.f32 0.0, %v3579
      %v3581 = vpop.f32.mrb[0].mxu0
      %3582 = vmatprep.mubr.bf16.mxu0 0
      %3583 = vmatmul.mubr.bf16.gmra.mrb[0].mxu0 %v3540
      %v3584 = vpop.f32.mrb[0].mxu0
      %v3585 = vadd.f32 0.0, %v3584
      %v3586 = vpop.f32.mrb[0].mxu0
      %v3587 = vpop.f32.mrb[0].mxu0
      %v3588 = vadd.f32 0.0, %v3587
      %v3589 = vpop.f32.mrb[0].mxu0
      %3590 = vdwg.mxu0
      %v3592 = vsel %vm1649, %v3400, 0
      %v3595 = vsel %vm1649, %v3401, 0
      %3597 = vmatprep.subr.bf16.mxu0 0
      %3598 = vmatpush1.bf16.msra.mxu0 %v1453
      %3599 = vmatprep.subr.bf16.mxu0 0
      %3600 = vmatpush1.bf16.msra.mxu0 %v1456
      %3601 = vmatprep.subr.bf16.mxu0 0
      %3602 = vmatpush1.bf16.msra.mxu0 0
      %3603 = vmatprep.subr.bf16.mxu0 0
      %3604 = vmatpush1.bf16.msra.mxu0 0
      %3605 = vmatprep.subr.bf16.mxu0 0
      %3606 = vmatpush1.bf16.msra.mxu0 0
      %3607 = vmatprep.subr.bf16.mxu0 0
      %3608 = vmatpush1.bf16.msra.mxu0 0
      %3609 = vmatprep.subr.bf16.mxu0 0
      %3610 = vmatpush1.bf16.msra.mxu0 0
      %3611 = vmatprep.subr.bf16.mxu0 0
      %3612 = vmatpush1.bf16.msra.mxu0 0
      %3613 = vmatprep.subr.bf16.mxu0 0
      %3614 = vmatpush1.bf16.msra.mxu0 0
      %3615 = vmatprep.subr.bf16.mxu0 0
      %3616 = vmatpush1.bf16.msra.mxu0 0
      %3617 = vmatprep.subr.bf16.mxu0 0
      %3618 = vmatpush1.bf16.msra.mxu0 0
      %3619 = vmatprep.subr.bf16.mxu0 0
      %3620 = vmatpush1.bf16.msra.mxu0 0
      %3621 = vmatprep.subr.bf16.mxu0 0
      %3622 = vmatpush1.bf16.msra.mxu0 0
      %3623 = vmatprep.subr.bf16.mxu0 0
      %3624 = vmatpush1.bf16.msra.mxu0 0
      %3625 = vmatprep.subr.bf16.mxu0 0
      %3626 = vmatpush1.bf16.msra.mxu0 0
      %3627 = vmatprep.subr.bf16.mxu0 0
      %3628 = vmatpush1.bf16.msra.mxu0 0
      %3629 = vmatprep.mubr.bf16.mxu0 0
      %3630 = vmatmul.mubr.bf16.gmra.mrb[0].mxu0 %v3592
      %v3631 = vpop.f32.mrb[0].mxu0
      %v3632 = vadd.f32 0.0, %v3631
      %v3633 = vpop.f32.mrb[0].mxu0
      %v3634 = vpop.f32.mrb[0].mxu0
      %v3635 = vadd.f32 0.0, %v3634
      %v3636 = vpop.f32.mrb[0].mxu0
      %3637 = vmatprep.mubr.bf16.mxu0 0
      %3638 = vmatmul.mubr.bf16.gmra.mrb[0].mxu0 %v3595
      %v3639 = vpop.f32.mrb[0].mxu0
      %v3640 = vadd.f32 0.0, %v3639
      %v3641 = vpop.f32.mrb[0].mxu0
      %v3642 = vpop.f32.mrb[0].mxu0
      %v3643 = vadd.f32 0.0, %v3642
      %v3644 = vpop.f32.mrb[0].mxu0
      %3645 = vdwg.mxu0
      %v3647 = vsel %vm1649, %v3402, 0
      %v3650 = vsel %vm1649, %v3403, 0
      %3652 = vmatprep.subr.bf16.mxu0 0
      %3653 = vmatpush1.bf16.msra.mxu0 %v1578
      %3654 = vmatprep.subr.bf16.mxu0 0
      %3655 = vmatpush1.bf16.msra.mxu0 %v1580
      %3656 = vmatprep.subr.bf16.mxu0 0
      %3657 = vmatpush1.bf16.msra.mxu0 0
      %3658 = vmatprep.subr.bf16.mxu0 0
      %3659 = vmatpush1.bf16.msra.mxu0 0
      %3660 = vmatprep.subr.bf16.mxu0 0
      %3661 = vmatpush1.bf16.msra.mxu0 0
      %3662 = vmatprep.subr.bf16.mxu0 0
      %3663 = vmatpush1.bf16.msra.mxu0 0
      %3664 = vmatprep.subr.bf16.mxu0 0
      %3665 = vmatpush1.bf16.msra.mxu0 0
      %3666 = vmatprep.subr.bf16.mxu0 0
      %3667 = vmatpush1.bf16.msra.mxu0 0
      %3668 = vmatprep.subr.bf16.mxu0 0
      %3669 = vmatpush1.bf16.msra.mxu0 0
      %3670 = vmatprep.subr.bf16.mxu0 0
      %3671 = vmatpush1.bf16.msra.mxu0 0
      %3672 = vmatprep.subr.bf16.mxu0 0
      %3673 = vmatpush1.bf16.msra.mxu0 0
      %3674 = vmatprep.subr.bf16.mxu0 0
      %3675 = vmatpush1.bf16.msra.mxu0 0
      %3676 = vmatprep.subr.bf16.mxu0 0
      %3677 = vmatpush1.bf16.msra.mxu0 0
      %3678 = vmatprep.subr.bf16.mxu0 0
      %3679 = vmatpush1.bf16.msra.mxu0 0
      %3680 = vmatprep.subr.bf16.mxu0 0
      %3681 = vmatpush1.bf16.msra.mxu0 0
      %3682 = vmatprep.subr.bf16.mxu0 0
      %3683 = vmatpush1.bf16.msra.mxu0 0
      %3684 = vmatprep.mubr.bf16.mxu0 0
      %3685 = vmatmul.mubr.bf16.gmra.mrb[0].mxu0 %v3647
      %v3686 = vpop.f32.mrb[0].mxu0
      %v3687 = vadd.f32 0.0, %v3686
      %v3688 = vpop.f32.mrb[0].mxu0
      %v3689 = vpop.f32.mrb[0].mxu0
      %v3690 = vadd.f32 0.0, %v3689
      %v3691 = vpop.f32.mrb[0].mxu0
      %3692 = vmatprep.mubr.bf16.mxu0 0
      %3693 = vmatmul.mubr.bf16.gmra.mrb[0].mxu0 %v3650
      %v3694 = vpop.f32.mrb[0].mxu0
      %v3695 = vadd.f32 0.0, %v3694
      %v3696 = vpop.f32.mrb[0].mxu0
      %v3697 = vpop.f32.mrb[0].mxu0
      %v3698 = vadd.f32 0.0, %v3697
      %v3699 = vpop.f32.mrb[0].mxu0
      %3700 = vdwg.mxu0
      %v3702 = vsel %vm1649, %v3404, 0
      %v3705 = vsel %vm1649, %v3405, 0
      %3707 = vmatprep.subr.bf16.mxu0 0
      %3708 = vmatpush1.bf16.msra.mxu0 %v1582
      %3709 = vmatprep.subr.bf16.mxu0 0
      %3710 = vmatpush1.bf16.msra.mxu0 %v1584
      %3711 = vmatprep.subr.bf16.mxu0 0
      %3712 = vmatpush1.bf16.msra.mxu0 0
      %3713 = vmatprep.subr.bf16.mxu0 0
      %3714 = vmatpush1.bf16.msra.mxu0 0
      %3715 = vmatprep.subr.bf16.mxu0 0
      %3716 = vmatpush1.bf16.msra.mxu0 0
      %3717 = vmatprep.subr.bf16.mxu0 0
      %3718 = vmatpush1.bf16.msra.mxu0 0
      %3719 = vmatprep.subr.bf16.mxu0 0
      %3720 = vmatpush1.bf16.msra.mxu0 0
      %3721 = vmatprep.subr.bf16.mxu0 0
      %3722 = vmatpush1.bf16.msra.mxu0 0
      %3723 = vmatprep.subr.bf16.mxu0 0
      %3724 = vmatpush1.bf16.msra.mxu0 0
      %3725 = vmatprep.subr.bf16.mxu0 0
      %3726 = vmatpush1.bf16.msra.mxu0 0
      %3727 = vmatprep.subr.bf16.mxu0 0
      %3728 = vmatpush1.bf16.msra.mxu0 0
      %3729 = vmatprep.subr.bf16.mxu0 0
      %3730 = vmatpush1.bf16.msra.mxu0 0
      %3731 = vmatprep.subr.bf16.mxu0 0
      %3732 = vmatpush1.bf16.msra.mxu0 0
      %3733 = vmatprep.subr.bf16.mxu0 0
      %3734 = vmatpush1.bf16.msra.mxu0 0
      %3735 = vmatprep.subr.bf16.mxu0 0
      %3736 = vmatpush1.bf16.msra.mxu0 0
      %3737 = vmatprep.subr.bf16.mxu0 0
      %3738 = vmatpush1.bf16.msra.mxu0 0
      %3739 = vmatprep.mubr.bf16.mxu0 0
      %3740 = vmatmul.mubr.bf16.gmra.mrb[0].mxu0 %v3702
      %v3741 = vpop.f32.mrb[0].mxu0
      %v3742 = vadd.f32 0.0, %v3741
      %v3743 = vpop.f32.mrb[0].mxu0
      %v3744 = vpop.f32.mrb[0].mxu0
      %v3745 = vadd.f32 0.0, %v3744
      %v3746 = vpop.f32.mrb[0].mxu0
      %3747 = vmatprep.mubr.bf16.mxu0 0
      %3748 = vmatmul.mubr.bf16.gmra.mrb[0].mxu0 %v3705
      %v3749 = vpop.f32.mrb[0].mxu0
      %v3750 = vadd.f32 0.0, %v3749
      %v3751 = vpop.f32.mrb[0].mxu0
      %v3752 = vpop.f32.mrb[0].mxu0
      %v3753 = vadd.f32 0.0, %v3752
      %v3754 = vpop.f32.mrb[0].mxu0
      %3755 = vdwg.mxu0
      %v3757 = vsel %vm1649, %v3406, 0
      %v3760 = vsel %vm1649, %v3407, 0
      %3762 = vmatprep.subr.bf16.mxu0 0
      %3763 = vmatpush1.bf16.msra.mxu0 %v1586
      %3764 = vmatprep.subr.bf16.mxu0 0
      %3765 = vmatpush1.bf16.msra.mxu0 %v1588
      %3766 = vmatprep.subr.bf16.mxu0 0
      %3767 = vmatpush1.bf16.msra.mxu0 0
      %3768 = vmatprep.subr.bf16.mxu0 0
      %3769 = vmatpush1.bf16.msra.mxu0 0
      %3770 = vmatprep.subr.bf16.mxu0 0
      %3771 = vmatpush1.bf16.msra.mxu0 0
      %3772 = vmatprep.subr.bf16.mxu0 0
      %3773 = vmatpush1.bf16.msra.mxu0 0
      %3774 = vmatprep.subr.bf16.mxu0 0
      %3775 = vmatpush1.bf16.msra.mxu0 0
      %3776 = vmatprep.subr.bf16.mxu0 0
      %3777 = vmatpush1.bf16.msra.mxu0 0
      %3778 = vmatprep.subr.bf16.mxu0 0
      %3779 = vmatpush1.bf16.msra.mxu0 0
      %3780 = vmatprep.subr.bf16.mxu0 0
      %3781 = vmatpush1.bf16.msra.mxu0 0
      %3782 = vmatprep.subr.bf16.mxu0 0
      %3783 = vmatpush1.bf16.msra.mxu0 0
      %3784 = vmatprep.subr.bf16.mxu0 0
      %3785 = vmatpush1.bf16.msra.mxu0 0
      %3786 = vmatprep.subr.bf16.mxu0 0
      %3787 = vmatpush1.bf16.msra.mxu0 0
      %3788 = vmatprep.subr.bf16.mxu0 0
      %3789 = vmatpush1.bf16.msra.mxu0 0
      %3790 = vmatprep.subr.bf16.mxu0 0
      %3791 = vmatpush1.bf16.msra.mxu0 0
      %3792 = vmatprep.subr.bf16.mxu0 0
      %3793 = vmatpush1.bf16.msra.mxu0 0
      %3794 = vmatprep.mubr.bf16.mxu0 0
      %3795 = vmatmul.mubr.bf16.gmra.mrb[0].mxu0 %v3757
      %v3796 = vpop.f32.mrb[0].mxu0
      %v3797 = vadd.f32 0.0, %v3796
      %v3798 = vpop.f32.mrb[0].mxu0
      %v3799 = vpop.f32.mrb[0].mxu0
      %v3800 = vadd.f32 0.0, %v3799
      %v3801 = vpop.f32.mrb[0].mxu0
      %3802 = vmatprep.mubr.bf16.mxu0 0
      %3803 = vmatmul.mubr.bf16.gmra.mrb[0].mxu0 %v3760
      %v3804 = vpop.f32.mrb[0].mxu0
      %v3805 = vadd.f32 0.0, %v3804
      %v3806 = vpop.f32.mrb[0].mxu0
      %v3807 = vpop.f32.mrb[0].mxu0
      %v3808 = vadd.f32 0.0, %v3807
      %v3809 = vpop.f32.mrb[0].mxu0
      %3810 = vdwg.mxu0
      %v3812 = vsel %vm1649, %v3408, 0
      %v3815 = vsel %vm1649, %v3409, 0
      %3817 = vmatprep.subr.bf16.mxu0 0
      %3818 = vmatpush1.bf16.msra.mxu0 %v1590
      %3819 = vmatprep.subr.bf16.mxu0 0
      %3820 = vmatpush1.bf16.msra.mxu0 %v1592
      %3821 = vmatprep.subr.bf16.mxu0 0
      %3822 = vmatpush1.bf16.msra.mxu0 0
      %3823 = vmatprep.subr.bf16.mxu0 0
      %3824 = vmatpush1.bf16.msra.mxu0 0
      %3825 = vmatprep.subr.bf16.mxu0 0
      %3826 = vmatpush1.bf16.msra.mxu0 0
      %3827 = vmatprep.subr.bf16.mxu0 0
      %3828 = vmatpush1.bf16.msra.mxu0 0
      %3829 = vmatprep.subr.bf16.mxu0 0
      %3830 = vmatpush1.bf16.msra.mxu0 0
      %3831 = vmatprep.subr.bf16.mxu0 0
      %3832 = vmatpush1.bf16.msra.mxu0 0
      %3833 = vmatprep.subr.bf16.mxu0 0
      %3834 = vmatpush1.bf16.msra.mxu0 0
      %3835 = vmatprep.subr.bf16.mxu0 0
      %3836 = vmatpush1.bf16.msra.mxu0 0
      %3837 = vmatprep.subr.bf16.mxu0 0
      %3838 = vmatpush1.bf16.msra.mxu0 0
      %3839 = vmatprep.subr.bf16.mxu0 0
      %3840 = vmatpush1.bf16.msra.mxu0 0
      %3841 = vmatprep.subr.bf16.mxu0 0
      %3842 = vmatpush1.bf16.msra.mxu0 0
      %3843 = vmatprep.subr.bf16.mxu0 0
      %3844 = vmatpush1.bf16.msra.mxu0 0
      %3845 = vmatprep.subr.bf16.mxu0 0
      %3846 = vmatpush1.bf16.msra.mxu0 0
      %3847 = vmatprep.subr.bf16.mxu0 0
      %3848 = vmatpush1.bf16.msra.mxu0 0
      %3849 = vmatprep.mubr.bf16.mxu0 0
      %3850 = vmatmul.mubr.bf16.gmra.mrb[0].mxu0 %v3812
      %v3851 = vpop.f32.mrb[0].mxu0
      %v3852 = vadd.f32 0.0, %v3851
      %v3853 = vpop.f32.mrb[0].mxu0
      %v3854 = vpop.f32.mrb[0].mxu0
      %v3855 = vadd.f32 0.0, %v3854
      %v3856 = vpop.f32.mrb[0].mxu0
      %3857 = vmatprep.mubr.bf16.mxu0 0
      %3858 = vmatmul.mubr.bf16.gmra.mrb[0].mxu0 %v3815
      %v3859 = vpop.f32.mrb[0].mxu0
      %v3860 = vadd.f32 0.0, %v3859
      %v3861 = vpop.f32.mrb[0].mxu0
      %v3862 = vpop.f32.mrb[0].mxu0
      %v3863 = vadd.f32 0.0, %v3862
      %v3864 = vpop.f32.mrb[0].mxu0
      %3865 = vdwg.mxu0
      %v3867 = vsel %vm1649, %v3410, 0
      %v3870 = vsel %vm1649, %v3411, 0
      %3872 = vmatprep.subr.bf16.mxu0 0
      %3873 = vmatpush1.bf16.msra.mxu0 %v1602
      %3874 = vmatprep.subr.bf16.mxu0 0
      %3875 = vmatpush1.bf16.msra.mxu0 %v1604
      %3876 = vmatprep.subr.bf16.mxu0 0
      %3877 = vmatpush1.bf16.msra.mxu0 0
      %3878 = vmatprep.subr.bf16.mxu0 0
      %3879 = vmatpush1.bf16.msra.mxu0 0
      %3880 = vmatprep.subr.bf16.mxu0 0
      %3881 = vmatpush1.bf16.msra.mxu0 0
      %3882 = vmatprep.subr.bf16.mxu0 0
      %3883 = vmatpush1.bf16.msra.mxu0 0
      %3884 = vmatprep.subr.bf16.mxu0 0
      %3885 = vmatpush1.bf16.msra.mxu0 0
      %3886 = vmatprep.subr.bf16.mxu0 0
      %3887 = vmatpush1.bf16.msra.mxu0 0
      %3888 = vmatprep.subr.bf16.mxu0 0
      %3889 = vmatpush1.bf16.msra.mxu0 0
      %3890 = vmatprep.subr.bf16.mxu0 0
      %3891 = vmatpush1.bf16.msra.mxu0 0
      %3892 = vmatprep.subr.bf16.mxu0 0
      %3893 = vmatpush1.bf16.msra.mxu0 0
      %3894 = vmatprep.subr.bf16.mxu0 0
      %3895 = vmatpush1.bf16.msra.mxu0 0
      %3896 = vmatprep.subr.bf16.mxu0 0
      %3897 = vmatpush1.bf16.msra.mxu0 0
      %3898 = vmatprep.subr.bf16.mxu0 0
      %3899 = vmatpush1.bf16.msra.mxu0 0
      %3900 = vmatprep.subr.bf16.mxu0 0
      %3901 = vmatpush1.bf16.msra.mxu0 0
      %3902 = vmatprep.subr.bf16.mxu0 0
      %3903 = vmatpush1.bf16.msra.mxu0 0
      %3904 = vmatprep.mubr.bf16.mxu0 0
      %3905 = vmatmul.mubr.bf16.gmra.mrb[0].mxu0 %v3867
      %v3906 = vpop.f32.mrb[0].mxu0
      %v3907 = vadd.f32 0.0, %v3906
      %v3908 = vpop.f32.mrb[0].mxu0
      %v3909 = vpop.f32.mrb[0].mxu0
      %v3910 = vadd.f32 0.0, %v3909
      %v3911 = vpop.f32.mrb[0].mxu0
      %3912 = vmatprep.mubr.bf16.mxu0 0
      %3913 = vmatmul.mubr.bf16.gmra.mrb[0].mxu0 %v3870
      %v3914 = vpop.f32.mrb[0].mxu0
      %v3915 = vadd.f32 0.0, %v3914
      %v3916 = vpop.f32.mrb[0].mxu0
      %v3917 = vpop.f32.mrb[0].mxu0
      %v3918 = vadd.f32 0.0, %v3917
      %v3919 = vpop.f32.mrb[0].mxu0
      %3920 = vdwg.mxu0
      %v3922 = vsel %vm1649, %v3412, 0
      %v3925 = vsel %vm1649, %v3413, 0
      %3927 = vmatprep.subr.bf16.mxu0 0
      %3928 = vmatpush1.bf16.msra.mxu0 %v1606
      %3929 = vmatprep.subr.bf16.mxu0 0
      %3930 = vmatpush1.bf16.msra.mxu0 %v1608
      %3931 = vmatprep.subr.bf16.mxu0 0
      %3932 = vmatpush1.bf16.msra.mxu0 0
      %3933 = vmatprep.subr.bf16.mxu0 0
      %3934 = vmatpush1.bf16.msra.mxu0 0
      %3935 = vmatprep.subr.bf16.mxu0 0
      %3936 = vmatpush1.bf16.msra.mxu0 0
      %3937 = vmatprep.subr.bf16.mxu0 0
      %3938 = vmatpush1.bf16.msra.mxu0 0
      %3939 = vmatprep.subr.bf16.mxu0 0
      %3940 = vmatpush1.bf16.msra.mxu0 0
      %3941 = vmatprep.subr.bf16.mxu0 0
      %3942 = vmatpush1.bf16.msra.mxu0 0
      %3943 = vmatprep.subr.bf16.mxu0 0
      %3944 = vmatpush1.bf16.msra.mxu0 0
      %3945 = vmatprep.subr.bf16.mxu0 0
      %3946 = vmatpush1.bf16.msra.mxu0 0
      %3947 = vmatprep.subr.bf16.mxu0 0
      %3948 = vmatpush1.bf16.msra.mxu0 0
      %3949 = vmatprep.subr.bf16.mxu0 0
      %3950 = vmatpush1.bf16.msra.mxu0 0
      %3951 = vmatprep.subr.bf16.mxu0 0
      %3952 = vmatpush1.bf16.msra.mxu0 0
      %3953 = vmatprep.subr.bf16.mxu0 0
      %3954 = vmatpush1.bf16.msra.mxu0 0
      %3955 = vmatprep.subr.bf16.mxu0 0
      %3956 = vmatpush1.bf16.msra.mxu0 0
      %3957 = vmatprep.subr.bf16.mxu0 0
      %3958 = vmatpush1.bf16.msra.mxu0 0
      %3959 = vmatprep.mubr.bf16.mxu0 0
      %3960 = vmatmul.mubr.bf16.gmra.mrb[0].mxu0 %v3922
      %v3961 = vpop.f32.mrb[0].mxu0
      %v3962 = vadd.f32 0.0, %v3961
      %v3963 = vpop.f32.mrb[0].mxu0
      %v3964 = vpop.f32.mrb[0].mxu0
      %v3965 = vadd.f32 0.0, %v3964
      %v3966 = vpop.f32.mrb[0].mxu0
      %3967 = vmatprep.mubr.bf16.mxu0 0
      %3968 = vmatmul.mubr.bf16.gmra.mrb[0].mxu0 %v3925
      %v3969 = vpop.f32.mrb[0].mxu0
      %v3970 = vadd.f32 0.0, %v3969
      %v3971 = vpop.f32.mrb[0].mxu0
      %v3972 = vpop.f32.mrb[0].mxu0
      %v3973 = vadd.f32 0.0, %v3972
      %v3974 = vpop.f32.mrb[0].mxu0
      %3975 = vdwg.mxu0
      %v3977 = vsel %vm1649, %v3414, 0
      %v3980 = vsel %vm1649, %v3415, 0
      %3982 = vmatprep.subr.bf16.mxu0 0
      %3983 = vmatpush1.bf16.msra.mxu0 %v1610
      %3984 = vmatprep.subr.bf16.mxu0 0
      %3985 = vmatpush1.bf16.msra.mxu0 %v1612
      %3986 = vmatprep.subr.bf16.mxu0 0
      %3987 = vmatpush1.bf16.msra.mxu0 0
      %3988 = vmatprep.subr.bf16.mxu0 0
      %3989 = vmatpush1.bf16.msra.mxu0 0
      %3990 = vmatprep.subr.bf16.mxu0 0
      %3991 = vmatpush1.bf16.msra.mxu0 0
      %3992 = vmatprep.subr.bf16.mxu0 0
      %3993 = vmatpush1.bf16.msra.mxu0 0
      %3994 = vmatprep.subr.bf16.mxu0 0
      %3995 = vmatpush1.bf16.msra.mxu0 0
      %3996 = vmatprep.subr.bf16.mxu0 0
      %3997 = vmatpush1.bf16.msra.mxu0 0
      %3998 = vmatprep.subr.bf16.mxu0 0
      %3999 = vmatpush1.bf16.msra.mxu0 0
      %4000 = vmatprep.subr.bf16.mxu0 0
      %4001 = vmatpush1.bf16.msra.mxu0 0
      %4002 = vmatprep.subr.bf16.mxu0 0
      %4003 = vmatpush1.bf16.msra.mxu0 0
      %4004 = vmatprep.subr.bf16.mxu0 0
      %4005 = vmatpush1.bf16.msra.mxu0 0
      %4006 = vmatprep.subr.bf16.mxu0 0
      %4007 = vmatpush1.bf16.msra.mxu0 0
      %4008 = vmatprep.subr.bf16.mxu0 0
      %4009 = vmatpush1.bf16.msra.mxu0 0
      %4010 = vmatprep.subr.bf16.mxu0 0
      %4011 = vmatpush1.bf16.msra.mxu0 0
      %4012 = vmatprep.subr.bf16.mxu0 0
      %4013 = vmatpush1.bf16.msra.mxu0 0
      %4014 = vmatprep.mubr.bf16.mxu0 0
      %4015 = vmatmul.mubr.bf16.gmra.mrb[0].mxu0 %v3977
      %v4016 = vpop.f32.mrb[0].mxu0
      %v4017 = vadd.f32 0.0, %v4016
      %v4018 = vpop.f32.mrb[0].mxu0
      %v4019 = vpop.f32.mrb[0].mxu0
      %v4020 = vadd.f32 0.0, %v4019
      %v4021 = vpop.f32.mrb[0].mxu0
      %4022 = vmatprep.mubr.bf16.mxu0 0
      %4023 = vmatmul.mubr.bf16.gmra.mrb[0].mxu0 %v3980
      %v4024 = vpop.f32.mrb[0].mxu0
      %v4025 = vadd.f32 0.0, %v4024
      %v4026 = vpop.f32.mrb[0].mxu0
      %v4027 = vpop.f32.mrb[0].mxu0
      %v4028 = vadd.f32 0.0, %v4027
      %v4029 = vpop.f32.mrb[0].mxu0
      %4030 = vdwg.mxu0
      %v4032 = vsel %vm1649, %v3416, 0
      %v4035 = vsel %vm1649, %v3417, 0
      %4037 = vmatprep.subr.bf16.mxu0 0
      %4038 = vmatpush1.bf16.msra.mxu0 %v1614
      %4039 = vmatprep.subr.bf16.mxu0 0
      %4040 = vmatpush1.bf16.msra.mxu0 %v1616
      %4041 = vmatprep.subr.bf16.mxu0 0
      %4042 = vmatpush1.bf16.msra.mxu0 0
      %4043 = vmatprep.subr.bf16.mxu0 0
      %4044 = vmatpush1.bf16.msra.mxu0 0
      %4045 = vmatprep.subr.bf16.mxu0 0
      %4046 = vmatpush1.bf16.msra.mxu0 0
      %4047 = vmatprep.subr.bf16.mxu0 0
      %4048 = vmatpush1.bf16.msra.mxu0 0
      %4049 = vmatprep.subr.bf16.mxu0 0
      %4050 = vmatpush1.bf16.msra.mxu0 0
      %4051 = vmatprep.subr.bf16.mxu0 0
      %4052 = vmatpush1.bf16.msra.mxu0 0
      %4053 = vmatprep.subr.bf16.mxu0 0
      %4054 = vmatpush1.bf16.msra.mxu0 0
      %4055 = vmatprep.subr.bf16.mxu0 0
      %4056 = vmatpush1.bf16.msra.mxu0 0
      %4057 = vmatprep.subr.bf16.mxu0 0
      %4058 = vmatpush1.bf16.msra.mxu0 0
      %4059 = vmatprep.subr.bf16.mxu0 0
      %4060 = vmatpush1.bf16.msra.mxu0 0
      %4061 = vmatprep.subr.bf16.mxu0 0
      %4062 = vmatpush1.bf16.msra.mxu0 0
      %4063 = vmatprep.subr.bf16.mxu0 0
      %4064 = vmatpush1.bf16.msra.mxu0 0
      %4065 = vmatprep.subr.bf16.mxu0 0
      %4066 = vmatpush1.bf16.msra.mxu0 0
      %4067 = vmatprep.subr.bf16.mxu0 0
      %4068 = vmatpush1.bf16.msra.mxu0 0
      %4069 = vmatprep.mubr.bf16.mxu0 0
      %4070 = vmatmul.mubr.bf16.gmra.mrb[0].mxu0 %v4032
      %v4071 = vpop.f32.mrb[0].mxu0
      %v4072 = vadd.f32 0.0, %v4071
      %v4073 = vpop.f32.mrb[0].mxu0
      %v4074 = vpop.f32.mrb[0].mxu0
      %v4075 = vadd.f32 0.0, %v4074
      %v4076 = vpop.f32.mrb[0].mxu0
      %4077 = vmatprep.mubr.bf16.mxu0 0
      %4078 = vmatmul.mubr.bf16.gmra.mrb[0].mxu0 %v4035
      %v4079 = vpop.f32.mrb[0].mxu0
      %v4080 = vadd.f32 0.0, %v4079
      %v4081 = vpop.f32.mrb[0].mxu0
      %v4082 = vpop.f32.mrb[0].mxu0
      %v4083 = vadd.f32 0.0, %v4082
      %v4084 = vpop.f32.mrb[0].mxu0
      %4085 = vdwg.mxu0
      %v4087 = vsel %vm1649, %v3418, 0
      %v4090 = vsel %vm1649, %v3419, 0
      %4092 = vmatprep.subr.bf16.mxu0 0
      %4093 = vmatpush1.bf16.msra.mxu0 %v1626
      %4094 = vmatprep.subr.bf16.mxu0 0
      %4095 = vmatpush1.bf16.msra.mxu0 %v1628
      %4096 = vmatprep.subr.bf16.mxu0 0
      %4097 = vmatpush1.bf16.msra.mxu0 0
      %4098 = vmatprep.subr.bf16.mxu0 0
      %4099 = vmatpush1.bf16.msra.mxu0 0
      %4100 = vmatprep.subr.bf16.mxu0 0
      %4101 = vmatpush1.bf16.msra.mxu0 0
      %4102 = vmatprep.subr.bf16.mxu0 0
      %4103 = vmatpush1.bf16.msra.mxu0 0
      %4104 = vmatprep.subr.bf16.mxu0 0
      %4105 = vmatpush1.bf16.msra.mxu0 0
      %4106 = vmatprep.subr.bf16.mxu0 0
      %4107 = vmatpush1.bf16.msra.mxu0 0
      %4108 = vmatprep.subr.bf16.mxu0 0
      %4109 = vmatpush1.bf16.msra.mxu0 0
      %4110 = vmatprep.subr.bf16.mxu0 0
      %4111 = vmatpush1.bf16.msra.mxu0 0
      %4112 = vmatprep.subr.bf16.mxu0 0
      %4113 = vmatpush1.bf16.msra.mxu0 0
      %4114 = vmatprep.subr.bf16.mxu0 0
      %4115 = vmatpush1.bf16.msra.mxu0 0
      %4116 = vmatprep.subr.bf16.mxu0 0
      %4117 = vmatpush1.bf16.msra.mxu0 0
      %4118 = vmatprep.subr.bf16.mxu0 0
      %4119 = vmatpush1.bf16.msra.mxu0 0
      %4120 = vmatprep.subr.bf16.mxu0 0
      %4121 = vmatpush1.bf16.msra.mxu0 0
      %4122 = vmatprep.subr.bf16.mxu0 0
      %4123 = vmatpush1.bf16.msra.mxu0 0
      %4124 = vmatprep.mubr.bf16.mxu0 0
      %4125 = vmatmul.mubr.bf16.gmra.mrb[0].mxu0 %v4087
      %v4126 = vpop.f32.mrb[0].mxu0
      %v4127 = vadd.f32 0.0, %v4126
      %v4128 = vpop.f32.mrb[0].mxu0
      %v4129 = vpop.f32.mrb[0].mxu0
      %v4130 = vadd.f32 0.0, %v4129
      %v4131 = vpop.f32.mrb[0].mxu0
      %4132 = vmatprep.mubr.bf16.mxu0 0
      %4133 = vmatmul.mubr.bf16.gmra.mrb[0].mxu0 %v4090
      %v4134 = vpop.f32.mrb[0].mxu0
      %v4135 = vadd.f32 0.0, %v4134
      %v4136 = vpop.f32.mrb[0].mxu0
      %v4137 = vpop.f32.mrb[0].mxu0
      %v4138 = vadd.f32 0.0, %v4137
      %v4139 = vpop.f32.mrb[0].mxu0
      %4140 = vdwg.mxu0
      %v4142 = vsel %vm1649, %v3420, 0
      %v4145 = vsel %vm1649, %v3421, 0
      %4147 = vmatprep.subr.bf16.mxu0 0
      %4148 = vmatpush1.bf16.msra.mxu0 %v1630
      %4149 = vmatprep.subr.bf16.mxu0 0
      %4150 = vmatpush1.bf16.msra.mxu0 %v1632
      %4151 = vmatprep.subr.bf16.mxu0 0
      %4152 = vmatpush1.bf16.msra.mxu0 0
      %4153 = vmatprep.subr.bf16.mxu0 0
      %4154 = vmatpush1.bf16.msra.mxu0 0
      %4155 = vmatprep.subr.bf16.mxu0 0
      %4156 = vmatpush1.bf16.msra.mxu0 0
      %4157 = vmatprep.subr.bf16.mxu0 0
      %4158 = vmatpush1.bf16.msra.mxu0 0
      %4159 = vmatprep.subr.bf16.mxu0 0
      %4160 = vmatpush1.bf16.msra.mxu0 0
      %4161 = vmatprep.subr.bf16.mxu0 0
      %4162 = vmatpush1.bf16.msra.mxu0 0
      %4163 = vmatprep.subr.bf16.mxu0 0
      %4164 = vmatpush1.bf16.msra.mxu0 0
      %4165 = vmatprep.subr.bf16.mxu0 0
      %4166 = vmatpush1.bf16.msra.mxu0 0
      %4167 = vmatprep.subr.bf16.mxu0 0
      %4168 = vmatpush1.bf16.msra.mxu0 0
      %4169 = vmatprep.subr.bf16.mxu0 0
      %4170 = vmatpush1.bf16.msra.mxu0 0
      %4171 = vmatprep.subr.bf16.mxu0 0
      %4172 = vmatpush1.bf16.msra.mxu0 0
      %4173 = vmatprep.subr.bf16.mxu0 0
      %4174 = vmatpush1.bf16.msra.mxu0 0
      %4175 = vmatprep.subr.bf16.mxu0 0
      %4176 = vmatpush1.bf16.msra.mxu0 0
      %4177 = vmatprep.subr.bf16.mxu0 0
      %4178 = vmatpush1.bf16.msra.mxu0 0
      %4179 = vmatprep.mubr.bf16.mxu0 0
      %4180 = vmatmul.mubr.bf16.gmra.mrb[0].mxu0 %v4142
      %v4181 = vpop.f32.mrb[0].mxu0
      %v4182 = vadd.f32 0.0, %v4181
      %v4183 = vpop.f32.mrb[0].mxu0
      %v4184 = vpop.f32.mrb[0].mxu0
      %v4185 = vadd.f32 0.0, %v4184
      %v4186 = vpop.f32.mrb[0].mxu0
      %4187 = vmatprep.mubr.bf16.mxu0 0
      %4188 = vmatmul.mubr.bf16.gmra.mrb[0].mxu0 %v4145
      %v4189 = vpop.f32.mrb[0].mxu0
      %v4190 = vadd.f32 0.0, %v4189
      %v4191 = vpop.f32.mrb[0].mxu0
      %v4192 = vpop.f32.mrb[0].mxu0
      %v4193 = vadd.f32 0.0, %v4192
      %v4194 = vpop.f32.mrb[0].mxu0
      %4195 = vdwg.mxu0
      %v4197 = vsel %vm1649, %v3422, 0
      %v4200 = vsel %vm1649, %v3423, 0
      %4202 = vmatprep.subr.bf16.mxu0 0
      %4203 = vmatpush1.bf16.msra.mxu0 %v1634
      %4204 = vmatprep.subr.bf16.mxu0 0
      %4205 = vmatpush1.bf16.msra.mxu0 %v1636
      %4206 = vmatprep.subr.bf16.mxu0 0
      %4207 = vmatpush1.bf16.msra.mxu0 0
      %4208 = vmatprep.subr.bf16.mxu0 0
      %4209 = vmatpush1.bf16.msra.mxu0 0
      %4210 = vmatprep.subr.bf16.mxu0 0
      %4211 = vmatpush1.bf16.msra.mxu0 0
      %4212 = vmatprep.subr.bf16.mxu0 0
      %4213 = vmatpush1.bf16.msra.mxu0 0
      %4214 = vmatprep.subr.bf16.mxu0 0
      %4215 = vmatpush1.bf16.msra.mxu0 0
      %4216 = vmatprep.subr.bf16.mxu0 0
      %4217 = vmatpush1.bf16.msra.mxu0 0
      %4218 = vmatprep.subr.bf16.mxu0 0
      %4219 = vmatpush1.bf16.msra.mxu0 0
      %4220 = vmatprep.subr.bf16.mxu0 0
      %4221 = vmatpush1.bf16.msra.mxu0 0
      %4222 = vmatprep.subr.bf16.mxu0 0
      %4223 = vmatpush1.bf16.msra.mxu0 0
      %4224 = vmatprep.subr.bf16.mxu0 0
      %4225 = vmatpush1.bf16.msra.mxu0 0
      %4226 = vmatprep.subr.bf16.mxu0 0
      %4227 = vmatpush1.bf16.msra.mxu0 0
      %4228 = vmatprep.subr.bf16.mxu0 0
      %4229 = vmatpush1.bf16.msra.mxu0 0
      %4230 = vmatprep.subr.bf16.mxu0 0
      %4231 = vmatpush1.bf16.msra.mxu0 0
      %4232 = vmatprep.subr.bf16.mxu0 0
      %4233 = vmatpush1.bf16.msra.mxu0 0
      %4234 = vmatprep.mubr.bf16.mxu0 0
      %4235 = vmatmul.mubr.bf16.gmra.mrb[0].mxu0 %v4197
      %v4236 = vpop.f32.mrb[0].mxu0
      %v4237 = vadd.f32 0.0, %v4236
      %v4238 = vpop.f32.mrb[0].mxu0
      %v4239 = vpop.f32.mrb[0].mxu0
      %v4240 = vadd.f32 0.0, %v4239
      %v4241 = vpop.f32.mrb[0].mxu0
      %4242 = vmatprep.mubr.bf16.mxu0 0
      %4243 = vmatmul.mubr.bf16.gmra.mrb[0].mxu0 %v4200
      %v4244 = vpop.f32.mrb[0].mxu0
      %v4245 = vadd.f32 0.0, %v4244
      %v4246 = vpop.f32.mrb[0].mxu0
      %v4247 = vpop.f32.mrb[0].mxu0
      %v4248 = vadd.f32 0.0, %v4247
      %v4249 = vpop.f32.mrb[0].mxu0
      %4250 = vdwg.mxu0
      %v4252 = vsel %vm1649, %v3424, 0
      %v4255 = vsel %vm1649, %v3425, 0
      %4257 = vmatprep.subr.bf16.mxu0 0
      %4258 = vmatpush1.bf16.msra.mxu0 %v1638
      %4259 = vmatprep.subr.bf16.mxu0 0
      %4260 = vmatpush1.bf16.msra.mxu0 %v1640
      %4261 = vmatprep.subr.bf16.mxu0 0
      %4262 = vmatpush1.bf16.msra.mxu0 0
      %4263 = vmatprep.subr.bf16.mxu0 0
      %4264 = vmatpush1.bf16.msra.mxu0 0
      %4265 = vmatprep.subr.bf16.mxu0 0
      %4266 = vmatpush1.bf16.msra.mxu0 0
      %4267 = vmatprep.subr.bf16.mxu0 0
      %4268 = vmatpush1.bf16.msra.mxu0 0
      %4269 = vmatprep.subr.bf16.mxu0 0
      %4270 = vmatpush1.bf16.msra.mxu0 0
      %4271 = vmatprep.subr.bf16.mxu0 0
      %4272 = vmatpush1.bf16.msra.mxu0 0
      %4273 = vmatprep.subr.bf16.mxu0 0
      %4274 = vmatpush1.bf16.msra.mxu0 0
      %4275 = vmatprep.subr.bf16.mxu0 0
      %4276 = vmatpush1.bf16.msra.mxu0 0
      %4277 = vmatprep.subr.bf16.mxu0 0
      %4278 = vmatpush1.bf16.msra.mxu0 0
      %4279 = vmatprep.subr.bf16.mxu0 0
      %4280 = vmatpush1.bf16.msra.mxu0 0
      %4281 = vmatprep.subr.bf16.mxu0 0
      %4282 = vmatpush1.bf16.msra.mxu0 0
      %4283 = vmatprep.subr.bf16.mxu0 0
      %4284 = vmatpush1.bf16.msra.mxu0 0
      %4285 = vmatprep.subr.bf16.mxu0 0
      %4286 = vmatpush1.bf16.msra.mxu0 0
      %4287 = vmatprep.subr.bf16.mxu0 0
      %4288 = vmatpush1.bf16.msra.mxu0 0
      %4289 = vmatprep.mubr.bf16.mxu0 0
      %4290 = vmatmul.mubr.bf16.gmra.mrb[0].mxu0 %v4252
      %v4291 = vpop.f32.mrb[0].mxu0
      %v4292 = vadd.f32 0.0, %v4291
      %v4293 = vpop.f32.mrb[0].mxu0
      %v4294 = vpop.f32.mrb[0].mxu0
      %v4295 = vadd.f32 0.0, %v4294
      %v4296 = vpop.f32.mrb[0].mxu0
      %4297 = vmatprep.mubr.bf16.mxu0 0
      %4298 = vmatmul.mubr.bf16.gmra.mrb[0].mxu0 %v4255
      %v4299 = vpop.f32.mrb[0].mxu0
      %v4300 = vadd.f32 0.0, %v4299
      %v4301 = vpop.f32.mrb[0].mxu0
      %v4302 = vpop.f32.mrb[0].mxu0
      %v4303 = vadd.f32 0.0, %v4302
      %v4304 = vpop.f32.mrb[0].mxu0
      %4305 = vdwg.mxu0
      %v4306 = vpack.c.bf16 %v3470, %v3467
      %v4307 = vpack.c.bf16 %v3478, %v3475
      %v4308 = vpack.c.bf16 %v3525, %v3522
      %v4309 = vpack.c.bf16 %v3533, %v3530
      %v4310 = vpack.c.bf16 %v3580, %v3577
      %v4311 = vpack.c.bf16 %v3588, %v3585
      %v4312 = vpack.c.bf16 %v3635, %v3632
      %v4313 = vpack.c.bf16 %v3643, %v3640
      %v4314 = vpack.c.bf16 %v3690, %v3687
      %v4315 = vpack.c.bf16 %v3698, %v3695
      %v4316 = vpack.c.bf16 %v3745, %v3742
      %v4317 = vpack.c.bf16 %v3753, %v3750
      %v4318 = vpack.c.bf16 %v3800, %v3797
      %v4319 = vpack.c.bf16 %v3808, %v3805
      %v4320 = vpack.c.bf16 %v3855, %v3852
      %v4321 = vpack.c.bf16 %v3863, %v3860
      %v4322 = vpack.c.bf16 %v3910, %v3907
      %v4323 = vpack.c.bf16 %v3918, %v3915
      %v4324 = vpack.c.bf16 %v3965, %v3962
      %v4325 = vpack.c.bf16 %v3973, %v3970
      %v4326 = vpack.c.bf16 %v4020, %v4017
      %v4327 = vpack.c.bf16 %v4028, %v4025
      %v4328 = vpack.c.bf16 %v4075, %v4072
      %v4329 = vpack.c.bf16 %v4083, %v4080
      %v4330 = vpack.c.bf16 %v4130, %v4127
      %v4331 = vpack.c.bf16 %v4138, %v4135
      %v4332 = vpack.c.bf16 %v4185, %v4182
      %v4333 = vpack.c.bf16 %v4193, %v4190
      %v4334 = vpack.c.bf16 %v4240, %v4237
      %v4335 = vpack.c.bf16 %v4248, %v4245
      %v4336 = vpack.c.bf16 %v4295, %v4292
      %v4337 = vpack.c.bf16 %v4303, %v4300
      %4346 = vrot.lane.b32.xlu0 %v4314, 32
      %v4347 = vpop.permute.xlu0 %4346
      %4348 = vrot.lane.b32.xlu0 %v4315, 32
      %v4349 = vpop.permute.xlu0 %4348
      %4350 = vrot.lane.b32.xlu0 %v4316, 32
      %v4351 = vpop.permute.xlu0 %4350
      %4352 = vrot.lane.b32.xlu0 %v4317, 32
      %v4353 = vpop.permute.xlu0 %4352
      %4354 = vrot.lane.b32.xlu0 %v4318, 32
      %v4355 = vpop.permute.xlu0 %4354
      %4356 = vrot.lane.b32.xlu0 %v4319, 32
      %v4357 = vpop.permute.xlu0 %4356
      %4358 = vrot.lane.b32.xlu0 %v4320, 32
      %v4359 = vpop.permute.xlu0 %4358
      %4360 = vrot.lane.b32.xlu0 %v4321, 32
      %v4361 = vpop.permute.xlu0 %4360
      %4370 = vrot.lane.b32.xlu0 %v4322, 64
      %v4371 = vpop.permute.xlu0 %4370
      %4372 = vrot.lane.b32.xlu0 %v4323, 64
      %v4373 = vpop.permute.xlu0 %4372
      %4374 = vrot.lane.b32.xlu0 %v4324, 64
      %v4375 = vpop.permute.xlu0 %4374
      %4376 = vrot.lane.b32.xlu0 %v4325, 64
      %v4377 = vpop.permute.xlu0 %4376
      %4378 = vrot.lane.b32.xlu0 %v4326, 64
      %v4379 = vpop.permute.xlu0 %4378
      %4380 = vrot.lane.b32.xlu0 %v4327, 64
      %v4381 = vpop.permute.xlu0 %4380
      %4382 = vrot.lane.b32.xlu0 %v4328, 64
      %v4383 = vpop.permute.xlu0 %4382
      %4384 = vrot.lane.b32.xlu0 %v4329, 64
      %v4385 = vpop.permute.xlu0 %4384
      %4394 = vrot.lane.b32.xlu0 %v4330, 96
      %v4395 = vpop.permute.xlu0 %4394
      %4396 = vrot.lane.b32.xlu0 %v4331, 96
      %v4397 = vpop.permute.xlu0 %4396
      %4398 = vrot.lane.b32.xlu0 %v4332, 96
      %v4399 = vpop.permute.xlu0 %4398
      %4400 = vrot.lane.b32.xlu0 %v4333, 96
      %v4401 = vpop.permute.xlu0 %4400
      %4402 = vrot.lane.b32.xlu0 %v4334, 96
      %v4403 = vpop.permute.xlu0 %4402
      %4404 = vrot.lane.b32.xlu0 %v4335, 96
      %v4405 = vpop.permute.xlu0 %4404
      %4406 = vrot.lane.b32.xlu0 %v4336, 96
      %v4407 = vpop.permute.xlu0 %4406
      %4408 = vrot.lane.b32.xlu0 %v4337, 96
      %v4409 = vpop.permute.xlu0 %4408
      %v4412 = vsel %vm1649, %v4306, %v4347
      %v4415 = vsel %vm1649, %v4307, %v4349
      %v4418 = vsel %vm1649, %v4308, %v4351
      %v4421 = vsel %vm1649, %v4309, %v4353
      %v4424 = vsel %vm1649, %v4310, %v4355
      %v4427 = vsel %vm1649, %v4311, %v4357
      %v4430 = vsel %vm1649, %v4312, %v4359
      %v4433 = vsel %vm1649, %v4313, %v4361
      %vm4434 = vcmask 523264
      %v4436 = vsel %vm4434, %v4412, %v4371
      %v4438 = vsel %vm4434, %v4415, %v4373
      %v4440 = vsel %vm4434, %v4418, %v4375
      %v4442 = vsel %vm4434, %v4421, %v4377
      %v4444 = vsel %vm4434, %v4424, %v4379
      %v4446 = vsel %vm4434, %v4427, %v4381
      %v4448 = vsel %vm4434, %v4430, %v4383
      %v4450 = vsel %vm4434, %v4433, %v4385
      %vm4451 = vcmask 785408
      %v4453 = vsel %vm4451, %v4436, %v4395
      %v4456 = vsel %vm4451, %v4438, %v4397
      %v4459 = vsel %vm4451, %v4440, %v4399
      %v4462 = vsel %vm4451, %v4442, %v4401
      %v4465 = vsel %vm4451, %v4444, %v4403
      %v4468 = vsel %vm4451, %v4446, %v4405
      %v4471 = vsel %vm4451, %v4448, %v4407
      %v4474 = vsel %vm4451, %v4450, %v4409
      %v4476 = vld [vmem:[%s723] sm:$0xf]
      %v4477 = vld [vmem:[%s723 + $0x4] sm:$0xf]
      %v4478 = vld [vmem:[%s723 + $0x8] sm:$0xf]
      %v4479 = vld [vmem:[%s723 + $0xc] sm:$0xf]
      %v4480 = vld [vmem:[%s723 + $0x10] sm:$0xf]
      %v4481 = vld [vmem:[%s723 + $0x14] sm:$0xf]
      %v4482 = vld [vmem:[%s723 + $0x18] sm:$0xf]
      %v4483 = vld [vmem:[%s723 + $0x1c] sm:$0xf]
      %v4484 = vld [vmem:[%s723 + $0x20] sm:$0xf]
      %v4485 = vld [vmem:[%s723 + $0x24] sm:$0xf]
      %v4486 = vld [vmem:[%s723 + $0x28] sm:$0xf]
      %v4487 = vld [vmem:[%s723 + $0x2c] sm:$0xf]
      %v4488 = vld [vmem:[%s723 + $0x30] sm:$0xf]
      %v4489 = vld [vmem:[%s723 + $0x34] sm:$0xf]
      %v4490 = vld [vmem:[%s723 + $0x38] sm:$0xf]
      %v4491 = vld [vmem:[%s723 + $0x3c] sm:$0xf]
      %v4492 = vld [vmem:[%s726] sm:$0x1]
      %v4494 = vlaneseq
      %v4495 = vshrl.u32 %v4494, 7
      %v4496 = vsub.s32 0, %v4495
      %v4497 = vrot.slane %v4492, %v4496
      %v4515 = vunpack.c.l.b16 %v4476
      %v4516 = vunpack.c.l.b16 %v4477
      %v4517 = vunpack.c.l.b16 %v4478
      %v4518 = vunpack.c.l.b16 %v4479
      %v4519 = vunpack.c.l.b16 %v4480
      %v4520 = vunpack.c.l.b16 %v4481
      %v4521 = vunpack.c.l.b16 %v4482
      %v4522 = vunpack.c.l.b16 %v4483
      %v4523 = vunpack.c.l.b16 %v4484
      %v4524 = vunpack.c.l.b16 %v4485
      %v4525 = vunpack.c.l.b16 %v4486
      %v4526 = vunpack.c.l.b16 %v4487
      %v4527 = vunpack.c.l.b16 %v4488
      %v4528 = vunpack.c.l.b16 %v4489
      %v4529 = vunpack.c.l.b16 %v4490
      %v4530 = vunpack.c.l.b16 %v4491
      %v4531 = vpack.c.b16 %v4516, %v4515
      %v4532 = vpack.c.b16 %v4518, %v4517
      %v4533 = vpack.c.b16 %v4520, %v4519
      %v4534 = vpack.c.b16 %v4522, %v4521
      %v4535 = vpack.c.b16 %v4524, %v4523
      %v4536 = vpack.c.b16 %v4526, %v4525
      %v4537 = vpack.c.b16 %v4528, %v4527
      %v4538 = vpack.c.b16 %v4530, %v4529
      %4547 = vmatprep.subr.bf16.mxu0 0
      %4548 = vmatpush1.bf16.msra.mxu0 %v4531
      %4549 = vmatprep.subr.bf16.mxu0 0
      %4550 = vmatpush1.bf16.msra.mxu0 %v4532
      %4551 = vmatprep.subr.bf16.mxu0 0
      %4552 = vmatpush1.bf16.msra.mxu0 %v4533
      %4553 = vmatprep.subr.bf16.mxu0 0
      %4554 = vmatpush1.bf16.msra.mxu0 %v4534
      %4555 = vmatprep.subr.bf16.mxu0 0
      %4556 = vmatpush1.bf16.msra.mxu0 %v4535
      %4557 = vmatprep.subr.bf16.mxu0 0
      %4558 = vmatpush1.bf16.msra.mxu0 %v4536
      %4559 = vmatprep.subr.bf16.mxu0 0
      %4560 = vmatpush1.bf16.msra.mxu0 %v4537
      %4561 = vmatprep.subr.bf16.mxu0 0
      %4562 = vmatpush1.bf16.msra.mxu0 %v4538
      %4563 = vmatprep.subr.bf16.mxu0 0
      %4564 = vmatpush1.bf16.msra.mxu0 0
      %4565 = vmatprep.subr.bf16.mxu0 0
      %4566 = vmatpush1.bf16.msra.mxu0 0
      %4567 = vmatprep.subr.bf16.mxu0 0
      %4568 = vmatpush1.bf16.msra.mxu0 0
      %4569 = vmatprep.subr.bf16.mxu0 0
      %4570 = vmatpush1.bf16.msra.mxu0 0
      %4571 = vmatprep.subr.bf16.mxu0 0
      %4572 = vmatpush1.bf16.msra.mxu0 0
      %4573 = vmatprep.subr.bf16.mxu0 0
      %4574 = vmatpush1.bf16.msra.mxu0 0
      %4575 = vmatprep.subr.bf16.mxu0 0
      %4576 = vmatpush1.bf16.msra.mxu0 0
      %4577 = vmatprep.subr.bf16.mxu0 0
      %4578 = vmatpush1.bf16.msra.mxu0 0
      %4579 = vmatprep.mubr.bf16.mxu0 0
      %4580 = vmatmul.mubr.bf16.gmra.mrb[0].mxu0 %v4453
      %v4581 = vpop.f32.mrb[0].mxu0
      %v4582 = vadd.f32 %v4497, %v4581
      %v4583 = vpop.f32.mrb[0].mxu0
      %v4584 = vpop.f32.mrb[0].mxu0
      %v4585 = vadd.f32 %v4497, %v4584
      %v4586 = vpop.f32.mrb[0].mxu0
      %4587 = vmatprep.mubr.bf16.mxu0 0
      %4588 = vmatmul.mubr.bf16.gmra.mrb[0].mxu0 %v4456
      %v4589 = vpop.f32.mrb[0].mxu0
      %v4590 = vadd.f32 %v4497, %v4589
      %v4591 = vpop.f32.mrb[0].mxu0
      %v4592 = vpop.f32.mrb[0].mxu0
      %v4593 = vadd.f32 %v4497, %v4592
      %v4594 = vpop.f32.mrb[0].mxu0
      %4595 = vmatprep.mubr.bf16.mxu0 0
      %4596 = vmatmul.mubr.bf16.gmra.mrb[0].mxu0 %v4459
      %v4597 = vpop.f32.mrb[0].mxu0
      %v4598 = vadd.f32 %v4497, %v4597
      %v4599 = vpop.f32.mrb[0].mxu0
      %v4600 = vpop.f32.mrb[0].mxu0
      %v4601 = vadd.f32 %v4497, %v4600
      %v4602 = vpop.f32.mrb[0].mxu0
      %4603 = vmatprep.mubr.bf16.mxu0 0
      %4604 = vmatmul.mubr.bf16.gmra.mrb[0].mxu0 %v4462
      %v4605 = vpop.f32.mrb[0].mxu0
      %v4606 = vadd.f32 %v4497, %v4605
      %v4607 = vpop.f32.mrb[0].mxu0
      %v4608 = vpop.f32.mrb[0].mxu0
      %v4609 = vadd.f32 %v4497, %v4608
      %v4610 = vpop.f32.mrb[0].mxu0
      %4611 = vmatprep.mubr.bf16.mxu0 0
      %4612 = vmatmul.mubr.bf16.gmra.mrb[0].mxu0 %v4465
      %v4613 = vpop.f32.mrb[0].mxu0
      %v4614 = vadd.f32 %v4497, %v4613
      %v4615 = vpop.f32.mrb[0].mxu0
      %v4616 = vpop.f32.mrb[0].mxu0
      %v4617 = vadd.f32 %v4497, %v4616
      %v4618 = vpop.f32.mrb[0].mxu0
      %4619 = vmatprep.mubr.bf16.mxu0 0
      %4620 = vmatmul.mubr.bf16.gmra.mrb[0].mxu0 %v4468
      %v4621 = vpop.f32.mrb[0].mxu0
      %v4622 = vadd.f32 %v4497, %v4621
      %v4623 = vpop.f32.mrb[0].mxu0
      %v4624 = vpop.f32.mrb[0].mxu0
      %v4625 = vadd.f32 %v4497, %v4624
      %v4626 = vpop.f32.mrb[0].mxu0
      %4627 = vmatprep.mubr.bf16.mxu0 0
      %4628 = vmatmul.mubr.bf16.gmra.mrb[0].mxu0 %v4471
      %v4629 = vpop.f32.mrb[0].mxu0
      %v4630 = vadd.f32 %v4497, %v4629
      %v4631 = vpop.f32.mrb[0].mxu0
      %v4632 = vpop.f32.mrb[0].mxu0
      %v4633 = vadd.f32 %v4497, %v4632
      %v4634 = vpop.f32.mrb[0].mxu0
      %4635 = vmatprep.mubr.bf16.mxu0 0
      %4636 = vmatmul.mubr.bf16.gmra.mrb[0].mxu0 %v4474
      %v4637 = vpop.f32.mrb[0].mxu0
      %v4638 = vadd.f32 %v4497, %v4637
      %v4639 = vpop.f32.mrb[0].mxu0
      %v4640 = vpop.f32.mrb[0].mxu0
      %v4641 = vadd.f32 %v4497, %v4640
      %v4642 = vpop.f32.mrb[0].mxu0
      %4643 = vdwg.mxu0
      %v4644 = vadd.f32 %v4582, %v1022
      %v4645 = vadd.f32 %v4585, %v1023
      %v4646 = vadd.f32 %v4590, %v1024
      %v4647 = vadd.f32 %v4593, %v1025
      %v4648 = vadd.f32 %v4598, %v1026
      %v4649 = vadd.f32 %v4601, %v1027
      %v4650 = vadd.f32 %v4606, %v1028
      %v4651 = vadd.f32 %v4609, %v1029
      %v4652 = vadd.f32 %v4614, %v1030
      %v4653 = vadd.f32 %v4617, %v1031
      %v4654 = vadd.f32 %v4622, %v1032
      %v4655 = vadd.f32 %v4625, %v1033
      %v4656 = vadd.f32 %v4630, %v1034
      %v4657 = vadd.f32 %v4633, %v1035
      %v4658 = vadd.f32 %v4638, %v1036
      %v4659 = vadd.f32 %v4641, %v1037
      %v4660 = vld [vmem:[%s729] sm:$0x1]
      %v4661 = vld [vmem:[%s732] sm:$0x1]
      %4662 = vadd.xlane.f32.xlu0 %v4644
      %v4663 = vpop.xlane.xlu0 %4662
      %4664 = vadd.xlane.f32.xlu0 %v4645
      %v4665 = vpop.xlane.xlu0 %4664
      %4666 = vadd.xlane.f32.xlu0 %v4646
      %v4667 = vpop.xlane.xlu0 %4666
      %4668 = vadd.xlane.f32.xlu0 %v4647
      %v4669 = vpop.xlane.xlu0 %4668
      %4670 = vadd.xlane.f32.xlu0 %v4648
      %v4671 = vpop.xlane.xlu0 %4670
      %4672 = vadd.xlane.f32.xlu0 %v4649
      %v4673 = vpop.xlane.xlu0 %4672
      %4674 = vadd.xlane.f32.xlu0 %v4650
      %v4675 = vpop.xlane.xlu0 %4674
      %4676 = vadd.xlane.f32.xlu0 %v4651
      %v4677 = vpop.xlane.xlu0 %4676
      %4678 = vadd.xlane.f32.xlu0 %v4652
      %v4679 = vpop.xlane.xlu0 %4678
      %4680 = vadd.xlane.f32.xlu0 %v4653
      %v4681 = vpop.xlane.xlu0 %4680
      %4682 = vadd.xlane.f32.xlu0 %v4654
      %v4683 = vpop.xlane.xlu0 %4682
      %4684 = vadd.xlane.f32.xlu0 %v4655
      %v4685 = vpop.xlane.xlu0 %4684
      %4686 = vadd.xlane.f32.xlu0 %v4656
      %v4687 = vpop.xlane.xlu0 %4686
      %4688 = vadd.xlane.f32.xlu0 %v4657
      %v4689 = vpop.xlane.xlu0 %4688
      %4690 = vadd.xlane.f32.xlu0 %v4658
      %v4691 = vpop.xlane.xlu0 %4690
      %4692 = vadd.xlane.f32.xlu0 %v4659
      %v4693 = vpop.xlane.xlu0 %4692
      %v4694 = vrcp.pop 128.0
      %v4695 = vmul.f32 %v4663, %v4694
      %v4696 = vmul.f32 %v4665, %v4694
      %v4697 = vmul.f32 %v4667, %v4694
      %v4698 = vmul.f32 %v4669, %v4694
      %v4699 = vmul.f32 %v4671, %v4694
      %v4700 = vmul.f32 %v4673, %v4694
      %v4701 = vmul.f32 %v4675, %v4694
      %v4702 = vmul.f32 %v4677, %v4694
      %v4703 = vmul.f32 %v4679, %v4694
      %v4704 = vmul.f32 %v4681, %v4694
      %v4705 = vmul.f32 %v4683, %v4694
      %v4706 = vmul.f32 %v4685, %v4694
      %v4707 = vmul.f32 %v4687, %v4694
      %v4708 = vmul.f32 %v4689, %v4694
      %v4709 = vmul.f32 %v4691, %v4694
      %v4710 = vmul.f32 %v4693, %v4694
      %v4711 = vsub.f32 %v4644, %v4695
      %v4712 = vsub.f32 %v4645, %v4696
      %v4713 = vsub.f32 %v4646, %v4697
      %v4714 = vsub.f32 %v4647, %v4698
      %v4715 = vsub.f32 %v4648, %v4699
      %v4716 = vsub.f32 %v4649, %v4700
      %v4717 = vsub.f32 %v4650, %v4701
      %v4718 = vsub.f32 %v4651, %v4702
      %v4719 = vsub.f32 %v4652, %v4703
      %v4720 = vsub.f32 %v4653, %v4704
      %v4721 = vsub.f32 %v4654, %v4705
      %v4722 = vsub.f32 %v4655, %v4706
      %v4723 = vsub.f32 %v4656, %v4707
      %v4724 = vsub.f32 %v4657, %v4708
      %v4725 = vsub.f32 %v4658, %v4709
      %v4726 = vsub.f32 %v4659, %v4710
      %v4727 = vmul.f32 %v4711, %v4711
      %v4728 = vmul.f32 %v4712, %v4712
      %v4729 = vmul.f32 %v4713, %v4713
      %v4730 = vmul.f32 %v4714, %v4714
      %v4731 = vmul.f32 %v4715, %v4715
      %v4732 = vmul.f32 %v4716, %v4716
      %v4733 = vmul.f32 %v4717, %v4717
      %v4734 = vmul.f32 %v4718, %v4718
      %v4735 = vmul.f32 %v4719, %v4719
      %v4736 = vmul.f32 %v4720, %v4720
      %v4737 = vmul.f32 %v4721, %v4721
      %v4738 = vmul.f32 %v4722, %v4722
      %v4739 = vmul.f32 %v4723, %v4723
      %v4740 = vmul.f32 %v4724, %v4724
      %v4741 = vmul.f32 %v4725, %v4725
      %v4742 = vmul.f32 %v4726, %v4726
      %4743 = vadd.xlane.f32.xlu0 %v4727
      %v4744 = vpop.xlane.xlu0 %4743
      %4745 = vadd.xlane.f32.xlu0 %v4728
      %v4746 = vpop.xlane.xlu0 %4745
      %4747 = vadd.xlane.f32.xlu0 %v4729
      %v4748 = vpop.xlane.xlu0 %4747
      %4749 = vadd.xlane.f32.xlu0 %v4730
      %v4750 = vpop.xlane.xlu0 %4749
      %4751 = vadd.xlane.f32.xlu0 %v4731
      %v4752 = vpop.xlane.xlu0 %4751
      %4753 = vadd.xlane.f32.xlu0 %v4732
      %v4754 = vpop.xlane.xlu0 %4753
      %4755 = vadd.xlane.f32.xlu0 %v4733
      %v4756 = vpop.xlane.xlu0 %4755
      %4757 = vadd.xlane.f32.xlu0 %v4734
      %v4758 = vpop.xlane.xlu0 %4757
      %4759 = vadd.xlane.f32.xlu0 %v4735
      %v4760 = vpop.xlane.xlu0 %4759
      %4761 = vadd.xlane.f32.xlu0 %v4736
      %v4762 = vpop.xlane.xlu0 %4761
      %4763 = vadd.xlane.f32.xlu0 %v4737
      %v4764 = vpop.xlane.xlu0 %4763
      %4765 = vadd.xlane.f32.xlu0 %v4738
      %v4766 = vpop.xlane.xlu0 %4765
      %4767 = vadd.xlane.f32.xlu0 %v4739
      %v4768 = vpop.xlane.xlu0 %4767
      %4769 = vadd.xlane.f32.xlu0 %v4740
      %v4770 = vpop.xlane.xlu0 %4769
      %4771 = vadd.xlane.f32.xlu0 %v4741
      %v4772 = vpop.xlane.xlu0 %4771
      %4773 = vadd.xlane.f32.xlu0 %v4742
      %v4774 = vpop.xlane.xlu0 %4773
      %v4775 = vmul.f32 %v4744, %v4694
      %v4776 = vmul.f32 %v4746, %v4694
      %v4777 = vmul.f32 %v4748, %v4694
      %v4778 = vmul.f32 %v4750, %v4694
      %v4779 = vmul.f32 %v4752, %v4694
      %v4780 = vmul.f32 %v4754, %v4694
      %v4781 = vmul.f32 %v4756, %v4694
      %v4782 = vmul.f32 %v4758, %v4694
      %v4783 = vmul.f32 %v4760, %v4694
      %v4784 = vmul.f32 %v4762, %v4694
      %v4785 = vmul.f32 %v4764, %v4694
      %v4786 = vmul.f32 %v4766, %v4694
      %v4787 = vmul.f32 %v4768, %v4694
      %v4788 = vmul.f32 %v4770, %v4694
      %v4789 = vmul.f32 %v4772, %v4694
      %v4790 = vmul.f32 %v4774, %v4694
      %v4791 = vadd.f32 %v4775, 1e-12
      %v4792 = vadd.f32 %v4776, 1e-12
      %v4793 = vadd.f32 %v4777, 1e-12
      %v4794 = vadd.f32 %v4778, 1e-12
      %v4795 = vadd.f32 %v4779, 1e-12
      %v4796 = vadd.f32 %v4780, 1e-12
      %v4797 = vadd.f32 %v4781, 1e-12
      %v4798 = vadd.f32 %v4782, 1e-12
      %v4799 = vadd.f32 %v4783, 1e-12
      %v4800 = vadd.f32 %v4784, 1e-12
      %v4801 = vadd.f32 %v4785, 1e-12
      %v4802 = vadd.f32 %v4786, 1e-12
      %v4803 = vadd.f32 %v4787, 1e-12
      %v4804 = vadd.f32 %v4788, 1e-12
      %v4805 = vadd.f32 %v4789, 1e-12
      %v4806 = vadd.f32 %v4790, 1e-12
      %v4807 = vrsqrt.pop %v4791
      %v4808 = vrsqrt.pop %v4792
      %v4809 = vrsqrt.pop %v4793
      %v4810 = vrsqrt.pop %v4794
      %v4811 = vrsqrt.pop %v4795
      %v4812 = vrsqrt.pop %v4796
      %v4813 = vrsqrt.pop %v4797
      %v4814 = vrsqrt.pop %v4798
      %v4815 = vrsqrt.pop %v4799
      %v4816 = vrsqrt.pop %v4800
      %v4817 = vrsqrt.pop %v4801
      %v4818 = vrsqrt.pop %v4802
      %v4819 = vrsqrt.pop %v4803
      %v4820 = vrsqrt.pop %v4804
      %v4821 = vrsqrt.pop %v4805
      %v4822 = vrsqrt.pop %v4806
      %v4823 = vmul.f32 %v4711, %v4807
      %v4824 = vmul.f32 %v4712, %v4808
      %v4825 = vmul.f32 %v4713, %v4809
      %v4826 = vmul.f32 %v4714, %v4810
      %v4827 = vmul.f32 %v4715, %v4811
      %v4828 = vmul.f32 %v4716, %v4812
      %v4829 = vmul.f32 %v4717, %v4813
      %v4830 = vmul.f32 %v4718, %v4814
      %v4831 = vmul.f32 %v4719, %v4815
      %v4832 = vmul.f32 %v4720, %v4816
      %v4833 = vmul.f32 %v4721, %v4817
      %v4834 = vmul.f32 %v4722, %v4818
      %v4835 = vmul.f32 %v4723, %v4819
      %v4836 = vmul.f32 %v4724, %v4820
      %v4837 = vmul.f32 %v4725, %v4821
      %v4838 = vmul.f32 %v4726, %v4822
      %v4840 = vlaneseq
      %v4841 = vshrl.u32 %v4840, 7
      %v4842 = vsub.s32 0, %v4841
      %v4843 = vrot.slane %v4660, %v4842
      %v4845 = vmul.f32 %v4823, %v4843
      %v4846 = vmul.f32 %v4824, %v4843
      %v4847 = vmul.f32 %v4825, %v4843
      %v4848 = vmul.f32 %v4826, %v4843
      %v4849 = vmul.f32 %v4827, %v4843
      %v4850 = vmul.f32 %v4828, %v4843
      %v4851 = vmul.f32 %v4829, %v4843
      %v4852 = vmul.f32 %v4830, %v4843
      %v4853 = vmul.f32 %v4831, %v4843
      %v4854 = vmul.f32 %v4832, %v4843
      %v4855 = vmul.f32 %v4833, %v4843
      %v4856 = vmul.f32 %v4834, %v4843
      %v4857 = vmul.f32 %v4835, %v4843
      %v4858 = vmul.f32 %v4836, %v4843
      %v4859 = vmul.f32 %v4837, %v4843
      %v4860 = vmul.f32 %v4838, %v4843
      %v4862 = vlaneseq
      %v4863 = vshrl.u32 %v4862, 7
      %v4864 = vsub.s32 0, %v4863
      %v4865 = vrot.slane %v4661, %v4864
      %v4867 = vadd.f32 %v4845, %v4865
      %v4868 = vadd.f32 %v4846, %v4865
      %v4869 = vadd.f32 %v4847, %v4865
      %v4870 = vadd.f32 %v4848, %v4865
      %v4871 = vadd.f32 %v4849, %v4865
      %v4872 = vadd.f32 %v4850, %v4865
      %v4873 = vadd.f32 %v4851, %v4865
      %v4874 = vadd.f32 %v4852, %v4865
      %v4875 = vadd.f32 %v4853, %v4865
      %v4876 = vadd.f32 %v4854, %v4865
      %v4877 = vadd.f32 %v4855, %v4865
      %v4878 = vadd.f32 %v4856, %v4865
      %v4879 = vadd.f32 %v4857, %v4865
      %v4880 = vadd.f32 %v4858, %v4865
      %v4881 = vadd.f32 %v4859, %v4865
      %v4882 = vadd.f32 %v4860, %v4865
      %v4883 = vpack.c.bf16 %v4868, %v4867
      %v4884 = vpack.c.bf16 %v4870, %v4869
      %v4885 = vpack.c.bf16 %v4872, %v4871
      %v4886 = vpack.c.bf16 %v4874, %v4873
      %v4887 = vpack.c.bf16 %v4876, %v4875
      %v4888 = vpack.c.bf16 %v4878, %v4877
      %v4889 = vpack.c.bf16 %v4880, %v4879
      %v4890 = vpack.c.bf16 %v4882, %v4881
      %v4891 = vld [vmem:[%s737] sm:$0xff]
      %v4892 = vld [vmem:[%s737 + $0x8] sm:$0xff]
      %v4893 = vld [vmem:[%s737 + $0x10] sm:$0xff]
      %v4894 = vld [vmem:[%s737 + $0x18] sm:$0xff]
      %v4895 = vld [vmem:[%s737 + $0x20] sm:$0xff]
      %v4896 = vld [vmem:[%s737 + $0x28] sm:$0xff]
      %v4897 = vld [vmem:[%s737 + $0x30] sm:$0xff]
      %v4898 = vld [vmem:[%s737 + $0x38] sm:$0xff]
      %v4899 = vld [vmem:[%s737 + $0x40] sm:$0xff]
      %v4900 = vld [vmem:[%s737 + $0x48] sm:$0xff]
      %v4901 = vld [vmem:[%s737 + $0x50] sm:$0xff]
      %v4902 = vld [vmem:[%s737 + $0x58] sm:$0xff]
      %v4903 = vld [vmem:[%s737 + $0x60] sm:$0xff]
      %v4904 = vld [vmem:[%s737 + $0x68] sm:$0xff]
      %v4905 = vld [vmem:[%s737 + $0x70] sm:$0xff]
      %v4906 = vld [vmem:[%s737 + $0x78] sm:$0xff]
      %v4907 = vld [vmem:[%s737 + $0x80] sm:$0xff]
      %v4908 = vld [vmem:[%s737 + $0x88] sm:$0xff]
      %v4909 = vld [vmem:[%s737 + $0x90] sm:$0xff]
      %v4910 = vld [vmem:[%s737 + $0x98] sm:$0xff]
      %v4911 = vld [vmem:[%s737 + $0xa0] sm:$0xff]
      %v4912 = vld [vmem:[%s737 + $0xa8] sm:$0xff]
      %v4913 = vld [vmem:[%s737 + $0xb0] sm:$0xff]
      %v4914 = vld [vmem:[%s737 + $0xb8] sm:$0xff]
      %v4915 = vld [vmem:[%s737 + $0xc0] sm:$0xff]
      %v4916 = vld [vmem:[%s737 + $0xc8] sm:$0xff]
      %v4917 = vld [vmem:[%s737 + $0xd0] sm:$0xff]
      %v4918 = vld [vmem:[%s737 + $0xd8] sm:$0xff]
      %v4919 = vld [vmem:[%s737 + $0xe0] sm:$0xff]
      %v4920 = vld [vmem:[%s737 + $0xe8] sm:$0xff]
      %v4921 = vld [vmem:[%s737 + $0xf0] sm:$0xff]
      %v4922 = vld [vmem:[%s737 + $0xf8] sm:$0xff]
      %v4923 = vld [vmem:[%s741] sm:$0xf]
      %v4925 = vlaneseq
      %v4926 = vshrl.u32 %v4925, 7
      %v4927 = vsub.s32 0, %v4926
      %v4928 = vrot.slane %v4923, %v4927
      %v4929 = vlaneseq
      %v4930 = vshrl.u32 %v4929, 7
      %v4931 = vsub.s32 1, %v4930
      %v4932 = vrot.slane %v4923, %v4931
      %v4933 = vlaneseq
      %v4934 = vshrl.u32 %v4933, 7
      %v4935 = vsub.s32 2, %v4934
      %v4936 = vrot.slane %v4923, %v4935
      %v4937 = vlaneseq
      %v4938 = vshrl.u32 %v4937, 7
      %v4939 = vsub.s32 3, %v4938
      %v4940 = vrot.slane %v4923, %v4939
      %v4977 = vunpack.c.l.b16 %v4891
      %v4978 = vunpack.c.h.b16 %v4891
      %v4979 = vunpack.c.l.b16 %v4892
      %v4980 = vunpack.c.h.b16 %v4892
      %v4981 = vunpack.c.l.b16 %v4893
      %v4982 = vunpack.c.h.b16 %v4893
      %v4983 = vunpack.c.l.b16 %v4894
      %v4984 = vunpack.c.h.b16 %v4894
      %v4985 = vunpack.c.l.b16 %v4895
      %v4986 = vunpack.c.h.b16 %v4895
      %v4987 = vunpack.c.l.b16 %v4896
      %v4988 = vunpack.c.h.b16 %v4896
      %v4989 = vunpack.c.l.b16 %v4897
      %v4990 = vunpack.c.h.b16 %v4897
      %v4991 = vunpack.c.l.b16 %v4898
      %v4992 = vunpack.c.h.b16 %v4898
      %v4993 = vunpack.c.l.b16 %v4899
      %v4994 = vunpack.c.h.b16 %v4899
      %v4995 = vunpack.c.l.b16 %v4900
      %v4996 = vunpack.c.h.b16 %v4900
      %v4997 = vunpack.c.l.b16 %v4901
      %v4998 = vunpack.c.h.b16 %v4901
      %v4999 = vunpack.c.l.b16 %v4902
      %v5000 = vunpack.c.h.b16 %v4902
      %v5001 = vunpack.c.l.b16 %v4903
      %v5002 = vunpack.c.h.b16 %v4903
      %v5003 = vunpack.c.l.b16 %v4904
      %v5004 = vunpack.c.h.b16 %v4904
      %v5005 = vunpack.c.l.b16 %v4905
      %v5006 = vunpack.c.h.b16 %v4905
      %v5007 = vunpack.c.l.b16 %v4906
      %v5008 = vunpack.c.h.b16 %v4906
      %v5009 = vunpack.c.l.b16 %v4907
      %v5010 = vunpack.c.h.b16 %v4907
      %v5011 = vunpack.c.l.b16 %v4908
      %v5012 = vunpack.c.h.b16 %v4908
      %v5013 = vunpack.c.l.b16 %v4909
      %v5014 = vunpack.c.h.b16 %v4909
      %v5015 = vunpack.c.l.b16 %v4910
      %v5016 = vunpack.c.h.b16 %v4910
      %v5017 = vunpack.c.l.b16 %v4911
      %v5018 = vunpack.c.h.b16 %v4911
      %v5019 = vunpack.c.l.b16 %v4912
      %v5020 = vunpack.c.h.b16 %v4912
      %v5021 = vunpack.c.l.b16 %v4913
      %v5022 = vunpack.c.h.b16 %v4913
      %v5023 = vunpack.c.l.b16 %v4914
      %v5024 = vunpack.c.h.b16 %v4914
      %v5025 = vunpack.c.l.b16 %v4915
      %v5026 = vunpack.c.h.b16 %v4915
      %v5027 = vunpack.c.l.b16 %v4916
      %v5028 = vunpack.c.h.b16 %v4916
      %v5029 = vunpack.c.l.b16 %v4917
      %v5030 = vunpack.c.h.b16 %v4917
      %v5031 = vunpack.c.l.b16 %v4918
      %v5032 = vunpack.c.h.b16 %v4918
      %v5033 = vunpack.c.l.b16 %v4919
      %v5034 = vunpack.c.h.b16 %v4919
      %v5035 = vunpack.c.l.b16 %v4920
      %v5036 = vunpack.c.h.b16 %v4920
      %v5037 = vunpack.c.l.b16 %v4921
      %v5038 = vunpack.c.h.b16 %v4921
      %v5039 = vunpack.c.l.b16 %v4922
      %v5040 = vunpack.c.h.b16 %v4922
      %v5041 = vpack.c.b16 %v4981, %v4977
      %v5042 = vpack.c.b16 %v4982, %v4978
      %v5043 = vpack.c.b16 %v4983, %v4979
      %v5044 = vpack.c.b16 %v4984, %v4980
      %v5045 = vpack.c.b16 %v4989, %v4985
      %v5046 = vpack.c.b16 %v4990, %v4986
      %v5047 = vpack.c.b16 %v4991, %v4987
      %v5048 = vpack.c.b16 %v4992, %v4988
      %v5049 = vpack.c.b16 %v4997, %v4993
      %v5050 = vpack.c.b16 %v4998, %v4994
      %v5051 = vpack.c.b16 %v4999, %v4995
      %v5052 = vpack.c.b16 %v5000, %v4996
      %v5053 = vpack.c.b16 %v5005, %v5001
      %v5054 = vpack.c.b16 %v5006, %v5002
      %v5055 = vpack.c.b16 %v5007, %v5003
      %v5056 = vpack.c.b16 %v5008, %v5004
      %v5057 = vpack.c.b16 %v5013, %v5009
      %v5058 = vpack.c.b16 %v5014, %v5010
      %v5059 = vpack.c.b16 %v5015, %v5011
      %v5060 = vpack.c.b16 %v5016, %v5012
      %v5061 = vpack.c.b16 %v5021, %v5017
      %v5062 = vpack.c.b16 %v5022, %v5018
      %v5063 = vpack.c.b16 %v5023, %v5019
      %v5064 = vpack.c.b16 %v5024, %v5020
      %v5065 = vpack.c.b16 %v5029, %v5025
      %v5066 = vpack.c.b16 %v5030, %v5026
      %v5067 = vpack.c.b16 %v5031, %v5027
      %v5068 = vpack.c.b16 %v5032, %v5028
      %v5069 = vpack.c.b16 %v5037, %v5033
      %v5070 = vpack.c.b16 %v5038, %v5034
      %v5071 = vpack.c.b16 %v5039, %v5035
      %v5072 = vpack.c.b16 %v5040, %v5036
      %5105 = vmatprep.subr.bf16.mxu0 %v5042
      %5106 = vmatpush1.bf16.msra.mxu0 %v5041
      %5107 = vmatprep.subr.bf16.mxu0 %v5046
      %5108 = vmatpush1.bf16.msra.mxu0 %v5045
      %5109 = vmatprep.subr.bf16.mxu0 %v5050
      %5110 = vmatpush1.bf16.msra.mxu0 %v5049
      %5111 = vmatprep.subr.bf16.mxu0 %v5054
      %5112 = vmatpush1.bf16.msra.mxu0 %v5053
      %5113 = vmatprep.subr.bf16.mxu0 %v5058
      %5114 = vmatpush1.bf16.msra.mxu0 %v5057
      %5115 = vmatprep.subr.bf16.mxu0 %v5062
      %5116 = vmatpush1.bf16.msra.mxu0 %v5061
      %5117 = vmatprep.subr.bf16.mxu0 %v5066
      %5118 = vmatpush1.bf16.msra.mxu0 %v5065
      %5119 = vmatprep.subr.bf16.mxu0 %v5070
      %5120 = vmatpush1.bf16.msra.mxu0 %v5069
      %5121 = vmatprep.subr.bf16.mxu0 0
      %5122 = vmatpush1.bf16.msra.mxu0 0
      %5123 = vmatprep.subr.bf16.mxu0 0
      %5124 = vmatpush1.bf16.msra.mxu0 0
      %5125 = vmatprep.subr.bf16.mxu0 0
      %5126 = vmatpush1.bf16.msra.mxu0 0
      %5127 = vmatprep.subr.bf16.mxu0 0
      %5128 = vmatpush1.bf16.msra.mxu0 0
      %5129 = vmatprep.subr.bf16.mxu0 0
      %5130 = vmatpush1.bf16.msra.mxu0 0
      %5131 = vmatprep.subr.bf16.mxu0 0
      %5132 = vmatpush1.bf16.msra.mxu0 0
      %5133 = vmatprep.subr.bf16.mxu0 0
      %5134 = vmatpush1.bf16.msra.mxu0 0
      %5135 = vmatprep.subr.bf16.mxu0 0
      %5136 = vmatpush1.bf16.msra.mxu0 0
      %5137 = vmatprep.mubr.bf16.mxu0 0
      %5138 = vmatmul.mubr.bf16.gmra.mrb[0].mxu0 %v4883
      %v5139 = vpop.f32.mrb[0].mxu0
      %v5140 = vadd.f32 %v4928, %v5139
      %v5141 = vpop.f32.mrb[0].mxu0
      %v5142 = vadd.f32 %v4932, %v5141
      %v5143 = vpop.f32.mrb[0].mxu0
      %v5144 = vadd.f32 %v4928, %v5143
      %v5145 = vpop.f32.mrb[0].mxu0
      %v5146 = vadd.f32 %v4932, %v5145
      %5147 = vmatprep.mubr.bf16.mxu0 0
      %5148 = vmatmul.mubr.bf16.gmra.mrb[0].mxu0 %v4884
      %v5149 = vpop.f32.mrb[0].mxu0
      %v5150 = vadd.f32 %v4928, %v5149
      %v5151 = vpop.f32.mrb[0].mxu0
      %v5152 = vadd.f32 %v4932, %v5151
      %v5153 = vpop.f32.mrb[0].mxu0
      %v5154 = vadd.f32 %v4928, %v5153
      %v5155 = vpop.f32.mrb[0].mxu0
      %v5156 = vadd.f32 %v4932, %v5155
      %5157 = vmatprep.mubr.bf16.mxu0 0
      %5158 = vmatmul.mubr.bf16.gmra.mrb[0].mxu0 %v4885
      %v5159 = vpop.f32.mrb[0].mxu0
      %v5160 = vadd.f32 %v4928, %v5159
      %v5161 = vpop.f32.mrb[0].mxu0
      %v5162 = vadd.f32 %v4932, %v5161
      %v5163 = vpop.f32.mrb[0].mxu0
      %v5164 = vadd.f32 %v4928, %v5163
      %v5165 = vpop.f32.mrb[0].mxu0
      %v5166 = vadd.f32 %v4932, %v5165
      %5167 = vmatprep.mubr.bf16.mxu0 0
      %5168 = vmatmul.mubr.bf16.gmra.mrb[0].mxu0 %v4886
      %v5169 = vpop.f32.mrb[0].mxu0
      %v5170 = vadd.f32 %v4928, %v5169
      %v5171 = vpop.f32.mrb[0].mxu0
      %v5172 = vadd.f32 %v4932, %v5171
      %v5173 = vpop.f32.mrb[0].mxu0
      %v5174 = vadd.f32 %v4928, %v5173
      %v5175 = vpop.f32.mrb[0].mxu0
      %v5176 = vadd.f32 %v4932, %v5175
      %5177 = vmatprep.mubr.bf16.mxu0 0
      %5178 = vmatmul.mubr.bf16.gmra.mrb[0].mxu0 %v4887
      %v5179 = vpop.f32.mrb[0].mxu0
      %v5180 = vadd.f32 %v4928, %v5179
      %v5181 = vpop.f32.mrb[0].mxu0
      %v5182 = vadd.f32 %v4932, %v5181
      %v5183 = vpop.f32.mrb[0].mxu0
      %v5184 = vadd.f32 %v4928, %v5183
      %v5185 = vpop.f32.mrb[0].mxu0
      %v5186 = vadd.f32 %v4932, %v5185
      %5187 = vmatprep.mubr.bf16.mxu0 0
      %5188 = vmatmul.mubr.bf16.gmra.mrb[0].mxu0 %v4888
      %v5189 = vpop.f32.mrb[0].mxu0
      %v5190 = vadd.f32 %v4928, %v5189
      %v5191 = vpop.f32.mrb[0].mxu0
      %v5192 = vadd.f32 %v4932, %v5191
      %v5193 = vpop.f32.mrb[0].mxu0
      %v5194 = vadd.f32 %v4928, %v5193
      %v5195 = vpop.f32.mrb[0].mxu0
      %v5196 = vadd.f32 %v4932, %v5195
      %5197 = vmatprep.mubr.bf16.mxu0 0
      %5198 = vmatmul.mubr.bf16.gmra.mrb[0].mxu0 %v4889
      %v5199 = vpop.f32.mrb[0].mxu0
      %v5200 = vadd.f32 %v4928, %v5199
      %v5201 = vpop.f32.mrb[0].mxu0
      %v5202 = vadd.f32 %v4932, %v5201
      %v5203 = vpop.f32.mrb[0].mxu0
      %v5204 = vadd.f32 %v4928, %v5203
      %v5205 = vpop.f32.mrb[0].mxu0
      %v5206 = vadd.f32 %v4932, %v5205
      %5207 = vmatprep.mubr.bf16.mxu0 0
      %5208 = vmatmul.mubr.bf16.gmra.mrb[0].mxu0 %v4890
      %v5209 = vpop.f32.mrb[0].mxu0
      %v5210 = vadd.f32 %v4928, %v5209
      %v5211 = vpop.f32.mrb[0].mxu0
      %v5212 = vadd.f32 %v4932, %v5211
      %v5213 = vpop.f32.mrb[0].mxu0
      %v5214 = vadd.f32 %v4928, %v5213
      %v5215 = vpop.f32.mrb[0].mxu0
      %v5216 = vadd.f32 %v4932, %v5215
      %5217 = vdwg.mxu0
      %5218 = vmatprep.subr.bf16.mxu0 %v5044
      %5219 = vmatpush1.bf16.msra.mxu0 %v5043
      %5220 = vmatprep.subr.bf16.mxu0 %v5048
      %5221 = vmatpush1.bf16.msra.mxu0 %v5047
      %5222 = vmatprep.subr.bf16.mxu0 %v5052
      %5223 = vmatpush1.bf16.msra.mxu0 %v5051
      %5224 = vmatprep.subr.bf16.mxu0 %v5056
      %5225 = vmatpush1.bf16.msra.mxu0 %v5055
      %5226 = vmatprep.subr.bf16.mxu0 %v5060
      %5227 = vmatpush1.bf16.msra.mxu0 %v5059
      %5228 = vmatprep.subr.bf16.mxu0 %v5064
      %5229 = vmatpush1.bf16.msra.mxu0 %v5063
      %5230 = vmatprep.subr.bf16.mxu0 %v5068
      %5231 = vmatpush1.bf16.msra.mxu0 %v5067
      %5232 = vmatprep.subr.bf16.mxu0 %v5072
      %5233 = vmatpush1.bf16.msra.mxu0 %v5071
      %5234 = vmatprep.subr.bf16.mxu0 0
      %5235 = vmatpush1.bf16.msra.mxu0 0
      %5236 = vmatprep.subr.bf16.mxu0 0
      %5237 = vmatpush1.bf16.msra.mxu0 0
      %5238 = vmatprep.subr.bf16.mxu0 0
      %5239 = vmatpush1.bf16.msra.mxu0 0
      %5240 = vmatprep.subr.bf16.mxu0 0
      %5241 = vmatpush1.bf16.msra.mxu0 0
      %5242 = vmatprep.subr.bf16.mxu0 0
      %5243 = vmatpush1.bf16.msra.mxu0 0
      %5244 = vmatprep.subr.bf16.mxu0 0
      %5245 = vmatpush1.bf16.msra.mxu0 0
      %5246 = vmatprep.subr.bf16.mxu0 0
      %5247 = vmatpush1.bf16.msra.mxu0 0
      %5248 = vmatprep.subr.bf16.mxu0 0
      %5249 = vmatpush1.bf16.msra.mxu0 0
      %5250 = vmatprep.mubr.bf16.mxu0 0
      %5251 = vmatmul.mubr.bf16.gmra.mrb[0].mxu0 %v4883
      %v5252 = vpop.f32.mrb[0].mxu0
      %v5253 = vadd.f32 %v4936, %v5252
      %v5254 = vpop.f32.mrb[0].mxu0
      %v5255 = vadd.f32 %v4940, %v5254
      %v5256 = vpop.f32.mrb[0].mxu0
      %v5257 = vadd.f32 %v4936, %v5256
      %v5258 = vpop.f32.mrb[0].mxu0
      %v5259 = vadd.f32 %v4940, %v5258
      %5260 = vmatprep.mubr.bf16.mxu0 0
      %5261 = vmatmul.mubr.bf16.gmra.mrb[0].mxu0 %v4884
      %v5262 = vpop.f32.mrb[0].mxu0
      %v5263 = vadd.f32 %v4936, %v5262
      %v5264 = vpop.f32.mrb[0].mxu0
      %v5265 = vadd.f32 %v4940, %v5264
      %v5266 = vpop.f32.mrb[0].mxu0
      %v5267 = vadd.f32 %v4936, %v5266
      %v5268 = vpop.f32.mrb[0].mxu0
      %v5269 = vadd.f32 %v4940, %v5268
      %5270 = vmatprep.mubr.bf16.mxu0 0
      %5271 = vmatmul.mubr.bf16.gmra.mrb[0].mxu0 %v4885
      %v5272 = vpop.f32.mrb[0].mxu0
      %v5273 = vadd.f32 %v4936, %v5272
      %v5274 = vpop.f32.mrb[0].mxu0
      %v5275 = vadd.f32 %v4940, %v5274
      %v5276 = vpop.f32.mrb[0].mxu0
      %v5277 = vadd.f32 %v4936, %v5276
      %v5278 = vpop.f32.mrb[0].mxu0
      %v5279 = vadd.f32 %v4940, %v5278
      %5280 = vmatprep.mubr.bf16.mxu0 0
      %5281 = vmatmul.mubr.bf16.gmra.mrb[0].mxu0 %v4886
      %v5282 = vpop.f32.mrb[0].mxu0
      %v5283 = vadd.f32 %v4936, %v5282
      %v5284 = vpop.f32.mrb[0].mxu0
      %v5285 = vadd.f32 %v4940, %v5284
      %v5286 = vpop.f32.mrb[0].mxu0
      %v5287 = vadd.f32 %v4936, %v5286
      %v5288 = vpop.f32.mrb[0].mxu0
      %v5289 = vadd.f32 %v4940, %v5288
      %5290 = vmatprep.mubr.bf16.mxu0 0
      %5291 = vmatmul.mubr.bf16.gmra.mrb[0].mxu0 %v4887
      %v5292 = vpop.f32.mrb[0].mxu0
      %v5293 = vadd.f32 %v4936, %v5292
      %v5294 = vpop.f32.mrb[0].mxu0
      %v5295 = vadd.f32 %v4940, %v5294
      %v5296 = vpop.f32.mrb[0].mxu0
      %v5297 = vadd.f32 %v4936, %v5296
      %v5298 = vpop.f32.mrb[0].mxu0
      %v5299 = vadd.f32 %v4940, %v5298
      %5300 = vmatprep.mubr.bf16.mxu0 0
      %5301 = vmatmul.mubr.bf16.gmra.mrb[0].mxu0 %v4888
      %v5302 = vpop.f32.mrb[0].mxu0
      %v5303 = vadd.f32 %v4936, %v5302
      %v5304 = vpop.f32.mrb[0].mxu0
      %v5305 = vadd.f32 %v4940, %v5304
      %v5306 = vpop.f32.mrb[0].mxu0
      %v5307 = vadd.f32 %v4936, %v5306
      %v5308 = vpop.f32.mrb[0].mxu0
      %v5309 = vadd.f32 %v4940, %v5308
      %5310 = vmatprep.mubr.bf16.mxu0 0
      %5311 = vmatmul.mubr.bf16.gmra.mrb[0].mxu0 %v4889
      %v5312 = vpop.f32.mrb[0].mxu0
      %v5313 = vadd.f32 %v4936, %v5312
      %v5314 = vpop.f32.mrb[0].mxu0
      %v5315 = vadd.f32 %v4940, %v5314
      %v5316 = vpop.f32.mrb[0].mxu0
      %v5317 = vadd.f32 %v4936, %v5316
      %v5318 = vpop.f32.mrb[0].mxu0
      %v5319 = vadd.f32 %v4940, %v5318
      %5320 = vmatprep.mubr.bf16.mxu0 0
      %5321 = vmatmul.mubr.bf16.gmra.mrb[0].mxu0 %v4890
      %v5322 = vpop.f32.mrb[0].mxu0
      %v5323 = vadd.f32 %v4936, %v5322
      %v5324 = vpop.f32.mrb[0].mxu0
      %v5325 = vadd.f32 %v4940, %v5324
      %v5326 = vpop.f32.mrb[0].mxu0
      %v5327 = vadd.f32 %v4936, %v5326
      %v5328 = vpop.f32.mrb[0].mxu0
      %v5329 = vadd.f32 %v4940, %v5328
      %5330 = vdwg.mxu0
      %v5331 = vmul.f32 %v5140, %v5140
      %v5332 = vmul.f32 %v5142, %v5142
      %v5333 = vmul.f32 %v5253, %v5253
      %v5334 = vmul.f32 %v5255, %v5255
      %v5335 = vmul.f32 %v5144, %v5144
      %v5336 = vmul.f32 %v5146, %v5146
      %v5337 = vmul.f32 %v5257, %v5257
      %v5338 = vmul.f32 %v5259, %v5259
      %v5339 = vmul.f32 %v5150, %v5150
      %v5340 = vmul.f32 %v5152, %v5152
      %v5341 = vmul.f32 %v5263, %v5263
      %v5342 = vmul.f32 %v5265, %v5265
      %v5343 = vmul.f32 %v5154, %v5154
      %v5344 = vmul.f32 %v5156, %v5156
      %v5345 = vmul.f32 %v5267, %v5267
      %v5346 = vmul.f32 %v5269, %v5269
      %v5347 = vmul.f32 %v5160, %v5160
      %v5348 = vmul.f32 %v5162, %v5162
      %v5349 = vmul.f32 %v5273, %v5273
      %v5350 = vmul.f32 %v5275, %v5275
      %v5351 = vmul.f32 %v5164, %v5164
      %v5352 = vmul.f32 %v5166, %v5166
      %v5353 = vmul.f32 %v5277, %v5277
      %v5354 = vmul.f32 %v5279, %v5279
      %v5355 = vmul.f32 %v5170, %v5170
      %v5356 = vmul.f32 %v5172, %v5172
      %v5357 = vmul.f32 %v5283, %v5283
      %v5358 = vmul.f32 %v5285, %v5285
      %v5359 = vmul.f32 %v5174, %v5174
      %v5360 = vmul.f32 %v5176, %v5176
      %v5361 = vmul.f32 %v5287, %v5287
      %v5362 = vmul.f32 %v5289, %v5289
      %v5363 = vmul.f32 %v5180, %v5180
      %v5364 = vmul.f32 %v5182, %v5182
      %v5365 = vmul.f32 %v5293, %v5293
      %v5366 = vmul.f32 %v5295, %v5295
      %v5367 = vmul.f32 %v5184, %v5184
      %v5368 = vmul.f32 %v5186, %v5186
      %v5369 = vmul.f32 %v5297, %v5297
      %v5370 = vmul.f32 %v5299, %v5299
      %v5371 = vmul.f32 %v5190, %v5190
      %v5372 = vmul.f32 %v5192, %v5192
      %v5373 = vmul.f32 %v5303, %v5303
      %v5374 = vmul.f32 %v5305, %v5305
      %v5375 = vmul.f32 %v5194, %v5194
      %v5376 = vmul.f32 %v5196, %v5196
      %v5377 = vmul.f32 %v5307, %v5307
      %v5378 = vmul.f32 %v5309, %v5309
      %v5379 = vmul.f32 %v5200, %v5200
      %v5380 = vmul.f32 %v5202, %v5202
      %v5381 = vmul.f32 %v5313, %v5313
      %v5382 = vmul.f32 %v5315, %v5315
      %v5383 = vmul.f32 %v5204, %v5204
      %v5384 = vmul.f32 %v5206, %v5206
      %v5385 = vmul.f32 %v5317, %v5317
      %v5386 = vmul.f32 %v5319, %v5319
      %v5387 = vmul.f32 %v5210, %v5210
      %v5388 = vmul.f32 %v5212, %v5212
      %v5389 = vmul.f32 %v5323, %v5323
      %v5390 = vmul.f32 %v5325, %v5325
      %v5391 = vmul.f32 %v5214, %v5214
      %v5392 = vmul.f32 %v5216, %v5216
      %v5393 = vmul.f32 %v5327, %v5327
      %v5394 = vmul.f32 %v5329, %v5329
      %v5395 = vmul.f32 %v5140, %v5331
      %v5396 = vmul.f32 %v5142, %v5332
      %v5397 = vmul.f32 %v5253, %v5333
      %v5398 = vmul.f32 %v5255, %v5334
      %v5399 = vmul.f32 %v5144, %v5335
      %v5400 = vmul.f32 %v5146, %v5336
      %v5401 = vmul.f32 %v5257, %v5337
      %v5402 = vmul.f32 %v5259, %v5338
      %v5403 = vmul.f32 %v5150, %v5339
      %v5404 = vmul.f32 %v5152, %v5340
      %v5405 = vmul.f32 %v5263, %v5341
      %v5406 = vmul.f32 %v5265, %v5342
      %v5407 = vmul.f32 %v5154, %v5343
      %v5408 = vmul.f32 %v5156, %v5344
      %v5409 = vmul.f32 %v5267, %v5345
      %v5410 = vmul.f32 %v5269, %v5346
      %v5411 = vmul.f32 %v5160, %v5347
      %v5412 = vmul.f32 %v5162, %v5348
      %v5413 = vmul.f32 %v5273, %v5349
      %v5414 = vmul.f32 %v5275, %v5350
      %v5415 = vmul.f32 %v5164, %v5351
      %v5416 = vmul.f32 %v5166, %v5352
      %v5417 = vmul.f32 %v5277, %v5353
      %v5418 = vmul.f32 %v5279, %v5354
      %v5419 = vmul.f32 %v5170, %v5355
      %v5420 = vmul.f32 %v5172, %v5356
      %v5421 = vmul.f32 %v5283, %v5357
      %v5422 = vmul.f32 %v5285, %v5358
      %v5423 = vmul.f32 %v5174, %v5359
      %v5424 = vmul.f32 %v5176, %v5360
      %v5425 = vmul.f32 %v5287, %v5361
      %v5426 = vmul.f32 %v5289, %v5362
      %v5427 = vmul.f32 %v5180, %v5363
      %v5428 = vmul.f32 %v5182, %v5364
      %v5429 = vmul.f32 %v5293, %v5365
      %v5430 = vmul.f32 %v5295, %v5366
      %v5431 = vmul.f32 %v5184, %v5367
      %v5432 = vmul.f32 %v5186, %v5368
      %v5433 = vmul.f32 %v5297, %v5369
      %v5434 = vmul.f32 %v5299, %v5370
      %v5435 = vmul.f32 %v5190, %v5371
      %v5436 = vmul.f32 %v5192, %v5372
      %v5437 = vmul.f32 %v5303, %v5373
      %v5438 = vmul.f32 %v5305, %v5374
      %v5439 = vmul.f32 %v5194, %v5375
      %v5440 = vmul.f32 %v5196, %v5376
      %v5441 = vmul.f32 %v5307, %v5377
      %v5442 = vmul.f32 %v5309, %v5378
      %v5443 = vmul.f32 %v5200, %v5379
      %v5444 = vmul.f32 %v5202, %v5380
      %v5445 = vmul.f32 %v5313, %v5381
      %v5446 = vmul.f32 %v5315, %v5382
      %v5447 = vmul.f32 %v5204, %v5383
      %v5448 = vmul.f32 %v5206, %v5384
      %v5449 = vmul.f32 %v5317, %v5385
      %v5450 = vmul.f32 %v5319, %v5386
      %v5451 = vmul.f32 %v5210, %v5387
      %v5452 = vmul.f32 %v5212, %v5388
      %v5453 = vmul.f32 %v5323, %v5389
      %v5454 = vmul.f32 %v5325, %v5390
      %v5455 = vmul.f32 %v5214, %v5391
      %v5456 = vmul.f32 %v5216, %v5392
      %v5457 = vmul.f32 %v5327, %v5393
      %v5458 = vmul.f32 %v5329, %v5394
      %v5459 = vmul.f32 %v5395, 0.044715
      %v5460 = vmul.f32 %v5396, 0.044715
      %v5461 = vmul.f32 %v5397, 0.044715
      %v5462 = vmul.f32 %v5398, 0.044715
      %v5463 = vmul.f32 %v5399, 0.044715
      %v5464 = vmul.f32 %v5400, 0.044715
      %v5465 = vmul.f32 %v5401, 0.044715
      %v5466 = vmul.f32 %v5402, 0.044715
      %v5467 = vmul.f32 %v5403, 0.044715
      %v5468 = vmul.f32 %v5404, 0.044715
      %v5469 = vmul.f32 %v5405, 0.044715
      %v5470 = vmul.f32 %v5406, 0.044715
      %v5471 = vmul.f32 %v5407, 0.044715
      %v5472 = vmul.f32 %v5408, 0.044715
      %v5473 = vmul.f32 %v5409, 0.044715
      %v5474 = vmul.f32 %v5410, 0.044715
      %v5475 = vmul.f32 %v5411, 0.044715
      %v5476 = vmul.f32 %v5412, 0.044715
      %v5477 = vmul.f32 %v5413, 0.044715
      %v5478 = vmul.f32 %v5414, 0.044715
      %v5479 = vmul.f32 %v5415, 0.044715
      %v5480 = vmul.f32 %v5416, 0.044715
      %v5481 = vmul.f32 %v5417, 0.044715
      %v5482 = vmul.f32 %v5418, 0.044715
      %v5483 = vmul.f32 %v5419, 0.044715
      %v5484 = vmul.f32 %v5420, 0.044715
      %v5485 = vmul.f32 %v5421, 0.044715
      %v5486 = vmul.f32 %v5422, 0.044715
      %v5487 = vmul.f32 %v5423, 0.044715
      %v5488 = vmul.f32 %v5424, 0.044715
      %v5489 = vmul.f32 %v5425, 0.044715
      %v5490 = vmul.f32 %v5426, 0.044715
      %v5491 = vmul.f32 %v5427, 0.044715
      %v5492 = vmul.f32 %v5428, 0.044715
      %v5493 = vmul.f32 %v5429, 0.044715
      %v5494 = vmul.f32 %v5430, 0.044715
      %v5495 = vmul.f32 %v5431, 0.044715
      %v5496 = vmul.f32 %v5432, 0.044715
      %v5497 = vmul.f32 %v5433, 0.044715
      %v5498 = vmul.f32 %v5434, 0.044715
      %v5499 = vmul.f32 %v5435, 0.044715
      %v5500 = vmul.f32 %v5436, 0.044715
      %v5501 = vmul.f32 %v5437, 0.044715
      %v5502 = vmul.f32 %v5438, 0.044715
      %v5503 = vmul.f32 %v5439, 0.044715
      %v5504 = vmul.f32 %v5440, 0.044715
      %v5505 = vmul.f32 %v5441, 0.044715
      %v5506 = vmul.f32 %v5442, 0.044715
      %v5507 = vmul.f32 %v5443, 0.044715
      %v5508 = vmul.f32 %v5444, 0.044715
      %v5509 = vmul.f32 %v5445, 0.044715
      %v5510 = vmul.f32 %v5446, 0.044715
      %v5511 = vmul.f32 %v5447, 0.044715
      %v5512 = vmul.f32 %v5448, 0.044715
      %v5513 = vmul.f32 %v5449, 0.044715
      %v5514 = vmul.f32 %v5450, 0.044715
      %v5515 = vmul.f32 %v5451, 0.044715
      %v5516 = vmul.f32 %v5452, 0.044715
      %v5517 = vmul.f32 %v5453, 0.044715
      %v5518 = vmul.f32 %v5454, 0.044715
      %v5519 = vmul.f32 %v5455, 0.044715
      %v5520 = vmul.f32 %v5456, 0.044715
      %v5521 = vmul.f32 %v5457, 0.044715
      %v5522 = vmul.f32 %v5458, 0.044715
      %v5523 = vadd.f32 %v5140, %v5459
      %v5524 = vadd.f32 %v5142, %v5460
      %v5525 = vadd.f32 %v5253, %v5461
      %v5526 = vadd.f32 %v5255, %v5462
      %v5527 = vadd.f32 %v5144, %v5463
      %v5528 = vadd.f32 %v5146, %v5464
      %v5529 = vadd.f32 %v5257, %v5465
      %v5530 = vadd.f32 %v5259, %v5466
      %v5531 = vadd.f32 %v5150, %v5467
      %v5532 = vadd.f32 %v5152, %v5468
      %v5533 = vadd.f32 %v5263, %v5469
      %v5534 = vadd.f32 %v5265, %v5470
      %v5535 = vadd.f32 %v5154, %v5471
      %v5536 = vadd.f32 %v5156, %v5472
      %v5537 = vadd.f32 %v5267, %v5473
      %v5538 = vadd.f32 %v5269, %v5474
      %v5539 = vadd.f32 %v5160, %v5475
      %v5540 = vadd.f32 %v5162, %v5476
      %v5541 = vadd.f32 %v5273, %v5477
      %v5542 = vadd.f32 %v5275, %v5478
      %v5543 = vadd.f32 %v5164, %v5479
      %v5544 = vadd.f32 %v5166, %v5480
      %v5545 = vadd.f32 %v5277, %v5481
      %v5546 = vadd.f32 %v5279, %v5482
      %v5547 = vadd.f32 %v5170, %v5483
      %v5548 = vadd.f32 %v5172, %v5484
      %v5549 = vadd.f32 %v5283, %v5485
      %v5550 = vadd.f32 %v5285, %v5486
      %v5551 = vadd.f32 %v5174, %v5487
      %v5552 = vadd.f32 %v5176, %v5488
      %v5553 = vadd.f32 %v5287, %v5489
      %v5554 = vadd.f32 %v5289, %v5490
      %v5555 = vadd.f32 %v5180, %v5491
      %v5556 = vadd.f32 %v5182, %v5492
      %v5557 = vadd.f32 %v5293, %v5493
      %v5558 = vadd.f32 %v5295, %v5494
      %v5559 = vadd.f32 %v5184, %v5495
      %v5560 = vadd.f32 %v5186, %v5496
      %v5561 = vadd.f32 %v5297, %v5497
      %v5562 = vadd.f32 %v5299, %v5498
      %v5563 = vadd.f32 %v5190, %v5499
      %v5564 = vadd.f32 %v5192, %v5500
      %v5565 = vadd.f32 %v5303, %v5501
      %v5566 = vadd.f32 %v5305, %v5502
      %v5567 = vadd.f32 %v5194, %v5503
      %v5568 = vadd.f32 %v5196, %v5504
      %v5569 = vadd.f32 %v5307, %v5505
      %v5570 = vadd.f32 %v5309, %v5506
      %v5571 = vadd.f32 %v5200, %v5507
      %v5572 = vadd.f32 %v5202, %v5508
      %v5573 = vadd.f32 %v5313, %v5509
      %v5574 = vadd.f32 %v5315, %v5510
      %v5575 = vadd.f32 %v5204, %v5511
      %v5576 = vadd.f32 %v5206, %v5512
      %v5577 = vadd.f32 %v5317, %v5513
      %v5578 = vadd.f32 %v5319, %v5514
      %v5579 = vadd.f32 %v5210, %v5515
      %v5580 = vadd.f32 %v5212, %v5516
      %v5581 = vadd.f32 %v5323, %v5517
      %v5582 = vadd.f32 %v5325, %v5518
      %v5583 = vadd.f32 %v5214, %v5519
      %v5584 = vadd.f32 %v5216, %v5520
      %v5585 = vadd.f32 %v5327, %v5521
      %v5586 = vadd.f32 %v5329, %v5522
      %v5587 = vmul.f32 %v5523, 0.7978846
      %v5588 = vmul.f32 %v5524, 0.7978846
      %v5589 = vmul.f32 %v5525, 0.7978846
      %v5590 = vmul.f32 %v5526, 0.7978846
      %v5591 = vmul.f32 %v5527, 0.7978846
      %v5592 = vmul.f32 %v5528, 0.7978846
      %v5593 = vmul.f32 %v5529, 0.7978846
      %v5594 = vmul.f32 %v5530, 0.7978846
      %v5595 = vmul.f32 %v5531, 0.7978846
      %v5596 = vmul.f32 %v5532, 0.7978846
      %v5597 = vmul.f32 %v5533, 0.7978846
      %v5598 = vmul.f32 %v5534, 0.7978846
      %v5599 = vmul.f32 %v5535, 0.7978846
      %v5600 = vmul.f32 %v5536, 0.7978846
      %v5601 = vmul.f32 %v5537, 0.7978846
      %v5602 = vmul.f32 %v5538, 0.7978846
      %v5603 = vmul.f32 %v5539, 0.7978846
      %v5604 = vmul.f32 %v5540, 0.7978846
      %v5605 = vmul.f32 %v5541, 0.7978846
      %v5606 = vmul.f32 %v5542, 0.7978846
      %v5607 = vmul.f32 %v5543, 0.7978846
      %v5608 = vmul.f32 %v5544, 0.7978846
      %v5609 = vmul.f32 %v5545, 0.7978846
      %v5610 = vmul.f32 %v5546, 0.7978846
      %v5611 = vmul.f32 %v5547, 0.7978846
      %v5612 = vmul.f32 %v5548, 0.7978846
      %v5613 = vmul.f32 %v5549, 0.7978846
      %v5614 = vmul.f32 %v5550, 0.7978846
      %v5615 = vmul.f32 %v5551, 0.7978846
      %v5616 = vmul.f32 %v5552, 0.7978846
      %v5617 = vmul.f32 %v5553, 0.7978846
      %v5618 = vmul.f32 %v5554, 0.7978846
      %v5619 = vmul.f32 %v5555, 0.7978846
      %v5620 = vmul.f32 %v5556, 0.7978846
      %v5621 = vmul.f32 %v5557, 0.7978846
      %v5622 = vmul.f32 %v5558, 0.7978846
      %v5623 = vmul.f32 %v5559, 0.7978846
      %v5624 = vmul.f32 %v5560, 0.7978846
      %v5625 = vmul.f32 %v5561, 0.7978846
      %v5626 = vmul.f32 %v5562, 0.7978846
      %v5627 = vmul.f32 %v5563, 0.7978846
      %v5628 = vmul.f32 %v5564, 0.7978846
      %v5629 = vmul.f32 %v5565, 0.7978846
      %v5630 = vmul.f32 %v5566, 0.7978846
      %v5631 = vmul.f32 %v5567, 0.7978846
      %v5632 = vmul.f32 %v5568, 0.7978846
      %v5633 = vmul.f32 %v5569, 0.7978846
      %v5634 = vmul.f32 %v5570, 0.7978846
      %v5635 = vmul.f32 %v5571, 0.7978846
      %v5636 = vmul.f32 %v5572, 0.7978846
      %v5637 = vmul.f32 %v5573, 0.7978846
      %v5638 = vmul.f32 %v5574, 0.7978846
      %v5639 = vmul.f32 %v5575, 0.7978846
      %v5640 = vmul.f32 %v5576, 0.7978846
      %v5641 = vmul.f32 %v5577, 0.7978846
      %v5642 = vmul.f32 %v5578, 0.7978846
      %v5643 = vmul.f32 %v5579, 0.7978846
      %v5644 = vmul.f32 %v5580, 0.7978846
      %v5645 = vmul.f32 %v5581, 0.7978846
      %v5646 = vmul.f32 %v5582, 0.7978846
      %v5647 = vmul.f32 %v5583, 0.7978846
      %v5648 = vmul.f32 %v5584, 0.7978846
      %v5649 = vmul.f32 %v5585, 0.7978846
      %v5650 = vmul.f32 %v5586, 0.7978846
      %v5651 = vtanh.pop %v5587
      %v5652 = vtanh.pop %v5588
      %v5653 = vtanh.pop %v5589
      %v5654 = vtanh.pop %v5590
      %v5655 = vtanh.pop %v5591
      %v5656 = vtanh.pop %v5592
      %v5657 = vtanh.pop %v5593
      %v5658 = vtanh.pop %v5594
      %v5659 = vtanh.pop %v5595
      %v5660 = vtanh.pop %v5596
      %v5661 = vtanh.pop %v5597
      %v5662 = vtanh.pop %v5598
      %v5663 = vtanh.pop %v5599
      %v5664 = vtanh.pop %v5600
      %v5665 = vtanh.pop %v5601
      %v5666 = vtanh.pop %v5602
      %v5667 = vtanh.pop %v5603
      %v5668 = vtanh.pop %v5604
      %v5669 = vtanh.pop %v5605
      %v5670 = vtanh.pop %v5606
      %v5671 = vtanh.pop %v5607
      %v5672 = vtanh.pop %v5608
      %v5673 = vtanh.pop %v5609
      %v5674 = vtanh.pop %v5610
      %v5675 = vtanh.pop %v5611
      %v5676 = vtanh.pop %v5612
      %v5677 = vtanh.pop %v5613
      %v5678 = vtanh.pop %v5614
      %v5679 = vtanh.pop %v5615
      %v5680 = vtanh.pop %v5616
      %v5681 = vtanh.pop %v5617
      %v5682 = vtanh.pop %v5618
      %v5683 = vtanh.pop %v5619
      %v5684 = vtanh.pop %v5620
      %v5685 = vtanh.pop %v5621
      %v5686 = vtanh.pop %v5622
      %v5687 = vtanh.pop %v5623
      %v5688 = vtanh.pop %v5624
      %v5689 = vtanh.pop %v5625
      %v5690 = vtanh.pop %v5626
      %v5691 = vtanh.pop %v5627
      %v5692 = vtanh.pop %v5628
      %v5693 = vtanh.pop %v5629
      %v5694 = vtanh.pop %v5630
      %v5695 = vtanh.pop %v5631
      %v5696 = vtanh.pop %v5632
      %v5697 = vtanh.pop %v5633
      %v5698 = vtanh.pop %v5634
      %v5699 = vtanh.pop %v5635
      %v5700 = vtanh.pop %v5636
      %v5701 = vtanh.pop %v5637
      %v5702 = vtanh.pop %v5638
      %v5703 = vtanh.pop %v5639
      %v5704 = vtanh.pop %v5640
      %v5705 = vtanh.pop %v5641
      %v5706 = vtanh.pop %v5642
      %v5707 = vtanh.pop %v5643
      %v5708 = vtanh.pop %v5644
      %v5709 = vtanh.pop %v5645
      %v5710 = vtanh.pop %v5646
      %v5711 = vtanh.pop %v5647
      %v5712 = vtanh.pop %v5648
      %v5713 = vtanh.pop %v5649
      %v5714 = vtanh.pop %v5650
      %v5715 = vadd.f32 %v5651, 1.0
      %v5716 = vadd.f32 %v5652, 1.0
      %v5717 = vadd.f32 %v5653, 1.0
      %v5718 = vadd.f32 %v5654, 1.0
      %v5719 = vadd.f32 %v5655, 1.0
      %v5720 = vadd.f32 %v5656, 1.0
      %v5721 = vadd.f32 %v5657, 1.0
      %v5722 = vadd.f32 %v5658, 1.0
      %v5723 = vadd.f32 %v5659, 1.0
      %v5724 = vadd.f32 %v5660, 1.0
      %v5725 = vadd.f32 %v5661, 1.0
      %v5726 = vadd.f32 %v5662, 1.0
      %v5727 = vadd.f32 %v5663, 1.0
      %v5728 = vadd.f32 %v5664, 1.0
      %v5729 = vadd.f32 %v5665, 1.0
      %v5730 = vadd.f32 %v5666, 1.0
      %v5731 = vadd.f32 %v5667, 1.0
      %v5732 = vadd.f32 %v5668, 1.0
      %v5733 = vadd.f32 %v5669, 1.0
      %v5734 = vadd.f32 %v5670, 1.0
      %v5735 = vadd.f32 %v5671, 1.0
      %v5736 = vadd.f32 %v5672, 1.0
      %v5737 = vadd.f32 %v5673, 1.0
      %v5738 = vadd.f32 %v5674, 1.0
      %v5739 = vadd.f32 %v5675, 1.0
      %v5740 = vadd.f32 %v5676, 1.0
      %v5741 = vadd.f32 %v5677, 1.0
      %v5742 = vadd.f32 %v5678, 1.0
      %v5743 = vadd.f32 %v5679, 1.0
      %v5744 = vadd.f32 %v5680, 1.0
      %v5745 = vadd.f32 %v5681, 1.0
      %v5746 = vadd.f32 %v5682, 1.0
      %v5747 = vadd.f32 %v5683, 1.0
      %v5748 = vadd.f32 %v5684, 1.0
      %v5749 = vadd.f32 %v5685, 1.0
      %v5750 = vadd.f32 %v5686, 1.0
      %v5751 = vadd.f32 %v5687, 1.0
      %v5752 = vadd.f32 %v5688, 1.0
      %v5753 = vadd.f32 %v5689, 1.0
      %v5754 = vadd.f32 %v5690, 1.0
      %v5755 = vadd.f32 %v5691, 1.0
      %v5756 = vadd.f32 %v5692, 1.0
      %v5757 = vadd.f32 %v5693, 1.0
      %v5758 = vadd.f32 %v5694, 1.0
      %v5759 = vadd.f32 %v5695, 1.0
      %v5760 = vadd.f32 %v5696, 1.0
      %v5761 = vadd.f32 %v5697, 1.0
      %v5762 = vadd.f32 %v5698, 1.0
      %v5763 = vadd.f32 %v5699, 1.0
      %v5764 = vadd.f32 %v5700, 1.0
      %v5765 = vadd.f32 %v5701, 1.0
      %v5766 = vadd.f32 %v5702, 1.0
      %v5767 = vadd.f32 %v5703, 1.0
      %v5768 = vadd.f32 %v5704, 1.0
      %v5769 = vadd.f32 %v5705, 1.0
      %v5770 = vadd.f32 %v5706, 1.0
      %v5771 = vadd.f32 %v5707, 1.0
      %v5772 = vadd.f32 %v5708, 1.0
      %v5773 = vadd.f32 %v5709, 1.0
      %v5774 = vadd.f32 %v5710, 1.0
      %v5775 = vadd.f32 %v5711, 1.0
      %v5776 = vadd.f32 %v5712, 1.0
      %v5777 = vadd.f32 %v5713, 1.0
      %v5778 = vadd.f32 %v5714, 1.0
      %v5779 = vmul.f32 %v5715, 0.5
      %v5780 = vmul.f32 %v5716, 0.5
      %v5781 = vmul.f32 %v5717, 0.5
      %v5782 = vmul.f32 %v5718, 0.5
      %v5783 = vmul.f32 %v5719, 0.5
      %v5784 = vmul.f32 %v5720, 0.5
      %v5785 = vmul.f32 %v5721, 0.5
      %v5786 = vmul.f32 %v5722, 0.5
      %v5787 = vmul.f32 %v5723, 0.5
      %v5788 = vmul.f32 %v5724, 0.5
      %v5789 = vmul.f32 %v5725, 0.5
      %v5790 = vmul.f32 %v5726, 0.5
      %v5791 = vmul.f32 %v5727, 0.5
      %v5792 = vmul.f32 %v5728, 0.5
      %v5793 = vmul.f32 %v5729, 0.5
      %v5794 = vmul.f32 %v5730, 0.5
      %v5795 = vmul.f32 %v5731, 0.5
      %v5796 = vmul.f32 %v5732, 0.5
      %v5797 = vmul.f32 %v5733, 0.5
      %v5798 = vmul.f32 %v5734, 0.5
      %v5799 = vmul.f32 %v5735, 0.5
      %v5800 = vmul.f32 %v5736, 0.5
      %v5801 = vmul.f32 %v5737, 0.5
      %v5802 = vmul.f32 %v5738, 0.5
      %v5803 = vmul.f32 %v5739, 0.5
      %v5804 = vmul.f32 %v5740, 0.5
      %v5805 = vmul.f32 %v5741, 0.5
      %v5806 = vmul.f32 %v5742, 0.5
      %v5807 = vmul.f32 %v5743, 0.5
      %v5808 = vmul.f32 %v5744, 0.5
      %v5809 = vmul.f32 %v5745, 0.5
      %v5810 = vmul.f32 %v5746, 0.5
      %v5811 = vmul.f32 %v5747, 0.5
      %v5812 = vmul.f32 %v5748, 0.5
      %v5813 = vmul.f32 %v5749, 0.5
      %v5814 = vmul.f32 %v5750, 0.5
      %v5815 = vmul.f32 %v5751, 0.5
      %v5816 = vmul.f32 %v5752, 0.5
      %v5817 = vmul.f32 %v5753, 0.5
      %v5818 = vmul.f32 %v5754, 0.5
      %v5819 = vmul.f32 %v5755, 0.5
      %v5820 = vmul.f32 %v5756, 0.5
      %v5821 = vmul.f32 %v5757, 0.5
      %v5822 = vmul.f32 %v5758, 0.5
      %v5823 = vmul.f32 %v5759, 0.5
      %v5824 = vmul.f32 %v5760, 0.5
      %v5825 = vmul.f32 %v5761, 0.5
      %v5826 = vmul.f32 %v5762, 0.5
      %v5827 = vmul.f32 %v5763, 0.5
      %v5828 = vmul.f32 %v5764, 0.5
      %v5829 = vmul.f32 %v5765, 0.5
      %v5830 = vmul.f32 %v5766, 0.5
      %v5831 = vmul.f32 %v5767, 0.5
      %v5832 = vmul.f32 %v5768, 0.5
      %v5833 = vmul.f32 %v5769, 0.5
      %v5834 = vmul.f32 %v5770, 0.5
      %v5835 = vmul.f32 %v5771, 0.5
      %v5836 = vmul.f32 %v5772, 0.5
      %v5837 = vmul.f32 %v5773, 0.5
      %v5838 = vmul.f32 %v5774, 0.5
      %v5839 = vmul.f32 %v5775, 0.5
      %v5840 = vmul.f32 %v5776, 0.5
      %v5841 = vmul.f32 %v5777, 0.5
      %v5842 = vmul.f32 %v5778, 0.5
      %v5843 = vmul.f32 %v5140, %v5779
      %v5844 = vmul.f32 %v5142, %v5780
      %v5845 = vmul.f32 %v5253, %v5781
      %v5846 = vmul.f32 %v5255, %v5782
      %v5847 = vmul.f32 %v5144, %v5783
      %v5848 = vmul.f32 %v5146, %v5784
      %v5849 = vmul.f32 %v5257, %v5785
      %v5850 = vmul.f32 %v5259, %v5786
      %v5851 = vmul.f32 %v5150, %v5787
      %v5852 = vmul.f32 %v5152, %v5788
      %v5853 = vmul.f32 %v5263, %v5789
      %v5854 = vmul.f32 %v5265, %v5790
      %v5855 = vmul.f32 %v5154, %v5791
      %v5856 = vmul.f32 %v5156, %v5792
      %v5857 = vmul.f32 %v5267, %v5793
      %v5858 = vmul.f32 %v5269, %v5794
      %v5859 = vmul.f32 %v5160, %v5795
      %v5860 = vmul.f32 %v5162, %v5796
      %v5861 = vmul.f32 %v5273, %v5797
      %v5862 = vmul.f32 %v5275, %v5798
      %v5863 = vmul.f32 %v5164, %v5799
      %v5864 = vmul.f32 %v5166, %v5800
      %v5865 = vmul.f32 %v5277, %v5801
      %v5866 = vmul.f32 %v5279, %v5802
      %v5867 = vmul.f32 %v5170, %v5803
      %v5868 = vmul.f32 %v5172, %v5804
      %v5869 = vmul.f32 %v5283, %v5805
      %v5870 = vmul.f32 %v5285, %v5806
      %v5871 = vmul.f32 %v5174, %v5807
      %v5872 = vmul.f32 %v5176, %v5808
      %v5873 = vmul.f32 %v5287, %v5809
      %v5874 = vmul.f32 %v5289, %v5810
      %v5875 = vmul.f32 %v5180, %v5811
      %v5876 = vmul.f32 %v5182, %v5812
      %v5877 = vmul.f32 %v5293, %v5813
      %v5878 = vmul.f32 %v5295, %v5814
      %v5879 = vmul.f32 %v5184, %v5815
      %v5880 = vmul.f32 %v5186, %v5816
      %v5881 = vmul.f32 %v5297, %v5817
      %v5882 = vmul.f32 %v5299, %v5818
      %v5883 = vmul.f32 %v5190, %v5819
      %v5884 = vmul.f32 %v5192, %v5820
      %v5885 = vmul.f32 %v5303, %v5821
      %v5886 = vmul.f32 %v5305, %v5822
      %v5887 = vmul.f32 %v5194, %v5823
      %v5888 = vmul.f32 %v5196, %v5824
      %v5889 = vmul.f32 %v5307, %v5825
      %v5890 = vmul.f32 %v5309, %v5826
      %v5891 = vmul.f32 %v5200, %v5827
      %v5892 = vmul.f32 %v5202, %v5828
      %v5893 = vmul.f32 %v5313, %v5829
      %v5894 = vmul.f32 %v5315, %v5830
      %v5895 = vmul.f32 %v5204, %v5831
      %v5896 = vmul.f32 %v5206, %v5832
      %v5897 = vmul.f32 %v5317, %v5833
      %v5898 = vmul.f32 %v5319, %v5834
      %v5899 = vmul.f32 %v5210, %v5835
      %v5900 = vmul.f32 %v5212, %v5836
      %v5901 = vmul.f32 %v5323, %v5837
      %v5902 = vmul.f32 %v5325, %v5838
      %v5903 = vmul.f32 %v5214, %v5839
      %v5904 = vmul.f32 %v5216, %v5840
      %v5905 = vmul.f32 %v5327, %v5841
      %v5906 = vmul.f32 %v5329, %v5842
      %v5907 = vpack.c.bf16 %v5847, %v5843
      %v5908 = vpack.c.bf16 %v5848, %v5844
      %v5909 = vpack.c.bf16 %v5849, %v5845
      %v5910 = vpack.c.bf16 %v5850, %v5846
      %v5911 = vpack.c.bf16 %v5855, %v5851
      %v5912 = vpack.c.bf16 %v5856, %v5852
      %v5913 = vpack.c.bf16 %v5857, %v5853
      %v5914 = vpack.c.bf16 %v5858, %v5854
      %v5915 = vpack.c.bf16 %v5863, %v5859
      %v5916 = vpack.c.bf16 %v5864, %v5860
      %v5917 = vpack.c.bf16 %v5865, %v5861
      %v5918 = vpack.c.bf16 %v5866, %v5862
      %v5919 = vpack.c.bf16 %v5871, %v5867
      %v5920 = vpack.c.bf16 %v5872, %v5868
      %v5921 = vpack.c.bf16 %v5873, %v5869
      %v5922 = vpack.c.bf16 %v5874, %v5870
      %v5923 = vpack.c.bf16 %v5879, %v5875
      %v5924 = vpack.c.bf16 %v5880, %v5876
      %v5925 = vpack.c.bf16 %v5881, %v5877
      %v5926 = vpack.c.bf16 %v5882, %v5878
      %v5927 = vpack.c.bf16 %v5887, %v5883
      %v5928 = vpack.c.bf16 %v5888, %v5884
      %v5929 = vpack.c.bf16 %v5889, %v5885
      %v5930 = vpack.c.bf16 %v5890, %v5886
      %v5931 = vpack.c.bf16 %v5895, %v5891
      %v5932 = vpack.c.bf16 %v5896, %v5892
      %v5933 = vpack.c.bf16 %v5897, %v5893
      %v5934 = vpack.c.bf16 %v5898, %v5894
      %v5935 = vpack.c.bf16 %v5903, %v5899
      %v5936 = vpack.c.bf16 %v5904, %v5900
      %v5937 = vpack.c.bf16 %v5905, %v5901
      %v5938 = vpack.c.bf16 %v5906, %v5902
      %v5939 = vld [vmem:[%s746] sm:$0xf]
      %v5940 = vld [vmem:[%s746 + $0x4] sm:$0xf]
      %v5941 = vld [vmem:[%s746 + $0x8] sm:$0xf]
      %v5942 = vld [vmem:[%s746 + $0xc] sm:$0xf]
      %v5943 = vld [vmem:[%s746 + $0x10] sm:$0xf]
      %v5944 = vld [vmem:[%s746 + $0x14] sm:$0xf]
      %v5945 = vld [vmem:[%s746 + $0x18] sm:$0xf]
      %v5946 = vld [vmem:[%s746 + $0x1c] sm:$0xf]
      %v5947 = vld [vmem:[%s746 + $0x20] sm:$0xf]
      %v5948 = vld [vmem:[%s746 + $0x24] sm:$0xf]
      %v5949 = vld [vmem:[%s746 + $0x28] sm:$0xf]
      %v5950 = vld [vmem:[%s746 + $0x2c] sm:$0xf]
      %v5951 = vld [vmem:[%s746 + $0x30] sm:$0xf]
      %v5952 = vld [vmem:[%s746 + $0x34] sm:$0xf]
      %v5953 = vld [vmem:[%s746 + $0x38] sm:$0xf]
      %v5954 = vld [vmem:[%s746 + $0x3c] sm:$0xf]
      %v5955 = vld [vmem:[%s746 + $0x40] sm:$0xf]
      %v5956 = vld [vmem:[%s746 + $0x44] sm:$0xf]
      %v5957 = vld [vmem:[%s746 + $0x48] sm:$0xf]
      %v5958 = vld [vmem:[%s746 + $0x4c] sm:$0xf]
      %v5959 = vld [vmem:[%s746 + $0x50] sm:$0xf]
      %v5960 = vld [vmem:[%s746 + $0x54] sm:$0xf]
      %v5961 = vld [vmem:[%s746 + $0x58] sm:$0xf]
      %v5962 = vld [vmem:[%s746 + $0x5c] sm:$0xf]
      %v5963 = vld [vmem:[%s746 + $0x60] sm:$0xf]
      %v5964 = vld [vmem:[%s746 + $0x64] sm:$0xf]
      %v5965 = vld [vmem:[%s746 + $0x68] sm:$0xf]
      %v5966 = vld [vmem:[%s746 + $0x6c] sm:$0xf]
      %v5967 = vld [vmem:[%s746 + $0x70] sm:$0xf]
      %v5968 = vld [vmem:[%s746 + $0x74] sm:$0xf]
      %v5969 = vld [vmem:[%s746 + $0x78] sm:$0xf]
      %v5970 = vld [vmem:[%s746 + $0x7c] sm:$0xf]
      %v5971 = vld [vmem:[%s746 + $0x80] sm:$0xf]
      %v5972 = vld [vmem:[%s746 + $0x84] sm:$0xf]
      %v5973 = vld [vmem:[%s746 + $0x88] sm:$0xf]
      %v5974 = vld [vmem:[%s746 + $0x8c] sm:$0xf]
      %v5975 = vld [vmem:[%s746 + $0x90] sm:$0xf]
      %v5976 = vld [vmem:[%s746 + $0x94] sm:$0xf]
      %v5977 = vld [vmem:[%s746 + $0x98] sm:$0xf]
      %v5978 = vld [vmem:[%s746 + $0x9c] sm:$0xf]
      %v5979 = vld [vmem:[%s746 + $0xa0] sm:$0xf]
      %v5980 = vld [vmem:[%s746 + $0xa4] sm:$0xf]
      %v5981 = vld [vmem:[%s746 + $0xa8] sm:$0xf]
      %v5982 = vld [vmem:[%s746 + $0xac] sm:$0xf]
      %v5983 = vld [vmem:[%s746 + $0xb0] sm:$0xf]
      %v5984 = vld [vmem:[%s746 + $0xb4] sm:$0xf]
      %v5985 = vld [vmem:[%s746 + $0xb8] sm:$0xf]
      %v5986 = vld [vmem:[%s746 + $0xbc] sm:$0xf]
      %v5987 = vld [vmem:[%s746 + $0xc0] sm:$0xf]
      %v5988 = vld [vmem:[%s746 + $0xc4] sm:$0xf]
      %v5989 = vld [vmem:[%s746 + $0xc8] sm:$0xf]
      %v5990 = vld [vmem:[%s746 + $0xcc] sm:$0xf]
      %v5991 = vld [vmem:[%s746 + $0xd0] sm:$0xf]
      %v5992 = vld [vmem:[%s746 + $0xd4] sm:$0xf]
      %v5993 = vld [vmem:[%s746 + $0xd8] sm:$0xf]
      %v5994 = vld [vmem:[%s746 + $0xdc] sm:$0xf]
      %v5995 = vld [vmem:[%s746 + $0xe0] sm:$0xf]
      %v5996 = vld [vmem:[%s746 + $0xe4] sm:$0xf]
      %v5997 = vld [vmem:[%s746 + $0xe8] sm:$0xf]
      %v5998 = vld [vmem:[%s746 + $0xec] sm:$0xf]
      %v5999 = vld [vmem:[%s746 + $0xf0] sm:$0xf]
      %v6000 = vld [vmem:[%s746 + $0xf4] sm:$0xf]
      %v6001 = vld [vmem:[%s746 + $0xf8] sm:$0xf]
      %v6002 = vld [vmem:[%s746 + $0xfc] sm:$0xf]
      %v6003 = vld [vmem:[%s749] sm:$0x1]
      %v6005 = vlaneseq
      %v6006 = vshrl.u32 %v6005, 7
      %v6007 = vsub.s32 0, %v6006
      %v6008 = vrot.slane %v6003, %v6007
      %v6074 = vunpack.c.l.b16 %v5939
      %v6075 = vunpack.c.l.b16 %v5940
      %v6076 = vunpack.c.l.b16 %v5941
      %v6077 = vunpack.c.l.b16 %v5942
      %v6078 = vunpack.c.l.b16 %v5943
      %v6079 = vunpack.c.l.b16 %v5944
      %v6080 = vunpack.c.l.b16 %v5945
      %v6081 = vunpack.c.l.b16 %v5946
      %v6082 = vunpack.c.l.b16 %v5947
      %v6083 = vunpack.c.l.b16 %v5948
      %v6084 = vunpack.c.l.b16 %v5949
      %v6085 = vunpack.c.l.b16 %v5950
      %v6086 = vunpack.c.l.b16 %v5951
      %v6087 = vunpack.c.l.b16 %v5952
      %v6088 = vunpack.c.l.b16 %v5953
      %v6089 = vunpack.c.l.b16 %v5954
      %v6090 = vunpack.c.l.b16 %v5955
      %v6091 = vunpack.c.l.b16 %v5956
      %v6092 = vunpack.c.l.b16 %v5957
      %v6093 = vunpack.c.l.b16 %v5958
      %v6094 = vunpack.c.l.b16 %v5959
      %v6095 = vunpack.c.l.b16 %v5960
      %v6096 = vunpack.c.l.b16 %v5961
      %v6097 = vunpack.c.l.b16 %v5962
      %v6098 = vunpack.c.l.b16 %v5963
      %v6099 = vunpack.c.l.b16 %v5964
      %v6100 = vunpack.c.l.b16 %v5965
      %v6101 = vunpack.c.l.b16 %v5966
      %v6102 = vunpack.c.l.b16 %v5967
      %v6103 = vunpack.c.l.b16 %v5968
      %v6104 = vunpack.c.l.b16 %v5969
      %v6105 = vunpack.c.l.b16 %v5970
      %v6106 = vunpack.c.l.b16 %v5971
      %v6107 = vunpack.c.l.b16 %v5972
      %v6108 = vunpack.c.l.b16 %v5973
      %v6109 = vunpack.c.l.b16 %v5974
      %v6110 = vunpack.c.l.b16 %v5975
      %v6111 = vunpack.c.l.b16 %v5976
      %v6112 = vunpack.c.l.b16 %v5977
      %v6113 = vunpack.c.l.b16 %v5978
      %v6114 = vunpack.c.l.b16 %v5979
      %v6115 = vunpack.c.l.b16 %v5980
      %v6116 = vunpack.c.l.b16 %v5981
      %v6117 = vunpack.c.l.b16 %v5982
      %v6118 = vunpack.c.l.b16 %v5983
      %v6119 = vunpack.c.l.b16 %v5984
      %v6120 = vunpack.c.l.b16 %v5985
      %v6121 = vunpack.c.l.b16 %v5986
      %v6122 = vunpack.c.l.b16 %v5987
      %v6123 = vunpack.c.l.b16 %v5988
      %v6124 = vunpack.c.l.b16 %v5989
      %v6125 = vunpack.c.l.b16 %v5990
      %v6126 = vunpack.c.l.b16 %v5991
      %v6127 = vunpack.c.l.b16 %v5992
      %v6128 = vunpack.c.l.b16 %v5993
      %v6129 = vunpack.c.l.b16 %v5994
      %v6130 = vunpack.c.l.b16 %v5995
      %v6131 = vunpack.c.l.b16 %v5996
      %v6132 = vunpack.c.l.b16 %v5997
      %v6133 = vunpack.c.l.b16 %v5998
      %v6134 = vunpack.c.l.b16 %v5999
      %v6135 = vunpack.c.l.b16 %v6000
      %v6136 = vunpack.c.l.b16 %v6001
      %v6137 = vunpack.c.l.b16 %v6002
      %v6138 = vpack.c.b16 %v6075, %v6074
      %v6139 = vpack.c.b16 %v6077, %v6076
      %v6140 = vpack.c.b16 %v6079, %v6078
      %v6141 = vpack.c.b16 %v6081, %v6080
      %v6142 = vpack.c.b16 %v6083, %v6082
      %v6143 = vpack.c.b16 %v6085, %v6084
      %v6144 = vpack.c.b16 %v6087, %v6086
      %v6145 = vpack.c.b16 %v6089, %v6088
      %v6146 = vpack.c.b16 %v6091, %v6090
      %v6147 = vpack.c.b16 %v6093, %v6092
      %v6148 = vpack.c.b16 %v6095, %v6094
      %v6149 = vpack.c.b16 %v6097, %v6096
      %v6150 = vpack.c.b16 %v6099, %v6098
      %v6151 = vpack.c.b16 %v6101, %v6100
      %v6152 = vpack.c.b16 %v6103, %v6102
      %v6153 = vpack.c.b16 %v6105, %v6104
      %v6154 = vpack.c.b16 %v6107, %v6106
      %v6155 = vpack.c.b16 %v6109, %v6108
      %v6156 = vpack.c.b16 %v6111, %v6110
      %v6157 = vpack.c.b16 %v6113, %v6112
      %v6158 = vpack.c.b16 %v6115, %v6114
      %v6159 = vpack.c.b16 %v6117, %v6116
      %v6160 = vpack.c.b16 %v6119, %v6118
      %v6161 = vpack.c.b16 %v6121, %v6120
      %v6162 = vpack.c.b16 %v6123, %v6122
      %v6163 = vpack.c.b16 %v6125, %v6124
      %v6164 = vpack.c.b16 %v6127, %v6126
      %v6165 = vpack.c.b16 %v6129, %v6128
      %v6166 = vpack.c.b16 %v6131, %v6130
      %v6167 = vpack.c.b16 %v6133, %v6132
      %v6168 = vpack.c.b16 %v6135, %v6134
      %v6169 = vpack.c.b16 %v6137, %v6136
      %6202 = vmatprep.subr.bf16.mxu0 0
      %6203 = vmatpush1.bf16.msra.mxu0 %v6138
      %6204 = vmatprep.subr.bf16.mxu0 0
      %6205 = vmatpush1.bf16.msra.mxu0 %v6139
      %6206 = vmatprep.subr.bf16.mxu0 0
      %6207 = vmatpush1.bf16.msra.mxu0 %v6140
      %6208 = vmatprep.subr.bf16.mxu0 0
      %6209 = vmatpush1.bf16.msra.mxu0 %v6141
      %6210 = vmatprep.subr.bf16.mxu0 0
      %6211 = vmatpush1.bf16.msra.mxu0 %v6142
      %6212 = vmatprep.subr.bf16.mxu0 0
      %6213 = vmatpush1.bf16.msra.mxu0 %v6143
      %6214 = vmatprep.subr.bf16.mxu0 0
      %6215 = vmatpush1.bf16.msra.mxu0 %v6144
      %6216 = vmatprep.subr.bf16.mxu0 0
      %6217 = vmatpush1.bf16.msra.mxu0 %v6145
      %6218 = vmatprep.subr.bf16.mxu0 0
      %6219 = vmatpush1.bf16.msra.mxu0 %v6146
      %6220 = vmatprep.subr.bf16.mxu0 0
      %6221 = vmatpush1.bf16.msra.mxu0 %v6147
      %6222 = vmatprep.subr.bf16.mxu0 0
      %6223 = vmatpush1.bf16.msra.mxu0 %v6148
      %6224 = vmatprep.subr.bf16.mxu0 0
      %6225 = vmatpush1.bf16.msra.mxu0 %v6149
      %6226 = vmatprep.subr.bf16.mxu0 0
      %6227 = vmatpush1.bf16.msra.mxu0 %v6150
      %6228 = vmatprep.subr.bf16.mxu0 0
      %6229 = vmatpush1.bf16.msra.mxu0 %v6151
      %6230 = vmatprep.subr.bf16.mxu0 0
      %6231 = vmatpush1.bf16.msra.mxu0 %v6152
      %6232 = vmatprep.subr.bf16.mxu0 0
      %6233 = vmatpush1.bf16.msra.mxu0 %v6153
      %6234 = vmatprep.mubr.bf16.mxu0 %v5908
      %6235 = vmatmul.mubr.bf16.gmra.mrb[0].mxu0 %v5907
      %v6236 = vpop.f32.mrb[0].mxu0
      %v6237 = vadd.f32 %v6008, %v6236
      %v6238 = vpop.f32.mrb[0].mxu0
      %v6239 = vpop.f32.mrb[0].mxu0
      %v6240 = vadd.f32 %v6008, %v6239
      %v6241 = vpop.f32.mrb[0].mxu0
      %6242 = vmatprep.mubr.bf16.mxu0 %v5912
      %6243 = vmatmul.mubr.bf16.gmra.mrb[0].mxu0 %v5911
      %v6244 = vpop.f32.mrb[0].mxu0
      %v6245 = vadd.f32 %v6008, %v6244
      %v6246 = vpop.f32.mrb[0].mxu0
      %v6247 = vpop.f32.mrb[0].mxu0
      %v6248 = vadd.f32 %v6008, %v6247
      %v6249 = vpop.f32.mrb[0].mxu0
      %6250 = vmatprep.mubr.bf16.mxu0 %v5916
      %6251 = vmatmul.mubr.bf16.gmra.mrb[0].mxu0 %v5915
      %v6252 = vpop.f32.mrb[0].mxu0
      %v6253 = vadd.f32 %v6008, %v6252
      %v6254 = vpop.f32.mrb[0].mxu0
      %v6255 = vpop.f32.mrb[0].mxu0
      %v6256 = vadd.f32 %v6008, %v6255
      %v6257 = vpop.f32.mrb[0].mxu0
      %6258 = vmatprep.mubr.bf16.mxu0 %v5920
      %6259 = vmatmul.mubr.bf16.gmra.mrb[0].mxu0 %v5919
      %v6260 = vpop.f32.mrb[0].mxu0
      %v6261 = vadd.f32 %v6008, %v6260
      %v6262 = vpop.f32.mrb[0].mxu0
      %v6263 = vpop.f32.mrb[0].mxu0
      %v6264 = vadd.f32 %v6008, %v6263
      %v6265 = vpop.f32.mrb[0].mxu0
      %6266 = vmatprep.mubr.bf16.mxu0 %v5924
      %6267 = vmatmul.mubr.bf16.gmra.mrb[0].mxu0 %v5923
      %v6268 = vpop.f32.mrb[0].mxu0
      %v6269 = vadd.f32 %v6008, %v6268
      %v6270 = vpop.f32.mrb[0].mxu0
      %v6271 = vpop.f32.mrb[0].mxu0
      %v6272 = vadd.f32 %v6008, %v6271
      %v6273 = vpop.f32.mrb[0].mxu0
      %6274 = vmatprep.mubr.bf16.mxu0 %v5928
      %6275 = vmatmul.mubr.bf16.gmra.mrb[0].mxu0 %v5927
      %v6276 = vpop.f32.mrb[0].mxu0
      %v6277 = vadd.f32 %v6008, %v6276
      %v6278 = vpop.f32.mrb[0].mxu0
      %v6279 = vpop.f32.mrb[0].mxu0
      %v6280 = vadd.f32 %v6008, %v6279
      %v6281 = vpop.f32.mrb[0].mxu0
      %6282 = vmatprep.mubr.bf16.mxu0 %v5932
      %6283 = vmatmul.mubr.bf16.gmra.mrb[0].mxu0 %v5931
      %v6284 = vpop.f32.mrb[0].mxu0
      %v6285 = vadd.f32 %v6008, %v6284
      %v6286 = vpop.f32.mrb[0].mxu0
      %v6287 = vpop.f32.mrb[0].mxu0
      %v6288 = vadd.f32 %v6008, %v6287
      %v6289 = vpop.f32.mrb[0].mxu0
      %6290 = vmatprep.mubr.bf16.mxu0 %v5936
      %6291 = vmatmul.mubr.bf16.gmra.mrb[0].mxu0 %v5935
      %v6292 = vpop.f32.mrb[0].mxu0
      %v6293 = vadd.f32 %v6008, %v6292
      %v6294 = vpop.f32.mrb[0].mxu0
      %v6295 = vpop.f32.mrb[0].mxu0
      %v6296 = vadd.f32 %v6008, %v6295
      %v6297 = vpop.f32.mrb[0].mxu0
      %6298 = vdwg.mxu0
      %6299 = vmatprep.subr.bf16.mxu0 0
      %6300 = vmatpush1.bf16.msra.mxu0 %v6154
      %6301 = vmatprep.subr.bf16.mxu0 0
      %6302 = vmatpush1.bf16.msra.mxu0 %v6155
      %6303 = vmatprep.subr.bf16.mxu0 0
      %6304 = vmatpush1.bf16.msra.mxu0 %v6156
      %6305 = vmatprep.subr.bf16.mxu0 0
      %6306 = vmatpush1.bf16.msra.mxu0 %v6157
      %6307 = vmatprep.subr.bf16.mxu0 0
      %6308 = vmatpush1.bf16.msra.mxu0 %v6158
      %6309 = vmatprep.subr.bf16.mxu0 0
      %6310 = vmatpush1.bf16.msra.mxu0 %v6159
      %6311 = vmatprep.subr.bf16.mxu0 0
      %6312 = vmatpush1.bf16.msra.mxu0 %v6160
      %6313 = vmatprep.subr.bf16.mxu0 0
      %6314 = vmatpush1.bf16.msra.mxu0 %v6161
      %6315 = vmatprep.subr.bf16.mxu0 0
      %6316 = vmatpush1.bf16.msra.mxu0 %v6162
      %6317 = vmatprep.subr.bf16.mxu0 0
      %6318 = vmatpush1.bf16.msra.mxu0 %v6163
      %6319 = vmatprep.subr.bf16.mxu0 0
      %6320 = vmatpush1.bf16.msra.mxu0 %v6164
      %6321 = vmatprep.subr.bf16.mxu0 0
      %6322 = vmatpush1.bf16.msra.mxu0 %v6165
      %6323 = vmatprep.subr.bf16.mxu0 0
      %6324 = vmatpush1.bf16.msra.mxu0 %v6166
      %6325 = vmatprep.subr.bf16.mxu0 0
      %6326 = vmatpush1.bf16.msra.mxu0 %v6167
      %6327 = vmatprep.subr.bf16.mxu0 0
      %6328 = vmatpush1.bf16.msra.mxu0 %v6168
      %6329 = vmatprep.subr.bf16.mxu0 0
      %6330 = vmatpush1.bf16.msra.mxu0 %v6169
      %6331 = vmatprep.mubr.bf16.mxu0 %v5910
      %6332 = vmatmul.mubr.bf16.gmra.mrb[0].mxu0 %v5909
      %v6333 = vpop.f32.mrb[0].mxu0
      %v6334 = vadd.f32 %v6237, %v6333
      %v6335 = vpop.f32.mrb[0].mxu0
      %v6336 = vpop.f32.mrb[0].mxu0
      %v6337 = vadd.f32 %v6240, %v6336
      %v6338 = vpop.f32.mrb[0].mxu0
      %6339 = vmatprep.mubr.bf16.mxu0 %v5914
      %6340 = vmatmul.mubr.bf16.gmra.mrb[0].mxu0 %v5913
      %v6341 = vpop.f32.mrb[0].mxu0
      %v6342 = vadd.f32 %v6245, %v6341
      %v6343 = vpop.f32.mrb[0].mxu0
      %v6344 = vpop.f32.mrb[0].mxu0
      %v6345 = vadd.f32 %v6248, %v6344
      %v6346 = vpop.f32.mrb[0].mxu0
      %6347 = vmatprep.mubr.bf16.mxu0 %v5918
      %6348 = vmatmul.mubr.bf16.gmra.mrb[0].mxu0 %v5917
      %v6349 = vpop.f32.mrb[0].mxu0
      %v6350 = vadd.f32 %v6253, %v6349
      %v6351 = vpop.f32.mrb[0].mxu0
      %v6352 = vpop.f32.mrb[0].mxu0
      %v6353 = vadd.f32 %v6256, %v6352
      %v6354 = vpop.f32.mrb[0].mxu0
      %6355 = vmatprep.mubr.bf16.mxu0 %v5922
      %6356 = vmatmul.mubr.bf16.gmra.mrb[0].mxu0 %v5921
      %v6357 = vpop.f32.mrb[0].mxu0
      %v6358 = vadd.f32 %v6261, %v6357
      %v6359 = vpop.f32.mrb[0].mxu0
      %v6360 = vpop.f32.mrb[0].mxu0
      %v6361 = vadd.f32 %v6264, %v6360
      %v6362 = vpop.f32.mrb[0].mxu0
      %6363 = vmatprep.mubr.bf16.mxu0 %v5926
      %6364 = vmatmul.mubr.bf16.gmra.mrb[0].mxu0 %v5925
      %v6365 = vpop.f32.mrb[0].mxu0
      %v6366 = vadd.f32 %v6269, %v6365
      %v6367 = vpop.f32.mrb[0].mxu0
      %v6368 = vpop.f32.mrb[0].mxu0
      %v6369 = vadd.f32 %v6272, %v6368
      %v6370 = vpop.f32.mrb[0].mxu0
      %6371 = vmatprep.mubr.bf16.mxu0 %v5930
      %6372 = vmatmul.mubr.bf16.gmra.mrb[0].mxu0 %v5929
      %v6373 = vpop.f32.mrb[0].mxu0
      %v6374 = vadd.f32 %v6277, %v6373
      %v6375 = vpop.f32.mrb[0].mxu0
      %v6376 = vpop.f32.mrb[0].mxu0
      %v6377 = vadd.f32 %v6280, %v6376
      %v6378 = vpop.f32.mrb[0].mxu0
      %6379 = vmatprep.mubr.bf16.mxu0 %v5934
      %6380 = vmatmul.mubr.bf16.gmra.mrb[0].mxu0 %v5933
      %v6381 = vpop.f32.mrb[0].mxu0
      %v6382 = vadd.f32 %v6285, %v6381
      %v6383 = vpop.f32.mrb[0].mxu0
      %v6384 = vpop.f32.mrb[0].mxu0
      %v6385 = vadd.f32 %v6288, %v6384
      %v6386 = vpop.f32.mrb[0].mxu0
      %6387 = vmatprep.mubr.bf16.mxu0 %v5938
      %6388 = vmatmul.mubr.bf16.gmra.mrb[0].mxu0 %v5937
      %v6389 = vpop.f32.mrb[0].mxu0
      %v6390 = vadd.f32 %v6293, %v6389
      %v6391 = vpop.f32.mrb[0].mxu0
      %v6392 = vpop.f32.mrb[0].mxu0
      %v6393 = vadd.f32 %v6296, %v6392
      %v6394 = vpop.f32.mrb[0].mxu0
      %6395 = vdwg.mxu0
      %v6396 = vadd.f32 %v6334, %v4867
      %v6397 = vadd.f32 %v6337, %v4868
      %v6398 = vadd.f32 %v6342, %v4869
      %v6399 = vadd.f32 %v6345, %v4870
      %v6400 = vadd.f32 %v6350, %v4871
      %v6401 = vadd.f32 %v6353, %v4872
      %v6402 = vadd.f32 %v6358, %v4873
      %v6403 = vadd.f32 %v6361, %v4874
      %v6404 = vadd.f32 %v6366, %v4875
      %v6405 = vadd.f32 %v6369, %v4876
      %v6406 = vadd.f32 %v6374, %v4877
      %v6407 = vadd.f32 %v6377, %v4878
      %v6408 = vadd.f32 %v6382, %v4879
      %v6409 = vadd.f32 %v6385, %v4880
      %v6410 = vadd.f32 %v6390, %v4881
      %v6411 = vadd.f32 %v6393, %v4882
      %v6412 = vld [vmem:[%s752] sm:$0x1]
      %v6413 = vld [vmem:[%s755] sm:$0x1]
      %6414 = vadd.xlane.f32.xlu0 %v6396
      %v6415 = vpop.xlane.xlu0 %6414
      %6416 = vadd.xlane.f32.xlu0 %v6397
      %v6417 = vpop.xlane.xlu0 %6416
      %6418 = vadd.xlane.f32.xlu0 %v6398
      %v6419 = vpop.xlane.xlu0 %6418
      %6420 = vadd.xlane.f32.xlu0 %v6399
      %v6421 = vpop.xlane.xlu0 %6420
      %6422 = vadd.xlane.f32.xlu0 %v6400
      %v6423 = vpop.xlane.xlu0 %6422
      %6424 = vadd.xlane.f32.xlu0 %v6401
      %v6425 = vpop.xlane.xlu0 %6424
      %6426 = vadd.xlane.f32.xlu0 %v6402
      %v6427 = vpop.xlane.xlu0 %6426
      %6428 = vadd.xlane.f32.xlu0 %v6403
      %v6429 = vpop.xlane.xlu0 %6428
      %6430 = vadd.xlane.f32.xlu0 %v6404
      %v6431 = vpop.xlane.xlu0 %6430
      %6432 = vadd.xlane.f32.xlu0 %v6405
      %v6433 = vpop.xlane.xlu0 %6432
      %6434 = vadd.xlane.f32.xlu0 %v6406
      %v6435 = vpop.xlane.xlu0 %6434
      %6436 = vadd.xlane.f32.xlu0 %v6407
      %v6437 = vpop.xlane.xlu0 %6436
      %6438 = vadd.xlane.f32.xlu0 %v6408
      %v6439 = vpop.xlane.xlu0 %6438
      %6440 = vadd.xlane.f32.xlu0 %v6409
      %v6441 = vpop.xlane.xlu0 %6440
      %6442 = vadd.xlane.f32.xlu0 %v6410
      %v6443 = vpop.xlane.xlu0 %6442
      %6444 = vadd.xlane.f32.xlu0 %v6411
      %v6445 = vpop.xlane.xlu0 %6444
      %v6446 = vmul.f32 %v6415, %v4694
      %v6447 = vmul.f32 %v6417, %v4694
      %v6448 = vmul.f32 %v6419, %v4694
      %v6449 = vmul.f32 %v6421, %v4694
      %v6450 = vmul.f32 %v6423, %v4694
      %v6451 = vmul.f32 %v6425, %v4694
      %v6452 = vmul.f32 %v6427, %v4694
      %v6453 = vmul.f32 %v6429, %v4694
      %v6454 = vmul.f32 %v6431, %v4694
      %v6455 = vmul.f32 %v6433, %v4694
      %v6456 = vmul.f32 %v6435, %v4694
      %v6457 = vmul.f32 %v6437, %v4694
      %v6458 = vmul.f32 %v6439, %v4694
      %v6459 = vmul.f32 %v6441, %v4694
      %v6460 = vmul.f32 %v6443, %v4694
      %v6461 = vmul.f32 %v6445, %v4694
      %v6462 = vsub.f32 %v6396, %v6446
      %v6463 = vsub.f32 %v6397, %v6447
      %v6464 = vsub.f32 %v6398, %v6448
      %v6465 = vsub.f32 %v6399, %v6449
      %v6466 = vsub.f32 %v6400, %v6450
      %v6467 = vsub.f32 %v6401, %v6451
      %v6468 = vsub.f32 %v6402, %v6452
      %v6469 = vsub.f32 %v6403, %v6453
      %v6470 = vsub.f32 %v6404, %v6454
      %v6471 = vsub.f32 %v6405, %v6455
      %v6472 = vsub.f32 %v6406, %v6456
      %v6473 = vsub.f32 %v6407, %v6457
      %v6474 = vsub.f32 %v6408, %v6458
      %v6475 = vsub.f32 %v6409, %v6459
      %v6476 = vsub.f32 %v6410, %v6460
      %v6477 = vsub.f32 %v6411, %v6461
      %v6478 = vmul.f32 %v6462, %v6462
      %v6479 = vmul.f32 %v6463, %v6463
      %v6480 = vmul.f32 %v6464, %v6464
      %v6481 = vmul.f32 %v6465, %v6465
      %v6482 = vmul.f32 %v6466, %v6466
      %v6483 = vmul.f32 %v6467, %v6467
      %v6484 = vmul.f32 %v6468, %v6468
      %v6485 = vmul.f32 %v6469, %v6469
      %v6486 = vmul.f32 %v6470, %v6470
      %v6487 = vmul.f32 %v6471, %v6471
      %v6488 = vmul.f32 %v6472, %v6472
      %v6489 = vmul.f32 %v6473, %v6473
      %v6490 = vmul.f32 %v6474, %v6474
      %v6491 = vmul.f32 %v6475, %v6475
      %v6492 = vmul.f32 %v6476, %v6476
      %v6493 = vmul.f32 %v6477, %v6477
      %6494 = vadd.xlane.f32.xlu0 %v6478
      %v6495 = vpop.xlane.xlu0 %6494
      %6496 = vadd.xlane.f32.xlu0 %v6479
      %v6497 = vpop.xlane.xlu0 %6496
      %6498 = vadd.xlane.f32.xlu0 %v6480
      %v6499 = vpop.xlane.xlu0 %6498
      %6500 = vadd.xlane.f32.xlu0 %v6481
      %v6501 = vpop.xlane.xlu0 %6500
      %6502 = vadd.xlane.f32.xlu0 %v6482
      %v6503 = vpop.xlane.xlu0 %6502
      %6504 = vadd.xlane.f32.xlu0 %v6483
      %v6505 = vpop.xlane.xlu0 %6504
      %6506 = vadd.xlane.f32.xlu0 %v6484
      %v6507 = vpop.xlane.xlu0 %6506
      %6508 = vadd.xlane.f32.xlu0 %v6485
      %v6509 = vpop.xlane.xlu0 %6508
      %6510 = vadd.xlane.f32.xlu0 %v6486
      %v6511 = vpop.xlane.xlu0 %6510
      %6512 = vadd.xlane.f32.xlu0 %v6487
      %v6513 = vpop.xlane.xlu0 %6512
      %6514 = vadd.xlane.f32.xlu0 %v6488
      %v6515 = vpop.xlane.xlu0 %6514
      %6516 = vadd.xlane.f32.xlu0 %v6489
      %v6517 = vpop.xlane.xlu0 %6516
      %6518 = vadd.xlane.f32.xlu0 %v6490
      %v6519 = vpop.xlane.xlu0 %6518
      %6520 = vadd.xlane.f32.xlu0 %v6491
      %v6521 = vpop.xlane.xlu0 %6520
      %6522 = vadd.xlane.f32.xlu0 %v6492
      %v6523 = vpop.xlane.xlu0 %6522
      %6524 = vadd.xlane.f32.xlu0 %v6493
      %v6525 = vpop.xlane.xlu0 %6524
      %v6526 = vmul.f32 %v6495, %v4694
      %v6527 = vmul.f32 %v6497, %v4694
      %v6528 = vmul.f32 %v6499, %v4694
      %v6529 = vmul.f32 %v6501, %v4694
      %v6530 = vmul.f32 %v6503, %v4694
      %v6531 = vmul.f32 %v6505, %v4694
      %v6532 = vmul.f32 %v6507, %v4694
      %v6533 = vmul.f32 %v6509, %v4694
      %v6534 = vmul.f32 %v6511, %v4694
      %v6535 = vmul.f32 %v6513, %v4694
      %v6536 = vmul.f32 %v6515, %v4694
      %v6537 = vmul.f32 %v6517, %v4694
      %v6538 = vmul.f32 %v6519, %v4694
      %v6539 = vmul.f32 %v6521, %v4694
      %v6540 = vmul.f32 %v6523, %v4694
      %v6541 = vmul.f32 %v6525, %v4694
      %v6542 = vadd.f32 %v6526, 1e-12
      %v6543 = vadd.f32 %v6527, 1e-12
      %v6544 = vadd.f32 %v6528, 1e-12
      %v6545 = vadd.f32 %v6529, 1e-12
      %v6546 = vadd.f32 %v6530, 1e-12
      %v6547 = vadd.f32 %v6531, 1e-12
      %v6548 = vadd.f32 %v6532, 1e-12
      %v6549 = vadd.f32 %v6533, 1e-12
      %v6550 = vadd.f32 %v6534, 1e-12
      %v6551 = vadd.f32 %v6535, 1e-12
      %v6552 = vadd.f32 %v6536, 1e-12
      %v6553 = vadd.f32 %v6537, 1e-12
      %v6554 = vadd.f32 %v6538, 1e-12
      %v6555 = vadd.f32 %v6539, 1e-12
      %v6556 = vadd.f32 %v6540, 1e-12
      %v6557 = vadd.f32 %v6541, 1e-12
      %v6558 = vrsqrt.pop %v6542
      %v6559 = vrsqrt.pop %v6543
      %v6560 = vrsqrt.pop %v6544
      %v6561 = vrsqrt.pop %v6545
      %v6562 = vrsqrt.pop %v6546
      %v6563 = vrsqrt.pop %v6547
      %v6564 = vrsqrt.pop %v6548
      %v6565 = vrsqrt.pop %v6549
      %v6566 = vrsqrt.pop %v6550
      %v6567 = vrsqrt.pop %v6551
      %v6568 = vrsqrt.pop %v6552
      %v6569 = vrsqrt.pop %v6553
      %v6570 = vrsqrt.pop %v6554
      %v6571 = vrsqrt.pop %v6555
      %v6572 = vrsqrt.pop %v6556
      %v6573 = vrsqrt.pop %v6557
      %v6574 = vmul.f32 %v6462, %v6558
      %v6575 = vmul.f32 %v6463, %v6559
      %v6576 = vmul.f32 %v6464, %v6560
      %v6577 = vmul.f32 %v6465, %v6561
      %v6578 = vmul.f32 %v6466, %v6562
      %v6579 = vmul.f32 %v6467, %v6563
      %v6580 = vmul.f32 %v6468, %v6564
      %v6581 = vmul.f32 %v6469, %v6565
      %v6582 = vmul.f32 %v6470, %v6566
      %v6583 = vmul.f32 %v6471, %v6567
      %v6584 = vmul.f32 %v6472, %v6568
      %v6585 = vmul.f32 %v6473, %v6569
      %v6586 = vmul.f32 %v6474, %v6570
      %v6587 = vmul.f32 %v6475, %v6571
      %v6588 = vmul.f32 %v6476, %v6572
      %v6589 = vmul.f32 %v6477, %v6573
      %v6591 = vlaneseq
      %v6592 = vshrl.u32 %v6591, 7
      %v6593 = vsub.s32 0, %v6592
      %v6594 = vrot.slane %v6412, %v6593
      %v6596 = vmul.f32 %v6574, %v6594
      %v6597 = vmul.f32 %v6575, %v6594
      %v6598 = vmul.f32 %v6576, %v6594
      %v6599 = vmul.f32 %v6577, %v6594
      %v6600 = vmul.f32 %v6578, %v6594
      %v6601 = vmul.f32 %v6579, %v6594
      %v6602 = vmul.f32 %v6580, %v6594
      %v6603 = vmul.f32 %v6581, %v6594
      %v6604 = vmul.f32 %v6582, %v6594
      %v6605 = vmul.f32 %v6583, %v6594
      %v6606 = vmul.f32 %v6584, %v6594
      %v6607 = vmul.f32 %v6585, %v6594
      %v6608 = vmul.f32 %v6586, %v6594
      %v6609 = vmul.f32 %v6587, %v6594
      %v6610 = vmul.f32 %v6588, %v6594
      %v6611 = vmul.f32 %v6589, %v6594
      %v6613 = vlaneseq
      %v6614 = vshrl.u32 %v6613, 7
      %v6615 = vsub.s32 0, %v6614
      %v6616 = vrot.slane %v6413, %v6615
      %v6618 = vadd.f32 %v6596, %v6616
      %v6619 = vadd.f32 %v6597, %v6616
      %v6620 = vadd.f32 %v6598, %v6616
      %v6621 = vadd.f32 %v6599, %v6616
      %v6622 = vadd.f32 %v6600, %v6616
      %v6623 = vadd.f32 %v6601, %v6616
      %v6624 = vadd.f32 %v6602, %v6616
      %v6625 = vadd.f32 %v6603, %v6616
      %v6626 = vadd.f32 %v6604, %v6616
      %v6627 = vadd.f32 %v6605, %v6616
      %v6628 = vadd.f32 %v6606, %v6616
      %v6629 = vadd.f32 %v6607, %v6616
      %v6630 = vadd.f32 %v6608, %v6616
      %v6631 = vadd.f32 %v6609, %v6616
      %v6632 = vadd.f32 %v6610, %v6616
      %v6633 = vadd.f32 %v6611, %v6616
      %6634 = vst [vmem:[#allocation2] sm:$0xff] %v6618
      %6635 = vst [vmem:[#allocation2 + $0x8] sm:$0xff] %v6619
      %6636 = vst [vmem:[#allocation2 + $0x10] sm:$0xff] %v6620
      %6637 = vst [vmem:[#allocation2 + $0x18] sm:$0xff] %v6621
      %6638 = vst [vmem:[#allocation2 + $0x20] sm:$0xff] %v6622
      %6639 = vst [vmem:[#allocation2 + $0x28] sm:$0xff] %v6623
      %6640 = vst [vmem:[#allocation2 + $0x30] sm:$0xff] %v6624
      %6641 = vst [vmem:[#allocation2 + $0x38] sm:$0xff] %v6625
      %6642 = vst [vmem:[#allocation2 + $0x40] sm:$0xff] %v6626
      %6643 = vst [vmem:[#allocation2 + $0x48] sm:$0xff] %v6627
      %6644 = vst [vmem:[#allocation2 + $0x50] sm:$0xff] %v6628
      %6645 = vst [vmem:[#allocation2 + $0x58] sm:$0xff] %v6629
      %6646 = vst [vmem:[#allocation2 + $0x60] sm:$0xff] %v6630
      %6647 = vst [vmem:[#allocation2 + $0x68] sm:$0xff] %v6631
      %6648 = vst [vmem:[#allocation2 + $0x70] sm:$0xff] %v6632
      %6649 = vst [vmem:[#allocation2 + $0x78] sm:$0xff] %v6633
      %p6650 = scmp.eq.s32.totalorder %s33, 1
      // Predicated region
      $region93: #{bert_forward.1} parent=87 // pred_check
        %p6651 = pneg %p6650
      $region94: #{bert_forward.1} parent=87 // pred_check_branch
        %6653 = sbr.rel (%p6651) target = $region96
      $region95: #{bert_forward.1} parent=87 // pred_region
        %v6654 = vpack.c.bf16 %v6619, %v6618
        %v6655 = vpack.c.bf16 %v6621, %v6620
        %v6656 = vpack.c.bf16 %v6623, %v6622
        %v6657 = vpack.c.bf16 %v6625, %v6624
        %v6658 = vpack.c.bf16 %v6627, %v6626
        %v6659 = vpack.c.bf16 %v6629, %v6628
        %v6660 = vpack.c.bf16 %v6631, %v6630
        %v6661 = vpack.c.bf16 %v6633, %v6632
        %v6662 = vld [vmem:[%s15] sm:$0xf]
        %v6663 = vld [vmem:[%s15 + $0x4] sm:$0xf]
        %v6664 = vld [vmem:[%s15 + $0x8] sm:$0xf]
        %v6665 = vld [vmem:[%s15 + $0xc] sm:$0xf]
        %v6666 = vld [vmem:[%s15 + $0x10] sm:$0xf]
        %v6667 = vld [vmem:[%s15 + $0x14] sm:$0xf]
        %v6668 = vld [vmem:[%s15 + $0x18] sm:$0xf]
        %v6669 = vld [vmem:[%s15 + $0x1c] sm:$0xf]
        %v6670 = vld [vmem:[%s15 + $0x20] sm:$0xf]
        %v6671 = vld [vmem:[%s15 + $0x24] sm:$0xf]
        %v6672 = vld [vmem:[%s15 + $0x28] sm:$0xf]
        %v6673 = vld [vmem:[%s15 + $0x2c] sm:$0xf]
        %v6674 = vld [vmem:[%s15 + $0x30] sm:$0xf]
        %v6675 = vld [vmem:[%s15 + $0x34] sm:$0xf]
        %v6676 = vld [vmem:[%s15 + $0x38] sm:$0xf]
        %v6677 = vld [vmem:[%s15 + $0x3c] sm:$0xf]
        %v6678 = vld [vmem:[%s16] sm:$0x1]
        %v6680 = vlaneseq
        %v6681 = vshrl.u32 %v6680, 7
        %v6682 = vsub.s32 0, %v6681
        %v6683 = vrot.slane %v6678, %v6682
        %v6701 = vunpack.c.l.b16 %v6662
        %v6702 = vunpack.c.l.b16 %v6663
        %v6703 = vunpack.c.l.b16 %v6664
        %v6704 = vunpack.c.l.b16 %v6665
        %v6705 = vunpack.c.l.b16 %v6666
        %v6706 = vunpack.c.l.b16 %v6667
        %v6707 = vunpack.c.l.b16 %v6668
        %v6708 = vunpack.c.l.b16 %v6669
        %v6709 = vunpack.c.l.b16 %v6670
        %v6710 = vunpack.c.l.b16 %v6671
        %v6711 = vunpack.c.l.b16 %v6672
        %v6712 = vunpack.c.l.b16 %v6673
        %v6713 = vunpack.c.l.b16 %v6674
        %v6714 = vunpack.c.l.b16 %v6675
        %v6715 = vunpack.c.l.b16 %v6676
        %v6716 = vunpack.c.l.b16 %v6677
        %v6717 = vpack.c.b16 %v6702, %v6701
        %v6718 = vpack.c.b16 %v6704, %v6703
        %v6719 = vpack.c.b16 %v6706, %v6705
        %v6720 = vpack.c.b16 %v6708, %v6707
        %v6721 = vpack.c.b16 %v6710, %v6709
        %v6722 = vpack.c.b16 %v6712, %v6711
        %v6723 = vpack.c.b16 %v6714, %v6713
        %v6724 = vpack.c.b16 %v6716, %v6715
        %6733 = vmatprep.subr.bf16.mxu0 0
        %6734 = vmatpush1.bf16.msra.mxu0 %v6717
        %6735 = vmatprep.subr.bf16.mxu0 0
        %6736 = vmatpush1.bf16.msra.mxu0 %v6718
        %6737 = vmatprep.subr.bf16.mxu0 0
        %6738 = vmatpush1.bf16.msra.mxu0 %v6719
        %6739 = vmatprep.subr.bf16.mxu0 0
        %6740 = vmatpush1.bf16.msra.mxu0 %v6720
        %6741 = vmatprep.subr.bf16.mxu0 0
        %6742 = vmatpush1.bf16.msra.mxu0 %v6721
        %6743 = vmatprep.subr.bf16.mxu0 0
        %6744 = vmatpush1.bf16.msra.mxu0 %v6722
        %6745 = vmatprep.subr.bf16.mxu0 0
        %6746 = vmatpush1.bf16.msra.mxu0 %v6723
        %6747 = vmatprep.subr.bf16.mxu0 0
        %6748 = vmatpush1.bf16.msra.mxu0 %v6724
        %6749 = vmatprep.subr.bf16.mxu0 0
        %6750 = vmatpush1.bf16.msra.mxu0 0
        %6751 = vmatprep.subr.bf16.mxu0 0
        %6752 = vmatpush1.bf16.msra.mxu0 0
        %6753 = vmatprep.subr.bf16.mxu0 0
        %6754 = vmatpush1.bf16.msra.mxu0 0
        %6755 = vmatprep.subr.bf16.mxu0 0
        %6756 = vmatpush1.bf16.msra.mxu0 0
        %6757 = vmatprep.subr.bf16.mxu0 0
        %6758 = vmatpush1.bf16.msra.mxu0 0
        %6759 = vmatprep.subr.bf16.mxu0 0
        %6760 = vmatpush1.bf16.msra.mxu0 0
        %6761 = vmatprep.subr.bf16.mxu0 0
        %6762 = vmatpush1.bf16.msra.mxu0 0
        %6763 = vmatprep.subr.bf16.mxu0 0
        %6764 = vmatpush1.bf16.msra.mxu0 0
        %6765 = vmatprep.mubr.bf16.mxu0 0
        %6766 = vmatmul.mubr.bf16.gmra.mrb[0].mxu0 %v6654
        %v6767 = vpop.f32.mrb[0].mxu0
        %v6768 = vadd.f32 %v6683, %v6767
        %v6769 = vpop.f32.mrb[0].mxu0
        %v6770 = vpop.f32.mrb[0].mxu0
        %v6771 = vadd.f32 %v6683, %v6770
        %v6772 = vpop.f32.mrb[0].mxu0
        %6773 = vmatprep.mubr.bf16.mxu0 0
        %6774 = vmatmul.mubr.bf16.gmra.mrb[0].mxu0 %v6655
        %v6775 = vpop.f32.mrb[0].mxu0
        %v6776 = vadd.f32 %v6683, %v6775
        %v6777 = vpop.f32.mrb[0].mxu0
        %v6778 = vpop.f32.mrb[0].mxu0
        %v6779 = vadd.f32 %v6683, %v6778
        %v6780 = vpop.f32.mrb[0].mxu0
        %6781 = vmatprep.mubr.bf16.mxu0 0
        %6782 = vmatmul.mubr.bf16.gmra.mrb[0].mxu0 %v6656
        %v6783 = vpop.f32.mrb[0].mxu0
        %v6784 = vadd.f32 %v6683, %v6783
        %v6785 = vpop.f32.mrb[0].mxu0
        %v6786 = vpop.f32.mrb[0].mxu0
        %v6787 = vadd.f32 %v6683, %v6786
        %v6788 = vpop.f32.mrb[0].mxu0
        %6789 = vmatprep.mubr.bf16.mxu0 0
        %6790 = vmatmul.mubr.bf16.gmra.mrb[0].mxu0 %v6657
        %v6791 = vpop.f32.mrb[0].mxu0
        %v6792 = vadd.f32 %v6683, %v6791
        %v6793 = vpop.f32.mrb[0].mxu0
        %v6794 = vpop.f32.mrb[0].mxu0
        %v6795 = vadd.f32 %v6683, %v6794
        %v6796 = vpop.f32.mrb[0].mxu0
        %6797 = vmatprep.mubr.bf16.mxu0 0
        %6798 = vmatmul.mubr.bf16.gmra.mrb[0].mxu0 %v6658
        %v6799 = vpop.f32.mrb[0].mxu0
        %v6800 = vadd.f32 %v6683, %v6799
        %v6801 = vpop.f32.mrb[0].mxu0
        %v6802 = vpop.f32.mrb[0].mxu0
        %v6803 = vadd.f32 %v6683, %v6802
        %v6804 = vpop.f32.mrb[0].mxu0
        %6805 = vmatprep.mubr.bf16.mxu0 0
        %6806 = vmatmul.mubr.bf16.gmra.mrb[0].mxu0 %v6659
        %v6807 = vpop.f32.mrb[0].mxu0
        %v6808 = vadd.f32 %v6683, %v6807
        %v6809 = vpop.f32.mrb[0].mxu0
        %v6810 = vpop.f32.mrb[0].mxu0
        %v6811 = vadd.f32 %v6683, %v6810
        %v6812 = vpop.f32.mrb[0].mxu0
        %6813 = vmatprep.mubr.bf16.mxu0 0
        %6814 = vmatmul.mubr.bf16.gmra.mrb[0].mxu0 %v6660
        %v6815 = vpop.f32.mrb[0].mxu0
        %v6816 = vadd.f32 %v6683, %v6815
        %v6817 = vpop.f32.mrb[0].mxu0
        %v6818 = vpop.f32.mrb[0].mxu0
        %v6819 = vadd.f32 %v6683, %v6818
        %v6820 = vpop.f32.mrb[0].mxu0
        %6821 = vmatprep.mubr.bf16.mxu0 0
        %6822 = vmatmul.mubr.bf16.gmra.mrb[0].mxu0 %v6661
        %v6823 = vpop.f32.mrb[0].mxu0
        %v6824 = vadd.f32 %v6683, %v6823
        %v6825 = vpop.f32.mrb[0].mxu0
        %v6826 = vpop.f32.mrb[0].mxu0
        %v6827 = vadd.f32 %v6683, %v6826
        %v6828 = vpop.f32.mrb[0].mxu0
        %6829 = vdwg.mxu0
        %v6830 = vmul.f32 %v6768, %v6768
        %v6831 = vmul.f32 %v6771, %v6771
        %v6832 = vmul.f32 %v6776, %v6776
        %v6833 = vmul.f32 %v6779, %v6779
        %v6834 = vmul.f32 %v6784, %v6784
        %v6835 = vmul.f32 %v6787, %v6787
        %v6836 = vmul.f32 %v6792, %v6792
        %v6837 = vmul.f32 %v6795, %v6795
        %v6838 = vmul.f32 %v6800, %v6800
        %v6839 = vmul.f32 %v6803, %v6803
        %v6840 = vmul.f32 %v6808, %v6808
        %v6841 = vmul.f32 %v6811, %v6811
        %v6842 = vmul.f32 %v6816, %v6816
        %v6843 = vmul.f32 %v6819, %v6819
        %v6844 = vmul.f32 %v6824, %v6824
        %v6845 = vmul.f32 %v6827, %v6827
        %v6846 = vmul.f32 %v6768, %v6830
        %v6847 = vmul.f32 %v6771, %v6831
        %v6848 = vmul.f32 %v6776, %v6832
        %v6849 = vmul.f32 %v6779, %v6833
        %v6850 = vmul.f32 %v6784, %v6834
        %v6851 = vmul.f32 %v6787, %v6835
        %v6852 = vmul.f32 %v6792, %v6836
        %v6853 = vmul.f32 %v6795, %v6837
        %v6854 = vmul.f32 %v6800, %v6838
        %v6855 = vmul.f32 %v6803, %v6839
        %v6856 = vmul.f32 %v6808, %v6840
        %v6857 = vmul.f32 %v6811, %v6841
        %v6858 = vmul.f32 %v6816, %v6842
        %v6859 = vmul.f32 %v6819, %v6843
        %v6860 = vmul.f32 %v6824, %v6844
        %v6861 = vmul.f32 %v6827, %v6845
        %v6862 = vmul.f32 %v6846, 0.044715
        %v6863 = vmul.f32 %v6847, 0.044715
        %v6864 = vmul.f32 %v6848, 0.044715
        %v6865 = vmul.f32 %v6849, 0.044715
        %v6866 = vmul.f32 %v6850, 0.044715
        %v6867 = vmul.f32 %v6851, 0.044715
        %v6868 = vmul.f32 %v6852, 0.044715
        %v6869 = vmul.f32 %v6853, 0.044715
        %v6870 = vmul.f32 %v6854, 0.044715
        %v6871 = vmul.f32 %v6855, 0.044715
        %v6872 = vmul.f32 %v6856, 0.044715
        %v6873 = vmul.f32 %v6857, 0.044715
        %v6874 = vmul.f32 %v6858, 0.044715
        %v6875 = vmul.f32 %v6859, 0.044715
        %v6876 = vmul.f32 %v6860, 0.044715
        %v6877 = vmul.f32 %v6861, 0.044715
        %v6878 = vadd.f32 %v6768, %v6862
        %v6879 = vadd.f32 %v6771, %v6863
        %v6880 = vadd.f32 %v6776, %v6864
        %v6881 = vadd.f32 %v6779, %v6865
        %v6882 = vadd.f32 %v6784, %v6866
        %v6883 = vadd.f32 %v6787, %v6867
        %v6884 = vadd.f32 %v6792, %v6868
        %v6885 = vadd.f32 %v6795, %v6869
        %v6886 = vadd.f32 %v6800, %v6870
        %v6887 = vadd.f32 %v6803, %v6871
        %v6888 = vadd.f32 %v6808, %v6872
        %v6889 = vadd.f32 %v6811, %v6873
        %v6890 = vadd.f32 %v6816, %v6874
        %v6891 = vadd.f32 %v6819, %v6875
        %v6892 = vadd.f32 %v6824, %v6876
        %v6893 = vadd.f32 %v6827, %v6877
        %v6894 = vmul.f32 %v6878, 0.7978846
        %v6895 = vmul.f32 %v6879, 0.7978846
        %v6896 = vmul.f32 %v6880, 0.7978846
        %v6897 = vmul.f32 %v6881, 0.7978846
        %v6898 = vmul.f32 %v6882, 0.7978846
        %v6899 = vmul.f32 %v6883, 0.7978846
        %v6900 = vmul.f32 %v6884, 0.7978846
        %v6901 = vmul.f32 %v6885, 0.7978846
        %v6902 = vmul.f32 %v6886, 0.7978846
        %v6903 = vmul.f32 %v6887, 0.7978846
        %v6904 = vmul.f32 %v6888, 0.7978846
        %v6905 = vmul.f32 %v6889, 0.7978846
        %v6906 = vmul.f32 %v6890, 0.7978846
        %v6907 = vmul.f32 %v6891, 0.7978846
        %v6908 = vmul.f32 %v6892, 0.7978846
        %v6909 = vmul.f32 %v6893, 0.7978846
        %v6910 = vtanh.pop %v6894
        %v6911 = vtanh.pop %v6895
        %v6912 = vtanh.pop %v6896
        %v6913 = vtanh.pop %v6897
        %v6914 = vtanh.pop %v6898
        %v6915 = vtanh.pop %v6899
        %v6916 = vtanh.pop %v6900
        %v6917 = vtanh.pop %v6901
        %v6918 = vtanh.pop %v6902
        %v6919 = vtanh.pop %v6903
        %v6920 = vtanh.pop %v6904
        %v6921 = vtanh.pop %v6905
        %v6922 = vtanh.pop %v6906
        %v6923 = vtanh.pop %v6907
        %v6924 = vtanh.pop %v6908
        %v6925 = vtanh.pop %v6909
        %v6926 = vadd.f32 %v6910, 1.0
        %v6927 = vadd.f32 %v6911, 1.0
        %v6928 = vadd.f32 %v6912, 1.0
        %v6929 = vadd.f32 %v6913, 1.0
        %v6930 = vadd.f32 %v6914, 1.0
        %v6931 = vadd.f32 %v6915, 1.0
        %v6932 = vadd.f32 %v6916, 1.0
        %v6933 = vadd.f32 %v6917, 1.0
        %v6934 = vadd.f32 %v6918, 1.0
        %v6935 = vadd.f32 %v6919, 1.0
        %v6936 = vadd.f32 %v6920, 1.0
        %v6937 = vadd.f32 %v6921, 1.0
        %v6938 = vadd.f32 %v6922, 1.0
        %v6939 = vadd.f32 %v6923, 1.0
        %v6940 = vadd.f32 %v6924, 1.0
        %v6941 = vadd.f32 %v6925, 1.0
        %v6942 = vmul.f32 %v6926, 0.5
        %v6943 = vmul.f32 %v6927, 0.5
        %v6944 = vmul.f32 %v6928, 0.5
        %v6945 = vmul.f32 %v6929, 0.5
        %v6946 = vmul.f32 %v6930, 0.5
        %v6947 = vmul.f32 %v6931, 0.5
        %v6948 = vmul.f32 %v6932, 0.5
        %v6949 = vmul.f32 %v6933, 0.5
        %v6950 = vmul.f32 %v6934, 0.5
        %v6951 = vmul.f32 %v6935, 0.5
        %v6952 = vmul.f32 %v6936, 0.5
        %v6953 = vmul.f32 %v6937, 0.5
        %v6954 = vmul.f32 %v6938, 0.5
        %v6955 = vmul.f32 %v6939, 0.5
        %v6956 = vmul.f32 %v6940, 0.5
        %v6957 = vmul.f32 %v6941, 0.5
        %v6958 = vmul.f32 %v6768, %v6942
        %v6959 = vmul.f32 %v6771, %v6943
        %v6960 = vmul.f32 %v6776, %v6944
        %v6961 = vmul.f32 %v6779, %v6945
        %v6962 = vmul.f32 %v6784, %v6946
        %v6963 = vmul.f32 %v6787, %v6947
        %v6964 = vmul.f32 %v6792, %v6948
        %v6965 = vmul.f32 %v6795, %v6949
        %v6966 = vmul.f32 %v6800, %v6950
        %v6967 = vmul.f32 %v6803, %v6951
        %v6968 = vmul.f32 %v6808, %v6952
        %v6969 = vmul.f32 %v6811, %v6953
        %v6970 = vmul.f32 %v6816, %v6954
        %v6971 = vmul.f32 %v6819, %v6955
        %v6972 = vmul.f32 %v6824, %v6956
        %v6973 = vmul.f32 %v6827, %v6957
        %6974 = vst [vmem:[%s760] sm:$0xff] %v6958
        %6975 = vst [vmem:[%s760 + $0x8] sm:$0xff] %v6959
        %6976 = vst [vmem:[%s760 + $0x10] sm:$0xff] %v6960
        %6977 = vst [vmem:[%s760 + $0x18] sm:$0xff] %v6961
        %6978 = vst [vmem:[%s760 + $0x20] sm:$0xff] %v6962
        %6979 = vst [vmem:[%s760 + $0x28] sm:$0xff] %v6963
        %6980 = vst [vmem:[%s760 + $0x30] sm:$0xff] %v6964
        %6981 = vst [vmem:[%s760 + $0x38] sm:$0xff] %v6965
        %6982 = vst [vmem:[%s760 + $0x40] sm:$0xff] %v6966
        %6983 = vst [vmem:[%s760 + $0x48] sm:$0xff] %v6967
        %6984 = vst [vmem:[%s760 + $0x50] sm:$0xff] %v6968
        %6985 = vst [vmem:[%s760 + $0x58] sm:$0xff] %v6969
        %6986 = vst [vmem:[%s760 + $0x60] sm:$0xff] %v6970
        %6987 = vst [vmem:[%s760 + $0x68] sm:$0xff] %v6971
        %6988 = vst [vmem:[%s760 + $0x70] sm:$0xff] %v6972
        %6989 = vst [vmem:[%s760 + $0x78] sm:$0xff] %v6973
      $region96: #{bert_forward.1} parent=87 // pred_fallthru
        _
      %s6990 = smul.u32 16, %s32
      %p6991 = scmp.lt.s32.totalorder %s6990, 31
      %s6992 = scalar_select %p6991, %s6990, 31
      %s6993 = smul.addr %s6992, 8
      %s6994 = scalar_lea.vmem %s17, %s6993
      // Predicated region
      $region97: #{bert_forward.1} parent=87 // pred_check
        %p6995 = pneg %p480
      $region98: #{bert_forward.1} parent=87 // pred_check_branch
        %6997 = sbr.rel (%p6995) target = $region100
      $region99: #{bert_forward.1} parent=87 // pred_region
        %s6998 = smul.u32 16, %s32
      $region100: #{bert_forward.1} parent=87 // pred_fallthru
        _
    $region88: #{bert_forward.1} parent=5 // pred_fallthru
      _
    %p6999 = scmp.le.s32.totalorder 2, %s23
    // Predicated region
    $region101: #{bert_forward.1} parent=5 // pred_check
      %p7000 = pneg %p6999
    $region102: #{bert_forward.1} parent=5 // pred_check_branch
      %7002 = sbr.rel (%p7000) target = $region104
    $region103: #{bert_forward.1} parent=5 // pred_region
      %s7003 = ssub.s32 %s23, 2
      // Predicated region
      $region105: #{bert_forward.1} parent=103 // pred_check
        %p7004 = pneg %p486
      $region106: #{bert_forward.1} parent=103 // pred_check_branch
        %7006 = sbr.rel (%p7004) target = $region108
      $region107: #{bert_forward.1} parent=103 // pred_region
        %s7007 = smul.u32 16, %s34
        %p7008 = scmp.lt.s32.totalorder %s7007, 31
        %s7009 = scalar_select %p7008, %s7007, 31
        %s7010 = smul.addr %s7009, 8
        %s7011 = scalar_lea.vmem %s17, %s7010
      $region108: #{bert_forward.1} parent=103 // pred_fallthru
        _
    $region104: #{bert_forward.1} parent=5 // pred_fallthru
      _
  $region6: #{bert_forward.1} parent=0 // loop_footer
    %s27 = sadd.s32 1, %s23
  $region7: #{bert_forward.1} parent=0 // loop_footer_branch
    %22 = sbr.rel target = $region3
  $region8: #{bert_forward.1} parent=0 // loop_exit
    _

</llo_original>
